<compile_context>
chip_gen: v7x
topology: tpu7x:2x2x1
jax: 0.10.0
libtpu: 0.0.40
codegen_flags: <defaults>
</compile_context>

<pallas_src>
import jax
import jax.numpy as jnp
import numpy as np
from jax.experimental import pallas as pl
from jax.experimental.pallas import tpu as pltpu

EPS = 1e-5


def basic_block0_kernel(x_ref, sdn_ref, sup_ref, sel_ref, selt_ref,
                        bm1_ref, g1_ref, be1_ref, bm2_ref, g2_ref, be2_ref,
                        out_ref):
    """Fused conv1+bn1+relu -> conv2+bn2 -> +identity -> relu.

    Layout: activations are (N*H, W*C) f32; lane dim = W*C (lane dense).
      x_ref           : (M, L)   f32,  M = N*H, L = W*C
      sdn_ref/sup_ref : (M, M)   f32   0/1 row-shift matrices (kh = 0 / 2)
      sel_ref         : (L, C)   f32   0/1 fold (w,c)-lanes -> channel
      selt_ref        : (C, L)   f32   0/1 broadcast channel -> (w,c)-lanes
      bm*_ref         : (3, L, L) bf16 band weight matrices (one per kh)
      g*/be*_ref      : (1, C)   f32   BN gamma / beta
      out_ref         : (M, L)   f32
    """
    M, L = x_ref.shape
    C = sel_ref.shape[1]
    inv_count = 1.0 / float(M * (L // C))          # 1 / (N*H*W)

    x = x_ref[...]
    s_dn = sdn_ref[...]
    s_up = sup_ref[...]
    sel = sel_ref[...]
    selt = selt_ref[...]

    def conv3x3(a_f32, bm_ref):
        a = a_f32.astype(jnp.bfloat16)             # bf16 MXU inputs
        p0 = jnp.dot(a, bm_ref[0], preferred_element_type=jnp.float32)
        p1 = jnp.dot(a, bm_ref[1], preferred_element_type=jnp.float32)
        p2 = jnp.dot(a, bm_ref[2], preferred_element_type=jnp.float32)
        # kh row shift + height zero-padding via tiny 0/1 shift matmuls
        # (exact: entries are plain row copies / zeros).
        return (jnp.dot(s_dn, p0, preferred_element_type=jnp.float32)
                + p1
                + jnp.dot(s_up, p2, preferred_element_type=jnp.float32))

    def batchnorm(acc, gamma_ref, beta_ref):
        # One-pass batch stats (sum / sumsq). Channels are tiled W times across
        # the lanes; fold/broadcast across the W groups with 0/1 matmuls.
        # (E[x^2]-E[x]^2 cancellation is benign here: conv outputs are ~zero-mean.)
        rs = jnp.sum(acc, axis=0, keepdims=True)               # (1, L)
        rss = jnp.sum(acc * acc, axis=0, keepdims=True)        # (1, L)
        s_c = jnp.dot(rs, sel, preferred_element_type=jnp.float32)    # (1, C)
        ss_c = jnp.dot(rss, sel, preferred_element_type=jnp.float32)  # (1, C)
        mean = s_c * inv_count
        var = jnp.maximum(ss_c * inv_count - mean * mean, 0.0)
        scale = gamma_ref[...] * jax.lax.rsqrt(var + EPS)      # (1, C)
        shift = beta_ref[...] - mean * scale                   # (1, C)
        scale_l = jnp.dot(scale, selt, preferred_element_type=jnp.float32)
        shift_l = jnp.dot(shift, selt, preferred_element_type=jnp.float32)
        return acc * scale_l + shift_l

    y = jnp.maximum(batchnorm(conv3x3(x, bm1_ref), g1_ref, be1_ref), 0.0)
    z = batchnorm(conv3x3(y, bm2_ref), g2_ref, be2_ref)
    out_ref[...] = jnp.maximum(z + x, 0.0)


def _band_matrices(w_hwio, width):
    """Fold the 3 kw taps + width zero-padding of a 3x3 conv into matrices.

    w_hwio: (3, 3, Cin, Cout).  Returns (3, W*Cin, W*Cout) f32 where
      mats[kh][wi*Cin + ci, w*Cout + co] = w_hwio[kh, wi - w + 1, ci, co]
    for |wi - w| <= 1 (out-of-range taps == zero padding are simply dropped).
    """
    kh_taps, kw_taps, cin, cout = w_hwio.shape
    w_cols = jnp.arange(width)
    mats = []
    for kh in range(kh_taps):
        # Padded-width coordinates first: row wp = w + kw, then drop the pads.
        bp = jnp.zeros((width + 2, width, cin, cout), jnp.float32)
        for kw in range(kw_taps):
            bp = bp.at[w_cols + kw, w_cols].set(
                jnp.broadcast_to(w_hwio[kh, kw].astype(jnp.float32),
                                 (width, cin, cout)))
        band = bp[1:width + 1]                                  # (W, W, Ci, Co)
        band = jnp.transpose(band, (0, 2, 1, 3)).reshape(width * cin,
                                                         width * cout)
        mats.append(band)
    return jnp.stack(mats, axis=0)


def _full_spec(shape):
    ndim = len(shape)
    return pl.BlockSpec(shape, lambda i, _n=ndim: (0,) * _n)


@jax.jit
def basic_block0(x_nchw, w1_hwio, g1, b1, w2_hwio, g2, b2):
    """BasicBlock0.forward (stride=1, downsample=None). NCHW in / NCHW out."""
    # TODO(synk): if the surrounding graph is NHWC, pass NHWC directly and drop
    # these transposes; they are kept only to match the PyTorch interface.
    x = jnp.transpose(x_nchw, (0, 2, 3, 1)).astype(jnp.float32)   # -> NHWC
    N, H, W, C = x.shape
    assert w1_hwio.shape[-1] == C, "identity add requires in == out channels"
    M, L = N * H, W * C

    x2d = x.reshape(M, L)                      # lane-dense activation layout

    bm1 = _band_matrices(w1_hwio, W).astype(jnp.bfloat16)
    bm2 = _band_matrices(w2_hwio, W).astype(jnp.bfloat16)

    # 0/1 row-shift matrices: shift rows by +/-1 inside each image, zero at the
    # image boundary (== the height zero-padding of the conv).
    ridx = jnp.arange(M)
    s_dn = (jnp.eye(M, k=-1, dtype=jnp.float32)
            * (ridx % H != 0)[:, None].astype(jnp.float32))
    s_up = (jnp.eye(M, k=1, dtype=jnp.float32)
            * (ridx % H != H - 1)[:, None].astype(jnp.float32))

    # 0/1 fold / broadcast between the (w, c)-interleaved lanes and channels.
    sel = jnp.tile(jnp.eye(C, dtype=jnp.float32), (W, 1))     # (W*C, C)
    selt = jnp.tile(jnp.eye(C, dtype=jnp.float32), (1, W))    # (C, W*C)

    args = (x2d, s_dn, s_up, sel, selt,
            bm1, g1.reshape(1, C).astype(jnp.float32),
            b1.reshape(1, C).astype(jnp.float32),
            bm2, g2.reshape(1, C).astype(jnp.float32),
            b2.reshape(1, C).astype(jnp.float32))

    out2d = pl.pallas_call(
        basic_block0_kernel,
        out_shape=jax.ShapeDtypeStruct((M, L), jnp.float32),
        grid_spec=pltpu.PrefetchScalarGridSpec(
            num_scalar_prefetch=0,
            grid=(1,),
            in_specs=[_full_spec(a.shape) for a in args],
            out_specs=_full_spec((M, L)),
        ),
        compiler_params=pltpu.CompilerParams(
            dimension_semantics=("arbitrary",),
            vmem_limit_bytes=32 * 1024 * 1024),
    )(*args)

    out = out2d.reshape(N, H, W, C)            # free (contiguous) reshape
    return jnp.transpose(out, (0, 3, 1, 2))    # -> NCHW


def _ref_forward(x_nchw, w1_hwio, g1, b1, w2_hwio, g2, b2):
    """Pure-JAX f32 reference of the PyTorch forward (training-mode BN)."""
    x = jnp.transpose(x_nchw, (0, 2, 3, 1))

    def conv(a, w):
        return jax.lax.conv_general_dilated(
            a, w, window_strides=(1, 1), padding="SAME",
            dimension_numbers=("NHWC", "HWIO", "NHWC"))

    def bn(a, g, b):
        mean = jnp.mean(a, axis=(0, 1, 2), keepdims=True)
        var = jnp.mean((a - mean) ** 2, axis=(0, 1, 2), keepdims=True)
        return (a - mean) * g / jnp.sqrt(var + EPS) + b

    y = jax.nn.relu(bn(conv(x, w1_hwio), g1, b1))
    z = bn(conv(y, w2_hwio), g2, b2)
    out = jax.nn.relu(z + x)
    return jnp.transpose(out, (0, 3, 1, 2))


if __name__ == "__main__":
    N, C, H, W = 2, 32, 16, 16  # in_channel == out_channel == 32
    key = jax.random.PRNGKey(0)
    k = jax.random.split(key, 7)

    x_nchw = jax.random.normal(k[0], (N, C, H, W), jnp.float32)
    # Conv weights in HWIO layout (deterministic stand-in for kaiming init).
    w1 = 0.1 * jax.random.normal(k[1], (3, 3, C, C), jnp.float32)
    w2 = 0.1 * jax.random.normal(k[2], (3, 3, C, C), jnp.float32)
    # BN affine params (PyTorch init is gamma=1, beta=0; perturbed).
    g1 = 1.0 + 0.1 * jax.random.normal(k[3], (C,), jnp.float32)
    b1 = 0.1 * jax.random.normal(k[4], (C,), jnp.float32)
    g2 = 1.0 + 0.1 * jax.random.normal(k[5], (C,), jnp.float32)
    b2 = 0.1 * jax.random.normal(k[6], (C,), jnp.float32)

    out = basic_block0(x_nchw, w1, g1, b1, w2, g2, b2)
    out = jax.block_until_ready(out)

    # f32 reference; tolerance accommodates the intentional bf16 MXU path.
    ref = _ref_forward(x_nchw, w1, g1, b1, w2, g2, b2)
    np.testing.assert_allclose(np.asarray(out), np.asarray(ref),
                               rtol=2e-2, atol=2e-2)
    assert out.shape == (N, C, H, W)
    print("KERNEL_OK")
</pallas_src>

<mosaic_0001>
module attributes {stable_mosaic.version = 11 : i64} {
  func.func @basic_block0_kernel(%arg0: i32, %arg1: memref<32x512xf32, #tpu.memory_space<vmem>>, %arg2: memref<32x32xf32, #tpu.memory_space<vmem>>, %arg3: memref<32x32xf32, #tpu.memory_space<vmem>>, %arg4: memref<512x32xf32, #tpu.memory_space<vmem>>, %arg5: memref<32x512xf32, #tpu.memory_space<vmem>>, %arg6: memref<3x512x512xbf16, #tpu.memory_space<vmem>>, %arg7: memref<1x32xf32, #tpu.memory_space<vmem>>, %arg8: memref<1x32xf32, #tpu.memory_space<vmem>>, %arg9: memref<3x512x512xbf16, #tpu.memory_space<vmem>>, %arg10: memref<1x32xf32, #tpu.memory_space<vmem>>, %arg11: memref<1x32xf32, #tpu.memory_space<vmem>>, %arg12: memref<32x512xf32, #tpu.memory_space<vmem>>) attributes {dimension_semantics = [#tpu.dimension_semantics<arbitrary>], iteration_bounds = array<i64: 1>, scalar_prefetch = 0 : i64, scratch_operands = 0 : i64, tpu.core_type = #tpu.core_type<tc>, window_params = [{pipeline_mode = #tpu.pipeline_mode<synchronous>, transform_indices = @transform_0, window_bounds = array<i64: 32, 512>}, {pipeline_mode = #tpu.pipeline_mode<synchronous>, transform_indices = @transform_1, window_bounds = array<i64: 32, 32>}, {pipeline_mode = #tpu.pipeline_mode<synchronous>, transform_indices = @transform_2, window_bounds = array<i64: 32, 32>}, {pipeline_mode = #tpu.pipeline_mode<synchronous>, transform_indices = @transform_3, window_bounds = array<i64: 512, 32>}, {pipeline_mode = #tpu.pipeline_mode<synchronous>, transform_indices = @transform_4, window_bounds = array<i64: 32, 512>}, {pipeline_mode = #tpu.pipeline_mode<synchronous>, transform_indices = @transform_5, window_bounds = array<i64: 3, 512, 512>}, {pipeline_mode = #tpu.pipeline_mode<synchronous>, transform_indices = @transform_6, window_bounds = array<i64: 1, 32>}, {pipeline_mode = #tpu.pipeline_mode<synchronous>, transform_indices = @transform_7, window_bounds = array<i64: 1, 32>}, {pipeline_mode = #tpu.pipeline_mode<synchronous>, transform_indices = @transform_8, window_bounds = array<i64: 3, 512, 512>}, {pipeline_mode = #tpu.pipeline_mode<synchronous>, transform_indices = @transform_9, window_bounds = array<i64: 1, 32>}, {pipeline_mode = #tpu.pipeline_mode<synchronous>, transform_indices = @transform_10, window_bounds = array<i64: 1, 32>}, {pipeline_mode = #tpu.pipeline_mode<synchronous>, transform_indices = @transform_11, window_bounds = array<i64: 32, 512>}]} {
    %c0 = arith.constant 0 : index
    %c0_0 = arith.constant 0 : index
    %0 = vector.load %arg1[%c0, %c0_0] : memref<32x512xf32, #tpu.memory_space<vmem>>, vector<32x512xf32>
    %c0_1 = arith.constant 0 : index
    %c0_2 = arith.constant 0 : index
    %1 = vector.load %arg2[%c0_1, %c0_2] : memref<32x32xf32, #tpu.memory_space<vmem>>, vector<32x32xf32>
    %c0_3 = arith.constant 0 : index
    %c0_4 = arith.constant 0 : index
    %2 = vector.load %arg3[%c0_3, %c0_4] : memref<32x32xf32, #tpu.memory_space<vmem>>, vector<32x32xf32>
    %c0_5 = arith.constant 0 : index
    %c0_6 = arith.constant 0 : index
    %3 = vector.load %arg4[%c0_5, %c0_6] : memref<512x32xf32, #tpu.memory_space<vmem>>, vector<512x32xf32>
    %c0_7 = arith.constant 0 : index
    %c0_8 = arith.constant 0 : index
    %4 = vector.load %arg5[%c0_7, %c0_8] : memref<32x512xf32, #tpu.memory_space<vmem>>, vector<32x512xf32>
    %5 = arith.truncf %0 : vector<32x512xf32> to vector<32x512xbf16>
    %c0_9 = arith.constant 0 : index
    %c0_10 = arith.constant 0 : index
    %c0_11 = arith.constant 0 : index
    %6 = vector.load %arg6[%c0_9, %c0_10, %c0_11] : memref<3x512x512xbf16, #tpu.memory_space<vmem>>, vector<1x512x512xbf16>
    %7 = vector.shape_cast %6 : vector<1x512x512xbf16> to vector<512x512xbf16>
    %cst = arith.constant dense<0.000000e+00> : vector<32x512xf32>
    %8 = tpu.matmul %5, %7, %cst {dimension_numbers = #tpu.dot_dimension_numbers<[1], [0], [0], [1], [0, 0, 1, 1], [], []>} : vector<32x512xbf16>, vector<512x512xbf16>, vector<32x512xf32> -> vector<32x512xf32>
    %c1 = arith.constant 1 : index
    %c0_12 = arith.constant 0 : index
    %c0_13 = arith.constant 0 : index
    %9 = vector.load %arg6[%c1, %c0_12, %c0_13] : memref<3x512x512xbf16, #tpu.memory_space<vmem>>, vector<1x512x512xbf16>
    %10 = vector.shape_cast %9 : vector<1x512x512xbf16> to vector<512x512xbf16>
    %cst_14 = arith.constant dense<0.000000e+00> : vector<32x512xf32>
    %11 = tpu.matmul %5, %10, %cst_14 {dimension_numbers = #tpu.dot_dimension_numbers<[1], [0], [0], [1], [0, 0, 1, 1], [], []>} : vector<32x512xbf16>, vector<512x512xbf16>, vector<32x512xf32> -> vector<32x512xf32>
    %c2 = arith.constant 2 : index
    %c0_15 = arith.constant 0 : index
    %c0_16 = arith.constant 0 : index
    %12 = vector.load %arg6[%c2, %c0_15, %c0_16] : memref<3x512x512xbf16, #tpu.memory_space<vmem>>, vector<1x512x512xbf16>
    %13 = vector.shape_cast %12 : vector<1x512x512xbf16> to vector<512x512xbf16>
    %cst_17 = arith.constant dense<0.000000e+00> : vector<32x512xf32>
    %14 = tpu.matmul %5, %13, %cst_17 {dimension_numbers = #tpu.dot_dimension_numbers<[1], [0], [0], [1], [0, 0, 1, 1], [], []>} : vector<32x512xbf16>, vector<512x512xbf16>, vector<32x512xf32> -> vector<32x512xf32>
    %cst_18 = arith.constant dense<0.000000e+00> : vector<32x512xf32>
    %15 = tpu.matmul %1, %8, %cst_18 {dimension_numbers = #tpu.dot_dimension_numbers<[1], [0], [0], [1], [0, 0, 1, 1], [], []>} : vector<32x32xf32>, vector<32x512xf32>, vector<32x512xf32> -> vector<32x512xf32>
    %16 = arith.addf %15, %11 : vector<32x512xf32>
    %cst_19 = arith.constant dense<0.000000e+00> : vector<32x512xf32>
    %17 = tpu.matmul %2, %14, %cst_19 {dimension_numbers = #tpu.dot_dimension_numbers<[1], [0], [0], [1], [0, 0, 1, 1], [], []>} : vector<32x32xf32>, vector<32x512xf32>, vector<32x512xf32> -> vector<32x512xf32>
    %18 = arith.addf %16, %17 : vector<32x512xf32>
    %cst_20 = arith.constant dense<0.000000e+00> : vector<512xf32>
    %19 = vector.multi_reduction <add>, %18, %cst_20 [0] : vector<32x512xf32> to vector<512xf32>
    %20 = vector.shape_cast %19 : vector<512xf32> to vector<1x512xf32>
    %21 = arith.mulf %18, %18 : vector<32x512xf32>
    %cst_21 = arith.constant dense<0.000000e+00> : vector<512xf32>
    %22 = vector.multi_reduction <add>, %21, %cst_21 [0] : vector<32x512xf32> to vector<512xf32>
    %23 = vector.shape_cast %22 : vector<512xf32> to vector<1x512xf32>
    %cst_22 = arith.constant dense<0.000000e+00> : vector<1x32xf32>
    %24 = tpu.matmul %20, %3, %cst_22 {dimension_numbers = #tpu.dot_dimension_numbers<[1], [0], [0], [1], [0, 0, 1, 1], [], []>} : vector<1x512xf32>, vector<512x32xf32>, vector<1x32xf32> -> vector<1x32xf32>
    %cst_23 = arith.constant dense<0.000000e+00> : vector<1x32xf32>
    %25 = tpu.matmul %23, %3, %cst_23 {dimension_numbers = #tpu.dot_dimension_numbers<[1], [0], [0], [1], [0, 0, 1, 1], [], []>} : vector<1x512xf32>, vector<512x32xf32>, vector<1x32xf32> -> vector<1x32xf32>
    %cst_24 = arith.constant 0.001953125 : f32
    %26 = vector.broadcast %cst_24 : f32 to vector<1x32xf32>
    %27 = arith.mulf %24, %26 : vector<1x32xf32>
    %cst_25 = arith.constant 0.001953125 : f32
    %28 = vector.broadcast %cst_25 : f32 to vector<1x32xf32>
    %29 = arith.mulf %25, %28 : vector<1x32xf32>
    %30 = arith.mulf %27, %27 : vector<1x32xf32>
    %31 = arith.subf %29, %30 : vector<1x32xf32>
    %cst_26 = arith.constant 0.000000e+00 : f32
    %32 = vector.broadcast %cst_26 : f32 to vector<1x32xf32>
    %33 = arith.maximumf %31, %32 : vector<1x32xf32>
    %c0_27 = arith.constant 0 : index
    %c0_28 = arith.constant 0 : index
    %34 = vector.load %arg7[%c0_27, %c0_28] : memref<1x32xf32, #tpu.memory_space<vmem>>, vector<1x32xf32>
    %cst_29 = arith.constant 9.99999974E-6 : f32
    %35 = vector.broadcast %cst_29 : f32 to vector<1x32xf32>
    %36 = arith.addf %33, %35 : vector<1x32xf32>
    %37 = math.rsqrt %36 : vector<1x32xf32>
    %38 = arith.mulf %34, %37 : vector<1x32xf32>
    %c0_30 = arith.constant 0 : index
    %c0_31 = arith.constant 0 : index
    %39 = vector.load %arg8[%c0_30, %c0_31] : memref<1x32xf32, #tpu.memory_space<vmem>>, vector<1x32xf32>
    %40 = arith.mulf %27, %38 : vector<1x32xf32>
    %41 = arith.subf %39, %40 : vector<1x32xf32>
    %cst_32 = arith.constant dense<0.000000e+00> : vector<1x512xf32>
    %42 = tpu.matmul %38, %4, %cst_32 {dimension_numbers = #tpu.dot_dimension_numbers<[1], [0], [0], [1], [0, 0, 1, 1], [], []>} : vector<1x32xf32>, vector<32x512xf32>, vector<1x512xf32> -> vector<1x512xf32>
    %cst_33 = arith.constant dense<0.000000e+00> : vector<1x512xf32>
    %43 = tpu.matmul %41, %4, %cst_33 {dimension_numbers = #tpu.dot_dimension_numbers<[1], [0], [0], [1], [0, 0, 1, 1], [], []>} : vector<1x32xf32>, vector<32x512xf32>, vector<1x512xf32> -> vector<1x512xf32>
    %44 = vector.broadcast %42 : vector<1x512xf32> to vector<32x512xf32>
    %45 = arith.mulf %18, %44 : vector<32x512xf32>
    %46 = vector.broadcast %43 : vector<1x512xf32> to vector<32x512xf32>
    %47 = arith.addf %45, %46 : vector<32x512xf32>
    %cst_34 = arith.constant 0.000000e+00 : f32
    %48 = vector.broadcast %cst_34 : f32 to vector<32x512xf32>
    %49 = arith.maximumf %47, %48 : vector<32x512xf32>
    %50 = arith.truncf %49 : vector<32x512xf32> to vector<32x512xbf16>
    %c0_35 = arith.constant 0 : index
    %c0_36 = arith.constant 0 : index
    %c0_37 = arith.constant 0 : index
    %51 = vector.load %arg9[%c0_35, %c0_36, %c0_37] : memref<3x512x512xbf16, #tpu.memory_space<vmem>>, vector<1x512x512xbf16>
    %52 = vector.shape_cast %51 : vector<1x512x512xbf16> to vector<512x512xbf16>
    %cst_38 = arith.constant dense<0.000000e+00> : vector<32x512xf32>
    %53 = tpu.matmul %50, %52, %cst_38 {dimension_numbers = #tpu.dot_dimension_numbers<[1], [0], [0], [1], [0, 0, 1, 1], [], []>} : vector<32x512xbf16>, vector<512x512xbf16>, vector<32x512xf32> -> vector<32x512xf32>
    %c1_39 = arith.constant 1 : index
    %c0_40 = arith.constant 0 : index
    %c0_41 = arith.constant 0 : index
    %54 = vector.load %arg9[%c1_39, %c0_40, %c0_41] : memref<3x512x512xbf16, #tpu.memory_space<vmem>>, vector<1x512x512xbf16>
    %55 = vector.shape_cast %54 : vector<1x512x512xbf16> to vector<512x512xbf16>
    %cst_42 = arith.constant dense<0.000000e+00> : vector<32x512xf32>
    %56 = tpu.matmul %50, %55, %cst_42 {dimension_numbers = #tpu.dot_dimension_numbers<[1], [0], [0], [1], [0, 0, 1, 1], [], []>} : vector<32x512xbf16>, vector<512x512xbf16>, vector<32x512xf32> -> vector<32x512xf32>
    %c2_43 = arith.constant 2 : index
    %c0_44 = arith.constant 0 : index
    %c0_45 = arith.constant 0 : index
    %57 = vector.load %arg9[%c2_43, %c0_44, %c0_45] : memref<3x512x512xbf16, #tpu.memory_space<vmem>>, vector<1x512x512xbf16>
    %58 = vector.shape_cast %57 : vector<1x512x512xbf16> to vector<512x512xbf16>
    %cst_46 = arith.constant dense<0.000000e+00> : vector<32x512xf32>
    %59 = tpu.matmul %50, %58, %cst_46 {dimension_numbers = #tpu.dot_dimension_numbers<[1], [0], [0], [1], [0, 0, 1, 1], [], []>} : vector<32x512xbf16>, vector<512x512xbf16>, vector<32x512xf32> -> vector<32x512xf32>
    %cst_47 = arith.constant dense<0.000000e+00> : vector<32x512xf32>
    %60 = tpu.matmul %1, %53, %cst_47 {dimension_numbers = #tpu.dot_dimension_numbers<[1], [0], [0], [1], [0, 0, 1, 1], [], []>} : vector<32x32xf32>, vector<32x512xf32>, vector<32x512xf32> -> vector<32x512xf32>
    %61 = arith.addf %60, %56 : vector<32x512xf32>
    %cst_48 = arith.constant dense<0.000000e+00> : vector<32x512xf32>
    %62 = tpu.matmul %2, %59, %cst_48 {dimension_numbers = #tpu.dot_dimension_numbers<[1], [0], [0], [1], [0, 0, 1, 1], [], []>} : vector<32x32xf32>, vector<32x512xf32>, vector<32x512xf32> -> vector<32x512xf32>
    %63 = arith.addf %61, %62 : vector<32x512xf32>
    %cst_49 = arith.constant dense<0.000000e+00> : vector<512xf32>
    %64 = vector.multi_reduction <add>, %63, %cst_49 [0] : vector<32x512xf32> to vector<512xf32>
    %65 = vector.shape_cast %64 : vector<512xf32> to vector<1x512xf32>
    %66 = arith.mulf %63, %63 : vector<32x512xf32>
    %cst_50 = arith.constant dense<0.000000e+00> : vector<512xf32>
    %67 = vector.multi_reduction <add>, %66, %cst_50 [0] : vector<32x512xf32> to vector<512xf32>
    %68 = vector.shape_cast %67 : vector<512xf32> to vector<1x512xf32>
    %cst_51 = arith.constant dense<0.000000e+00> : vector<1x32xf32>
    %69 = tpu.matmul %65, %3, %cst_51 {dimension_numbers = #tpu.dot_dimension_numbers<[1], [0], [0], [1], [0, 0, 1, 1], [], []>} : vector<1x512xf32>, vector<512x32xf32>, vector<1x32xf32> -> vector<1x32xf32>
    %cst_52 = arith.constant dense<0.000000e+00> : vector<1x32xf32>
    %70 = tpu.matmul %68, %3, %cst_52 {dimension_numbers = #tpu.dot_dimension_numbers<[1], [0], [0], [1], [0, 0, 1, 1], [], []>} : vector<1x512xf32>, vector<512x32xf32>, vector<1x32xf32> -> vector<1x32xf32>
    %cst_53 = arith.constant 0.001953125 : f32
    %71 = vector.broadcast %cst_53 : f32 to vector<1x32xf32>
    %72 = arith.mulf %69, %71 : vector<1x32xf32>
    %cst_54 = arith.constant 0.001953125 : f32
    %73 = vector.broadcast %cst_54 : f32 to vector<1x32xf32>
    %74 = arith.mulf %70, %73 : vector<1x32xf32>
    %75 = arith.mulf %72, %72 : vector<1x32xf32>
    %76 = arith.subf %74, %75 : vector<1x32xf32>
    %cst_55 = arith.constant 0.000000e+00 : f32
    %77 = vector.broadcast %cst_55 : f32 to vector<1x32xf32>
    %78 = arith.maximumf %76, %77 : vector<1x32xf32>
    %c0_56 = arith.constant 0 : index
    %c0_57 = arith.constant 0 : index
    %79 = vector.load %arg10[%c0_56, %c0_57] : memref<1x32xf32, #tpu.memory_space<vmem>>, vector<1x32xf32>
    %cst_58 = arith.constant 9.99999974E-6 : f32
    %80 = vector.broadcast %cst_58 : f32 to vector<1x32xf32>
    %81 = arith.addf %78, %80 : vector<1x32xf32>
    %82 = math.rsqrt %81 : vector<1x32xf32>
    %83 = arith.mulf %79, %82 : vector<1x32xf32>
    %c0_59 = arith.constant 0 : index
    %c0_60 = arith.constant 0 : index
    %84 = vector.load %arg11[%c0_59, %c0_60] : memref<1x32xf32, #tpu.memory_space<vmem>>, vector<1x32xf32>
    %85 = arith.mulf %72, %83 : vector<1x32xf32>
    %86 = arith.subf %84, %85 : vector<1x32xf32>
    %cst_61 = arith.constant dense<0.000000e+00> : vector<1x512xf32>
    %87 = tpu.matmul %83, %4, %cst_61 {dimension_numbers = #tpu.dot_dimension_numbers<[1], [0], [0], [1], [0, 0, 1, 1], [], []>} : vector<1x32xf32>, vector<32x512xf32>, vector<1x512xf32> -> vector<1x512xf32>
    %cst_62 = arith.constant dense<0.000000e+00> : vector<1x512xf32>
    %88 = tpu.matmul %86, %4, %cst_62 {dimension_numbers = #tpu.dot_dimension_numbers<[1], [0], [0], [1], [0, 0, 1, 1], [], []>} : vector<1x32xf32>, vector<32x512xf32>, vector<1x512xf32> -> vector<1x512xf32>
    %89 = vector.broadcast %87 : vector<1x512xf32> to vector<32x512xf32>
    %90 = arith.mulf %63, %89 : vector<32x512xf32>
    %91 = vector.broadcast %88 : vector<1x512xf32> to vector<32x512xf32>
    %92 = arith.addf %90, %91 : vector<32x512xf32>
    %93 = arith.addf %92, %0 : vector<32x512xf32>
    %cst_63 = arith.constant 0.000000e+00 : f32
    %94 = vector.broadcast %cst_63 : f32 to vector<32x512xf32>
    %95 = arith.maximumf %93, %94 : vector<32x512xf32>
    %c0_64 = arith.constant 0 : index
    %c0_65 = arith.constant 0 : index
    %96 = vector.load %arg12[%c0_64, %c0_65] : memref<32x512xf32, #tpu.memory_space<vmem>>, vector<32x512xf32>
    tpu.vector_store %arg12[%c0_64, %c0_65], %95 {strides = array<i32>} : memref<32x512xf32, #tpu.memory_space<vmem>>, vector<32x512xf32>,
    return
  }
  func.func @transform_0(%arg0: i32) -> (i32, i32) {
    %c0_i32 = arith.constant 0 : i32
    %c0_i32_0 = arith.constant 0 : i32
    %c0_i32_1 = arith.constant 0 : i32
    return %c0_i32, %c0_i32_0 : i32, i32
  }
  func.func @transform_1(%arg0: i32) -> (i32, i32) {
    %c0_i32 = arith.constant 0 : i32
    %c0_i32_0 = arith.constant 0 : i32
    %c0_i32_1 = arith.constant 0 : i32
    return %c0_i32, %c0_i32_0 : i32, i32
  }
  func.func @transform_2(%arg0: i32) -> (i32, i32) {
    %c0_i32 = arith.constant 0 : i32
    %c0_i32_0 = arith.constant 0 : i32
    %c0_i32_1 = arith.constant 0 : i32
    return %c0_i32, %c0_i32_0 : i32, i32
  }
  func.func @transform_3(%arg0: i32) -> (i32, i32) {
    %c0_i32 = arith.constant 0 : i32
    %c0_i32_0 = arith.constant 0 : i32
    %c0_i32_1 = arith.constant 0 : i32
    return %c0_i32, %c0_i32_0 : i32, i32
  }
  func.func @transform_4(%arg0: i32) -> (i32, i32) {
    %c0_i32 = arith.constant 0 : i32
    %c0_i32_0 = arith.constant 0 : i32
    %c0_i32_1 = arith.constant 0 : i32
    return %c0_i32, %c0_i32_0 : i32, i32
  }
  func.func @transform_5(%arg0: i32) -> (i32, i32, i32) {
    %c0_i32 = arith.constant 0 : i32
    %c0_i32_0 = arith.constant 0 : i32
    %c0_i32_1 = arith.constant 0 : i32
    %c0_i32_2 = arith.constant 0 : i32
    return %c0_i32, %c0_i32_0, %c0_i32_1 : i32, i32, i32
  }
  func.func @transform_6(%arg0: i32) -> (i32, i32) {
    %c0_i32 = arith.constant 0 : i32
    %c0_i32_0 = arith.constant 0 : i32
    %c0_i32_1 = arith.constant 0 : i32
    return %c0_i32, %c0_i32_0 : i32, i32
  }
  func.func @transform_7(%arg0: i32) -> (i32, i32) {
    %c0_i32 = arith.constant 0 : i32
    %c0_i32_0 = arith.constant 0 : i32
    %c0_i32_1 = arith.constant 0 : i32
    return %c0_i32, %c0_i32_0 : i32, i32
  }
  func.func @transform_8(%arg0: i32) -> (i32, i32, i32) {
    %c0_i32 = arith.constant 0 : i32
    %c0_i32_0 = arith.constant 0 : i32
    %c0_i32_1 = arith.constant 0 : i32
    %c0_i32_2 = arith.constant 0 : i32
    return %c0_i32, %c0_i32_0, %c0_i32_1 : i32, i32, i32
  }
  func.func @transform_9(%arg0: i32) -> (i32, i32) {
    %c0_i32 = arith.constant 0 : i32
    %c0_i32_0 = arith.constant 0 : i32
    %c0_i32_1 = arith.constant 0 : i32
    return %c0_i32, %c0_i32_0 : i32, i32
  }
  func.func @transform_10(%arg0: i32) -> (i32, i32) {
    %c0_i32 = arith.constant 0 : i32
    %c0_i32_0 = arith.constant 0 : i32
    %c0_i32_1 = arith.constant 0 : i32
    return %c0_i32, %c0_i32_0 : i32, i32
  }
  func.func @transform_11(%arg0: i32) -> (i32, i32) {
    %c0_i32 = arith.constant 0 : i32
    %c0_i32_0 = arith.constant 0 : i32
    %c0_i32_1 = arith.constant 0 : i32
    return %c0_i32, %c0_i32_0 : i32, i32
  }
}

</mosaic_0001>

<llo_original>
// kernel: tile.19
$region0: #{tile.19}
  %s0 = inlined_call_operand.vmem [shape: f32[32,16,32], index: 0, kind: input, shape index: {}]
  %s1 = inlined_call_operand.vmem [shape: f32[32,512], index: 1, kind: output, shape index: {}]
  %v2 = vld [vmem:[%s0] ss:$4 sm:$0xff]
  %vm3 = vcmask 261120
  %4 = vst.msk [vmem:[%s1] ss:$8 sm:$0xf] %vm3, %v2
  %s5 = scalar_lea.vmem %s1, 4294967265
  %6 = vst.msk [vmem:[%s5] ss:$8 sm:$0xf0] %vm3, %v2
  %s7 = scalar_lea.vmem %s0, 32
  %v8 = vld [vmem:[%s7] ss:$4 sm:$0xff]
  %vm9 = vcmask 261120
  %s10 = scalar_lea.vmem %s1, 2
  %11 = vst.msk [vmem:[%s10] ss:$8 sm:$0xf] %vm9, %v8
  %s12 = scalar_lea.vmem %s1, 4294967267
  %13 = vst.msk [vmem:[%s12] ss:$8 sm:$0xf0] %vm9, %v8
  %s14 = scalar_lea.vmem %s0, 64
  %v15 = vld [vmem:[%s14] ss:$4 sm:$0xff]
  %vm16 = vcmask 261120
  %s17 = scalar_lea.vmem %s1, 4
  %18 = vst.msk [vmem:[%s17] ss:$8 sm:$0xf] %vm16, %v15
  %s19 = scalar_lea.vmem %s1, 4294967269
  %20 = vst.msk [vmem:[%s19] ss:$8 sm:$0xf0] %vm16, %v15
  %s21 = scalar_lea.vmem %s0, 96
  %v22 = vld [vmem:[%s21] ss:$4 sm:$0xff]
  %vm23 = vcmask 261120
  %s24 = scalar_lea.vmem %s1, 6
  %25 = vst.msk [vmem:[%s24] ss:$8 sm:$0xf] %vm23, %v22
  %s26 = scalar_lea.vmem %s1, 4294967271
  %27 = vst.msk [vmem:[%s26] ss:$8 sm:$0xf0] %vm23, %v22
  %s28 = scalar_lea.vmem %s0, 128
  %v29 = vld [vmem:[%s28] ss:$4 sm:$0xff]
  %vm30 = vcmask 261120
  %s31 = scalar_lea.vmem %s1, 32
  %32 = vst.msk [vmem:[%s31] ss:$8 sm:$0xf] %vm30, %v29
  %s33 = scalar_lea.vmem %s1, 1
  %34 = vst.msk [vmem:[%s33] ss:$8 sm:$0xf0] %vm30, %v29
  %s35 = scalar_lea.vmem %s0, 160
  %v36 = vld [vmem:[%s35] ss:$4 sm:$0xff]
  %vm37 = vcmask 261120
  %s38 = scalar_lea.vmem %s1, 34
  %39 = vst.msk [vmem:[%s38] ss:$8 sm:$0xf] %vm37, %v36
  %s40 = scalar_lea.vmem %s1, 3
  %41 = vst.msk [vmem:[%s40] ss:$8 sm:$0xf0] %vm37, %v36
  %s42 = scalar_lea.vmem %s0, 192
  %v43 = vld [vmem:[%s42] ss:$4 sm:$0xff]
  %vm44 = vcmask 261120
  %s45 = scalar_lea.vmem %s1, 36
  %46 = vst.msk [vmem:[%s45] ss:$8 sm:$0xf] %vm44, %v43
  %s47 = scalar_lea.vmem %s1, 5
  %48 = vst.msk [vmem:[%s47] ss:$8 sm:$0xf0] %vm44, %v43
  %s49 = scalar_lea.vmem %s0, 224
  %v50 = vld [vmem:[%s49] ss:$4 sm:$0xff]
  %vm51 = vcmask 261120
  %s52 = scalar_lea.vmem %s1, 38
  %53 = vst.msk [vmem:[%s52] ss:$8 sm:$0xf] %vm51, %v50
  %s54 = scalar_lea.vmem %s1, 7
  %55 = vst.msk [vmem:[%s54] ss:$8 sm:$0xf0] %vm51, %v50
  %s56 = scalar_lea.vmem %s0, 256
  %v57 = vld [vmem:[%s56] ss:$4 sm:$0xff]
  %vm58 = vcmask 261120
  %s59 = scalar_lea.vmem %s1, 64
  %60 = vst.msk [vmem:[%s59] ss:$8 sm:$0xf] %vm58, %v57
  %s61 = scalar_lea.vmem %s1, 33
  %62 = vst.msk [vmem:[%s61] ss:$8 sm:$0xf0] %vm58, %v57
  %s63 = scalar_lea.vmem %s0, 288
  %v64 = vld [vmem:[%s63] ss:$4 sm:$0xff]
  %vm65 = vcmask 261120
  %s66 = scalar_lea.vmem %s1, 66
  %67 = vst.msk [vmem:[%s66] ss:$8 sm:$0xf] %vm65, %v64
  %s68 = scalar_lea.vmem %s1, 35
  %69 = vst.msk [vmem:[%s68] ss:$8 sm:$0xf0] %vm65, %v64
  %s70 = scalar_lea.vmem %s0, 320
  %v71 = vld [vmem:[%s70] ss:$4 sm:$0xff]
  %vm72 = vcmask 261120
  %s73 = scalar_lea.vmem %s1, 68
  %74 = vst.msk [vmem:[%s73] ss:$8 sm:$0xf] %vm72, %v71
  %s75 = scalar_lea.vmem %s1, 37
  %76 = vst.msk [vmem:[%s75] ss:$8 sm:$0xf0] %vm72, %v71
  %s77 = scalar_lea.vmem %s0, 352
  %v78 = vld [vmem:[%s77] ss:$4 sm:$0xff]
  %vm79 = vcmask 261120
  %s80 = scalar_lea.vmem %s1, 70
  %81 = vst.msk [vmem:[%s80] ss:$8 sm:$0xf] %vm79, %v78
  %s82 = scalar_lea.vmem %s1, 39
  %83 = vst.msk [vmem:[%s82] ss:$8 sm:$0xf0] %vm79, %v78
  %s84 = scalar_lea.vmem %s0, 384
  %v85 = vld [vmem:[%s84] ss:$4 sm:$0xff]
  %vm86 = vcmask 261120
  %s87 = scalar_lea.vmem %s1, 96
  %88 = vst.msk [vmem:[%s87] ss:$8 sm:$0xf] %vm86, %v85
  %s89 = scalar_lea.vmem %s1, 65
  %90 = vst.msk [vmem:[%s89] ss:$8 sm:$0xf0] %vm86, %v85
  %s91 = scalar_lea.vmem %s0, 416
  %v92 = vld [vmem:[%s91] ss:$4 sm:$0xff]
  %vm93 = vcmask 261120
  %s94 = scalar_lea.vmem %s1, 98
  %95 = vst.msk [vmem:[%s94] ss:$8 sm:$0xf] %vm93, %v92
  %s96 = scalar_lea.vmem %s1, 67
  %97 = vst.msk [vmem:[%s96] ss:$8 sm:$0xf0] %vm93, %v92
  %s98 = scalar_lea.vmem %s0, 448
  %v99 = vld [vmem:[%s98] ss:$4 sm:$0xff]
  %vm100 = vcmask 261120
  %s101 = scalar_lea.vmem %s1, 100
  %102 = vst.msk [vmem:[%s101] ss:$8 sm:$0xf] %vm100, %v99
  %s103 = scalar_lea.vmem %s1, 69
  %104 = vst.msk [vmem:[%s103] ss:$8 sm:$0xf0] %vm100, %v99
  %s105 = scalar_lea.vmem %s0, 480
  %v106 = vld [vmem:[%s105] ss:$4 sm:$0xff]
  %vm107 = vcmask 261120
  %s108 = scalar_lea.vmem %s1, 102
  %109 = vst.msk [vmem:[%s108] ss:$8 sm:$0xf] %vm107, %v106
  %s110 = scalar_lea.vmem %s1, 71
  %111 = vst.msk [vmem:[%s110] ss:$8 sm:$0xf0] %vm107, %v106
  %s112 = scalar_lea.vmem %s0, 3
  %s113 = smov 3
  %v114 = vld [vmem:[%s112] ss:$16 sm:%s113]
  %s115 = scalar_lea.vmem %s0, 3
  %s116 = smov 12
  %v117 = vld [vmem:[%s115] ss:$16 sm:%s116]
  %vm118 = vcmask 1043458
  %v119 = vsel %vm118, %v117, %v114
  %s120 = scalar_lea.vmem %s0, 3
  %s121 = smov 48
  %v122 = vld [vmem:[%s120] ss:$16 sm:%s121]
  %vm123 = vcmask 1045508
  %v124 = vsel %vm123, %v122, %v119
  %s125 = scalar_lea.vmem %s0, 3
  %s126 = smov 192
  %v127 = vld [vmem:[%s125] ss:$16 sm:%s126]
  %vm128 = vcmask 1047558
  %v129 = vsel %vm128, %v127, %v124
  %130 = vrot.lane.b32.xlu0 %v129, 96
  %v131 = vpop.permute.xlu0 %130
  %vm132 = vcmask 1048320
  %133 = vst.msk [vmem:[%s1] sm:$0xff] %vm132, %v131
  %s134 = scalar_lea.vmem %s0, 131
  %s135 = smov 3
  %v136 = vld [vmem:[%s134] ss:$16 sm:%s135]
  %s137 = scalar_lea.vmem %s0, 131
  %s138 = smov 12
  %v139 = vld [vmem:[%s137] ss:$16 sm:%s138]
  %vm140 = vcmask 1043458
  %v141 = vsel %vm140, %v139, %v136
  %s142 = scalar_lea.vmem %s0, 131
  %s143 = smov 48
  %v144 = vld [vmem:[%s142] ss:$16 sm:%s143]
  %vm145 = vcmask 1045508
  %v146 = vsel %vm145, %v144, %v141
  %s147 = scalar_lea.vmem %s0, 131
  %s148 = smov 192
  %v149 = vld [vmem:[%s147] ss:$16 sm:%s148]
  %vm150 = vcmask 1047558
  %v151 = vsel %vm150, %v149, %v146
  %152 = vrot.lane.b32.xlu0 %v151, 96
  %v153 = vpop.permute.xlu0 %152
  %vm154 = vcmask 1048320
  %s155 = scalar_lea.vmem %s1, 32
  %156 = vst.msk [vmem:[%s155] sm:$0xff] %vm154, %v153
  %s157 = scalar_lea.vmem %s0, 259
  %s158 = smov 3
  %v159 = vld [vmem:[%s157] ss:$16 sm:%s158]
  %s160 = scalar_lea.vmem %s0, 259
  %s161 = smov 12
  %v162 = vld [vmem:[%s160] ss:$16 sm:%s161]
  %vm163 = vcmask 1043458
  %v164 = vsel %vm163, %v162, %v159
  %s165 = scalar_lea.vmem %s0, 259
  %s166 = smov 48
  %v167 = vld [vmem:[%s165] ss:$16 sm:%s166]
  %vm168 = vcmask 1045508
  %v169 = vsel %vm168, %v167, %v164
  %s170 = scalar_lea.vmem %s0, 259
  %s171 = smov 192
  %v172 = vld [vmem:[%s170] ss:$16 sm:%s171]
  %vm173 = vcmask 1047558
  %v174 = vsel %vm173, %v172, %v169
  %175 = vrot.lane.b32.xlu0 %v174, 96
  %v176 = vpop.permute.xlu0 %175
  %vm177 = vcmask 1048320
  %s178 = scalar_lea.vmem %s1, 64
  %179 = vst.msk [vmem:[%s178] sm:$0xff] %vm177, %v176
  %s180 = scalar_lea.vmem %s0, 387
  %s181 = smov 3
  %v182 = vld [vmem:[%s180] ss:$16 sm:%s181]
  %s183 = scalar_lea.vmem %s0, 387
  %s184 = smov 12
  %v185 = vld [vmem:[%s183] ss:$16 sm:%s184]
  %vm186 = vcmask 1043458
  %v187 = vsel %vm186, %v185, %v182
  %s188 = scalar_lea.vmem %s0, 387
  %s189 = smov 48
  %v190 = vld [vmem:[%s188] ss:$16 sm:%s189]
  %vm191 = vcmask 1045508
  %v192 = vsel %vm191, %v190, %v187
  %s193 = scalar_lea.vmem %s0, 387
  %s194 = smov 192
  %v195 = vld [vmem:[%s193] ss:$16 sm:%s194]
  %vm196 = vcmask 1047558
  %v197 = vsel %vm196, %v195, %v192
  %198 = vrot.lane.b32.xlu0 %v197, 96
  %v199 = vpop.permute.xlu0 %198
  %vm200 = vcmask 1048320
  %s201 = scalar_lea.vmem %s1, 96
  %202 = vst.msk [vmem:[%s201] sm:$0xff] %vm200, %v199
  %s203 = scalar_lea.vmem %s0, 7
  %s204 = smov 3
  %v205 = vld [vmem:[%s203] ss:$16 sm:%s204]
  %s206 = scalar_lea.vmem %s0, 7
  %s207 = smov 12
  %v208 = vld [vmem:[%s206] ss:$16 sm:%s207]
  %vm209 = vcmask 1043458
  %v210 = vsel %vm209, %v208, %v205
  %s211 = scalar_lea.vmem %s0, 7
  %s212 = smov 48
  %v213 = vld [vmem:[%s211] ss:$16 sm:%s212]
  %vm214 = vcmask 1045508
  %v215 = vsel %vm214, %v213, %v210
  %s216 = scalar_lea.vmem %s0, 7
  %s217 = smov 192
  %v218 = vld [vmem:[%s216] ss:$16 sm:%s217]
  %vm219 = vcmask 1047558
  %v220 = vsel %vm219, %v218, %v215
  %221 = vrot.lane.b32.xlu0 %v220, 96
  %v222 = vpop.permute.xlu0 %221
  %vm223 = vcmask 1048320
  %s224 = scalar_lea.vmem %s1, 8
  %225 = vst.msk [vmem:[%s224] sm:$0xff] %vm223, %v222
  %s226 = scalar_lea.vmem %s0, 135
  %s227 = smov 3
  %v228 = vld [vmem:[%s226] ss:$16 sm:%s227]
  %s229 = scalar_lea.vmem %s0, 135
  %s230 = smov 12
  %v231 = vld [vmem:[%s229] ss:$16 sm:%s230]
  %vm232 = vcmask 1043458
  %v233 = vsel %vm232, %v231, %v228
  %s234 = scalar_lea.vmem %s0, 135
  %s235 = smov 48
  %v236 = vld [vmem:[%s234] ss:$16 sm:%s235]
  %vm237 = vcmask 1045508
  %v238 = vsel %vm237, %v236, %v233
  %s239 = scalar_lea.vmem %s0, 135
  %s240 = smov 192
  %v241 = vld [vmem:[%s239] ss:$16 sm:%s240]
  %vm242 = vcmask 1047558
  %v243 = vsel %vm242, %v241, %v238
  %244 = vrot.lane.b32.xlu0 %v243, 96
  %v245 = vpop.permute.xlu0 %244
  %vm246 = vcmask 1048320
  %s247 = scalar_lea.vmem %s1, 40
  %248 = vst.msk [vmem:[%s247] sm:$0xff] %vm246, %v245
  %s249 = scalar_lea.vmem %s0, 263
  %s250 = smov 3
  %v251 = vld [vmem:[%s249] ss:$16 sm:%s250]
  %s252 = scalar_lea.vmem %s0, 263
  %s253 = smov 12
  %v254 = vld [vmem:[%s252] ss:$16 sm:%s253]
  %vm255 = vcmask 1043458
  %v256 = vsel %vm255, %v254, %v251
  %s257 = scalar_lea.vmem %s0, 263
  %s258 = smov 48
  %v259 = vld [vmem:[%s257] ss:$16 sm:%s258]
  %vm260 = vcmask 1045508
  %v261 = vsel %vm260, %v259, %v256
  %s262 = scalar_lea.vmem %s0, 263
  %s263 = smov 192
  %v264 = vld [vmem:[%s262] ss:$16 sm:%s263]
  %vm265 = vcmask 1047558
  %v266 = vsel %vm265, %v264, %v261
  %267 = vrot.lane.b32.xlu0 %v266, 96
  %v268 = vpop.permute.xlu0 %267
  %vm269 = vcmask 1048320
  %s270 = scalar_lea.vmem %s1, 72
  %271 = vst.msk [vmem:[%s270] sm:$0xff] %vm269, %v268
  %s272 = scalar_lea.vmem %s0, 391
  %s273 = smov 3
  %v274 = vld [vmem:[%s272] ss:$16 sm:%s273]
  %s275 = scalar_lea.vmem %s0, 391
  %s276 = smov 12
  %v277 = vld [vmem:[%s275] ss:$16 sm:%s276]
  %vm278 = vcmask 1043458
  %v279 = vsel %vm278, %v277, %v274
  %s280 = scalar_lea.vmem %s0, 391
  %s281 = smov 48
  %v282 = vld [vmem:[%s280] ss:$16 sm:%s281]
  %vm283 = vcmask 1045508
  %v284 = vsel %vm283, %v282, %v279
  %s285 = scalar_lea.vmem %s0, 391
  %s286 = smov 192
  %v287 = vld [vmem:[%s285] ss:$16 sm:%s286]
  %vm288 = vcmask 1047558
  %v289 = vsel %vm288, %v287, %v284
  %290 = vrot.lane.b32.xlu0 %v289, 96
  %v291 = vpop.permute.xlu0 %290
  %vm292 = vcmask 1048320
  %s293 = scalar_lea.vmem %s1, 104
  %294 = vst.msk [vmem:[%s293] sm:$0xff] %vm292, %v291
  %s295 = scalar_lea.vmem %s0, 11
  %s296 = smov 3
  %v297 = vld [vmem:[%s295] ss:$16 sm:%s296]
  %s298 = scalar_lea.vmem %s0, 11
  %s299 = smov 12
  %v300 = vld [vmem:[%s298] ss:$16 sm:%s299]
  %vm301 = vcmask 1043458
  %v302 = vsel %vm301, %v300, %v297
  %s303 = scalar_lea.vmem %s0, 11
  %s304 = smov 48
  %v305 = vld [vmem:[%s303] ss:$16 sm:%s304]
  %vm306 = vcmask 1045508
  %v307 = vsel %vm306, %v305, %v302
  %s308 = scalar_lea.vmem %s0, 11
  %s309 = smov 192
  %v310 = vld [vmem:[%s308] ss:$16 sm:%s309]
  %vm311 = vcmask 1047558
  %v312 = vsel %vm311, %v310, %v307
  %313 = vrot.lane.b32.xlu0 %v312, 96
  %v314 = vpop.permute.xlu0 %313
  %vm315 = vcmask 1048320
  %s316 = scalar_lea.vmem %s1, 16
  %317 = vst.msk [vmem:[%s316] sm:$0xff] %vm315, %v314
  %s318 = scalar_lea.vmem %s0, 139
  %s319 = smov 3
  %v320 = vld [vmem:[%s318] ss:$16 sm:%s319]
  %s321 = scalar_lea.vmem %s0, 139
  %s322 = smov 12
  %v323 = vld [vmem:[%s321] ss:$16 sm:%s322]
  %vm324 = vcmask 1043458
  %v325 = vsel %vm324, %v323, %v320
  %s326 = scalar_lea.vmem %s0, 139
  %s327 = smov 48
  %v328 = vld [vmem:[%s326] ss:$16 sm:%s327]
  %vm329 = vcmask 1045508
  %v330 = vsel %vm329, %v328, %v325
  %s331 = scalar_lea.vmem %s0, 139
  %s332 = smov 192
  %v333 = vld [vmem:[%s331] ss:$16 sm:%s332]
  %vm334 = vcmask 1047558
  %v335 = vsel %vm334, %v333, %v330
  %336 = vrot.lane.b32.xlu0 %v335, 96
  %v337 = vpop.permute.xlu0 %336
  %vm338 = vcmask 1048320
  %s339 = scalar_lea.vmem %s1, 48
  %340 = vst.msk [vmem:[%s339] sm:$0xff] %vm338, %v337
  %s341 = scalar_lea.vmem %s0, 267
  %s342 = smov 3
  %v343 = vld [vmem:[%s341] ss:$16 sm:%s342]
  %s344 = scalar_lea.vmem %s0, 267
  %s345 = smov 12
  %v346 = vld [vmem:[%s344] ss:$16 sm:%s345]
  %vm347 = vcmask 1043458
  %v348 = vsel %vm347, %v346, %v343
  %s349 = scalar_lea.vmem %s0, 267
  %s350 = smov 48
  %v351 = vld [vmem:[%s349] ss:$16 sm:%s350]
  %vm352 = vcmask 1045508
  %v353 = vsel %vm352, %v351, %v348
  %s354 = scalar_lea.vmem %s0, 267
  %s355 = smov 192
  %v356 = vld [vmem:[%s354] ss:$16 sm:%s355]
  %vm357 = vcmask 1047558
  %v358 = vsel %vm357, %v356, %v353
  %359 = vrot.lane.b32.xlu0 %v358, 96
  %v360 = vpop.permute.xlu0 %359
  %vm361 = vcmask 1048320
  %s362 = scalar_lea.vmem %s1, 80
  %363 = vst.msk [vmem:[%s362] sm:$0xff] %vm361, %v360
  %s364 = scalar_lea.vmem %s0, 395
  %s365 = smov 3
  %v366 = vld [vmem:[%s364] ss:$16 sm:%s365]
  %s367 = scalar_lea.vmem %s0, 395
  %s368 = smov 12
  %v369 = vld [vmem:[%s367] ss:$16 sm:%s368]
  %vm370 = vcmask 1043458
  %v371 = vsel %vm370, %v369, %v366
  %s372 = scalar_lea.vmem %s0, 395
  %s373 = smov 48
  %v374 = vld [vmem:[%s372] ss:$16 sm:%s373]
  %vm375 = vcmask 1045508
  %v376 = vsel %vm375, %v374, %v371
  %s377 = scalar_lea.vmem %s0, 395
  %s378 = smov 192
  %v379 = vld [vmem:[%s377] ss:$16 sm:%s378]
  %vm380 = vcmask 1047558
  %v381 = vsel %vm380, %v379, %v376
  %382 = vrot.lane.b32.xlu0 %v381, 96
  %v383 = vpop.permute.xlu0 %382
  %vm384 = vcmask 1048320
  %s385 = scalar_lea.vmem %s1, 112
  %386 = vst.msk [vmem:[%s385] sm:$0xff] %vm384, %v383
  %s387 = scalar_lea.vmem %s0, 15
  %s388 = smov 3
  %v389 = vld [vmem:[%s387] ss:$16 sm:%s388]
  %s390 = scalar_lea.vmem %s0, 15
  %s391 = smov 12
  %v392 = vld [vmem:[%s390] ss:$16 sm:%s391]
  %vm393 = vcmask 1043458
  %v394 = vsel %vm393, %v392, %v389
  %s395 = scalar_lea.vmem %s0, 15
  %s396 = smov 48
  %v397 = vld [vmem:[%s395] ss:$16 sm:%s396]
  %vm398 = vcmask 1045508
  %v399 = vsel %vm398, %v397, %v394
  %s400 = scalar_lea.vmem %s0, 15
  %s401 = smov 192
  %v402 = vld [vmem:[%s400] ss:$16 sm:%s401]
  %vm403 = vcmask 1047558
  %v404 = vsel %vm403, %v402, %v399
  %405 = vrot.lane.b32.xlu0 %v404, 96
  %v406 = vpop.permute.xlu0 %405
  %vm407 = vcmask 1048320
  %s408 = scalar_lea.vmem %s1, 24
  %409 = vst.msk [vmem:[%s408] sm:$0xff] %vm407, %v406
  %s410 = scalar_lea.vmem %s0, 143
  %s411 = smov 3
  %v412 = vld [vmem:[%s410] ss:$16 sm:%s411]
  %s413 = scalar_lea.vmem %s0, 143
  %s414 = smov 12
  %v415 = vld [vmem:[%s413] ss:$16 sm:%s414]
  %vm416 = vcmask 1043458
  %v417 = vsel %vm416, %v415, %v412
  %s418 = scalar_lea.vmem %s0, 143
  %s419 = smov 48
  %v420 = vld [vmem:[%s418] ss:$16 sm:%s419]
  %vm421 = vcmask 1045508
  %v422 = vsel %vm421, %v420, %v417
  %s423 = scalar_lea.vmem %s0, 143
  %s424 = smov 192
  %v425 = vld [vmem:[%s423] ss:$16 sm:%s424]
  %vm426 = vcmask 1047558
  %v427 = vsel %vm426, %v425, %v422
  %428 = vrot.lane.b32.xlu0 %v427, 96
  %v429 = vpop.permute.xlu0 %428
  %vm430 = vcmask 1048320
  %s431 = scalar_lea.vmem %s1, 56
  %432 = vst.msk [vmem:[%s431] sm:$0xff] %vm430, %v429
  %s433 = scalar_lea.vmem %s0, 271
  %s434 = smov 3
  %v435 = vld [vmem:[%s433] ss:$16 sm:%s434]
  %s436 = scalar_lea.vmem %s0, 271
  %s437 = smov 12
  %v438 = vld [vmem:[%s436] ss:$16 sm:%s437]
  %vm439 = vcmask 1043458
  %v440 = vsel %vm439, %v438, %v435
  %s441 = scalar_lea.vmem %s0, 271
  %s442 = smov 48
  %v443 = vld [vmem:[%s441] ss:$16 sm:%s442]
  %vm444 = vcmask 1045508
  %v445 = vsel %vm444, %v443, %v440
  %s446 = scalar_lea.vmem %s0, 271
  %s447 = smov 192
  %v448 = vld [vmem:[%s446] ss:$16 sm:%s447]
  %vm449 = vcmask 1047558
  %v450 = vsel %vm449, %v448, %v445
  %451 = vrot.lane.b32.xlu0 %v450, 96
  %v452 = vpop.permute.xlu0 %451
  %vm453 = vcmask 1048320
  %s454 = scalar_lea.vmem %s1, 88
  %455 = vst.msk [vmem:[%s454] sm:$0xff] %vm453, %v452
  %s456 = scalar_lea.vmem %s0, 399
  %s457 = smov 3
  %v458 = vld [vmem:[%s456] ss:$16 sm:%s457]
  %s459 = scalar_lea.vmem %s0, 399
  %s460 = smov 12
  %v461 = vld [vmem:[%s459] ss:$16 sm:%s460]
  %vm462 = vcmask 1043458
  %v463 = vsel %vm462, %v461, %v458
  %s464 = scalar_lea.vmem %s0, 399
  %s465 = smov 48
  %v466 = vld [vmem:[%s464] ss:$16 sm:%s465]
  %vm467 = vcmask 1045508
  %v468 = vsel %vm467, %v466, %v463
  %s469 = scalar_lea.vmem %s0, 399
  %s470 = smov 192
  %v471 = vld [vmem:[%s469] ss:$16 sm:%s470]
  %vm472 = vcmask 1047558
  %v473 = vsel %vm472, %v471, %v468
  %474 = vrot.lane.b32.xlu0 %v473, 96
  %v475 = vpop.permute.xlu0 %474
  %vm476 = vcmask 1048320
  %s477 = scalar_lea.vmem %s1, 120
  %478 = vst.msk [vmem:[%s477] sm:$0xff] %vm476, %v475
  %s479 = scalar_lea.vmem %s0, 2
  %s480 = smov 3
  %v481 = vld [vmem:[%s479] ss:$16 sm:%s480]
  %s482 = scalar_lea.vmem %s0, 2
  %s483 = smov 12
  %v484 = vld [vmem:[%s482] ss:$16 sm:%s483]
  %vm485 = vcmask 1043458
  %v486 = vsel %vm485, %v484, %v481
  %s487 = scalar_lea.vmem %s0, 2
  %s488 = smov 48
  %v489 = vld [vmem:[%s487] ss:$16 sm:%s488]
  %vm490 = vcmask 1045508
  %v491 = vsel %vm490, %v489, %v486
  %s492 = scalar_lea.vmem %s0, 2
  %s493 = smov 192
  %v494 = vld [vmem:[%s492] ss:$16 sm:%s493]
  %vm495 = vcmask 1047558
  %v496 = vsel %vm495, %v494, %v491
  %497 = vrot.lane.b32.xlu0 %v496, 64
  %v498 = vpop.permute.xlu0 %497
  %vm499 = vcmask 785920
  %500 = vst.msk [vmem:[%s1] sm:$0xff] %vm499, %v498
  %s501 = scalar_lea.vmem %s0, 130
  %s502 = smov 3
  %v503 = vld [vmem:[%s501] ss:$16 sm:%s502]
  %s504 = scalar_lea.vmem %s0, 130
  %s505 = smov 12
  %v506 = vld [vmem:[%s504] ss:$16 sm:%s505]
  %vm507 = vcmask 1043458
  %v508 = vsel %vm507, %v506, %v503
  %s509 = scalar_lea.vmem %s0, 130
  %s510 = smov 48
  %v511 = vld [vmem:[%s509] ss:$16 sm:%s510]
  %vm512 = vcmask 1045508
  %v513 = vsel %vm512, %v511, %v508
  %s514 = scalar_lea.vmem %s0, 130
  %s515 = smov 192
  %v516 = vld [vmem:[%s514] ss:$16 sm:%s515]
  %vm517 = vcmask 1047558
  %v518 = vsel %vm517, %v516, %v513
  %519 = vrot.lane.b32.xlu0 %v518, 64
  %v520 = vpop.permute.xlu0 %519
  %vm521 = vcmask 785920
  %s522 = scalar_lea.vmem %s1, 32
  %523 = vst.msk [vmem:[%s522] sm:$0xff] %vm521, %v520
  %s524 = scalar_lea.vmem %s0, 258
  %s525 = smov 3
  %v526 = vld [vmem:[%s524] ss:$16 sm:%s525]
  %s527 = scalar_lea.vmem %s0, 258
  %s528 = smov 12
  %v529 = vld [vmem:[%s527] ss:$16 sm:%s528]
  %vm530 = vcmask 1043458
  %v531 = vsel %vm530, %v529, %v526
  %s532 = scalar_lea.vmem %s0, 258
  %s533 = smov 48
  %v534 = vld [vmem:[%s532] ss:$16 sm:%s533]
  %vm535 = vcmask 1045508
  %v536 = vsel %vm535, %v534, %v531
  %s537 = scalar_lea.vmem %s0, 258
  %s538 = smov 192
  %v539 = vld [vmem:[%s537] ss:$16 sm:%s538]
  %vm540 = vcmask 1047558
  %v541 = vsel %vm540, %v539, %v536
  %542 = vrot.lane.b32.xlu0 %v541, 64
  %v543 = vpop.permute.xlu0 %542
  %vm544 = vcmask 785920
  %s545 = scalar_lea.vmem %s1, 64
  %546 = vst.msk [vmem:[%s545] sm:$0xff] %vm544, %v543
  %s547 = scalar_lea.vmem %s0, 386
  %s548 = smov 3
  %v549 = vld [vmem:[%s547] ss:$16 sm:%s548]
  %s550 = scalar_lea.vmem %s0, 386
  %s551 = smov 12
  %v552 = vld [vmem:[%s550] ss:$16 sm:%s551]
  %vm553 = vcmask 1043458
  %v554 = vsel %vm553, %v552, %v549
  %s555 = scalar_lea.vmem %s0, 386
  %s556 = smov 48
  %v557 = vld [vmem:[%s555] ss:$16 sm:%s556]
  %vm558 = vcmask 1045508
  %v559 = vsel %vm558, %v557, %v554
  %s560 = scalar_lea.vmem %s0, 386
  %s561 = smov 192
  %v562 = vld [vmem:[%s560] ss:$16 sm:%s561]
  %vm563 = vcmask 1047558
  %v564 = vsel %vm563, %v562, %v559
  %565 = vrot.lane.b32.xlu0 %v564, 64
  %v566 = vpop.permute.xlu0 %565
  %vm567 = vcmask 785920
  %s568 = scalar_lea.vmem %s1, 96
  %569 = vst.msk [vmem:[%s568] sm:$0xff] %vm567, %v566
  %s570 = scalar_lea.vmem %s0, 6
  %s571 = smov 3
  %v572 = vld [vmem:[%s570] ss:$16 sm:%s571]
  %s573 = scalar_lea.vmem %s0, 6
  %s574 = smov 12
  %v575 = vld [vmem:[%s573] ss:$16 sm:%s574]
  %vm576 = vcmask 1043458
  %v577 = vsel %vm576, %v575, %v572
  %s578 = scalar_lea.vmem %s0, 6
  %s579 = smov 48
  %v580 = vld [vmem:[%s578] ss:$16 sm:%s579]
  %vm581 = vcmask 1045508
  %v582 = vsel %vm581, %v580, %v577
  %s583 = scalar_lea.vmem %s0, 6
  %s584 = smov 192
  %v585 = vld [vmem:[%s583] ss:$16 sm:%s584]
  %vm586 = vcmask 1047558
  %v587 = vsel %vm586, %v585, %v582
  %588 = vrot.lane.b32.xlu0 %v587, 64
  %v589 = vpop.permute.xlu0 %588
  %vm590 = vcmask 785920
  %s591 = scalar_lea.vmem %s1, 8
  %592 = vst.msk [vmem:[%s591] sm:$0xff] %vm590, %v589
  %s593 = scalar_lea.vmem %s0, 134
  %s594 = smov 3
  %v595 = vld [vmem:[%s593] ss:$16 sm:%s594]
  %s596 = scalar_lea.vmem %s0, 134
  %s597 = smov 12
  %v598 = vld [vmem:[%s596] ss:$16 sm:%s597]
  %vm599 = vcmask 1043458
  %v600 = vsel %vm599, %v598, %v595
  %s601 = scalar_lea.vmem %s0, 134
  %s602 = smov 48
  %v603 = vld [vmem:[%s601] ss:$16 sm:%s602]
  %vm604 = vcmask 1045508
  %v605 = vsel %vm604, %v603, %v600
  %s606 = scalar_lea.vmem %s0, 134
  %s607 = smov 192
  %v608 = vld [vmem:[%s606] ss:$16 sm:%s607]
  %vm609 = vcmask 1047558
  %v610 = vsel %vm609, %v608, %v605
  %611 = vrot.lane.b32.xlu0 %v610, 64
  %v612 = vpop.permute.xlu0 %611
  %vm613 = vcmask 785920
  %s614 = scalar_lea.vmem %s1, 40
  %615 = vst.msk [vmem:[%s614] sm:$0xff] %vm613, %v612
  %s616 = scalar_lea.vmem %s0, 262
  %s617 = smov 3
  %v618 = vld [vmem:[%s616] ss:$16 sm:%s617]
  %s619 = scalar_lea.vmem %s0, 262
  %s620 = smov 12
  %v621 = vld [vmem:[%s619] ss:$16 sm:%s620]
  %vm622 = vcmask 1043458
  %v623 = vsel %vm622, %v621, %v618
  %s624 = scalar_lea.vmem %s0, 262
  %s625 = smov 48
  %v626 = vld [vmem:[%s624] ss:$16 sm:%s625]
  %vm627 = vcmask 1045508
  %v628 = vsel %vm627, %v626, %v623
  %s629 = scalar_lea.vmem %s0, 262
  %s630 = smov 192
  %v631 = vld [vmem:[%s629] ss:$16 sm:%s630]
  %vm632 = vcmask 1047558
  %v633 = vsel %vm632, %v631, %v628
  %634 = vrot.lane.b32.xlu0 %v633, 64
  %v635 = vpop.permute.xlu0 %634
  %vm636 = vcmask 785920
  %s637 = scalar_lea.vmem %s1, 72
  %638 = vst.msk [vmem:[%s637] sm:$0xff] %vm636, %v635
  %s639 = scalar_lea.vmem %s0, 390
  %s640 = smov 3
  %v641 = vld [vmem:[%s639] ss:$16 sm:%s640]
  %s642 = scalar_lea.vmem %s0, 390
  %s643 = smov 12
  %v644 = vld [vmem:[%s642] ss:$16 sm:%s643]
  %vm645 = vcmask 1043458
  %v646 = vsel %vm645, %v644, %v641
  %s647 = scalar_lea.vmem %s0, 390
  %s648 = smov 48
  %v649 = vld [vmem:[%s647] ss:$16 sm:%s648]
  %vm650 = vcmask 1045508
  %v651 = vsel %vm650, %v649, %v646
  %s652 = scalar_lea.vmem %s0, 390
  %s653 = smov 192
  %v654 = vld [vmem:[%s652] ss:$16 sm:%s653]
  %vm655 = vcmask 1047558
  %v656 = vsel %vm655, %v654, %v651
  %657 = vrot.lane.b32.xlu0 %v656, 64
  %v658 = vpop.permute.xlu0 %657
  %vm659 = vcmask 785920
  %s660 = scalar_lea.vmem %s1, 104
  %661 = vst.msk [vmem:[%s660] sm:$0xff] %vm659, %v658
  %s662 = scalar_lea.vmem %s0, 10
  %s663 = smov 3
  %v664 = vld [vmem:[%s662] ss:$16 sm:%s663]
  %s665 = scalar_lea.vmem %s0, 10
  %s666 = smov 12
  %v667 = vld [vmem:[%s665] ss:$16 sm:%s666]
  %vm668 = vcmask 1043458
  %v669 = vsel %vm668, %v667, %v664
  %s670 = scalar_lea.vmem %s0, 10
  %s671 = smov 48
  %v672 = vld [vmem:[%s670] ss:$16 sm:%s671]
  %vm673 = vcmask 1045508
  %v674 = vsel %vm673, %v672, %v669
  %s675 = scalar_lea.vmem %s0, 10
  %s676 = smov 192
  %v677 = vld [vmem:[%s675] ss:$16 sm:%s676]
  %vm678 = vcmask 1047558
  %v679 = vsel %vm678, %v677, %v674
  %680 = vrot.lane.b32.xlu0 %v679, 64
  %v681 = vpop.permute.xlu0 %680
  %vm682 = vcmask 785920
  %s683 = scalar_lea.vmem %s1, 16
  %684 = vst.msk [vmem:[%s683] sm:$0xff] %vm682, %v681
  %s685 = scalar_lea.vmem %s0, 138
  %s686 = smov 3
  %v687 = vld [vmem:[%s685] ss:$16 sm:%s686]
  %s688 = scalar_lea.vmem %s0, 138
  %s689 = smov 12
  %v690 = vld [vmem:[%s688] ss:$16 sm:%s689]
  %vm691 = vcmask 1043458
  %v692 = vsel %vm691, %v690, %v687
  %s693 = scalar_lea.vmem %s0, 138
  %s694 = smov 48
  %v695 = vld [vmem:[%s693] ss:$16 sm:%s694]
  %vm696 = vcmask 1045508
  %v697 = vsel %vm696, %v695, %v692
  %s698 = scalar_lea.vmem %s0, 138
  %s699 = smov 192
  %v700 = vld [vmem:[%s698] ss:$16 sm:%s699]
  %vm701 = vcmask 1047558
  %v702 = vsel %vm701, %v700, %v697
  %703 = vrot.lane.b32.xlu0 %v702, 64
  %v704 = vpop.permute.xlu0 %703
  %vm705 = vcmask 785920
  %s706 = scalar_lea.vmem %s1, 48
  %707 = vst.msk [vmem:[%s706] sm:$0xff] %vm705, %v704
  %s708 = scalar_lea.vmem %s0, 266
  %s709 = smov 3
  %v710 = vld [vmem:[%s708] ss:$16 sm:%s709]
  %s711 = scalar_lea.vmem %s0, 266
  %s712 = smov 12
  %v713 = vld [vmem:[%s711] ss:$16 sm:%s712]
  %vm714 = vcmask 1043458
  %v715 = vsel %vm714, %v713, %v710
  %s716 = scalar_lea.vmem %s0, 266
  %s717 = smov 48
  %v718 = vld [vmem:[%s716] ss:$16 sm:%s717]
  %vm719 = vcmask 1045508
  %v720 = vsel %vm719, %v718, %v715
  %s721 = scalar_lea.vmem %s0, 266
  %s722 = smov 192
  %v723 = vld [vmem:[%s721] ss:$16 sm:%s722]
  %vm724 = vcmask 1047558
  %v725 = vsel %vm724, %v723, %v720
  %726 = vrot.lane.b32.xlu0 %v725, 64
  %v727 = vpop.permute.xlu0 %726
  %vm728 = vcmask 785920
  %s729 = scalar_lea.vmem %s1, 80
  %730 = vst.msk [vmem:[%s729] sm:$0xff] %vm728, %v727
  %s731 = scalar_lea.vmem %s0, 394
  %s732 = smov 3
  %v733 = vld [vmem:[%s731] ss:$16 sm:%s732]
  %s734 = scalar_lea.vmem %s0, 394
  %s735 = smov 12
  %v736 = vld [vmem:[%s734] ss:$16 sm:%s735]
  %vm737 = vcmask 1043458
  %v738 = vsel %vm737, %v736, %v733
  %s739 = scalar_lea.vmem %s0, 394
  %s740 = smov 48
  %v741 = vld [vmem:[%s739] ss:$16 sm:%s740]
  %vm742 = vcmask 1045508
  %v743 = vsel %vm742, %v741, %v738
  %s744 = scalar_lea.vmem %s0, 394
  %s745 = smov 192
  %v746 = vld [vmem:[%s744] ss:$16 sm:%s745]
  %vm747 = vcmask 1047558
  %v748 = vsel %vm747, %v746, %v743
  %749 = vrot.lane.b32.xlu0 %v748, 64
  %v750 = vpop.permute.xlu0 %749
  %vm751 = vcmask 785920
  %s752 = scalar_lea.vmem %s1, 112
  %753 = vst.msk [vmem:[%s752] sm:$0xff] %vm751, %v750
  %s754 = scalar_lea.vmem %s0, 14
  %s755 = smov 3
  %v756 = vld [vmem:[%s754] ss:$16 sm:%s755]
  %s757 = scalar_lea.vmem %s0, 14
  %s758 = smov 12
  %v759 = vld [vmem:[%s757] ss:$16 sm:%s758]
  %vm760 = vcmask 1043458
  %v761 = vsel %vm760, %v759, %v756
  %s762 = scalar_lea.vmem %s0, 14
  %s763 = smov 48
  %v764 = vld [vmem:[%s762] ss:$16 sm:%s763]
  %vm765 = vcmask 1045508
  %v766 = vsel %vm765, %v764, %v761
  %s767 = scalar_lea.vmem %s0, 14
  %s768 = smov 192
  %v769 = vld [vmem:[%s767] ss:$16 sm:%s768]
  %vm770 = vcmask 1047558
  %v771 = vsel %vm770, %v769, %v766
  %772 = vrot.lane.b32.xlu0 %v771, 64
  %v773 = vpop.permute.xlu0 %772
  %vm774 = vcmask 785920
  %s775 = scalar_lea.vmem %s1, 24
  %776 = vst.msk [vmem:[%s775] sm:$0xff] %vm774, %v773
  %s777 = scalar_lea.vmem %s0, 142
  %s778 = smov 3
  %v779 = vld [vmem:[%s777] ss:$16 sm:%s778]
  %s780 = scalar_lea.vmem %s0, 142
  %s781 = smov 12
  %v782 = vld [vmem:[%s780] ss:$16 sm:%s781]
  %vm783 = vcmask 1043458
  %v784 = vsel %vm783, %v782, %v779
  %s785 = scalar_lea.vmem %s0, 142
  %s786 = smov 48
  %v787 = vld [vmem:[%s785] ss:$16 sm:%s786]
  %vm788 = vcmask 1045508
  %v789 = vsel %vm788, %v787, %v784
  %s790 = scalar_lea.vmem %s0, 142
  %s791 = smov 192
  %v792 = vld [vmem:[%s790] ss:$16 sm:%s791]
  %vm793 = vcmask 1047558
  %v794 = vsel %vm793, %v792, %v789
  %795 = vrot.lane.b32.xlu0 %v794, 64
  %v796 = vpop.permute.xlu0 %795
  %vm797 = vcmask 785920
  %s798 = scalar_lea.vmem %s1, 56
  %799 = vst.msk [vmem:[%s798] sm:$0xff] %vm797, %v796
  %s800 = scalar_lea.vmem %s0, 270
  %s801 = smov 3
  %v802 = vld [vmem:[%s800] ss:$16 sm:%s801]
  %s803 = scalar_lea.vmem %s0, 270
  %s804 = smov 12
  %v805 = vld [vmem:[%s803] ss:$16 sm:%s804]
  %vm806 = vcmask 1043458
  %v807 = vsel %vm806, %v805, %v802
  %s808 = scalar_lea.vmem %s0, 270
  %s809 = smov 48
  %v810 = vld [vmem:[%s808] ss:$16 sm:%s809]
  %vm811 = vcmask 1045508
  %v812 = vsel %vm811, %v810, %v807
  %s813 = scalar_lea.vmem %s0, 270
  %s814 = smov 192
  %v815 = vld [vmem:[%s813] ss:$16 sm:%s814]
  %vm816 = vcmask 1047558
  %v817 = vsel %vm816, %v815, %v812
  %818 = vrot.lane.b32.xlu0 %v817, 64
  %v819 = vpop.permute.xlu0 %818
  %vm820 = vcmask 785920
  %s821 = scalar_lea.vmem %s1, 88
  %822 = vst.msk [vmem:[%s821] sm:$0xff] %vm820, %v819
  %s823 = scalar_lea.vmem %s0, 398
  %s824 = smov 3
  %v825 = vld [vmem:[%s823] ss:$16 sm:%s824]
  %s826 = scalar_lea.vmem %s0, 398
  %s827 = smov 12
  %v828 = vld [vmem:[%s826] ss:$16 sm:%s827]
  %vm829 = vcmask 1043458
  %v830 = vsel %vm829, %v828, %v825
  %s831 = scalar_lea.vmem %s0, 398
  %s832 = smov 48
  %v833 = vld [vmem:[%s831] ss:$16 sm:%s832]
  %vm834 = vcmask 1045508
  %v835 = vsel %vm834, %v833, %v830
  %s836 = scalar_lea.vmem %s0, 398
  %s837 = smov 192
  %v838 = vld [vmem:[%s836] ss:$16 sm:%s837]
  %vm839 = vcmask 1047558
  %v840 = vsel %vm839, %v838, %v835
  %841 = vrot.lane.b32.xlu0 %v840, 64
  %v842 = vpop.permute.xlu0 %841
  %vm843 = vcmask 785920
  %s844 = scalar_lea.vmem %s1, 120
  %845 = vst.msk [vmem:[%s844] sm:$0xff] %vm843, %v842
  %s846 = scalar_lea.vmem %s0, 1
  %s847 = smov 3
  %v848 = vld [vmem:[%s846] ss:$16 sm:%s847]
  %s849 = scalar_lea.vmem %s0, 1
  %s850 = smov 12
  %v851 = vld [vmem:[%s849] ss:$16 sm:%s850]
  %vm852 = vcmask 1043458
  %v853 = vsel %vm852, %v851, %v848
  %s854 = scalar_lea.vmem %s0, 1
  %s855 = smov 48
  %v856 = vld [vmem:[%s854] ss:$16 sm:%s855]
  %vm857 = vcmask 1045508
  %v858 = vsel %vm857, %v856, %v853
  %s859 = scalar_lea.vmem %s0, 1
  %s860 = smov 192
  %v861 = vld [vmem:[%s859] ss:$16 sm:%s860]
  %vm862 = vcmask 1047558
  %v863 = vsel %vm862, %v861, %v858
  %864 = vrot.lane.b32.xlu0 %v863, 32
  %v865 = vpop.permute.xlu0 %864
  %vm866 = vcmask 523520
  %867 = vst.msk [vmem:[%s1] sm:$0xff] %vm866, %v865
  %s868 = scalar_lea.vmem %s0, 129
  %s869 = smov 3
  %v870 = vld [vmem:[%s868] ss:$16 sm:%s869]
  %s871 = scalar_lea.vmem %s0, 129
  %s872 = smov 12
  %v873 = vld [vmem:[%s871] ss:$16 sm:%s872]
  %vm874 = vcmask 1043458
  %v875 = vsel %vm874, %v873, %v870
  %s876 = scalar_lea.vmem %s0, 129
  %s877 = smov 48
  %v878 = vld [vmem:[%s876] ss:$16 sm:%s877]
  %vm879 = vcmask 1045508
  %v880 = vsel %vm879, %v878, %v875
  %s881 = scalar_lea.vmem %s0, 129
  %s882 = smov 192
  %v883 = vld [vmem:[%s881] ss:$16 sm:%s882]
  %vm884 = vcmask 1047558
  %v885 = vsel %vm884, %v883, %v880
  %886 = vrot.lane.b32.xlu0 %v885, 32
  %v887 = vpop.permute.xlu0 %886
  %vm888 = vcmask 523520
  %s889 = scalar_lea.vmem %s1, 32
  %890 = vst.msk [vmem:[%s889] sm:$0xff] %vm888, %v887
  %s891 = scalar_lea.vmem %s0, 257
  %s892 = smov 3
  %v893 = vld [vmem:[%s891] ss:$16 sm:%s892]
  %s894 = scalar_lea.vmem %s0, 257
  %s895 = smov 12
  %v896 = vld [vmem:[%s894] ss:$16 sm:%s895]
  %vm897 = vcmask 1043458
  %v898 = vsel %vm897, %v896, %v893
  %s899 = scalar_lea.vmem %s0, 257
  %s900 = smov 48
  %v901 = vld [vmem:[%s899] ss:$16 sm:%s900]
  %vm902 = vcmask 1045508
  %v903 = vsel %vm902, %v901, %v898
  %s904 = scalar_lea.vmem %s0, 257
  %s905 = smov 192
  %v906 = vld [vmem:[%s904] ss:$16 sm:%s905]
  %vm907 = vcmask 1047558
  %v908 = vsel %vm907, %v906, %v903
  %909 = vrot.lane.b32.xlu0 %v908, 32
  %v910 = vpop.permute.xlu0 %909
  %vm911 = vcmask 523520
  %s912 = scalar_lea.vmem %s1, 64
  %913 = vst.msk [vmem:[%s912] sm:$0xff] %vm911, %v910
  %s914 = scalar_lea.vmem %s0, 385
  %s915 = smov 3
  %v916 = vld [vmem:[%s914] ss:$16 sm:%s915]
  %s917 = scalar_lea.vmem %s0, 385
  %s918 = smov 12
  %v919 = vld [vmem:[%s917] ss:$16 sm:%s918]
  %vm920 = vcmask 1043458
  %v921 = vsel %vm920, %v919, %v916
  %s922 = scalar_lea.vmem %s0, 385
  %s923 = smov 48
  %v924 = vld [vmem:[%s922] ss:$16 sm:%s923]
  %vm925 = vcmask 1045508
  %v926 = vsel %vm925, %v924, %v921
  %s927 = scalar_lea.vmem %s0, 385
  %s928 = smov 192
  %v929 = vld [vmem:[%s927] ss:$16 sm:%s928]
  %vm930 = vcmask 1047558
  %v931 = vsel %vm930, %v929, %v926
  %932 = vrot.lane.b32.xlu0 %v931, 32
  %v933 = vpop.permute.xlu0 %932
  %vm934 = vcmask 523520
  %s935 = scalar_lea.vmem %s1, 96
  %936 = vst.msk [vmem:[%s935] sm:$0xff] %vm934, %v933
  %s937 = scalar_lea.vmem %s0, 5
  %s938 = smov 3
  %v939 = vld [vmem:[%s937] ss:$16 sm:%s938]
  %s940 = scalar_lea.vmem %s0, 5
  %s941 = smov 12
  %v942 = vld [vmem:[%s940] ss:$16 sm:%s941]
  %vm943 = vcmask 1043458
  %v944 = vsel %vm943, %v942, %v939
  %s945 = scalar_lea.vmem %s0, 5
  %s946 = smov 48
  %v947 = vld [vmem:[%s945] ss:$16 sm:%s946]
  %vm948 = vcmask 1045508
  %v949 = vsel %vm948, %v947, %v944
  %s950 = scalar_lea.vmem %s0, 5
  %s951 = smov 192
  %v952 = vld [vmem:[%s950] ss:$16 sm:%s951]
  %vm953 = vcmask 1047558
  %v954 = vsel %vm953, %v952, %v949
  %955 = vrot.lane.b32.xlu0 %v954, 32
  %v956 = vpop.permute.xlu0 %955
  %vm957 = vcmask 523520
  %s958 = scalar_lea.vmem %s1, 8
  %959 = vst.msk [vmem:[%s958] sm:$0xff] %vm957, %v956
  %s960 = scalar_lea.vmem %s0, 133
  %s961 = smov 3
  %v962 = vld [vmem:[%s960] ss:$16 sm:%s961]
  %s963 = scalar_lea.vmem %s0, 133
  %s964 = smov 12
  %v965 = vld [vmem:[%s963] ss:$16 sm:%s964]
  %vm966 = vcmask 1043458
  %v967 = vsel %vm966, %v965, %v962
  %s968 = scalar_lea.vmem %s0, 133
  %s969 = smov 48
  %v970 = vld [vmem:[%s968] ss:$16 sm:%s969]
  %vm971 = vcmask 1045508
  %v972 = vsel %vm971, %v970, %v967
  %s973 = scalar_lea.vmem %s0, 133
  %s974 = smov 192
  %v975 = vld [vmem:[%s973] ss:$16 sm:%s974]
  %vm976 = vcmask 1047558
  %v977 = vsel %vm976, %v975, %v972
  %978 = vrot.lane.b32.xlu0 %v977, 32
  %v979 = vpop.permute.xlu0 %978
  %vm980 = vcmask 523520
  %s981 = scalar_lea.vmem %s1, 40
  %982 = vst.msk [vmem:[%s981] sm:$0xff] %vm980, %v979
  %s983 = scalar_lea.vmem %s0, 261
  %s984 = smov 3
  %v985 = vld [vmem:[%s983] ss:$16 sm:%s984]
  %s986 = scalar_lea.vmem %s0, 261
  %s987 = smov 12
  %v988 = vld [vmem:[%s986] ss:$16 sm:%s987]
  %vm989 = vcmask 1043458
  %v990 = vsel %vm989, %v988, %v985
  %s991 = scalar_lea.vmem %s0, 261
  %s992 = smov 48
  %v993 = vld [vmem:[%s991] ss:$16 sm:%s992]
  %vm994 = vcmask 1045508
  %v995 = vsel %vm994, %v993, %v990
  %s996 = scalar_lea.vmem %s0, 261
  %s997 = smov 192
  %v998 = vld [vmem:[%s996] ss:$16 sm:%s997]
  %vm999 = vcmask 1047558
  %v1000 = vsel %vm999, %v998, %v995
  %1001 = vrot.lane.b32.xlu0 %v1000, 32
  %v1002 = vpop.permute.xlu0 %1001
  %vm1003 = vcmask 523520
  %s1004 = scalar_lea.vmem %s1, 72
  %1005 = vst.msk [vmem:[%s1004] sm:$0xff] %vm1003, %v1002
  %s1006 = scalar_lea.vmem %s0, 389
  %s1007 = smov 3
  %v1008 = vld [vmem:[%s1006] ss:$16 sm:%s1007]
  %s1009 = scalar_lea.vmem %s0, 389
  %s1010 = smov 12
  %v1011 = vld [vmem:[%s1009] ss:$16 sm:%s1010]
  %vm1012 = vcmask 1043458
  %v1013 = vsel %vm1012, %v1011, %v1008
  %s1014 = scalar_lea.vmem %s0, 389
  %s1015 = smov 48
  %v1016 = vld [vmem:[%s1014] ss:$16 sm:%s1015]
  %vm1017 = vcmask 1045508
  %v1018 = vsel %vm1017, %v1016, %v1013
  %s1019 = scalar_lea.vmem %s0, 389
  %s1020 = smov 192
  %v1021 = vld [vmem:[%s1019] ss:$16 sm:%s1020]
  %vm1022 = vcmask 1047558
  %v1023 = vsel %vm1022, %v1021, %v1018
  %1024 = vrot.lane.b32.xlu0 %v1023, 32
  %v1025 = vpop.permute.xlu0 %1024
  %vm1026 = vcmask 523520
  %s1027 = scalar_lea.vmem %s1, 104
  %1028 = vst.msk [vmem:[%s1027] sm:$0xff] %vm1026, %v1025
  %s1029 = scalar_lea.vmem %s0, 9
  %s1030 = smov 3
  %v1031 = vld [vmem:[%s1029] ss:$16 sm:%s1030]
  %s1032 = scalar_lea.vmem %s0, 9
  %s1033 = smov 12
  %v1034 = vld [vmem:[%s1032] ss:$16 sm:%s1033]
  %vm1035 = vcmask 1043458
  %v1036 = vsel %vm1035, %v1034, %v1031
  %s1037 = scalar_lea.vmem %s0, 9
  %s1038 = smov 48
  %v1039 = vld [vmem:[%s1037] ss:$16 sm:%s1038]
  %vm1040 = vcmask 1045508
  %v1041 = vsel %vm1040, %v1039, %v1036
  %s1042 = scalar_lea.vmem %s0, 9
  %s1043 = smov 192
  %v1044 = vld [vmem:[%s1042] ss:$16 sm:%s1043]
  %vm1045 = vcmask 1047558
  %v1046 = vsel %vm1045, %v1044, %v1041
  %1047 = vrot.lane.b32.xlu0 %v1046, 32
  %v1048 = vpop.permute.xlu0 %1047
  %vm1049 = vcmask 523520
  %s1050 = scalar_lea.vmem %s1, 16
  %1051 = vst.msk [vmem:[%s1050] sm:$0xff] %vm1049, %v1048
  %s1052 = scalar_lea.vmem %s0, 137
  %s1053 = smov 3
  %v1054 = vld [vmem:[%s1052] ss:$16 sm:%s1053]
  %s1055 = scalar_lea.vmem %s0, 137
  %s1056 = smov 12
  %v1057 = vld [vmem:[%s1055] ss:$16 sm:%s1056]
  %vm1058 = vcmask 1043458
  %v1059 = vsel %vm1058, %v1057, %v1054
  %s1060 = scalar_lea.vmem %s0, 137
  %s1061 = smov 48
  %v1062 = vld [vmem:[%s1060] ss:$16 sm:%s1061]
  %vm1063 = vcmask 1045508
  %v1064 = vsel %vm1063, %v1062, %v1059
  %s1065 = scalar_lea.vmem %s0, 137
  %s1066 = smov 192
  %v1067 = vld [vmem:[%s1065] ss:$16 sm:%s1066]
  %vm1068 = vcmask 1047558
  %v1069 = vsel %vm1068, %v1067, %v1064
  %1070 = vrot.lane.b32.xlu0 %v1069, 32
  %v1071 = vpop.permute.xlu0 %1070
  %vm1072 = vcmask 523520
  %s1073 = scalar_lea.vmem %s1, 48
  %1074 = vst.msk [vmem:[%s1073] sm:$0xff] %vm1072, %v1071
  %s1075 = scalar_lea.vmem %s0, 265
  %s1076 = smov 3
  %v1077 = vld [vmem:[%s1075] ss:$16 sm:%s1076]
  %s1078 = scalar_lea.vmem %s0, 265
  %s1079 = smov 12
  %v1080 = vld [vmem:[%s1078] ss:$16 sm:%s1079]
  %vm1081 = vcmask 1043458
  %v1082 = vsel %vm1081, %v1080, %v1077
  %s1083 = scalar_lea.vmem %s0, 265
  %s1084 = smov 48
  %v1085 = vld [vmem:[%s1083] ss:$16 sm:%s1084]
  %vm1086 = vcmask 1045508
  %v1087 = vsel %vm1086, %v1085, %v1082
  %s1088 = scalar_lea.vmem %s0, 265
  %s1089 = smov 192
  %v1090 = vld [vmem:[%s1088] ss:$16 sm:%s1089]
  %vm1091 = vcmask 1047558
  %v1092 = vsel %vm1091, %v1090, %v1087
  %1093 = vrot.lane.b32.xlu0 %v1092, 32
  %v1094 = vpop.permute.xlu0 %1093
  %vm1095 = vcmask 523520
  %s1096 = scalar_lea.vmem %s1, 80
  %1097 = vst.msk [vmem:[%s1096] sm:$0xff] %vm1095, %v1094
  %s1098 = scalar_lea.vmem %s0, 393
  %s1099 = smov 3
  %v1100 = vld [vmem:[%s1098] ss:$16 sm:%s1099]
  %s1101 = scalar_lea.vmem %s0, 393
  %s1102 = smov 12
  %v1103 = vld [vmem:[%s1101] ss:$16 sm:%s1102]
  %vm1104 = vcmask 1043458
  %v1105 = vsel %vm1104, %v1103, %v1100
  %s1106 = scalar_lea.vmem %s0, 393
  %s1107 = smov 48
  %v1108 = vld [vmem:[%s1106] ss:$16 sm:%s1107]
  %vm1109 = vcmask 1045508
  %v1110 = vsel %vm1109, %v1108, %v1105
  %s1111 = scalar_lea.vmem %s0, 393
  %s1112 = smov 192
  %v1113 = vld [vmem:[%s1111] ss:$16 sm:%s1112]
  %vm1114 = vcmask 1047558
  %v1115 = vsel %vm1114, %v1113, %v1110
  %1116 = vrot.lane.b32.xlu0 %v1115, 32
  %v1117 = vpop.permute.xlu0 %1116
  %vm1118 = vcmask 523520
  %s1119 = scalar_lea.vmem %s1, 112
  %1120 = vst.msk [vmem:[%s1119] sm:$0xff] %vm1118, %v1117
  %s1121 = scalar_lea.vmem %s0, 13
  %s1122 = smov 3
  %v1123 = vld [vmem:[%s1121] ss:$16 sm:%s1122]
  %s1124 = scalar_lea.vmem %s0, 13
  %s1125 = smov 12
  %v1126 = vld [vmem:[%s1124] ss:$16 sm:%s1125]
  %vm1127 = vcmask 1043458
  %v1128 = vsel %vm1127, %v1126, %v1123
  %s1129 = scalar_lea.vmem %s0, 13
  %s1130 = smov 48
  %v1131 = vld [vmem:[%s1129] ss:$16 sm:%s1130]
  %vm1132 = vcmask 1045508
  %v1133 = vsel %vm1132, %v1131, %v1128
  %s1134 = scalar_lea.vmem %s0, 13
  %s1135 = smov 192
  %v1136 = vld [vmem:[%s1134] ss:$16 sm:%s1135]
  %vm1137 = vcmask 1047558
  %v1138 = vsel %vm1137, %v1136, %v1133
  %1139 = vrot.lane.b32.xlu0 %v1138, 32
  %v1140 = vpop.permute.xlu0 %1139
  %vm1141 = vcmask 523520
  %s1142 = scalar_lea.vmem %s1, 24
  %1143 = vst.msk [vmem:[%s1142] sm:$0xff] %vm1141, %v1140
  %s1144 = scalar_lea.vmem %s0, 141
  %s1145 = smov 3
  %v1146 = vld [vmem:[%s1144] ss:$16 sm:%s1145]
  %s1147 = scalar_lea.vmem %s0, 141
  %s1148 = smov 12
  %v1149 = vld [vmem:[%s1147] ss:$16 sm:%s1148]
  %vm1150 = vcmask 1043458
  %v1151 = vsel %vm1150, %v1149, %v1146
  %s1152 = scalar_lea.vmem %s0, 141
  %s1153 = smov 48
  %v1154 = vld [vmem:[%s1152] ss:$16 sm:%s1153]
  %vm1155 = vcmask 1045508
  %v1156 = vsel %vm1155, %v1154, %v1151
  %s1157 = scalar_lea.vmem %s0, 141
  %s1158 = smov 192
  %v1159 = vld [vmem:[%s1157] ss:$16 sm:%s1158]
  %vm1160 = vcmask 1047558
  %v1161 = vsel %vm1160, %v1159, %v1156
  %1162 = vrot.lane.b32.xlu0 %v1161, 32
  %v1163 = vpop.permute.xlu0 %1162
  %vm1164 = vcmask 523520
  %s1165 = scalar_lea.vmem %s1, 56
  %1166 = vst.msk [vmem:[%s1165] sm:$0xff] %vm1164, %v1163
  %s1167 = scalar_lea.vmem %s0, 269
  %s1168 = smov 3
  %v1169 = vld [vmem:[%s1167] ss:$16 sm:%s1168]
  %s1170 = scalar_lea.vmem %s0, 269
  %s1171 = smov 12
  %v1172 = vld [vmem:[%s1170] ss:$16 sm:%s1171]
  %vm1173 = vcmask 1043458
  %v1174 = vsel %vm1173, %v1172, %v1169
  %s1175 = scalar_lea.vmem %s0, 269
  %s1176 = smov 48
  %v1177 = vld [vmem:[%s1175] ss:$16 sm:%s1176]
  %vm1178 = vcmask 1045508
  %v1179 = vsel %vm1178, %v1177, %v1174
  %s1180 = scalar_lea.vmem %s0, 269
  %s1181 = smov 192
  %v1182 = vld [vmem:[%s1180] ss:$16 sm:%s1181]
  %vm1183 = vcmask 1047558
  %v1184 = vsel %vm1183, %v1182, %v1179
  %1185 = vrot.lane.b32.xlu0 %v1184, 32
  %v1186 = vpop.permute.xlu0 %1185
  %vm1187 = vcmask 523520
  %s1188 = scalar_lea.vmem %s1, 88
  %1189 = vst.msk [vmem:[%s1188] sm:$0xff] %vm1187, %v1186
  %s1190 = scalar_lea.vmem %s0, 397
  %s1191 = smov 3
  %v1192 = vld [vmem:[%s1190] ss:$16 sm:%s1191]
  %s1193 = scalar_lea.vmem %s0, 397
  %s1194 = smov 12
  %v1195 = vld [vmem:[%s1193] ss:$16 sm:%s1194]
  %vm1196 = vcmask 1043458
  %v1197 = vsel %vm1196, %v1195, %v1192
  %s1198 = scalar_lea.vmem %s0, 397
  %s1199 = smov 48
  %v1200 = vld [vmem:[%s1198] ss:$16 sm:%s1199]
  %vm1201 = vcmask 1045508
  %v1202 = vsel %vm1201, %v1200, %v1197
  %s1203 = scalar_lea.vmem %s0, 397
  %s1204 = smov 192
  %v1205 = vld [vmem:[%s1203] ss:$16 sm:%s1204]
  %vm1206 = vcmask 1047558
  %v1207 = vsel %vm1206, %v1205, %v1202
  %1208 = vrot.lane.b32.xlu0 %v1207, 32
  %v1209 = vpop.permute.xlu0 %1208
  %vm1210 = vcmask 523520
  %s1211 = scalar_lea.vmem %s1, 120
  %1212 = vst.msk [vmem:[%s1211] sm:$0xff] %vm1210, %v1209

// kernel: basic_block0.1
$region0: #{basic_block0.1}
  #allocation0 [shape = 'u32[]', space=smem, size = 0x4, offset = 0x4, fixed_abs, tag = 'smem constant byte address 0x4 - core index']
  #allocation1 [shape = 'u32[144,128]{1,0:T(1,128)}', space=vmem, size = 0x12000, scoped, tag = 'internal scratch']
  %s0 = inlined_call_operand.vmem [shape: f32[32,512], index: 0, kind: input, shape index: {}]
  %s1 = inlined_call_operand.vmem [shape: f32[32,32], index: 1, kind: input, shape index: {}]
  %s2 = inlined_call_operand.vmem [shape: f32[32,32], index: 2, kind: input, shape index: {}]
  %s3 = inlined_call_operand.vmem [shape: f32[512,32], index: 3, kind: input, shape index: {}]
  %s4 = inlined_call_operand.vmem [shape: f32[32,512], index: 4, kind: input, shape index: {}]
  %s5 = inlined_call_operand.vmem [shape: bf16[3,512,512], index: 5, kind: input, shape index: {}]
  %s6 = inlined_call_operand.vmem [shape: f32[1,32], index: 6, kind: input, shape index: {}]
  %s7 = inlined_call_operand.vmem [shape: f32[1,32], index: 7, kind: input, shape index: {}]
  %s8 = inlined_call_operand.vmem [shape: bf16[3,512,512], index: 8, kind: input, shape index: {}]
  %s9 = inlined_call_operand.vmem [shape: f32[1,32], index: 9, kind: input, shape index: {}]
  %s10 = inlined_call_operand.vmem [shape: f32[1,32], index: 10, kind: input, shape index: {}]
  %s11 = inlined_call_operand.vmem [shape: f32[32,512], index: 11, kind: output, shape index: {}]
  %s12 = sld [smem:[#allocation0]]
  $region54: #{basic_block0.1} parent=0
    _
  %s14 = ssub.s32 1, %s12
  %s15 = scalar_select 0, %s14, %s12
  // Predicated region
  $region2: #{basic_block0.1} parent=0 // pred_check
    _
  $region3: #{basic_block0.1} parent=0 // pred_check_branch
    %17 = sbr.rel (0) target = $region5
  $region4: #{basic_block0.1} parent=0 // pred_region
    _
  $region5: #{basic_block0.1} parent=0 // pred_fallthru
    _
  // Predicated region
  $region6: #{basic_block0.1} parent=0 // pred_check
    _
  $region7: #{basic_block0.1} parent=0 // pred_check_branch
    %19 = sbr.rel (0) target = $region9
  $region8: #{basic_block0.1} parent=0 // pred_region
    _
  $region9: #{basic_block0.1} parent=0 // pred_fallthru
    _
  // Predicated region
  $region10: #{basic_block0.1} parent=0 // pred_check
    _
  $region11: #{basic_block0.1} parent=0 // pred_check_branch
    %21 = sbr.rel (0) target = $region13
  $region12: #{basic_block0.1} parent=0 // pred_region
    _
  $region13: #{basic_block0.1} parent=0 // pred_fallthru
    _
  // Predicated region
  $region14: #{basic_block0.1} parent=0 // pred_check
    _
  $region15: #{basic_block0.1} parent=0 // pred_check_branch
    %23 = sbr.rel (0) target = $region17
  $region16: #{basic_block0.1} parent=0 // pred_region
    _
  $region17: #{basic_block0.1} parent=0 // pred_fallthru
    _
  // Predicated region
  $region18: #{basic_block0.1} parent=0 // pred_check
    _
  $region19: #{basic_block0.1} parent=0 // pred_check_branch
    %25 = sbr.rel (0) target = $region21
  $region20: #{basic_block0.1} parent=0 // pred_region
    _
  $region21: #{basic_block0.1} parent=0 // pred_fallthru
    _
  // Predicated region
  $region22: #{basic_block0.1} parent=0 // pred_check
    _
  $region23: #{basic_block0.1} parent=0 // pred_check_branch
    %27 = sbr.rel (0) target = $region25
  $region24: #{basic_block0.1} parent=0 // pred_region
    _
  $region25: #{basic_block0.1} parent=0 // pred_fallthru
    _
  // Predicated region
  $region26: #{basic_block0.1} parent=0 // pred_check
    _
  $region27: #{basic_block0.1} parent=0 // pred_check_branch
    %29 = sbr.rel (0) target = $region29
  $region28: #{basic_block0.1} parent=0 // pred_region
    _
  $region29: #{basic_block0.1} parent=0 // pred_fallthru
    _
  // Predicated region
  $region30: #{basic_block0.1} parent=0 // pred_check
    _
  $region31: #{basic_block0.1} parent=0 // pred_check_branch
    %31 = sbr.rel (0) target = $region33
  $region32: #{basic_block0.1} parent=0 // pred_region
    _
  $region33: #{basic_block0.1} parent=0 // pred_fallthru
    _
  // Predicated region
  $region34: #{basic_block0.1} parent=0 // pred_check
    _
  $region35: #{basic_block0.1} parent=0 // pred_check_branch
    %33 = sbr.rel (0) target = $region37
  $region36: #{basic_block0.1} parent=0 // pred_region
    _
  $region37: #{basic_block0.1} parent=0 // pred_fallthru
    _
  // Predicated region
  $region38: #{basic_block0.1} parent=0 // pred_check
    _
  $region39: #{basic_block0.1} parent=0 // pred_check_branch
    %35 = sbr.rel (0) target = $region41
  $region40: #{basic_block0.1} parent=0 // pred_region
    _
  $region41: #{basic_block0.1} parent=0 // pred_fallthru
    _
  // Predicated region
  $region42: #{basic_block0.1} parent=0 // pred_check
    _
  $region43: #{basic_block0.1} parent=0 // pred_check_branch
    %37 = sbr.rel (0) target = $region45
  $region44: #{basic_block0.1} parent=0 // pred_region
    _
  $region45: #{basic_block0.1} parent=0 // pred_fallthru
    _
  %v38 = vld [vmem:[%s0] sm:$0xff]
  %v39 = vld [vmem:[%s0 + $0x8] sm:$0xff]
  %v40 = vld [vmem:[%s0 + $0x10] sm:$0xff]
  %v41 = vld [vmem:[%s0 + $0x18] sm:$0xff]
  %v42 = vld [vmem:[%s0 + $0x20] sm:$0xff]
  %v43 = vld [vmem:[%s0 + $0x28] sm:$0xff]
  %v44 = vld [vmem:[%s0 + $0x30] sm:$0xff]
  %v45 = vld [vmem:[%s0 + $0x38] sm:$0xff]
  %v46 = vld [vmem:[%s0 + $0x40] sm:$0xff]
  %v47 = vld [vmem:[%s0 + $0x48] sm:$0xff]
  %v48 = vld [vmem:[%s0 + $0x50] sm:$0xff]
  %v49 = vld [vmem:[%s0 + $0x58] sm:$0xff]
  %v50 = vld [vmem:[%s0 + $0x60] sm:$0xff]
  %v51 = vld [vmem:[%s0 + $0x68] sm:$0xff]
  %v52 = vld [vmem:[%s0 + $0x70] sm:$0xff]
  %v53 = vld [vmem:[%s0 + $0x78] sm:$0xff]
  %v54 = vld [vmem:[%s1] sm:$0xff]
  %v55 = vld [vmem:[%s1 + $0x8] sm:$0xff]
  %v56 = vld [vmem:[%s1 + $0x10] sm:$0xff]
  %v57 = vld [vmem:[%s1 + $0x18] sm:$0xff]
  %v58 = vld [vmem:[%s2] sm:$0xff]
  %v59 = vld [vmem:[%s2 + $0x8] sm:$0xff]
  %v60 = vld [vmem:[%s2 + $0x10] sm:$0xff]
  %v61 = vld [vmem:[%s2 + $0x18] sm:$0xff]
  %v62 = vld [vmem:[%s3] sm:$0xff]
  %v63 = vld [vmem:[%s3 + $0x8] sm:$0xff]
  %v64 = vld [vmem:[%s3 + $0x10] sm:$0xff]
  %v65 = vld [vmem:[%s3 + $0x18] sm:$0xff]
  %v66 = vld [vmem:[%s3 + $0x20] sm:$0xff]
  %v67 = vld [vmem:[%s3 + $0x28] sm:$0xff]
  %v68 = vld [vmem:[%s3 + $0x30] sm:$0xff]
  %v69 = vld [vmem:[%s3 + $0x38] sm:$0xff]
  %v70 = vld [vmem:[%s3 + $0x40] sm:$0xff]
  %v71 = vld [vmem:[%s3 + $0x48] sm:$0xff]
  %v72 = vld [vmem:[%s3 + $0x50] sm:$0xff]
  %v73 = vld [vmem:[%s3 + $0x58] sm:$0xff]
  %v74 = vld [vmem:[%s3 + $0x60] sm:$0xff]
  %v75 = vld [vmem:[%s3 + $0x68] sm:$0xff]
  %v76 = vld [vmem:[%s3 + $0x70] sm:$0xff]
  %v77 = vld [vmem:[%s3 + $0x78] sm:$0xff]
  %v78 = vld [vmem:[%s3 + $0x80] sm:$0xff]
  %v79 = vld [vmem:[%s3 + $0x88] sm:$0xff]
  %v80 = vld [vmem:[%s3 + $0x90] sm:$0xff]
  %v81 = vld [vmem:[%s3 + $0x98] sm:$0xff]
  %v82 = vld [vmem:[%s3 + $0xa0] sm:$0xff]
  %v83 = vld [vmem:[%s3 + $0xa8] sm:$0xff]
  %v84 = vld [vmem:[%s3 + $0xb0] sm:$0xff]
  %v85 = vld [vmem:[%s3 + $0xb8] sm:$0xff]
  %v86 = vld [vmem:[%s3 + $0xc0] sm:$0xff]
  %v87 = vld [vmem:[%s3 + $0xc8] sm:$0xff]
  %v88 = vld [vmem:[%s3 + $0xd0] sm:$0xff]
  %v89 = vld [vmem:[%s3 + $0xd8] sm:$0xff]
  %v90 = vld [vmem:[%s3 + $0xe0] sm:$0xff]
  %v91 = vld [vmem:[%s3 + $0xe8] sm:$0xff]
  %v92 = vld [vmem:[%s3 + $0xf0] sm:$0xff]
  %v93 = vld [vmem:[%s3 + $0xf8] sm:$0xff]
  %v94 = vld [vmem:[%s3 + $0x100] sm:$0xff]
  %v95 = vld [vmem:[%s3 + $0x108] sm:$0xff]
  %v96 = vld [vmem:[%s3 + $0x110] sm:$0xff]
  %v97 = vld [vmem:[%s3 + $0x118] sm:$0xff]
  %v98 = vld [vmem:[%s3 + $0x120] sm:$0xff]
  %v99 = vld [vmem:[%s3 + $0x128] sm:$0xff]
  %v100 = vld [vmem:[%s3 + $0x130] sm:$0xff]
  %v101 = vld [vmem:[%s3 + $0x138] sm:$0xff]
  %v102 = vld [vmem:[%s3 + $0x140] sm:$0xff]
  %v103 = vld [vmem:[%s3 + $0x148] sm:$0xff]
  %v104 = vld [vmem:[%s3 + $0x150] sm:$0xff]
  %v105 = vld [vmem:[%s3 + $0x158] sm:$0xff]
  %v106 = vld [vmem:[%s3 + $0x160] sm:$0xff]
  %v107 = vld [vmem:[%s3 + $0x168] sm:$0xff]
  %v108 = vld [vmem:[%s3 + $0x170] sm:$0xff]
  %v109 = vld [vmem:[%s3 + $0x178] sm:$0xff]
  %v110 = vld [vmem:[%s3 + $0x180] sm:$0xff]
  %v111 = vld [vmem:[%s3 + $0x188] sm:$0xff]
  %v112 = vld [vmem:[%s3 + $0x190] sm:$0xff]
  %v113 = vld [vmem:[%s3 + $0x198] sm:$0xff]
  %v114 = vld [vmem:[%s3 + $0x1a0] sm:$0xff]
  %v115 = vld [vmem:[%s3 + $0x1a8] sm:$0xff]
  %v116 = vld [vmem:[%s3 + $0x1b0] sm:$0xff]
  %v117 = vld [vmem:[%s3 + $0x1b8] sm:$0xff]
  %v118 = vld [vmem:[%s3 + $0x1c0] sm:$0xff]
  %v119 = vld [vmem:[%s3 + $0x1c8] sm:$0xff]
  %v120 = vld [vmem:[%s3 + $0x1d0] sm:$0xff]
  %v121 = vld [vmem:[%s3 + $0x1d8] sm:$0xff]
  %v122 = vld [vmem:[%s3 + $0x1e0] sm:$0xff]
  %v123 = vld [vmem:[%s3 + $0x1e8] sm:$0xff]
  %v124 = vld [vmem:[%s3 + $0x1f0] sm:$0xff]
  %v125 = vld [vmem:[%s3 + $0x1f8] sm:$0xff]
  %v126 = vld [vmem:[%s4] sm:$0xff]
  %v127 = vld [vmem:[%s4 + $0x8] sm:$0xff]
  %v128 = vld [vmem:[%s4 + $0x10] sm:$0xff]
  %v129 = vld [vmem:[%s4 + $0x18] sm:$0xff]
  %v130 = vld [vmem:[%s4 + $0x20] sm:$0xff]
  %v131 = vld [vmem:[%s4 + $0x28] sm:$0xff]
  %v132 = vld [vmem:[%s4 + $0x30] sm:$0xff]
  %v133 = vld [vmem:[%s4 + $0x38] sm:$0xff]
  %v134 = vld [vmem:[%s4 + $0x40] sm:$0xff]
  %v135 = vld [vmem:[%s4 + $0x48] sm:$0xff]
  %v136 = vld [vmem:[%s4 + $0x50] sm:$0xff]
  %v137 = vld [vmem:[%s4 + $0x58] sm:$0xff]
  %v138 = vld [vmem:[%s4 + $0x60] sm:$0xff]
  %v139 = vld [vmem:[%s4 + $0x68] sm:$0xff]
  %v140 = vld [vmem:[%s4 + $0x70] sm:$0xff]
  %v141 = vld [vmem:[%s4 + $0x78] sm:$0xff]
  %v142 = vpack.c.bf16 %v42, %v38
  %v143 = vpack.c.bf16 %v43, %v39
  %v144 = vpack.c.bf16 %v44, %v40
  %v145 = vpack.c.bf16 %v45, %v41
  %v146 = vpack.c.bf16 %v50, %v46
  %v147 = vpack.c.bf16 %v51, %v47
  %v148 = vpack.c.bf16 %v52, %v48
  %v149 = vpack.c.bf16 %v53, %v49
  %v150 = vld [vmem:[%s5] sm:$0xff]
  %v151 = vld [vmem:[%s5 + $0x8] sm:$0xff]
  %v152 = vld [vmem:[%s5 + $0x10] sm:$0xff]
  %v153 = vld [vmem:[%s5 + $0x18] sm:$0xff]
  %v154 = vld [vmem:[%s5 + $0x20] sm:$0xff]
  %v155 = vld [vmem:[%s5 + $0x28] sm:$0xff]
  %v156 = vld [vmem:[%s5 + $0x30] sm:$0xff]
  %v157 = vld [vmem:[%s5 + $0x38] sm:$0xff]
  %v158 = vld [vmem:[%s5 + $0x40] sm:$0xff]
  %v159 = vld [vmem:[%s5 + $0x48] sm:$0xff]
  %v160 = vld [vmem:[%s5 + $0x50] sm:$0xff]
  %v161 = vld [vmem:[%s5 + $0x58] sm:$0xff]
  %v162 = vld [vmem:[%s5 + $0x60] sm:$0xff]
  %v163 = vld [vmem:[%s5 + $0x68] sm:$0xff]
  %v164 = vld [vmem:[%s5 + $0x70] sm:$0xff]
  %v165 = vld [vmem:[%s5 + $0x78] sm:$0xff]
  %v166 = vld [vmem:[%s5 + $0x80] sm:$0xff]
  %v167 = vld [vmem:[%s5 + $0x88] sm:$0xff]
  %v168 = vld [vmem:[%s5 + $0x90] sm:$0xff]
  %v169 = vld [vmem:[%s5 + $0x98] sm:$0xff]
  %v170 = vld [vmem:[%s5 + $0xa0] sm:$0xff]
  %v171 = vld [vmem:[%s5 + $0xa8] sm:$0xff]
  %v172 = vld [vmem:[%s5 + $0xb0] sm:$0xff]
  %v173 = vld [vmem:[%s5 + $0xb8] sm:$0xff]
  %v174 = vld [vmem:[%s5 + $0xc0] sm:$0xff]
  %v175 = vld [vmem:[%s5 + $0xc8] sm:$0xff]
  %v176 = vld [vmem:[%s5 + $0xd0] sm:$0xff]
  %v177 = vld [vmem:[%s5 + $0xd8] sm:$0xff]
  %v178 = vld [vmem:[%s5 + $0xe0] sm:$0xff]
  %v179 = vld [vmem:[%s5 + $0xe8] sm:$0xff]
  %v180 = vld [vmem:[%s5 + $0xf0] sm:$0xff]
  %v181 = vld [vmem:[%s5 + $0xf8] sm:$0xff]
  %v182 = vld [vmem:[%s5 + $0x100] sm:$0xff]
  %v183 = vld [vmem:[%s5 + $0x108] sm:$0xff]
  %v184 = vld [vmem:[%s5 + $0x110] sm:$0xff]
  %v185 = vld [vmem:[%s5 + $0x118] sm:$0xff]
  %v186 = vld [vmem:[%s5 + $0x120] sm:$0xff]
  %v187 = vld [vmem:[%s5 + $0x128] sm:$0xff]
  %v188 = vld [vmem:[%s5 + $0x130] sm:$0xff]
  %v189 = vld [vmem:[%s5 + $0x138] sm:$0xff]
  %v190 = vld [vmem:[%s5 + $0x140] sm:$0xff]
  %v191 = vld [vmem:[%s5 + $0x148] sm:$0xff]
  %v192 = vld [vmem:[%s5 + $0x150] sm:$0xff]
  %v193 = vld [vmem:[%s5 + $0x158] sm:$0xff]
  %v194 = vld [vmem:[%s5 + $0x160] sm:$0xff]
  %v195 = vld [vmem:[%s5 + $0x168] sm:$0xff]
  %v196 = vld [vmem:[%s5 + $0x170] sm:$0xff]
  %v197 = vld [vmem:[%s5 + $0x178] sm:$0xff]
  %v198 = vld [vmem:[%s5 + $0x180] sm:$0xff]
  %v199 = vld [vmem:[%s5 + $0x188] sm:$0xff]
  %v200 = vld [vmem:[%s5 + $0x190] sm:$0xff]
  %v201 = vld [vmem:[%s5 + $0x198] sm:$0xff]
  %v202 = vld [vmem:[%s5 + $0x1a0] sm:$0xff]
  %v203 = vld [vmem:[%s5 + $0x1a8] sm:$0xff]
  %v204 = vld [vmem:[%s5 + $0x1b0] sm:$0xff]
  %v205 = vld [vmem:[%s5 + $0x1b8] sm:$0xff]
  %v206 = vld [vmem:[%s5 + $0x1c0] sm:$0xff]
  %v207 = vld [vmem:[%s5 + $0x1c8] sm:$0xff]
  %v208 = vld [vmem:[%s5 + $0x1d0] sm:$0xff]
  %v209 = vld [vmem:[%s5 + $0x1d8] sm:$0xff]
  %v210 = vld [vmem:[%s5 + $0x1e0] sm:$0xff]
  %v211 = vld [vmem:[%s5 + $0x1e8] sm:$0xff]
  %v212 = vld [vmem:[%s5 + $0x1f0] sm:$0xff]
  %v213 = vld [vmem:[%s5 + $0x1f8] sm:$0xff]
  %v214 = vld [vmem:[%s5 + $0x200] sm:$0xff]
  %v215 = vld [vmem:[%s5 + $0x208] sm:$0xff]
  %v216 = vld [vmem:[%s5 + $0x210] sm:$0xff]
  %v217 = vld [vmem:[%s5 + $0x218] sm:$0xff]
  %v218 = vld [vmem:[%s5 + $0x220] sm:$0xff]
  %v219 = vld [vmem:[%s5 + $0x228] sm:$0xff]
  %v220 = vld [vmem:[%s5 + $0x230] sm:$0xff]
  %v221 = vld [vmem:[%s5 + $0x238] sm:$0xff]
  %v222 = vld [vmem:[%s5 + $0x240] sm:$0xff]
  %v223 = vld [vmem:[%s5 + $0x248] sm:$0xff]
  %v224 = vld [vmem:[%s5 + $0x250] sm:$0xff]
  %v225 = vld [vmem:[%s5 + $0x258] sm:$0xff]
  %v226 = vld [vmem:[%s5 + $0x260] sm:$0xff]
  %v227 = vld [vmem:[%s5 + $0x268] sm:$0xff]
  %v228 = vld [vmem:[%s5 + $0x270] sm:$0xff]
  %v229 = vld [vmem:[%s5 + $0x278] sm:$0xff]
  %v230 = vld [vmem:[%s5 + $0x280] sm:$0xff]
  %v231 = vld [vmem:[%s5 + $0x288] sm:$0xff]
  %v232 = vld [vmem:[%s5 + $0x290] sm:$0xff]
  %v233 = vld [vmem:[%s5 + $0x298] sm:$0xff]
  %v234 = vld [vmem:[%s5 + $0x2a0] sm:$0xff]
  %v235 = vld [vmem:[%s5 + $0x2a8] sm:$0xff]
  %v236 = vld [vmem:[%s5 + $0x2b0] sm:$0xff]
  %v237 = vld [vmem:[%s5 + $0x2b8] sm:$0xff]
  %v238 = vld [vmem:[%s5 + $0x2c0] sm:$0xff]
  %v239 = vld [vmem:[%s5 + $0x2c8] sm:$0xff]
  %v240 = vld [vmem:[%s5 + $0x2d0] sm:$0xff]
  %v241 = vld [vmem:[%s5 + $0x2d8] sm:$0xff]
  %v242 = vld [vmem:[%s5 + $0x2e0] sm:$0xff]
  %v243 = vld [vmem:[%s5 + $0x2e8] sm:$0xff]
  %v244 = vld [vmem:[%s5 + $0x2f0] sm:$0xff]
  %v245 = vld [vmem:[%s5 + $0x2f8] sm:$0xff]
  %v246 = vld [vmem:[%s5 + $0x300] sm:$0xff]
  %v247 = vld [vmem:[%s5 + $0x308] sm:$0xff]
  %v248 = vld [vmem:[%s5 + $0x310] sm:$0xff]
  %v249 = vld [vmem:[%s5 + $0x318] sm:$0xff]
  %v250 = vld [vmem:[%s5 + $0x320] sm:$0xff]
  %v251 = vld [vmem:[%s5 + $0x328] sm:$0xff]
  %v252 = vld [vmem:[%s5 + $0x330] sm:$0xff]
  %v253 = vld [vmem:[%s5 + $0x338] sm:$0xff]
  %v254 = vld [vmem:[%s5 + $0x340] sm:$0xff]
  %v255 = vld [vmem:[%s5 + $0x348] sm:$0xff]
  %v256 = vld [vmem:[%s5 + $0x350] sm:$0xff]
  %v257 = vld [vmem:[%s5 + $0x358] sm:$0xff]
  %v258 = vld [vmem:[%s5 + $0x360] sm:$0xff]
  %v259 = vld [vmem:[%s5 + $0x368] sm:$0xff]
  %v260 = vld [vmem:[%s5 + $0x370] sm:$0xff]
  %v261 = vld [vmem:[%s5 + $0x378] sm:$0xff]
  %v262 = vld [vmem:[%s5 + $0x380] sm:$0xff]
  %v263 = vld [vmem:[%s5 + $0x388] sm:$0xff]
  %v264 = vld [vmem:[%s5 + $0x390] sm:$0xff]
  %v265 = vld [vmem:[%s5 + $0x398] sm:$0xff]
  %v266 = vld [vmem:[%s5 + $0x3a0] sm:$0xff]
  %v267 = vld [vmem:[%s5 + $0x3a8] sm:$0xff]
  %v268 = vld [vmem:[%s5 + $0x3b0] sm:$0xff]
  %v269 = vld [vmem:[%s5 + $0x3b8] sm:$0xff]
  %v270 = vld [vmem:[%s5 + $0x3c0] sm:$0xff]
  %v271 = vld [vmem:[%s5 + $0x3c8] sm:$0xff]
  %v272 = vld [vmem:[%s5 + $0x3d0] sm:$0xff]
  %v273 = vld [vmem:[%s5 + $0x3d8] sm:$0xff]
  %v274 = vld [vmem:[%s5 + $0x3e0] sm:$0xff]
  %v275 = vld [vmem:[%s5 + $0x3e8] sm:$0xff]
  %v276 = vld [vmem:[%s5 + $0x3f0] sm:$0xff]
  %v277 = vld [vmem:[%s5 + $0x3f8] sm:$0xff]
  %v406 = vunpack.c.l.b16 %v150
  %v407 = vunpack.c.h.b16 %v150
  %v408 = vunpack.c.l.b16 %v151
  %v409 = vunpack.c.h.b16 %v151
  %v410 = vunpack.c.l.b16 %v152
  %v411 = vunpack.c.h.b16 %v152
  %v412 = vunpack.c.l.b16 %v153
  %v413 = vunpack.c.h.b16 %v153
  %v414 = vunpack.c.l.b16 %v154
  %v415 = vunpack.c.h.b16 %v154
  %v416 = vunpack.c.l.b16 %v155
  %v417 = vunpack.c.h.b16 %v155
  %v418 = vunpack.c.l.b16 %v156
  %v419 = vunpack.c.h.b16 %v156
  %v420 = vunpack.c.l.b16 %v157
  %v421 = vunpack.c.h.b16 %v157
  %v422 = vunpack.c.l.b16 %v158
  %v423 = vunpack.c.h.b16 %v158
  %v424 = vunpack.c.l.b16 %v159
  %v425 = vunpack.c.h.b16 %v159
  %v426 = vunpack.c.l.b16 %v160
  %v427 = vunpack.c.h.b16 %v160
  %v428 = vunpack.c.l.b16 %v161
  %v429 = vunpack.c.h.b16 %v161
  %v430 = vunpack.c.l.b16 %v162
  %v431 = vunpack.c.h.b16 %v162
  %v432 = vunpack.c.l.b16 %v163
  %v433 = vunpack.c.h.b16 %v163
  %v434 = vunpack.c.l.b16 %v164
  %v435 = vunpack.c.h.b16 %v164
  %v436 = vunpack.c.l.b16 %v165
  %v437 = vunpack.c.h.b16 %v165
  %v438 = vunpack.c.l.b16 %v166
  %v439 = vunpack.c.h.b16 %v166
  %v440 = vunpack.c.l.b16 %v167
  %v441 = vunpack.c.h.b16 %v167
  %v442 = vunpack.c.l.b16 %v168
  %v443 = vunpack.c.h.b16 %v168
  %v444 = vunpack.c.l.b16 %v169
  %v445 = vunpack.c.h.b16 %v169
  %v446 = vunpack.c.l.b16 %v170
  %v447 = vunpack.c.h.b16 %v170
  %v448 = vunpack.c.l.b16 %v171
  %v449 = vunpack.c.h.b16 %v171
  %v450 = vunpack.c.l.b16 %v172
  %v451 = vunpack.c.h.b16 %v172
  %v452 = vunpack.c.l.b16 %v173
  %v453 = vunpack.c.h.b16 %v173
  %v454 = vunpack.c.l.b16 %v174
  %v455 = vunpack.c.h.b16 %v174
  %v456 = vunpack.c.l.b16 %v175
  %v457 = vunpack.c.h.b16 %v175
  %v458 = vunpack.c.l.b16 %v176
  %v459 = vunpack.c.h.b16 %v176
  %v460 = vunpack.c.l.b16 %v177
  %v461 = vunpack.c.h.b16 %v177
  %v462 = vunpack.c.l.b16 %v178
  %v463 = vunpack.c.h.b16 %v178
  %v464 = vunpack.c.l.b16 %v179
  %v465 = vunpack.c.h.b16 %v179
  %v466 = vunpack.c.l.b16 %v180
  %v467 = vunpack.c.h.b16 %v180
  %v468 = vunpack.c.l.b16 %v181
  %v469 = vunpack.c.h.b16 %v181
  %v470 = vunpack.c.l.b16 %v182
  %v471 = vunpack.c.h.b16 %v182
  %v472 = vunpack.c.l.b16 %v183
  %v473 = vunpack.c.h.b16 %v183
  %v474 = vunpack.c.l.b16 %v184
  %v475 = vunpack.c.h.b16 %v184
  %v476 = vunpack.c.l.b16 %v185
  %v477 = vunpack.c.h.b16 %v185
  %v478 = vunpack.c.l.b16 %v186
  %v479 = vunpack.c.h.b16 %v186
  %v480 = vunpack.c.l.b16 %v187
  %v481 = vunpack.c.h.b16 %v187
  %v482 = vunpack.c.l.b16 %v188
  %v483 = vunpack.c.h.b16 %v188
  %v484 = vunpack.c.l.b16 %v189
  %v485 = vunpack.c.h.b16 %v189
  %v486 = vunpack.c.l.b16 %v190
  %v487 = vunpack.c.h.b16 %v190
  %v488 = vunpack.c.l.b16 %v191
  %v489 = vunpack.c.h.b16 %v191
  %v490 = vunpack.c.l.b16 %v192
  %v491 = vunpack.c.h.b16 %v192
  %v492 = vunpack.c.l.b16 %v193
  %v493 = vunpack.c.h.b16 %v193
  %v494 = vunpack.c.l.b16 %v194
  %v495 = vunpack.c.h.b16 %v194
  %v496 = vunpack.c.l.b16 %v195
  %v497 = vunpack.c.h.b16 %v195
  %v498 = vunpack.c.l.b16 %v196
  %v499 = vunpack.c.h.b16 %v196
  %v500 = vunpack.c.l.b16 %v197
  %v501 = vunpack.c.h.b16 %v197
  %v502 = vunpack.c.l.b16 %v198
  %v503 = vunpack.c.h.b16 %v198
  %v504 = vunpack.c.l.b16 %v199
  %v505 = vunpack.c.h.b16 %v199
  %v506 = vunpack.c.l.b16 %v200
  %v507 = vunpack.c.h.b16 %v200
  %v508 = vunpack.c.l.b16 %v201
  %v509 = vunpack.c.h.b16 %v201
  %v510 = vunpack.c.l.b16 %v202
  %v511 = vunpack.c.h.b16 %v202
  %v512 = vunpack.c.l.b16 %v203
  %v513 = vunpack.c.h.b16 %v203
  %v514 = vunpack.c.l.b16 %v204
  %v515 = vunpack.c.h.b16 %v204
  %v516 = vunpack.c.l.b16 %v205
  %v517 = vunpack.c.h.b16 %v205
  %v518 = vunpack.c.l.b16 %v206
  %v519 = vunpack.c.h.b16 %v206
  %v520 = vunpack.c.l.b16 %v207
  %v521 = vunpack.c.h.b16 %v207
  %v522 = vunpack.c.l.b16 %v208
  %v523 = vunpack.c.h.b16 %v208
  %v524 = vunpack.c.l.b16 %v209
  %v525 = vunpack.c.h.b16 %v209
  %v526 = vunpack.c.l.b16 %v210
  %v527 = vunpack.c.h.b16 %v210
  %v528 = vunpack.c.l.b16 %v211
  %v529 = vunpack.c.h.b16 %v211
  %v530 = vunpack.c.l.b16 %v212
  %v531 = vunpack.c.h.b16 %v212
  %v532 = vunpack.c.l.b16 %v213
  %v533 = vunpack.c.h.b16 %v213
  %v534 = vunpack.c.l.b16 %v214
  %v535 = vunpack.c.h.b16 %v214
  %v536 = vunpack.c.l.b16 %v215
  %v537 = vunpack.c.h.b16 %v215
  %v538 = vunpack.c.l.b16 %v216
  %v539 = vunpack.c.h.b16 %v216
  %v540 = vunpack.c.l.b16 %v217
  %v541 = vunpack.c.h.b16 %v217
  %v542 = vunpack.c.l.b16 %v218
  %v543 = vunpack.c.h.b16 %v218
  %v544 = vunpack.c.l.b16 %v219
  %v545 = vunpack.c.h.b16 %v219
  %v546 = vunpack.c.l.b16 %v220
  %v547 = vunpack.c.h.b16 %v220
  %v548 = vunpack.c.l.b16 %v221
  %v549 = vunpack.c.h.b16 %v221
  %v550 = vunpack.c.l.b16 %v222
  %v551 = vunpack.c.h.b16 %v222
  %v552 = vunpack.c.l.b16 %v223
  %v553 = vunpack.c.h.b16 %v223
  %v554 = vunpack.c.l.b16 %v224
  %v555 = vunpack.c.h.b16 %v224
  %v556 = vunpack.c.l.b16 %v225
  %v557 = vunpack.c.h.b16 %v225
  %v558 = vunpack.c.l.b16 %v226
  %v559 = vunpack.c.h.b16 %v226
  %v560 = vunpack.c.l.b16 %v227
  %v561 = vunpack.c.h.b16 %v227
  %v562 = vunpack.c.l.b16 %v228
  %v563 = vunpack.c.h.b16 %v228
  %v564 = vunpack.c.l.b16 %v229
  %v565 = vunpack.c.h.b16 %v229
  %v566 = vunpack.c.l.b16 %v230
  %v567 = vunpack.c.h.b16 %v230
  %v568 = vunpack.c.l.b16 %v231
  %v569 = vunpack.c.h.b16 %v231
  %v570 = vunpack.c.l.b16 %v232
  %v571 = vunpack.c.h.b16 %v232
  %v572 = vunpack.c.l.b16 %v233
  %v573 = vunpack.c.h.b16 %v233
  %v574 = vunpack.c.l.b16 %v234
  %v575 = vunpack.c.h.b16 %v234
  %v576 = vunpack.c.l.b16 %v235
  %v577 = vunpack.c.h.b16 %v235
  %v578 = vunpack.c.l.b16 %v236
  %v579 = vunpack.c.h.b16 %v236
  %v580 = vunpack.c.l.b16 %v237
  %v581 = vunpack.c.h.b16 %v237
  %v582 = vunpack.c.l.b16 %v238
  %v583 = vunpack.c.h.b16 %v238
  %v584 = vunpack.c.l.b16 %v239
  %v585 = vunpack.c.h.b16 %v239
  %v586 = vunpack.c.l.b16 %v240
  %v587 = vunpack.c.h.b16 %v240
  %v588 = vunpack.c.l.b16 %v241
  %v589 = vunpack.c.h.b16 %v241
  %v590 = vunpack.c.l.b16 %v242
  %v591 = vunpack.c.h.b16 %v242
  %v592 = vunpack.c.l.b16 %v243
  %v593 = vunpack.c.h.b16 %v243
  %v594 = vunpack.c.l.b16 %v244
  %v595 = vunpack.c.h.b16 %v244
  %v596 = vunpack.c.l.b16 %v245
  %v597 = vunpack.c.h.b16 %v245
  %v598 = vunpack.c.l.b16 %v246
  %v599 = vunpack.c.h.b16 %v246
  %v600 = vunpack.c.l.b16 %v247
  %v601 = vunpack.c.h.b16 %v247
  %v602 = vunpack.c.l.b16 %v248
  %v603 = vunpack.c.h.b16 %v248
  %v604 = vunpack.c.l.b16 %v249
  %v605 = vunpack.c.h.b16 %v249
  %v606 = vunpack.c.l.b16 %v250
  %v607 = vunpack.c.h.b16 %v250
  %v608 = vunpack.c.l.b16 %v251
  %v609 = vunpack.c.h.b16 %v251
  %v610 = vunpack.c.l.b16 %v252
  %v611 = vunpack.c.h.b16 %v252
  %v612 = vunpack.c.l.b16 %v253
  %v613 = vunpack.c.h.b16 %v253
  %v614 = vunpack.c.l.b16 %v254
  %v615 = vunpack.c.h.b16 %v254
  %v616 = vunpack.c.l.b16 %v255
  %v617 = vunpack.c.h.b16 %v255
  %v618 = vunpack.c.l.b16 %v256
  %v619 = vunpack.c.h.b16 %v256
  %v620 = vunpack.c.l.b16 %v257
  %v621 = vunpack.c.h.b16 %v257
  %v622 = vunpack.c.l.b16 %v258
  %v623 = vunpack.c.h.b16 %v258
  %v624 = vunpack.c.l.b16 %v259
  %v625 = vunpack.c.h.b16 %v259
  %v626 = vunpack.c.l.b16 %v260
  %v627 = vunpack.c.h.b16 %v260
  %v628 = vunpack.c.l.b16 %v261
  %v629 = vunpack.c.h.b16 %v261
  %v630 = vunpack.c.l.b16 %v262
  %v631 = vunpack.c.h.b16 %v262
  %v632 = vunpack.c.l.b16 %v263
  %v633 = vunpack.c.h.b16 %v263
  %v634 = vunpack.c.l.b16 %v264
  %v635 = vunpack.c.h.b16 %v264
  %v636 = vunpack.c.l.b16 %v265
  %v637 = vunpack.c.h.b16 %v265
  %v638 = vunpack.c.l.b16 %v266
  %v639 = vunpack.c.h.b16 %v266
  %v640 = vunpack.c.l.b16 %v267
  %v641 = vunpack.c.h.b16 %v267
  %v642 = vunpack.c.l.b16 %v268
  %v643 = vunpack.c.h.b16 %v268
  %v644 = vunpack.c.l.b16 %v269
  %v645 = vunpack.c.h.b16 %v269
  %v646 = vunpack.c.l.b16 %v270
  %v647 = vunpack.c.h.b16 %v270
  %v648 = vunpack.c.l.b16 %v271
  %v649 = vunpack.c.h.b16 %v271
  %v650 = vunpack.c.l.b16 %v272
  %v651 = vunpack.c.h.b16 %v272
  %v652 = vunpack.c.l.b16 %v273
  %v653 = vunpack.c.h.b16 %v273
  %v654 = vunpack.c.l.b16 %v274
  %v655 = vunpack.c.h.b16 %v274
  %v656 = vunpack.c.l.b16 %v275
  %v657 = vunpack.c.h.b16 %v275
  %v658 = vunpack.c.l.b16 %v276
  %v659 = vunpack.c.h.b16 %v276
  %v660 = vunpack.c.l.b16 %v277
  %v661 = vunpack.c.h.b16 %v277
  %v662 = vpack.c.b16 %v410, %v406
  %v663 = vpack.c.b16 %v411, %v407
  %v664 = vpack.c.b16 %v412, %v408
  %v665 = vpack.c.b16 %v413, %v409
  %v666 = vpack.c.b16 %v418, %v414
  %v667 = vpack.c.b16 %v419, %v415
  %v668 = vpack.c.b16 %v420, %v416
  %v669 = vpack.c.b16 %v421, %v417
  %v670 = vpack.c.b16 %v426, %v422
  %v671 = vpack.c.b16 %v427, %v423
  %v672 = vpack.c.b16 %v428, %v424
  %v673 = vpack.c.b16 %v429, %v425
  %v674 = vpack.c.b16 %v434, %v430
  %v675 = vpack.c.b16 %v435, %v431
  %v676 = vpack.c.b16 %v436, %v432
  %v677 = vpack.c.b16 %v437, %v433
  %v678 = vpack.c.b16 %v442, %v438
  %v679 = vpack.c.b16 %v443, %v439
  %v680 = vpack.c.b16 %v444, %v440
  %v681 = vpack.c.b16 %v445, %v441
  %v682 = vpack.c.b16 %v450, %v446
  %v683 = vpack.c.b16 %v451, %v447
  %v684 = vpack.c.b16 %v452, %v448
  %v685 = vpack.c.b16 %v453, %v449
  %v686 = vpack.c.b16 %v458, %v454
  %v687 = vpack.c.b16 %v459, %v455
  %v688 = vpack.c.b16 %v460, %v456
  %v689 = vpack.c.b16 %v461, %v457
  %v690 = vpack.c.b16 %v466, %v462
  %v691 = vpack.c.b16 %v467, %v463
  %v692 = vpack.c.b16 %v468, %v464
  %v693 = vpack.c.b16 %v469, %v465
  %v694 = vpack.c.b16 %v474, %v470
  %v695 = vpack.c.b16 %v475, %v471
  %v696 = vpack.c.b16 %v476, %v472
  %v697 = vpack.c.b16 %v477, %v473
  %v698 = vpack.c.b16 %v482, %v478
  %v699 = vpack.c.b16 %v483, %v479
  %v700 = vpack.c.b16 %v484, %v480
  %v701 = vpack.c.b16 %v485, %v481
  %v702 = vpack.c.b16 %v490, %v486
  %v703 = vpack.c.b16 %v491, %v487
  %v704 = vpack.c.b16 %v492, %v488
  %v705 = vpack.c.b16 %v493, %v489
  %v706 = vpack.c.b16 %v498, %v494
  %v707 = vpack.c.b16 %v499, %v495
  %v708 = vpack.c.b16 %v500, %v496
  %v709 = vpack.c.b16 %v501, %v497
  %v710 = vpack.c.b16 %v506, %v502
  %v711 = vpack.c.b16 %v507, %v503
  %v712 = vpack.c.b16 %v508, %v504
  %v713 = vpack.c.b16 %v509, %v505
  %v714 = vpack.c.b16 %v514, %v510
  %v715 = vpack.c.b16 %v515, %v511
  %v716 = vpack.c.b16 %v516, %v512
  %v717 = vpack.c.b16 %v517, %v513
  %v718 = vpack.c.b16 %v522, %v518
  %v719 = vpack.c.b16 %v523, %v519
  %v720 = vpack.c.b16 %v524, %v520
  %v721 = vpack.c.b16 %v525, %v521
  %v722 = vpack.c.b16 %v530, %v526
  %v723 = vpack.c.b16 %v531, %v527
  %v724 = vpack.c.b16 %v532, %v528
  %v725 = vpack.c.b16 %v533, %v529
  %v726 = vpack.c.b16 %v538, %v534
  %v727 = vpack.c.b16 %v539, %v535
  %v728 = vpack.c.b16 %v540, %v536
  %v729 = vpack.c.b16 %v541, %v537
  %v730 = vpack.c.b16 %v546, %v542
  %v731 = vpack.c.b16 %v547, %v543
  %v732 = vpack.c.b16 %v548, %v544
  %v733 = vpack.c.b16 %v549, %v545
  %v734 = vpack.c.b16 %v554, %v550
  %v735 = vpack.c.b16 %v555, %v551
  %v736 = vpack.c.b16 %v556, %v552
  %v737 = vpack.c.b16 %v557, %v553
  %v738 = vpack.c.b16 %v562, %v558
  %v739 = vpack.c.b16 %v563, %v559
  %v740 = vpack.c.b16 %v564, %v560
  %v741 = vpack.c.b16 %v565, %v561
  %v742 = vpack.c.b16 %v570, %v566
  %v743 = vpack.c.b16 %v571, %v567
  %v744 = vpack.c.b16 %v572, %v568
  %v745 = vpack.c.b16 %v573, %v569
  %v746 = vpack.c.b16 %v578, %v574
  %v747 = vpack.c.b16 %v579, %v575
  %v748 = vpack.c.b16 %v580, %v576
  %v749 = vpack.c.b16 %v581, %v577
  %v750 = vpack.c.b16 %v586, %v582
  %v751 = vpack.c.b16 %v587, %v583
  %v752 = vpack.c.b16 %v588, %v584
  %v753 = vpack.c.b16 %v589, %v585
  %v754 = vpack.c.b16 %v594, %v590
  %v755 = vpack.c.b16 %v595, %v591
  %v756 = vpack.c.b16 %v596, %v592
  %v757 = vpack.c.b16 %v597, %v593
  %v758 = vpack.c.b16 %v602, %v598
  %v759 = vpack.c.b16 %v603, %v599
  %v760 = vpack.c.b16 %v604, %v600
  %v761 = vpack.c.b16 %v605, %v601
  %v762 = vpack.c.b16 %v610, %v606
  %v763 = vpack.c.b16 %v611, %v607
  %v764 = vpack.c.b16 %v612, %v608
  %v765 = vpack.c.b16 %v613, %v609
  %v766 = vpack.c.b16 %v618, %v614
  %v767 = vpack.c.b16 %v619, %v615
  %v768 = vpack.c.b16 %v620, %v616
  %v769 = vpack.c.b16 %v621, %v617
  %v770 = vpack.c.b16 %v626, %v622
  %v771 = vpack.c.b16 %v627, %v623
  %v772 = vpack.c.b16 %v628, %v624
  %v773 = vpack.c.b16 %v629, %v625
  %v774 = vpack.c.b16 %v634, %v630
  %v775 = vpack.c.b16 %v635, %v631
  %v776 = vpack.c.b16 %v636, %v632
  %v777 = vpack.c.b16 %v637, %v633
  %v778 = vpack.c.b16 %v642, %v638
  %v779 = vpack.c.b16 %v643, %v639
  %v780 = vpack.c.b16 %v644, %v640
  %v781 = vpack.c.b16 %v645, %v641
  %v782 = vpack.c.b16 %v650, %v646
  %v783 = vpack.c.b16 %v651, %v647
  %v784 = vpack.c.b16 %v652, %v648
  %v785 = vpack.c.b16 %v653, %v649
  %v786 = vpack.c.b16 %v658, %v654
  %v787 = vpack.c.b16 %v659, %v655
  %v788 = vpack.c.b16 %v660, %v656
  %v789 = vpack.c.b16 %v661, %v657
  %918 = vmatprep.subr.bf16.mxu0 %v663
  %919 = vmatpush1.bf16.msra.mxu0 %v662
  %920 = vmatprep.subr.bf16.mxu0 %v667
  %921 = vmatpush1.bf16.msra.mxu0 %v666
  %922 = vmatprep.subr.bf16.mxu0 %v671
  %923 = vmatpush1.bf16.msra.mxu0 %v670
  %924 = vmatprep.subr.bf16.mxu0 %v675
  %925 = vmatpush1.bf16.msra.mxu0 %v674
  %926 = vmatprep.subr.bf16.mxu0 %v679
  %927 = vmatpush1.bf16.msra.mxu0 %v678
  %928 = vmatprep.subr.bf16.mxu0 %v683
  %929 = vmatpush1.bf16.msra.mxu0 %v682
  %930 = vmatprep.subr.bf16.mxu0 %v687
  %931 = vmatpush1.bf16.msra.mxu0 %v686
  %932 = vmatprep.subr.bf16.mxu0 %v691
  %933 = vmatpush1.bf16.msra.mxu0 %v690
  %934 = vmatprep.subr.bf16.mxu0 %v695
  %935 = vmatpush1.bf16.msra.mxu0 %v694
  %936 = vmatprep.subr.bf16.mxu0 %v699
  %937 = vmatpush1.bf16.msra.mxu0 %v698
  %938 = vmatprep.subr.bf16.mxu0 %v703
  %939 = vmatpush1.bf16.msra.mxu0 %v702
  %940 = vmatprep.subr.bf16.mxu0 %v707
  %941 = vmatpush1.bf16.msra.mxu0 %v706
  %942 = vmatprep.subr.bf16.mxu0 %v711
  %943 = vmatpush1.bf16.msra.mxu0 %v710
  %944 = vmatprep.subr.bf16.mxu0 %v715
  %945 = vmatpush1.bf16.msra.mxu0 %v714
  %946 = vmatprep.subr.bf16.mxu0 %v719
  %947 = vmatpush1.bf16.msra.mxu0 %v718
  %948 = vmatprep.subr.bf16.mxu0 %v723
  %949 = vmatpush1.bf16.msra.mxu0 %v722
  %950 = vmatprep.mubr.bf16.mxu0 %v143
  %951 = vmatmul.mubr.bf16.gmra.mrb[0].mxu0 %v142
  %v952 = vpop.f32.mrb[0].mxu0
  %v953 = vadd.f32 0.0, %v952
  %v954 = vpop.f32.mrb[0].mxu0
  %v955 = vadd.f32 0.0, %v954
  %v956 = vpop.f32.mrb[0].mxu0
  %v957 = vadd.f32 0.0, %v956
  %v958 = vpop.f32.mrb[0].mxu0
  %v959 = vadd.f32 0.0, %v958
  %960 = vmatprep.mubr.bf16.mxu0 %v147
  %961 = vmatmul.mubr.bf16.gmra.mrb[0].mxu0 %v146
  %v962 = vpop.f32.mrb[0].mxu0
  %v963 = vadd.f32 0.0, %v962
  %v964 = vpop.f32.mrb[0].mxu0
  %v965 = vadd.f32 0.0, %v964
  %v966 = vpop.f32.mrb[0].mxu0
  %v967 = vadd.f32 0.0, %v966
  %v968 = vpop.f32.mrb[0].mxu0
  %v969 = vadd.f32 0.0, %v968
  %970 = vdwg.mxu0
  %971 = vmatprep.subr.bf16.mxu0 %v727
  %972 = vmatpush1.bf16.msra.mxu0 %v726
  %973 = vmatprep.subr.bf16.mxu0 %v731
  %974 = vmatpush1.bf16.msra.mxu0 %v730
  %975 = vmatprep.subr.bf16.mxu0 %v735
  %976 = vmatpush1.bf16.msra.mxu0 %v734
  %977 = vmatprep.subr.bf16.mxu0 %v739
  %978 = vmatpush1.bf16.msra.mxu0 %v738
  %979 = vmatprep.subr.bf16.mxu0 %v743
  %980 = vmatpush1.bf16.msra.mxu0 %v742
  %981 = vmatprep.subr.bf16.mxu0 %v747
  %982 = vmatpush1.bf16.msra.mxu0 %v746
  %983 = vmatprep.subr.bf16.mxu0 %v751
  %984 = vmatpush1.bf16.msra.mxu0 %v750
  %985 = vmatprep.subr.bf16.mxu0 %v755
  %986 = vmatpush1.bf16.msra.mxu0 %v754
  %987 = vmatprep.subr.bf16.mxu0 %v759
  %988 = vmatpush1.bf16.msra.mxu0 %v758
  %989 = vmatprep.subr.bf16.mxu0 %v763
  %990 = vmatpush1.bf16.msra.mxu0 %v762
  %991 = vmatprep.subr.bf16.mxu0 %v767
  %992 = vmatpush1.bf16.msra.mxu0 %v766
  %993 = vmatprep.subr.bf16.mxu0 %v771
  %994 = vmatpush1.bf16.msra.mxu0 %v770
  %995 = vmatprep.subr.bf16.mxu0 %v775
  %996 = vmatpush1.bf16.msra.mxu0 %v774
  %997 = vmatprep.subr.bf16.mxu0 %v779
  %998 = vmatpush1.bf16.msra.mxu0 %v778
  %999 = vmatprep.subr.bf16.mxu0 %v783
  %1000 = vmatpush1.bf16.msra.mxu0 %v782
  %1001 = vmatprep.subr.bf16.mxu0 %v787
  %1002 = vmatpush1.bf16.msra.mxu0 %v786
  %1003 = vmatprep.mubr.bf16.mxu0 %v145
  %1004 = vmatmul.mubr.bf16.gmra.mrb[0].mxu0 %v144
  %v1005 = vpop.f32.mrb[0].mxu0
  %v1006 = vadd.f32 %v953, %v1005
  %v1007 = vpop.f32.mrb[0].mxu0
  %v1008 = vadd.f32 %v955, %v1007
  %v1009 = vpop.f32.mrb[0].mxu0
  %v1010 = vadd.f32 %v957, %v1009
  %v1011 = vpop.f32.mrb[0].mxu0
  %v1012 = vadd.f32 %v959, %v1011
  %1013 = vmatprep.mubr.bf16.mxu0 %v149
  %1014 = vmatmul.mubr.bf16.gmra.mrb[0].mxu0 %v148
  %v1015 = vpop.f32.mrb[0].mxu0
  %v1016 = vadd.f32 %v963, %v1015
  %v1017 = vpop.f32.mrb[0].mxu0
  %v1018 = vadd.f32 %v965, %v1017
  %v1019 = vpop.f32.mrb[0].mxu0
  %v1020 = vadd.f32 %v967, %v1019
  %v1021 = vpop.f32.mrb[0].mxu0
  %v1022 = vadd.f32 %v969, %v1021
  %1023 = vdwg.mxu0
  %1024 = vmatprep.subr.bf16.mxu0 %v665
  %1025 = vmatpush1.bf16.msra.mxu0 %v664
  %1026 = vmatprep.subr.bf16.mxu0 %v669
  %1027 = vmatpush1.bf16.msra.mxu0 %v668
  %1028 = vmatprep.subr.bf16.mxu0 %v673
  %1029 = vmatpush1.bf16.msra.mxu0 %v672
  %1030 = vmatprep.subr.bf16.mxu0 %v677
  %1031 = vmatpush1.bf16.msra.mxu0 %v676
  %1032 = vmatprep.subr.bf16.mxu0 %v681
  %1033 = vmatpush1.bf16.msra.mxu0 %v680
  %1034 = vmatprep.subr.bf16.mxu0 %v685
  %1035 = vmatpush1.bf16.msra.mxu0 %v684
  %1036 = vmatprep.subr.bf16.mxu0 %v689
  %1037 = vmatpush1.bf16.msra.mxu0 %v688
  %1038 = vmatprep.subr.bf16.mxu0 %v693
  %1039 = vmatpush1.bf16.msra.mxu0 %v692
  %1040 = vmatprep.subr.bf16.mxu0 %v697
  %1041 = vmatpush1.bf16.msra.mxu0 %v696
  %1042 = vmatprep.subr.bf16.mxu0 %v701
  %1043 = vmatpush1.bf16.msra.mxu0 %v700
  %1044 = vmatprep.subr.bf16.mxu0 %v705
  %1045 = vmatpush1.bf16.msra.mxu0 %v704
  %1046 = vmatprep.subr.bf16.mxu0 %v709
  %1047 = vmatpush1.bf16.msra.mxu0 %v708
  %1048 = vmatprep.subr.bf16.mxu0 %v713
  %1049 = vmatpush1.bf16.msra.mxu0 %v712
  %1050 = vmatprep.subr.bf16.mxu0 %v717
  %1051 = vmatpush1.bf16.msra.mxu0 %v716
  %1052 = vmatprep.subr.bf16.mxu0 %v721
  %1053 = vmatpush1.bf16.msra.mxu0 %v720
  %1054 = vmatprep.subr.bf16.mxu0 %v725
  %1055 = vmatpush1.bf16.msra.mxu0 %v724
  %1056 = vmatprep.mubr.bf16.mxu0 %v143
  %1057 = vmatmul.mubr.bf16.gmra.mrb[0].mxu0 %v142
  %v1058 = vpop.f32.mrb[0].mxu0
  %v1059 = vadd.f32 0.0, %v1058
  %v1060 = vpop.f32.mrb[0].mxu0
  %v1061 = vadd.f32 0.0, %v1060
  %v1062 = vpop.f32.mrb[0].mxu0
  %v1063 = vadd.f32 0.0, %v1062
  %v1064 = vpop.f32.mrb[0].mxu0
  %v1065 = vadd.f32 0.0, %v1064
  %1066 = vmatprep.mubr.bf16.mxu0 %v147
  %1067 = vmatmul.mubr.bf16.gmra.mrb[0].mxu0 %v146
  %v1068 = vpop.f32.mrb[0].mxu0
  %v1069 = vadd.f32 0.0, %v1068
  %v1070 = vpop.f32.mrb[0].mxu0
  %v1071 = vadd.f32 0.0, %v1070
  %v1072 = vpop.f32.mrb[0].mxu0
  %v1073 = vadd.f32 0.0, %v1072
  %v1074 = vpop.f32.mrb[0].mxu0
  %v1075 = vadd.f32 0.0, %v1074
  %1076 = vdwg.mxu0
  %1077 = vmatprep.subr.bf16.mxu0 %v729
  %1078 = vmatpush1.bf16.msra.mxu0 %v728
  %1079 = vmatprep.subr.bf16.mxu0 %v733
  %1080 = vmatpush1.bf16.msra.mxu0 %v732
  %1081 = vmatprep.subr.bf16.mxu0 %v737
  %1082 = vmatpush1.bf16.msra.mxu0 %v736
  %1083 = vmatprep.subr.bf16.mxu0 %v741
  %1084 = vmatpush1.bf16.msra.mxu0 %v740
  %1085 = vmatprep.subr.bf16.mxu0 %v745
  %1086 = vmatpush1.bf16.msra.mxu0 %v744
  %1087 = vmatprep.subr.bf16.mxu0 %v749
  %1088 = vmatpush1.bf16.msra.mxu0 %v748
  %1089 = vmatprep.subr.bf16.mxu0 %v753
  %1090 = vmatpush1.bf16.msra.mxu0 %v752
  %1091 = vmatprep.subr.bf16.mxu0 %v757
  %1092 = vmatpush1.bf16.msra.mxu0 %v756
  %1093 = vmatprep.subr.bf16.mxu0 %v761
  %1094 = vmatpush1.bf16.msra.mxu0 %v760
  %1095 = vmatprep.subr.bf16.mxu0 %v765
  %1096 = vmatpush1.bf16.msra.mxu0 %v764
  %1097 = vmatprep.subr.bf16.mxu0 %v769
  %1098 = vmatpush1.bf16.msra.mxu0 %v768
  %1099 = vmatprep.subr.bf16.mxu0 %v773
  %1100 = vmatpush1.bf16.msra.mxu0 %v772
  %1101 = vmatprep.subr.bf16.mxu0 %v777
  %1102 = vmatpush1.bf16.msra.mxu0 %v776
  %1103 = vmatprep.subr.bf16.mxu0 %v781
  %1104 = vmatpush1.bf16.msra.mxu0 %v780
  %1105 = vmatprep.subr.bf16.mxu0 %v785
  %1106 = vmatpush1.bf16.msra.mxu0 %v784
  %1107 = vmatprep.subr.bf16.mxu0 %v789
  %1108 = vmatpush1.bf16.msra.mxu0 %v788
  %1109 = vmatprep.mubr.bf16.mxu0 %v145
  %1110 = vmatmul.mubr.bf16.gmra.mrb[0].mxu0 %v144
  %v1111 = vpop.f32.mrb[0].mxu0
  %v1112 = vadd.f32 %v1059, %v1111
  %v1113 = vpop.f32.mrb[0].mxu0
  %v1114 = vadd.f32 %v1061, %v1113
  %v1115 = vpop.f32.mrb[0].mxu0
  %v1116 = vadd.f32 %v1063, %v1115
  %v1117 = vpop.f32.mrb[0].mxu0
  %v1118 = vadd.f32 %v1065, %v1117
  %1119 = vmatprep.mubr.bf16.mxu0 %v149
  %1120 = vmatmul.mubr.bf16.gmra.mrb[0].mxu0 %v148
  %v1121 = vpop.f32.mrb[0].mxu0
  %v1122 = vadd.f32 %v1069, %v1121
  %v1123 = vpop.f32.mrb[0].mxu0
  %v1124 = vadd.f32 %v1071, %v1123
  %v1125 = vpop.f32.mrb[0].mxu0
  %v1126 = vadd.f32 %v1073, %v1125
  %v1127 = vpop.f32.mrb[0].mxu0
  %v1128 = vadd.f32 %v1075, %v1127
  %1129 = vdwg.mxu0
  %s1130 = scalar_lea.vmem %s5, 1024
  %v1131 = vld [vmem:[%s1130] sm:$0xff]
  %v1132 = vld [vmem:[%s1130 + $0x8] sm:$0xff]
  %v1133 = vld [vmem:[%s1130 + $0x10] sm:$0xff]
  %v1134 = vld [vmem:[%s1130 + $0x18] sm:$0xff]
  %v1135 = vld [vmem:[%s1130 + $0x20] sm:$0xff]
  %v1136 = vld [vmem:[%s1130 + $0x28] sm:$0xff]
  %v1137 = vld [vmem:[%s1130 + $0x30] sm:$0xff]
  %v1138 = vld [vmem:[%s1130 + $0x38] sm:$0xff]
  %v1139 = vld [vmem:[%s1130 + $0x40] sm:$0xff]
  %v1140 = vld [vmem:[%s1130 + $0x48] sm:$0xff]
  %v1141 = vld [vmem:[%s1130 + $0x50] sm:$0xff]
  %v1142 = vld [vmem:[%s1130 + $0x58] sm:$0xff]
  %v1143 = vld [vmem:[%s1130 + $0x60] sm:$0xff]
  %v1144 = vld [vmem:[%s1130 + $0x68] sm:$0xff]
  %v1145 = vld [vmem:[%s1130 + $0x70] sm:$0xff]
  %v1146 = vld [vmem:[%s1130 + $0x78] sm:$0xff]
  %v1147 = vld [vmem:[%s1130 + $0x80] sm:$0xff]
  %v1148 = vld [vmem:[%s1130 + $0x88] sm:$0xff]
  %v1149 = vld [vmem:[%s1130 + $0x90] sm:$0xff]
  %v1150 = vld [vmem:[%s1130 + $0x98] sm:$0xff]
  %v1151 = vld [vmem:[%s1130 + $0xa0] sm:$0xff]
  %v1152 = vld [vmem:[%s1130 + $0xa8] sm:$0xff]
  %v1153 = vld [vmem:[%s1130 + $0xb0] sm:$0xff]
  %v1154 = vld [vmem:[%s1130 + $0xb8] sm:$0xff]
  %v1155 = vld [vmem:[%s1130 + $0xc0] sm:$0xff]
  %v1156 = vld [vmem:[%s1130 + $0xc8] sm:$0xff]
  %v1157 = vld [vmem:[%s1130 + $0xd0] sm:$0xff]
  %v1158 = vld [vmem:[%s1130 + $0xd8] sm:$0xff]
  %v1159 = vld [vmem:[%s1130 + $0xe0] sm:$0xff]
  %v1160 = vld [vmem:[%s1130 + $0xe8] sm:$0xff]
  %v1161 = vld [vmem:[%s1130 + $0xf0] sm:$0xff]
  %v1162 = vld [vmem:[%s1130 + $0xf8] sm:$0xff]
  %v1163 = vld [vmem:[%s1130 + $0x100] sm:$0xff]
  %v1164 = vld [vmem:[%s1130 + $0x108] sm:$0xff]
  %v1165 = vld [vmem:[%s1130 + $0x110] sm:$0xff]
  %v1166 = vld [vmem:[%s1130 + $0x118] sm:$0xff]
  %v1167 = vld [vmem:[%s1130 + $0x120] sm:$0xff]
  %v1168 = vld [vmem:[%s1130 + $0x128] sm:$0xff]
  %v1169 = vld [vmem:[%s1130 + $0x130] sm:$0xff]
  %v1170 = vld [vmem:[%s1130 + $0x138] sm:$0xff]
  %v1171 = vld [vmem:[%s1130 + $0x140] sm:$0xff]
  %v1172 = vld [vmem:[%s1130 + $0x148] sm:$0xff]
  %v1173 = vld [vmem:[%s1130 + $0x150] sm:$0xff]
  %v1174 = vld [vmem:[%s1130 + $0x158] sm:$0xff]
  %v1175 = vld [vmem:[%s1130 + $0x160] sm:$0xff]
  %v1176 = vld [vmem:[%s1130 + $0x168] sm:$0xff]
  %v1177 = vld [vmem:[%s1130 + $0x170] sm:$0xff]
  %v1178 = vld [vmem:[%s1130 + $0x178] sm:$0xff]
  %v1179 = vld [vmem:[%s1130 + $0x180] sm:$0xff]
  %v1180 = vld [vmem:[%s1130 + $0x188] sm:$0xff]
  %v1181 = vld [vmem:[%s1130 + $0x190] sm:$0xff]
  %v1182 = vld [vmem:[%s1130 + $0x198] sm:$0xff]
  %v1183 = vld [vmem:[%s1130 + $0x1a0] sm:$0xff]
  %v1184 = vld [vmem:[%s1130 + $0x1a8] sm:$0xff]
  %v1185 = vld [vmem:[%s1130 + $0x1b0] sm:$0xff]
  %v1186 = vld [vmem:[%s1130 + $0x1b8] sm:$0xff]
  %v1187 = vld [vmem:[%s1130 + $0x1c0] sm:$0xff]
  %v1188 = vld [vmem:[%s1130 + $0x1c8] sm:$0xff]
  %v1189 = vld [vmem:[%s1130 + $0x1d0] sm:$0xff]
  %v1190 = vld [vmem:[%s1130 + $0x1d8] sm:$0xff]
  %v1191 = vld [vmem:[%s1130 + $0x1e0] sm:$0xff]
  %v1192 = vld [vmem:[%s1130 + $0x1e8] sm:$0xff]
  %v1193 = vld [vmem:[%s1130 + $0x1f0] sm:$0xff]
  %v1194 = vld [vmem:[%s1130 + $0x1f8] sm:$0xff]
  %v1195 = vld [vmem:[%s1130 + $0x200] sm:$0xff]
  %v1196 = vld [vmem:[%s1130 + $0x208] sm:$0xff]
  %v1197 = vld [vmem:[%s1130 + $0x210] sm:$0xff]
  %v1198 = vld [vmem:[%s1130 + $0x218] sm:$0xff]
  %v1199 = vld [vmem:[%s1130 + $0x220] sm:$0xff]
  %v1200 = vld [vmem:[%s1130 + $0x228] sm:$0xff]
  %v1201 = vld [vmem:[%s1130 + $0x230] sm:$0xff]
  %v1202 = vld [vmem:[%s1130 + $0x238] sm:$0xff]
  %v1203 = vld [vmem:[%s1130 + $0x240] sm:$0xff]
  %v1204 = vld [vmem:[%s1130 + $0x248] sm:$0xff]
  %v1205 = vld [vmem:[%s1130 + $0x250] sm:$0xff]
  %v1206 = vld [vmem:[%s1130 + $0x258] sm:$0xff]
  %v1207 = vld [vmem:[%s1130 + $0x260] sm:$0xff]
  %v1208 = vld [vmem:[%s1130 + $0x268] sm:$0xff]
  %v1209 = vld [vmem:[%s1130 + $0x270] sm:$0xff]
  %v1210 = vld [vmem:[%s1130 + $0x278] sm:$0xff]
  %v1211 = vld [vmem:[%s1130 + $0x280] sm:$0xff]
  %v1212 = vld [vmem:[%s1130 + $0x288] sm:$0xff]
  %v1213 = vld [vmem:[%s1130 + $0x290] sm:$0xff]
  %v1214 = vld [vmem:[%s1130 + $0x298] sm:$0xff]
  %v1215 = vld [vmem:[%s1130 + $0x2a0] sm:$0xff]
  %v1216 = vld [vmem:[%s1130 + $0x2a8] sm:$0xff]
  %v1217 = vld [vmem:[%s1130 + $0x2b0] sm:$0xff]
  %v1218 = vld [vmem:[%s1130 + $0x2b8] sm:$0xff]
  %v1219 = vld [vmem:[%s1130 + $0x2c0] sm:$0xff]
  %v1220 = vld [vmem:[%s1130 + $0x2c8] sm:$0xff]
  %v1221 = vld [vmem:[%s1130 + $0x2d0] sm:$0xff]
  %v1222 = vld [vmem:[%s1130 + $0x2d8] sm:$0xff]
  %v1223 = vld [vmem:[%s1130 + $0x2e0] sm:$0xff]
  %v1224 = vld [vmem:[%s1130 + $0x2e8] sm:$0xff]
  %v1225 = vld [vmem:[%s1130 + $0x2f0] sm:$0xff]
  %v1226 = vld [vmem:[%s1130 + $0x2f8] sm:$0xff]
  %v1227 = vld [vmem:[%s1130 + $0x300] sm:$0xff]
  %v1228 = vld [vmem:[%s1130 + $0x308] sm:$0xff]
  %v1229 = vld [vmem:[%s1130 + $0x310] sm:$0xff]
  %v1230 = vld [vmem:[%s1130 + $0x318] sm:$0xff]
  %v1231 = vld [vmem:[%s1130 + $0x320] sm:$0xff]
  %v1232 = vld [vmem:[%s1130 + $0x328] sm:$0xff]
  %v1233 = vld [vmem:[%s1130 + $0x330] sm:$0xff]
  %v1234 = vld [vmem:[%s1130 + $0x338] sm:$0xff]
  %v1235 = vld [vmem:[%s1130 + $0x340] sm:$0xff]
  %v1236 = vld [vmem:[%s1130 + $0x348] sm:$0xff]
  %v1237 = vld [vmem:[%s1130 + $0x350] sm:$0xff]
  %v1238 = vld [vmem:[%s1130 + $0x358] sm:$0xff]
  %v1239 = vld [vmem:[%s1130 + $0x360] sm:$0xff]
  %v1240 = vld [vmem:[%s1130 + $0x368] sm:$0xff]
  %v1241 = vld [vmem:[%s1130 + $0x370] sm:$0xff]
  %v1242 = vld [vmem:[%s1130 + $0x378] sm:$0xff]
  %v1243 = vld [vmem:[%s1130 + $0x380] sm:$0xff]
  %v1244 = vld [vmem:[%s1130 + $0x388] sm:$0xff]
  %v1245 = vld [vmem:[%s1130 + $0x390] sm:$0xff]
  %v1246 = vld [vmem:[%s1130 + $0x398] sm:$0xff]
  %v1247 = vld [vmem:[%s1130 + $0x3a0] sm:$0xff]
  %v1248 = vld [vmem:[%s1130 + $0x3a8] sm:$0xff]
  %v1249 = vld [vmem:[%s1130 + $0x3b0] sm:$0xff]
  %v1250 = vld [vmem:[%s1130 + $0x3b8] sm:$0xff]
  %v1251 = vld [vmem:[%s1130 + $0x3c0] sm:$0xff]
  %v1252 = vld [vmem:[%s1130 + $0x3c8] sm:$0xff]
  %v1253 = vld [vmem:[%s1130 + $0x3d0] sm:$0xff]
  %v1254 = vld [vmem:[%s1130 + $0x3d8] sm:$0xff]
  %v1255 = vld [vmem:[%s1130 + $0x3e0] sm:$0xff]
  %v1256 = vld [vmem:[%s1130 + $0x3e8] sm:$0xff]
  %v1257 = vld [vmem:[%s1130 + $0x3f0] sm:$0xff]
  %v1258 = vld [vmem:[%s1130 + $0x3f8] sm:$0xff]
  %v1387 = vunpack.c.l.b16 %v1131
  %v1388 = vunpack.c.h.b16 %v1131
  %v1389 = vunpack.c.l.b16 %v1132
  %v1390 = vunpack.c.h.b16 %v1132
  %v1391 = vunpack.c.l.b16 %v1133
  %v1392 = vunpack.c.h.b16 %v1133
  %v1393 = vunpack.c.l.b16 %v1134
  %v1394 = vunpack.c.h.b16 %v1134
  %v1395 = vunpack.c.l.b16 %v1135
  %v1396 = vunpack.c.h.b16 %v1135
  %v1397 = vunpack.c.l.b16 %v1136
  %v1398 = vunpack.c.h.b16 %v1136
  %v1399 = vunpack.c.l.b16 %v1137
  %v1400 = vunpack.c.h.b16 %v1137
  %v1401 = vunpack.c.l.b16 %v1138
  %v1402 = vunpack.c.h.b16 %v1138
  %v1403 = vunpack.c.l.b16 %v1139
  %v1404 = vunpack.c.h.b16 %v1139
  %v1405 = vunpack.c.l.b16 %v1140
  %v1406 = vunpack.c.h.b16 %v1140
  %v1407 = vunpack.c.l.b16 %v1141
  %v1408 = vunpack.c.h.b16 %v1141
  %v1409 = vunpack.c.l.b16 %v1142
  %v1410 = vunpack.c.h.b16 %v1142
  %v1411 = vunpack.c.l.b16 %v1143
  %v1412 = vunpack.c.h.b16 %v1143
  %v1413 = vunpack.c.l.b16 %v1144
  %v1414 = vunpack.c.h.b16 %v1144
  %v1415 = vunpack.c.l.b16 %v1145
  %v1416 = vunpack.c.h.b16 %v1145
  %v1417 = vunpack.c.l.b16 %v1146
  %v1418 = vunpack.c.h.b16 %v1146
  %v1419 = vunpack.c.l.b16 %v1147
  %v1420 = vunpack.c.h.b16 %v1147
  %v1421 = vunpack.c.l.b16 %v1148
  %v1422 = vunpack.c.h.b16 %v1148
  %v1423 = vunpack.c.l.b16 %v1149
  %v1424 = vunpack.c.h.b16 %v1149
  %v1425 = vunpack.c.l.b16 %v1150
  %v1426 = vunpack.c.h.b16 %v1150
  %v1427 = vunpack.c.l.b16 %v1151
  %v1428 = vunpack.c.h.b16 %v1151
  %v1429 = vunpack.c.l.b16 %v1152
  %v1430 = vunpack.c.h.b16 %v1152
  %v1431 = vunpack.c.l.b16 %v1153
  %v1432 = vunpack.c.h.b16 %v1153
  %v1433 = vunpack.c.l.b16 %v1154
  %v1434 = vunpack.c.h.b16 %v1154
  %v1435 = vunpack.c.l.b16 %v1155
  %v1436 = vunpack.c.h.b16 %v1155
  %v1437 = vunpack.c.l.b16 %v1156
  %v1438 = vunpack.c.h.b16 %v1156
  %v1439 = vunpack.c.l.b16 %v1157
  %v1440 = vunpack.c.h.b16 %v1157
  %v1441 = vunpack.c.l.b16 %v1158
  %v1442 = vunpack.c.h.b16 %v1158
  %v1443 = vunpack.c.l.b16 %v1159
  %v1444 = vunpack.c.h.b16 %v1159
  %v1445 = vunpack.c.l.b16 %v1160
  %v1446 = vunpack.c.h.b16 %v1160
  %v1447 = vunpack.c.l.b16 %v1161
  %v1448 = vunpack.c.h.b16 %v1161
  %v1449 = vunpack.c.l.b16 %v1162
  %v1450 = vunpack.c.h.b16 %v1162
  %v1451 = vunpack.c.l.b16 %v1163
  %v1452 = vunpack.c.h.b16 %v1163
  %v1453 = vunpack.c.l.b16 %v1164
  %v1454 = vunpack.c.h.b16 %v1164
  %v1455 = vunpack.c.l.b16 %v1165
  %v1456 = vunpack.c.h.b16 %v1165
  %v1457 = vunpack.c.l.b16 %v1166
  %v1458 = vunpack.c.h.b16 %v1166
  %v1459 = vunpack.c.l.b16 %v1167
  %v1460 = vunpack.c.h.b16 %v1167
  %v1461 = vunpack.c.l.b16 %v1168
  %v1462 = vunpack.c.h.b16 %v1168
  %v1463 = vunpack.c.l.b16 %v1169
  %v1464 = vunpack.c.h.b16 %v1169
  %v1465 = vunpack.c.l.b16 %v1170
  %v1466 = vunpack.c.h.b16 %v1170
  %v1467 = vunpack.c.l.b16 %v1171
  %v1468 = vunpack.c.h.b16 %v1171
  %v1469 = vunpack.c.l.b16 %v1172
  %v1470 = vunpack.c.h.b16 %v1172
  %v1471 = vunpack.c.l.b16 %v1173
  %v1472 = vunpack.c.h.b16 %v1173
  %v1473 = vunpack.c.l.b16 %v1174
  %v1474 = vunpack.c.h.b16 %v1174
  %v1475 = vunpack.c.l.b16 %v1175
  %v1476 = vunpack.c.h.b16 %v1175
  %v1477 = vunpack.c.l.b16 %v1176
  %v1478 = vunpack.c.h.b16 %v1176
  %v1479 = vunpack.c.l.b16 %v1177
  %v1480 = vunpack.c.h.b16 %v1177
  %v1481 = vunpack.c.l.b16 %v1178
  %v1482 = vunpack.c.h.b16 %v1178
  %v1483 = vunpack.c.l.b16 %v1179
  %v1484 = vunpack.c.h.b16 %v1179
  %v1485 = vunpack.c.l.b16 %v1180
  %v1486 = vunpack.c.h.b16 %v1180
  %v1487 = vunpack.c.l.b16 %v1181
  %v1488 = vunpack.c.h.b16 %v1181
  %v1489 = vunpack.c.l.b16 %v1182
  %v1490 = vunpack.c.h.b16 %v1182
  %v1491 = vunpack.c.l.b16 %v1183
  %v1492 = vunpack.c.h.b16 %v1183
  %v1493 = vunpack.c.l.b16 %v1184
  %v1494 = vunpack.c.h.b16 %v1184
  %v1495 = vunpack.c.l.b16 %v1185
  %v1496 = vunpack.c.h.b16 %v1185
  %v1497 = vunpack.c.l.b16 %v1186
  %v1498 = vunpack.c.h.b16 %v1186
  %v1499 = vunpack.c.l.b16 %v1187
  %v1500 = vunpack.c.h.b16 %v1187
  %v1501 = vunpack.c.l.b16 %v1188
  %v1502 = vunpack.c.h.b16 %v1188
  %v1503 = vunpack.c.l.b16 %v1189
  %v1504 = vunpack.c.h.b16 %v1189
  %v1505 = vunpack.c.l.b16 %v1190
  %v1506 = vunpack.c.h.b16 %v1190
  %v1507 = vunpack.c.l.b16 %v1191
  %v1508 = vunpack.c.h.b16 %v1191
  %v1509 = vunpack.c.l.b16 %v1192
  %v1510 = vunpack.c.h.b16 %v1192
  %v1511 = vunpack.c.l.b16 %v1193
  %v1512 = vunpack.c.h.b16 %v1193
  %v1513 = vunpack.c.l.b16 %v1194
  %v1514 = vunpack.c.h.b16 %v1194
  %v1515 = vunpack.c.l.b16 %v1195
  %v1516 = vunpack.c.h.b16 %v1195
  %v1517 = vunpack.c.l.b16 %v1196
  %v1518 = vunpack.c.h.b16 %v1196
  %v1519 = vunpack.c.l.b16 %v1197
  %v1520 = vunpack.c.h.b16 %v1197
  %v1521 = vunpack.c.l.b16 %v1198
  %v1522 = vunpack.c.h.b16 %v1198
  %v1523 = vunpack.c.l.b16 %v1199
  %v1524 = vunpack.c.h.b16 %v1199
  %v1525 = vunpack.c.l.b16 %v1200
  %v1526 = vunpack.c.h.b16 %v1200
  %v1527 = vunpack.c.l.b16 %v1201
  %v1528 = vunpack.c.h.b16 %v1201
  %v1529 = vunpack.c.l.b16 %v1202
  %v1530 = vunpack.c.h.b16 %v1202
  %v1531 = vunpack.c.l.b16 %v1203
  %v1532 = vunpack.c.h.b16 %v1203
  %v1533 = vunpack.c.l.b16 %v1204
  %v1534 = vunpack.c.h.b16 %v1204
  %v1535 = vunpack.c.l.b16 %v1205
  %v1536 = vunpack.c.h.b16 %v1205
  %v1537 = vunpack.c.l.b16 %v1206
  %v1538 = vunpack.c.h.b16 %v1206
  %v1539 = vunpack.c.l.b16 %v1207
  %v1540 = vunpack.c.h.b16 %v1207
  %v1541 = vunpack.c.l.b16 %v1208
  %v1542 = vunpack.c.h.b16 %v1208
  %v1543 = vunpack.c.l.b16 %v1209
  %v1544 = vunpack.c.h.b16 %v1209
  %v1545 = vunpack.c.l.b16 %v1210
  %v1546 = vunpack.c.h.b16 %v1210
  %v1547 = vunpack.c.l.b16 %v1211
  %v1548 = vunpack.c.h.b16 %v1211
  %v1549 = vunpack.c.l.b16 %v1212
  %v1550 = vunpack.c.h.b16 %v1212
  %v1551 = vunpack.c.l.b16 %v1213
  %v1552 = vunpack.c.h.b16 %v1213
  %v1553 = vunpack.c.l.b16 %v1214
  %v1554 = vunpack.c.h.b16 %v1214
  %v1555 = vunpack.c.l.b16 %v1215
  %v1556 = vunpack.c.h.b16 %v1215
  %v1557 = vunpack.c.l.b16 %v1216
  %v1558 = vunpack.c.h.b16 %v1216
  %v1559 = vunpack.c.l.b16 %v1217
  %v1560 = vunpack.c.h.b16 %v1217
  %v1561 = vunpack.c.l.b16 %v1218
  %v1562 = vunpack.c.h.b16 %v1218
  %v1563 = vunpack.c.l.b16 %v1219
  %v1564 = vunpack.c.h.b16 %v1219
  %v1565 = vunpack.c.l.b16 %v1220
  %v1566 = vunpack.c.h.b16 %v1220
  %v1567 = vunpack.c.l.b16 %v1221
  %v1568 = vunpack.c.h.b16 %v1221
  %v1569 = vunpack.c.l.b16 %v1222
  %v1570 = vunpack.c.h.b16 %v1222
  %v1571 = vunpack.c.l.b16 %v1223
  %v1572 = vunpack.c.h.b16 %v1223
  %v1573 = vunpack.c.l.b16 %v1224
  %v1574 = vunpack.c.h.b16 %v1224
  %v1575 = vunpack.c.l.b16 %v1225
  %v1576 = vunpack.c.h.b16 %v1225
  %v1577 = vunpack.c.l.b16 %v1226
  %v1578 = vunpack.c.h.b16 %v1226
  %v1579 = vunpack.c.l.b16 %v1227
  %v1580 = vunpack.c.h.b16 %v1227
  %v1581 = vunpack.c.l.b16 %v1228
  %v1582 = vunpack.c.h.b16 %v1228
  %v1583 = vunpack.c.l.b16 %v1229
  %v1584 = vunpack.c.h.b16 %v1229
  %v1585 = vunpack.c.l.b16 %v1230
  %v1586 = vunpack.c.h.b16 %v1230
  %v1587 = vunpack.c.l.b16 %v1231
  %v1588 = vunpack.c.h.b16 %v1231
  %v1589 = vunpack.c.l.b16 %v1232
  %v1590 = vunpack.c.h.b16 %v1232
  %v1591 = vunpack.c.l.b16 %v1233
  %v1592 = vunpack.c.h.b16 %v1233
  %v1593 = vunpack.c.l.b16 %v1234
  %v1594 = vunpack.c.h.b16 %v1234
  %v1595 = vunpack.c.l.b16 %v1235
  %v1596 = vunpack.c.h.b16 %v1235
  %v1597 = vunpack.c.l.b16 %v1236
  %v1598 = vunpack.c.h.b16 %v1236
  %v1599 = vunpack.c.l.b16 %v1237
  %v1600 = vunpack.c.h.b16 %v1237
  %v1601 = vunpack.c.l.b16 %v1238
  %v1602 = vunpack.c.h.b16 %v1238
  %v1603 = vunpack.c.l.b16 %v1239
  %v1604 = vunpack.c.h.b16 %v1239
  %v1605 = vunpack.c.l.b16 %v1240
  %v1606 = vunpack.c.h.b16 %v1240
  %v1607 = vunpack.c.l.b16 %v1241
  %v1608 = vunpack.c.h.b16 %v1241
  %v1609 = vunpack.c.l.b16 %v1242
  %v1610 = vunpack.c.h.b16 %v1242
  %v1611 = vunpack.c.l.b16 %v1243
  %v1612 = vunpack.c.h.b16 %v1243
  %v1613 = vunpack.c.l.b16 %v1244
  %v1614 = vunpack.c.h.b16 %v1244
  %v1615 = vunpack.c.l.b16 %v1245
  %v1616 = vunpack.c.h.b16 %v1245
  %v1617 = vunpack.c.l.b16 %v1246
  %v1618 = vunpack.c.h.b16 %v1246
  %v1619 = vunpack.c.l.b16 %v1247
  %v1620 = vunpack.c.h.b16 %v1247
  %v1621 = vunpack.c.l.b16 %v1248
  %v1622 = vunpack.c.h.b16 %v1248
  %v1623 = vunpack.c.l.b16 %v1249
  %v1624 = vunpack.c.h.b16 %v1249
  %v1625 = vunpack.c.l.b16 %v1250
  %v1626 = vunpack.c.h.b16 %v1250
  %v1627 = vunpack.c.l.b16 %v1251
  %v1628 = vunpack.c.h.b16 %v1251
  %v1629 = vunpack.c.l.b16 %v1252
  %v1630 = vunpack.c.h.b16 %v1252
  %v1631 = vunpack.c.l.b16 %v1253
  %v1632 = vunpack.c.h.b16 %v1253
  %v1633 = vunpack.c.l.b16 %v1254
  %v1634 = vunpack.c.h.b16 %v1254
  %v1635 = vunpack.c.l.b16 %v1255
  %v1636 = vunpack.c.h.b16 %v1255
  %v1637 = vunpack.c.l.b16 %v1256
  %v1638 = vunpack.c.h.b16 %v1256
  %v1639 = vunpack.c.l.b16 %v1257
  %v1640 = vunpack.c.h.b16 %v1257
  %v1641 = vunpack.c.l.b16 %v1258
  %v1642 = vunpack.c.h.b16 %v1258
  %v1643 = vpack.c.b16 %v1391, %v1387
  %v1644 = vpack.c.b16 %v1392, %v1388
  %v1645 = vpack.c.b16 %v1393, %v1389
  %v1646 = vpack.c.b16 %v1394, %v1390
  %v1647 = vpack.c.b16 %v1399, %v1395
  %v1648 = vpack.c.b16 %v1400, %v1396
  %v1649 = vpack.c.b16 %v1401, %v1397
  %v1650 = vpack.c.b16 %v1402, %v1398
  %v1651 = vpack.c.b16 %v1407, %v1403
  %v1652 = vpack.c.b16 %v1408, %v1404
  %v1653 = vpack.c.b16 %v1409, %v1405
  %v1654 = vpack.c.b16 %v1410, %v1406
  %v1655 = vpack.c.b16 %v1415, %v1411
  %v1656 = vpack.c.b16 %v1416, %v1412
  %v1657 = vpack.c.b16 %v1417, %v1413
  %v1658 = vpack.c.b16 %v1418, %v1414
  %v1659 = vpack.c.b16 %v1423, %v1419
  %v1660 = vpack.c.b16 %v1424, %v1420
  %v1661 = vpack.c.b16 %v1425, %v1421
  %v1662 = vpack.c.b16 %v1426, %v1422
  %v1663 = vpack.c.b16 %v1431, %v1427
  %v1664 = vpack.c.b16 %v1432, %v1428
  %v1665 = vpack.c.b16 %v1433, %v1429
  %v1666 = vpack.c.b16 %v1434, %v1430
  %v1667 = vpack.c.b16 %v1439, %v1435
  %v1668 = vpack.c.b16 %v1440, %v1436
  %v1669 = vpack.c.b16 %v1441, %v1437
  %v1670 = vpack.c.b16 %v1442, %v1438
  %v1671 = vpack.c.b16 %v1447, %v1443
  %v1672 = vpack.c.b16 %v1448, %v1444
  %v1673 = vpack.c.b16 %v1449, %v1445
  %v1674 = vpack.c.b16 %v1450, %v1446
  %v1675 = vpack.c.b16 %v1455, %v1451
  %v1676 = vpack.c.b16 %v1456, %v1452
  %v1677 = vpack.c.b16 %v1457, %v1453
  %v1678 = vpack.c.b16 %v1458, %v1454
  %v1679 = vpack.c.b16 %v1463, %v1459
  %v1680 = vpack.c.b16 %v1464, %v1460
  %v1681 = vpack.c.b16 %v1465, %v1461
  %v1682 = vpack.c.b16 %v1466, %v1462
  %v1683 = vpack.c.b16 %v1471, %v1467
  %v1684 = vpack.c.b16 %v1472, %v1468
  %v1685 = vpack.c.b16 %v1473, %v1469
  %v1686 = vpack.c.b16 %v1474, %v1470
  %v1687 = vpack.c.b16 %v1479, %v1475
  %v1688 = vpack.c.b16 %v1480, %v1476
  %v1689 = vpack.c.b16 %v1481, %v1477
  %v1690 = vpack.c.b16 %v1482, %v1478
  %v1691 = vpack.c.b16 %v1487, %v1483
  %v1692 = vpack.c.b16 %v1488, %v1484
  %v1693 = vpack.c.b16 %v1489, %v1485
  %v1694 = vpack.c.b16 %v1490, %v1486
  %v1695 = vpack.c.b16 %v1495, %v1491
  %v1696 = vpack.c.b16 %v1496, %v1492
  %v1697 = vpack.c.b16 %v1497, %v1493
  %v1698 = vpack.c.b16 %v1498, %v1494
  %v1699 = vpack.c.b16 %v1503, %v1499
  %v1700 = vpack.c.b16 %v1504, %v1500
  %v1701 = vpack.c.b16 %v1505, %v1501
  %v1702 = vpack.c.b16 %v1506, %v1502
  %v1703 = vpack.c.b16 %v1511, %v1507
  %v1704 = vpack.c.b16 %v1512, %v1508
  %v1705 = vpack.c.b16 %v1513, %v1509
  %v1706 = vpack.c.b16 %v1514, %v1510
  %v1707 = vpack.c.b16 %v1519, %v1515
  %v1708 = vpack.c.b16 %v1520, %v1516
  %v1709 = vpack.c.b16 %v1521, %v1517
  %v1710 = vpack.c.b16 %v1522, %v1518
  %v1711 = vpack.c.b16 %v1527, %v1523
  %v1712 = vpack.c.b16 %v1528, %v1524
  %v1713 = vpack.c.b16 %v1529, %v1525
  %v1714 = vpack.c.b16 %v1530, %v1526
  %v1715 = vpack.c.b16 %v1535, %v1531
  %v1716 = vpack.c.b16 %v1536, %v1532
  %v1717 = vpack.c.b16 %v1537, %v1533
  %v1718 = vpack.c.b16 %v1538, %v1534
  %v1719 = vpack.c.b16 %v1543, %v1539
  %v1720 = vpack.c.b16 %v1544, %v1540
  %v1721 = vpack.c.b16 %v1545, %v1541
  %v1722 = vpack.c.b16 %v1546, %v1542
  %v1723 = vpack.c.b16 %v1551, %v1547
  %v1724 = vpack.c.b16 %v1552, %v1548
  %v1725 = vpack.c.b16 %v1553, %v1549
  %v1726 = vpack.c.b16 %v1554, %v1550
  %v1727 = vpack.c.b16 %v1559, %v1555
  %v1728 = vpack.c.b16 %v1560, %v1556
  %v1729 = vpack.c.b16 %v1561, %v1557
  %v1730 = vpack.c.b16 %v1562, %v1558
  %v1731 = vpack.c.b16 %v1567, %v1563
  %v1732 = vpack.c.b16 %v1568, %v1564
  %v1733 = vpack.c.b16 %v1569, %v1565
  %v1734 = vpack.c.b16 %v1570, %v1566
  %v1735 = vpack.c.b16 %v1575, %v1571
  %v1736 = vpack.c.b16 %v1576, %v1572
  %v1737 = vpack.c.b16 %v1577, %v1573
  %v1738 = vpack.c.b16 %v1578, %v1574
  %v1739 = vpack.c.b16 %v1583, %v1579
  %v1740 = vpack.c.b16 %v1584, %v1580
  %v1741 = vpack.c.b16 %v1585, %v1581
  %v1742 = vpack.c.b16 %v1586, %v1582
  %v1743 = vpack.c.b16 %v1591, %v1587
  %v1744 = vpack.c.b16 %v1592, %v1588
  %v1745 = vpack.c.b16 %v1593, %v1589
  %v1746 = vpack.c.b16 %v1594, %v1590
  %v1747 = vpack.c.b16 %v1599, %v1595
  %v1748 = vpack.c.b16 %v1600, %v1596
  %v1749 = vpack.c.b16 %v1601, %v1597
  %v1750 = vpack.c.b16 %v1602, %v1598
  %v1751 = vpack.c.b16 %v1607, %v1603
  %v1752 = vpack.c.b16 %v1608, %v1604
  %v1753 = vpack.c.b16 %v1609, %v1605
  %v1754 = vpack.c.b16 %v1610, %v1606
  %v1755 = vpack.c.b16 %v1615, %v1611
  %v1756 = vpack.c.b16 %v1616, %v1612
  %v1757 = vpack.c.b16 %v1617, %v1613
  %v1758 = vpack.c.b16 %v1618, %v1614
  %v1759 = vpack.c.b16 %v1623, %v1619
  %v1760 = vpack.c.b16 %v1624, %v1620
  %v1761 = vpack.c.b16 %v1625, %v1621
  %v1762 = vpack.c.b16 %v1626, %v1622
  %v1763 = vpack.c.b16 %v1631, %v1627
  %v1764 = vpack.c.b16 %v1632, %v1628
  %v1765 = vpack.c.b16 %v1633, %v1629
  %v1766 = vpack.c.b16 %v1634, %v1630
  %v1767 = vpack.c.b16 %v1639, %v1635
  %v1768 = vpack.c.b16 %v1640, %v1636
  %v1769 = vpack.c.b16 %v1641, %v1637
  %v1770 = vpack.c.b16 %v1642, %v1638
  %1899 = vmatprep.subr.bf16.mxu0 %v1644
  %1900 = vmatpush1.bf16.msra.mxu0 %v1643
  %1901 = vmatprep.subr.bf16.mxu0 %v1648
  %1902 = vmatpush1.bf16.msra.mxu0 %v1647
  %1903 = vmatprep.subr.bf16.mxu0 %v1652
  %1904 = vmatpush1.bf16.msra.mxu0 %v1651
  %1905 = vmatprep.subr.bf16.mxu0 %v1656
  %1906 = vmatpush1.bf16.msra.mxu0 %v1655
  %1907 = vmatprep.subr.bf16.mxu0 %v1660
  %1908 = vmatpush1.bf16.msra.mxu0 %v1659
  %1909 = vmatprep.subr.bf16.mxu0 %v1664
  %1910 = vmatpush1.bf16.msra.mxu0 %v1663
  %1911 = vmatprep.subr.bf16.mxu0 %v1668
  %1912 = vmatpush1.bf16.msra.mxu0 %v1667
  %1913 = vmatprep.subr.bf16.mxu0 %v1672
  %1914 = vmatpush1.bf16.msra.mxu0 %v1671
  %1915 = vmatprep.subr.bf16.mxu0 %v1676
  %1916 = vmatpush1.bf16.msra.mxu0 %v1675
  %1917 = vmatprep.subr.bf16.mxu0 %v1680
  %1918 = vmatpush1.bf16.msra.mxu0 %v1679
  %1919 = vmatprep.subr.bf16.mxu0 %v1684
  %1920 = vmatpush1.bf16.msra.mxu0 %v1683
  %1921 = vmatprep.subr.bf16.mxu0 %v1688
  %1922 = vmatpush1.bf16.msra.mxu0 %v1687
  %1923 = vmatprep.subr.bf16.mxu0 %v1692
  %1924 = vmatpush1.bf16.msra.mxu0 %v1691
  %1925 = vmatprep.subr.bf16.mxu0 %v1696
  %1926 = vmatpush1.bf16.msra.mxu0 %v1695
  %1927 = vmatprep.subr.bf16.mxu0 %v1700
  %1928 = vmatpush1.bf16.msra.mxu0 %v1699
  %1929 = vmatprep.subr.bf16.mxu0 %v1704
  %1930 = vmatpush1.bf16.msra.mxu0 %v1703
  %1931 = vmatprep.mubr.bf16.mxu0 %v143
  %1932 = vmatmul.mubr.bf16.gmra.mrb[0].mxu0 %v142
  %v1933 = vpop.f32.mrb[0].mxu0
  %v1934 = vadd.f32 0.0, %v1933
  %v1935 = vpop.f32.mrb[0].mxu0
  %v1936 = vadd.f32 0.0, %v1935
  %v1937 = vpop.f32.mrb[0].mxu0
  %v1938 = vadd.f32 0.0, %v1937
  %v1939 = vpop.f32.mrb[0].mxu0
  %v1940 = vadd.f32 0.0, %v1939
  %1941 = vmatprep.mubr.bf16.mxu0 %v147
  %1942 = vmatmul.mubr.bf16.gmra.mrb[0].mxu0 %v146
  %v1943 = vpop.f32.mrb[0].mxu0
  %v1944 = vadd.f32 0.0, %v1943
  %v1945 = vpop.f32.mrb[0].mxu0
  %v1946 = vadd.f32 0.0, %v1945
  %v1947 = vpop.f32.mrb[0].mxu0
  %v1948 = vadd.f32 0.0, %v1947
  %v1949 = vpop.f32.mrb[0].mxu0
  %v1950 = vadd.f32 0.0, %v1949
  %1951 = vdwg.mxu0
  %1952 = vmatprep.subr.bf16.mxu0 %v1708
  %1953 = vmatpush1.bf16.msra.mxu0 %v1707
  %1954 = vmatprep.subr.bf16.mxu0 %v1712
  %1955 = vmatpush1.bf16.msra.mxu0 %v1711
  %1956 = vmatprep.subr.bf16.mxu0 %v1716
  %1957 = vmatpush1.bf16.msra.mxu0 %v1715
  %1958 = vmatprep.subr.bf16.mxu0 %v1720
  %1959 = vmatpush1.bf16.msra.mxu0 %v1719
  %1960 = vmatprep.subr.bf16.mxu0 %v1724
  %1961 = vmatpush1.bf16.msra.mxu0 %v1723
  %1962 = vmatprep.subr.bf16.mxu0 %v1728
  %1963 = vmatpush1.bf16.msra.mxu0 %v1727
  %1964 = vmatprep.subr.bf16.mxu0 %v1732
  %1965 = vmatpush1.bf16.msra.mxu0 %v1731
  %1966 = vmatprep.subr.bf16.mxu0 %v1736
  %1967 = vmatpush1.bf16.msra.mxu0 %v1735
  %1968 = vmatprep.subr.bf16.mxu0 %v1740
  %1969 = vmatpush1.bf16.msra.mxu0 %v1739
  %1970 = vmatprep.subr.bf16.mxu0 %v1744
  %1971 = vmatpush1.bf16.msra.mxu0 %v1743
  %1972 = vmatprep.subr.bf16.mxu0 %v1748
  %1973 = vmatpush1.bf16.msra.mxu0 %v1747
  %1974 = vmatprep.subr.bf16.mxu0 %v1752
  %1975 = vmatpush1.bf16.msra.mxu0 %v1751
  %1976 = vmatprep.subr.bf16.mxu0 %v1756
  %1977 = vmatpush1.bf16.msra.mxu0 %v1755
  %1978 = vmatprep.subr.bf16.mxu0 %v1760
  %1979 = vmatpush1.bf16.msra.mxu0 %v1759
  %1980 = vmatprep.subr.bf16.mxu0 %v1764
  %1981 = vmatpush1.bf16.msra.mxu0 %v1763
  %1982 = vmatprep.subr.bf16.mxu0 %v1768
  %1983 = vmatpush1.bf16.msra.mxu0 %v1767
  %1984 = vmatprep.mubr.bf16.mxu0 %v145
  %1985 = vmatmul.mubr.bf16.gmra.mrb[0].mxu0 %v144
  %v1986 = vpop.f32.mrb[0].mxu0
  %v1987 = vadd.f32 %v1934, %v1986
  %v1988 = vpop.f32.mrb[0].mxu0
  %v1989 = vadd.f32 %v1936, %v1988
  %v1990 = vpop.f32.mrb[0].mxu0
  %v1991 = vadd.f32 %v1938, %v1990
  %v1992 = vpop.f32.mrb[0].mxu0
  %v1993 = vadd.f32 %v1940, %v1992
  %1994 = vmatprep.mubr.bf16.mxu0 %v149
  %1995 = vmatmul.mubr.bf16.gmra.mrb[0].mxu0 %v148
  %v1996 = vpop.f32.mrb[0].mxu0
  %v1997 = vadd.f32 %v1944, %v1996
  %v1998 = vpop.f32.mrb[0].mxu0
  %v1999 = vadd.f32 %v1946, %v1998
  %v2000 = vpop.f32.mrb[0].mxu0
  %v2001 = vadd.f32 %v1948, %v2000
  %v2002 = vpop.f32.mrb[0].mxu0
  %v2003 = vadd.f32 %v1950, %v2002
  %2004 = vdwg.mxu0
  %2005 = vmatprep.subr.bf16.mxu0 %v1646
  %2006 = vmatpush1.bf16.msra.mxu0 %v1645
  %2007 = vmatprep.subr.bf16.mxu0 %v1650
  %2008 = vmatpush1.bf16.msra.mxu0 %v1649
  %2009 = vmatprep.subr.bf16.mxu0 %v1654
  %2010 = vmatpush1.bf16.msra.mxu0 %v1653
  %2011 = vmatprep.subr.bf16.mxu0 %v1658
  %2012 = vmatpush1.bf16.msra.mxu0 %v1657
  %2013 = vmatprep.subr.bf16.mxu0 %v1662
  %2014 = vmatpush1.bf16.msra.mxu0 %v1661
  %2015 = vmatprep.subr.bf16.mxu0 %v1666
  %2016 = vmatpush1.bf16.msra.mxu0 %v1665
  %2017 = vmatprep.subr.bf16.mxu0 %v1670
  %2018 = vmatpush1.bf16.msra.mxu0 %v1669
  %2019 = vmatprep.subr.bf16.mxu0 %v1674
  %2020 = vmatpush1.bf16.msra.mxu0 %v1673
  %2021 = vmatprep.subr.bf16.mxu0 %v1678
  %2022 = vmatpush1.bf16.msra.mxu0 %v1677
  %2023 = vmatprep.subr.bf16.mxu0 %v1682
  %2024 = vmatpush1.bf16.msra.mxu0 %v1681
  %2025 = vmatprep.subr.bf16.mxu0 %v1686
  %2026 = vmatpush1.bf16.msra.mxu0 %v1685
  %2027 = vmatprep.subr.bf16.mxu0 %v1690
  %2028 = vmatpush1.bf16.msra.mxu0 %v1689
  %2029 = vmatprep.subr.bf16.mxu0 %v1694
  %2030 = vmatpush1.bf16.msra.mxu0 %v1693
  %2031 = vmatprep.subr.bf16.mxu0 %v1698
  %2032 = vmatpush1.bf16.msra.mxu0 %v1697
  %2033 = vmatprep.subr.bf16.mxu0 %v1702
  %2034 = vmatpush1.bf16.msra.mxu0 %v1701
  %2035 = vmatprep.subr.bf16.mxu0 %v1706
  %2036 = vmatpush1.bf16.msra.mxu0 %v1705
  %2037 = vmatprep.mubr.bf16.mxu0 %v143
  %2038 = vmatmul.mubr.bf16.gmra.mrb[0].mxu0 %v142
  %v2039 = vpop.f32.mrb[0].mxu0
  %v2040 = vadd.f32 0.0, %v2039
  %v2041 = vpop.f32.mrb[0].mxu0
  %v2042 = vadd.f32 0.0, %v2041
  %v2043 = vpop.f32.mrb[0].mxu0
  %v2044 = vadd.f32 0.0, %v2043
  %v2045 = vpop.f32.mrb[0].mxu0
  %v2046 = vadd.f32 0.0, %v2045
  %2047 = vmatprep.mubr.bf16.mxu0 %v147
  %2048 = vmatmul.mubr.bf16.gmra.mrb[0].mxu0 %v146
  %v2049 = vpop.f32.mrb[0].mxu0
  %v2050 = vadd.f32 0.0, %v2049
  %v2051 = vpop.f32.mrb[0].mxu0
  %v2052 = vadd.f32 0.0, %v2051
  %v2053 = vpop.f32.mrb[0].mxu0
  %v2054 = vadd.f32 0.0, %v2053
  %v2055 = vpop.f32.mrb[0].mxu0
  %v2056 = vadd.f32 0.0, %v2055
  %2057 = vdwg.mxu0
  %2058 = vmatprep.subr.bf16.mxu0 %v1710
  %2059 = vmatpush1.bf16.msra.mxu0 %v1709
  %2060 = vmatprep.subr.bf16.mxu0 %v1714
  %2061 = vmatpush1.bf16.msra.mxu0 %v1713
  %2062 = vmatprep.subr.bf16.mxu0 %v1718
  %2063 = vmatpush1.bf16.msra.mxu0 %v1717
  %2064 = vmatprep.subr.bf16.mxu0 %v1722
  %2065 = vmatpush1.bf16.msra.mxu0 %v1721
  %2066 = vmatprep.subr.bf16.mxu0 %v1726
  %2067 = vmatpush1.bf16.msra.mxu0 %v1725
  %2068 = vmatprep.subr.bf16.mxu0 %v1730
  %2069 = vmatpush1.bf16.msra.mxu0 %v1729
  %2070 = vmatprep.subr.bf16.mxu0 %v1734
  %2071 = vmatpush1.bf16.msra.mxu0 %v1733
  %2072 = vmatprep.subr.bf16.mxu0 %v1738
  %2073 = vmatpush1.bf16.msra.mxu0 %v1737
  %2074 = vmatprep.subr.bf16.mxu0 %v1742
  %2075 = vmatpush1.bf16.msra.mxu0 %v1741
  %2076 = vmatprep.subr.bf16.mxu0 %v1746
  %2077 = vmatpush1.bf16.msra.mxu0 %v1745
  %2078 = vmatprep.subr.bf16.mxu0 %v1750
  %2079 = vmatpush1.bf16.msra.mxu0 %v1749
  %2080 = vmatprep.subr.bf16.mxu0 %v1754
  %2081 = vmatpush1.bf16.msra.mxu0 %v1753
  %2082 = vmatprep.subr.bf16.mxu0 %v1758
  %2083 = vmatpush1.bf16.msra.mxu0 %v1757
  %2084 = vmatprep.subr.bf16.mxu0 %v1762
  %2085 = vmatpush1.bf16.msra.mxu0 %v1761
  %2086 = vmatprep.subr.bf16.mxu0 %v1766
  %2087 = vmatpush1.bf16.msra.mxu0 %v1765
  %2088 = vmatprep.subr.bf16.mxu0 %v1770
  %2089 = vmatpush1.bf16.msra.mxu0 %v1769
  %2090 = vmatprep.mubr.bf16.mxu0 %v145
  %2091 = vmatmul.mubr.bf16.gmra.mrb[0].mxu0 %v144
  %v2092 = vpop.f32.mrb[0].mxu0
  %v2093 = vadd.f32 %v2040, %v2092
  %v2094 = vpop.f32.mrb[0].mxu0
  %v2095 = vadd.f32 %v2042, %v2094
  %v2096 = vpop.f32.mrb[0].mxu0
  %v2097 = vadd.f32 %v2044, %v2096
  %v2098 = vpop.f32.mrb[0].mxu0
  %v2099 = vadd.f32 %v2046, %v2098
  %2100 = vmatprep.mubr.bf16.mxu0 %v149
  %2101 = vmatmul.mubr.bf16.gmra.mrb[0].mxu0 %v148
  %v2102 = vpop.f32.mrb[0].mxu0
  %v2103 = vadd.f32 %v2050, %v2102
  %v2104 = vpop.f32.mrb[0].mxu0
  %v2105 = vadd.f32 %v2052, %v2104
  %v2106 = vpop.f32.mrb[0].mxu0
  %v2107 = vadd.f32 %v2054, %v2106
  %v2108 = vpop.f32.mrb[0].mxu0
  %v2109 = vadd.f32 %v2056, %v2108
  %2110 = vdwg.mxu0
  %s2111 = scalar_lea.vmem %s5, 2048
  %v2112 = vld [vmem:[%s2111] sm:$0xff]
  %v2113 = vld [vmem:[%s2111 + $0x8] sm:$0xff]
  %v2114 = vld [vmem:[%s2111 + $0x10] sm:$0xff]
  %v2115 = vld [vmem:[%s2111 + $0x18] sm:$0xff]
  %v2116 = vld [vmem:[%s2111 + $0x20] sm:$0xff]
  %v2117 = vld [vmem:[%s2111 + $0x28] sm:$0xff]
  %v2118 = vld [vmem:[%s2111 + $0x30] sm:$0xff]
  %v2119 = vld [vmem:[%s2111 + $0x38] sm:$0xff]
  %v2120 = vld [vmem:[%s2111 + $0x40] sm:$0xff]
  %v2121 = vld [vmem:[%s2111 + $0x48] sm:$0xff]
  %v2122 = vld [vmem:[%s2111 + $0x50] sm:$0xff]
  %v2123 = vld [vmem:[%s2111 + $0x58] sm:$0xff]
  %v2124 = vld [vmem:[%s2111 + $0x60] sm:$0xff]
  %v2125 = vld [vmem:[%s2111 + $0x68] sm:$0xff]
  %v2126 = vld [vmem:[%s2111 + $0x70] sm:$0xff]
  %v2127 = vld [vmem:[%s2111 + $0x78] sm:$0xff]
  %v2128 = vld [vmem:[%s2111 + $0x80] sm:$0xff]
  %v2129 = vld [vmem:[%s2111 + $0x88] sm:$0xff]
  %v2130 = vld [vmem:[%s2111 + $0x90] sm:$0xff]
  %v2131 = vld [vmem:[%s2111 + $0x98] sm:$0xff]
  %v2132 = vld [vmem:[%s2111 + $0xa0] sm:$0xff]
  %v2133 = vld [vmem:[%s2111 + $0xa8] sm:$0xff]
  %v2134 = vld [vmem:[%s2111 + $0xb0] sm:$0xff]
  %v2135 = vld [vmem:[%s2111 + $0xb8] sm:$0xff]
  %v2136 = vld [vmem:[%s2111 + $0xc0] sm:$0xff]
  %v2137 = vld [vmem:[%s2111 + $0xc8] sm:$0xff]
  %v2138 = vld [vmem:[%s2111 + $0xd0] sm:$0xff]
  %v2139 = vld [vmem:[%s2111 + $0xd8] sm:$0xff]
  %v2140 = vld [vmem:[%s2111 + $0xe0] sm:$0xff]
  %v2141 = vld [vmem:[%s2111 + $0xe8] sm:$0xff]
  %v2142 = vld [vmem:[%s2111 + $0xf0] sm:$0xff]
  %v2143 = vld [vmem:[%s2111 + $0xf8] sm:$0xff]
  %v2144 = vld [vmem:[%s2111 + $0x100] sm:$0xff]
  %v2145 = vld [vmem:[%s2111 + $0x108] sm:$0xff]
  %v2146 = vld [vmem:[%s2111 + $0x110] sm:$0xff]
  %v2147 = vld [vmem:[%s2111 + $0x118] sm:$0xff]
  %v2148 = vld [vmem:[%s2111 + $0x120] sm:$0xff]
  %v2149 = vld [vmem:[%s2111 + $0x128] sm:$0xff]
  %v2150 = vld [vmem:[%s2111 + $0x130] sm:$0xff]
  %v2151 = vld [vmem:[%s2111 + $0x138] sm:$0xff]
  %v2152 = vld [vmem:[%s2111 + $0x140] sm:$0xff]
  %v2153 = vld [vmem:[%s2111 + $0x148] sm:$0xff]
  %v2154 = vld [vmem:[%s2111 + $0x150] sm:$0xff]
  %v2155 = vld [vmem:[%s2111 + $0x158] sm:$0xff]
  %v2156 = vld [vmem:[%s2111 + $0x160] sm:$0xff]
  %v2157 = vld [vmem:[%s2111 + $0x168] sm:$0xff]
  %v2158 = vld [vmem:[%s2111 + $0x170] sm:$0xff]
  %v2159 = vld [vmem:[%s2111 + $0x178] sm:$0xff]
  %v2160 = vld [vmem:[%s2111 + $0x180] sm:$0xff]
  %v2161 = vld [vmem:[%s2111 + $0x188] sm:$0xff]
  %v2162 = vld [vmem:[%s2111 + $0x190] sm:$0xff]
  %v2163 = vld [vmem:[%s2111 + $0x198] sm:$0xff]
  %v2164 = vld [vmem:[%s2111 + $0x1a0] sm:$0xff]
  %v2165 = vld [vmem:[%s2111 + $0x1a8] sm:$0xff]
  %v2166 = vld [vmem:[%s2111 + $0x1b0] sm:$0xff]
  %v2167 = vld [vmem:[%s2111 + $0x1b8] sm:$0xff]
  %v2168 = vld [vmem:[%s2111 + $0x1c0] sm:$0xff]
  %v2169 = vld [vmem:[%s2111 + $0x1c8] sm:$0xff]
  %v2170 = vld [vmem:[%s2111 + $0x1d0] sm:$0xff]
  %v2171 = vld [vmem:[%s2111 + $0x1d8] sm:$0xff]
  %v2172 = vld [vmem:[%s2111 + $0x1e0] sm:$0xff]
  %v2173 = vld [vmem:[%s2111 + $0x1e8] sm:$0xff]
  %v2174 = vld [vmem:[%s2111 + $0x1f0] sm:$0xff]
  %v2175 = vld [vmem:[%s2111 + $0x1f8] sm:$0xff]
  %v2176 = vld [vmem:[%s2111 + $0x200] sm:$0xff]
  %v2177 = vld [vmem:[%s2111 + $0x208] sm:$0xff]
  %v2178 = vld [vmem:[%s2111 + $0x210] sm:$0xff]
  %v2179 = vld [vmem:[%s2111 + $0x218] sm:$0xff]
  %v2180 = vld [vmem:[%s2111 + $0x220] sm:$0xff]
  %v2181 = vld [vmem:[%s2111 + $0x228] sm:$0xff]
  %v2182 = vld [vmem:[%s2111 + $0x230] sm:$0xff]
  %v2183 = vld [vmem:[%s2111 + $0x238] sm:$0xff]
  %v2184 = vld [vmem:[%s2111 + $0x240] sm:$0xff]
  %v2185 = vld [vmem:[%s2111 + $0x248] sm:$0xff]
  %v2186 = vld [vmem:[%s2111 + $0x250] sm:$0xff]
  %v2187 = vld [vmem:[%s2111 + $0x258] sm:$0xff]
  %v2188 = vld [vmem:[%s2111 + $0x260] sm:$0xff]
  %v2189 = vld [vmem:[%s2111 + $0x268] sm:$0xff]
  %v2190 = vld [vmem:[%s2111 + $0x270] sm:$0xff]
  %v2191 = vld [vmem:[%s2111 + $0x278] sm:$0xff]
  %v2192 = vld [vmem:[%s2111 + $0x280] sm:$0xff]
  %v2193 = vld [vmem:[%s2111 + $0x288] sm:$0xff]
  %v2194 = vld [vmem:[%s2111 + $0x290] sm:$0xff]
  %v2195 = vld [vmem:[%s2111 + $0x298] sm:$0xff]
  %v2196 = vld [vmem:[%s2111 + $0x2a0] sm:$0xff]
  %v2197 = vld [vmem:[%s2111 + $0x2a8] sm:$0xff]
  %v2198 = vld [vmem:[%s2111 + $0x2b0] sm:$0xff]
  %v2199 = vld [vmem:[%s2111 + $0x2b8] sm:$0xff]
  %v2200 = vld [vmem:[%s2111 + $0x2c0] sm:$0xff]
  %v2201 = vld [vmem:[%s2111 + $0x2c8] sm:$0xff]
  %v2202 = vld [vmem:[%s2111 + $0x2d0] sm:$0xff]
  %v2203 = vld [vmem:[%s2111 + $0x2d8] sm:$0xff]
  %v2204 = vld [vmem:[%s2111 + $0x2e0] sm:$0xff]
  %v2205 = vld [vmem:[%s2111 + $0x2e8] sm:$0xff]
  %v2206 = vld [vmem:[%s2111 + $0x2f0] sm:$0xff]
  %v2207 = vld [vmem:[%s2111 + $0x2f8] sm:$0xff]
  %v2208 = vld [vmem:[%s2111 + $0x300] sm:$0xff]
  %v2209 = vld [vmem:[%s2111 + $0x308] sm:$0xff]
  %v2210 = vld [vmem:[%s2111 + $0x310] sm:$0xff]
  %v2211 = vld [vmem:[%s2111 + $0x318] sm:$0xff]
  %v2212 = vld [vmem:[%s2111 + $0x320] sm:$0xff]
  %v2213 = vld [vmem:[%s2111 + $0x328] sm:$0xff]
  %v2214 = vld [vmem:[%s2111 + $0x330] sm:$0xff]
  %v2215 = vld [vmem:[%s2111 + $0x338] sm:$0xff]
  %v2216 = vld [vmem:[%s2111 + $0x340] sm:$0xff]
  %v2217 = vld [vmem:[%s2111 + $0x348] sm:$0xff]
  %v2218 = vld [vmem:[%s2111 + $0x350] sm:$0xff]
  %v2219 = vld [vmem:[%s2111 + $0x358] sm:$0xff]
  %v2220 = vld [vmem:[%s2111 + $0x360] sm:$0xff]
  %v2221 = vld [vmem:[%s2111 + $0x368] sm:$0xff]
  %v2222 = vld [vmem:[%s2111 + $0x370] sm:$0xff]
  %v2223 = vld [vmem:[%s2111 + $0x378] sm:$0xff]
  %v2224 = vld [vmem:[%s2111 + $0x380] sm:$0xff]
  %v2225 = vld [vmem:[%s2111 + $0x388] sm:$0xff]
  %v2226 = vld [vmem:[%s2111 + $0x390] sm:$0xff]
  %v2227 = vld [vmem:[%s2111 + $0x398] sm:$0xff]
  %v2228 = vld [vmem:[%s2111 + $0x3a0] sm:$0xff]
  %v2229 = vld [vmem:[%s2111 + $0x3a8] sm:$0xff]
  %v2230 = vld [vmem:[%s2111 + $0x3b0] sm:$0xff]
  %v2231 = vld [vmem:[%s2111 + $0x3b8] sm:$0xff]
  %v2232 = vld [vmem:[%s2111 + $0x3c0] sm:$0xff]
  %v2233 = vld [vmem:[%s2111 + $0x3c8] sm:$0xff]
  %v2234 = vld [vmem:[%s2111 + $0x3d0] sm:$0xff]
  %v2235 = vld [vmem:[%s2111 + $0x3d8] sm:$0xff]
  %v2236 = vld [vmem:[%s2111 + $0x3e0] sm:$0xff]
  %v2237 = vld [vmem:[%s2111 + $0x3e8] sm:$0xff]
  %v2238 = vld [vmem:[%s2111 + $0x3f0] sm:$0xff]
  %v2239 = vld [vmem:[%s2111 + $0x3f8] sm:$0xff]
  %v2368 = vunpack.c.l.b16 %v2112
  %v2369 = vunpack.c.h.b16 %v2112
  %v2370 = vunpack.c.l.b16 %v2113
  %v2371 = vunpack.c.h.b16 %v2113
  %v2372 = vunpack.c.l.b16 %v2114
  %v2373 = vunpack.c.h.b16 %v2114
  %v2374 = vunpack.c.l.b16 %v2115
  %v2375 = vunpack.c.h.b16 %v2115
  %v2376 = vunpack.c.l.b16 %v2116
  %v2377 = vunpack.c.h.b16 %v2116
  %v2378 = vunpack.c.l.b16 %v2117
  %v2379 = vunpack.c.h.b16 %v2117
  %v2380 = vunpack.c.l.b16 %v2118
  %v2381 = vunpack.c.h.b16 %v2118
  %v2382 = vunpack.c.l.b16 %v2119
  %v2383 = vunpack.c.h.b16 %v2119
  %v2384 = vunpack.c.l.b16 %v2120
  %v2385 = vunpack.c.h.b16 %v2120
  %v2386 = vunpack.c.l.b16 %v2121
  %v2387 = vunpack.c.h.b16 %v2121
  %v2388 = vunpack.c.l.b16 %v2122
  %v2389 = vunpack.c.h.b16 %v2122
  %v2390 = vunpack.c.l.b16 %v2123
  %v2391 = vunpack.c.h.b16 %v2123
  %v2392 = vunpack.c.l.b16 %v2124
  %v2393 = vunpack.c.h.b16 %v2124
  %v2394 = vunpack.c.l.b16 %v2125
  %v2395 = vunpack.c.h.b16 %v2125
  %v2396 = vunpack.c.l.b16 %v2126
  %v2397 = vunpack.c.h.b16 %v2126
  %v2398 = vunpack.c.l.b16 %v2127
  %v2399 = vunpack.c.h.b16 %v2127
  %v2400 = vunpack.c.l.b16 %v2128
  %v2401 = vunpack.c.h.b16 %v2128
  %v2402 = vunpack.c.l.b16 %v2129
  %v2403 = vunpack.c.h.b16 %v2129
  %v2404 = vunpack.c.l.b16 %v2130
  %v2405 = vunpack.c.h.b16 %v2130
  %v2406 = vunpack.c.l.b16 %v2131
  %v2407 = vunpack.c.h.b16 %v2131
  %v2408 = vunpack.c.l.b16 %v2132
  %v2409 = vunpack.c.h.b16 %v2132
  %v2410 = vunpack.c.l.b16 %v2133
  %v2411 = vunpack.c.h.b16 %v2133
  %v2412 = vunpack.c.l.b16 %v2134
  %v2413 = vunpack.c.h.b16 %v2134
  %v2414 = vunpack.c.l.b16 %v2135
  %v2415 = vunpack.c.h.b16 %v2135
  %v2416 = vunpack.c.l.b16 %v2136
  %v2417 = vunpack.c.h.b16 %v2136
  %v2418 = vunpack.c.l.b16 %v2137
  %v2419 = vunpack.c.h.b16 %v2137
  %v2420 = vunpack.c.l.b16 %v2138
  %v2421 = vunpack.c.h.b16 %v2138
  %v2422 = vunpack.c.l.b16 %v2139
  %v2423 = vunpack.c.h.b16 %v2139
  %v2424 = vunpack.c.l.b16 %v2140
  %v2425 = vunpack.c.h.b16 %v2140
  %v2426 = vunpack.c.l.b16 %v2141
  %v2427 = vunpack.c.h.b16 %v2141
  %v2428 = vunpack.c.l.b16 %v2142
  %v2429 = vunpack.c.h.b16 %v2142
  %v2430 = vunpack.c.l.b16 %v2143
  %v2431 = vunpack.c.h.b16 %v2143
  %v2432 = vunpack.c.l.b16 %v2144
  %v2433 = vunpack.c.h.b16 %v2144
  %v2434 = vunpack.c.l.b16 %v2145
  %v2435 = vunpack.c.h.b16 %v2145
  %v2436 = vunpack.c.l.b16 %v2146
  %v2437 = vunpack.c.h.b16 %v2146
  %v2438 = vunpack.c.l.b16 %v2147
  %v2439 = vunpack.c.h.b16 %v2147
  %v2440 = vunpack.c.l.b16 %v2148
  %v2441 = vunpack.c.h.b16 %v2148
  %v2442 = vunpack.c.l.b16 %v2149
  %v2443 = vunpack.c.h.b16 %v2149
  %v2444 = vunpack.c.l.b16 %v2150
  %v2445 = vunpack.c.h.b16 %v2150
  %v2446 = vunpack.c.l.b16 %v2151
  %v2447 = vunpack.c.h.b16 %v2151
  %v2448 = vunpack.c.l.b16 %v2152
  %v2449 = vunpack.c.h.b16 %v2152
  %v2450 = vunpack.c.l.b16 %v2153
  %v2451 = vunpack.c.h.b16 %v2153
  %v2452 = vunpack.c.l.b16 %v2154
  %v2453 = vunpack.c.h.b16 %v2154
  %v2454 = vunpack.c.l.b16 %v2155
  %v2455 = vunpack.c.h.b16 %v2155
  %v2456 = vunpack.c.l.b16 %v2156
  %v2457 = vunpack.c.h.b16 %v2156
  %v2458 = vunpack.c.l.b16 %v2157
  %v2459 = vunpack.c.h.b16 %v2157
  %v2460 = vunpack.c.l.b16 %v2158
  %v2461 = vunpack.c.h.b16 %v2158
  %v2462 = vunpack.c.l.b16 %v2159
  %v2463 = vunpack.c.h.b16 %v2159
  %v2464 = vunpack.c.l.b16 %v2160
  %v2465 = vunpack.c.h.b16 %v2160
  %v2466 = vunpack.c.l.b16 %v2161
  %v2467 = vunpack.c.h.b16 %v2161
  %v2468 = vunpack.c.l.b16 %v2162
  %v2469 = vunpack.c.h.b16 %v2162
  %v2470 = vunpack.c.l.b16 %v2163
  %v2471 = vunpack.c.h.b16 %v2163
  %v2472 = vunpack.c.l.b16 %v2164
  %v2473 = vunpack.c.h.b16 %v2164
  %v2474 = vunpack.c.l.b16 %v2165
  %v2475 = vunpack.c.h.b16 %v2165
  %v2476 = vunpack.c.l.b16 %v2166
  %v2477 = vunpack.c.h.b16 %v2166
  %v2478 = vunpack.c.l.b16 %v2167
  %v2479 = vunpack.c.h.b16 %v2167
  %v2480 = vunpack.c.l.b16 %v2168
  %v2481 = vunpack.c.h.b16 %v2168
  %v2482 = vunpack.c.l.b16 %v2169
  %v2483 = vunpack.c.h.b16 %v2169
  %v2484 = vunpack.c.l.b16 %v2170
  %v2485 = vunpack.c.h.b16 %v2170
  %v2486 = vunpack.c.l.b16 %v2171
  %v2487 = vunpack.c.h.b16 %v2171
  %v2488 = vunpack.c.l.b16 %v2172
  %v2489 = vunpack.c.h.b16 %v2172
  %v2490 = vunpack.c.l.b16 %v2173
  %v2491 = vunpack.c.h.b16 %v2173
  %v2492 = vunpack.c.l.b16 %v2174
  %v2493 = vunpack.c.h.b16 %v2174
  %v2494 = vunpack.c.l.b16 %v2175
  %v2495 = vunpack.c.h.b16 %v2175
  %v2496 = vunpack.c.l.b16 %v2176
  %v2497 = vunpack.c.h.b16 %v2176
  %v2498 = vunpack.c.l.b16 %v2177
  %v2499 = vunpack.c.h.b16 %v2177
  %v2500 = vunpack.c.l.b16 %v2178
  %v2501 = vunpack.c.h.b16 %v2178
  %v2502 = vunpack.c.l.b16 %v2179
  %v2503 = vunpack.c.h.b16 %v2179
  %v2504 = vunpack.c.l.b16 %v2180
  %v2505 = vunpack.c.h.b16 %v2180
  %v2506 = vunpack.c.l.b16 %v2181
  %v2507 = vunpack.c.h.b16 %v2181
  %v2508 = vunpack.c.l.b16 %v2182
  %v2509 = vunpack.c.h.b16 %v2182
  %v2510 = vunpack.c.l.b16 %v2183
  %v2511 = vunpack.c.h.b16 %v2183
  %v2512 = vunpack.c.l.b16 %v2184
  %v2513 = vunpack.c.h.b16 %v2184
  %v2514 = vunpack.c.l.b16 %v2185
  %v2515 = vunpack.c.h.b16 %v2185
  %v2516 = vunpack.c.l.b16 %v2186
  %v2517 = vunpack.c.h.b16 %v2186
  %v2518 = vunpack.c.l.b16 %v2187
  %v2519 = vunpack.c.h.b16 %v2187
  %v2520 = vunpack.c.l.b16 %v2188
  %v2521 = vunpack.c.h.b16 %v2188
  %v2522 = vunpack.c.l.b16 %v2189
  %v2523 = vunpack.c.h.b16 %v2189
  %v2524 = vunpack.c.l.b16 %v2190
  %v2525 = vunpack.c.h.b16 %v2190
  %v2526 = vunpack.c.l.b16 %v2191
  %v2527 = vunpack.c.h.b16 %v2191
  %v2528 = vunpack.c.l.b16 %v2192
  %v2529 = vunpack.c.h.b16 %v2192
  %v2530 = vunpack.c.l.b16 %v2193
  %v2531 = vunpack.c.h.b16 %v2193
  %v2532 = vunpack.c.l.b16 %v2194
  %v2533 = vunpack.c.h.b16 %v2194
  %v2534 = vunpack.c.l.b16 %v2195
  %v2535 = vunpack.c.h.b16 %v2195
  %v2536 = vunpack.c.l.b16 %v2196
  %v2537 = vunpack.c.h.b16 %v2196
  %v2538 = vunpack.c.l.b16 %v2197
  %v2539 = vunpack.c.h.b16 %v2197
  %v2540 = vunpack.c.l.b16 %v2198
  %v2541 = vunpack.c.h.b16 %v2198
  %v2542 = vunpack.c.l.b16 %v2199
  %v2543 = vunpack.c.h.b16 %v2199
  %v2544 = vunpack.c.l.b16 %v2200
  %v2545 = vunpack.c.h.b16 %v2200
  %v2546 = vunpack.c.l.b16 %v2201
  %v2547 = vunpack.c.h.b16 %v2201
  %v2548 = vunpack.c.l.b16 %v2202
  %v2549 = vunpack.c.h.b16 %v2202
  %v2550 = vunpack.c.l.b16 %v2203
  %v2551 = vunpack.c.h.b16 %v2203
  %v2552 = vunpack.c.l.b16 %v2204
  %v2553 = vunpack.c.h.b16 %v2204
  %v2554 = vunpack.c.l.b16 %v2205
  %v2555 = vunpack.c.h.b16 %v2205
  %v2556 = vunpack.c.l.b16 %v2206
  %v2557 = vunpack.c.h.b16 %v2206
  %v2558 = vunpack.c.l.b16 %v2207
  %v2559 = vunpack.c.h.b16 %v2207
  %v2560 = vunpack.c.l.b16 %v2208
  %v2561 = vunpack.c.h.b16 %v2208
  %v2562 = vunpack.c.l.b16 %v2209
  %v2563 = vunpack.c.h.b16 %v2209
  %v2564 = vunpack.c.l.b16 %v2210
  %v2565 = vunpack.c.h.b16 %v2210
  %v2566 = vunpack.c.l.b16 %v2211
  %v2567 = vunpack.c.h.b16 %v2211
  %v2568 = vunpack.c.l.b16 %v2212
  %v2569 = vunpack.c.h.b16 %v2212
  %v2570 = vunpack.c.l.b16 %v2213
  %v2571 = vunpack.c.h.b16 %v2213
  %v2572 = vunpack.c.l.b16 %v2214
  %v2573 = vunpack.c.h.b16 %v2214
  %v2574 = vunpack.c.l.b16 %v2215
  %v2575 = vunpack.c.h.b16 %v2215
  %v2576 = vunpack.c.l.b16 %v2216
  %v2577 = vunpack.c.h.b16 %v2216
  %v2578 = vunpack.c.l.b16 %v2217
  %v2579 = vunpack.c.h.b16 %v2217
  %v2580 = vunpack.c.l.b16 %v2218
  %v2581 = vunpack.c.h.b16 %v2218
  %v2582 = vunpack.c.l.b16 %v2219
  %v2583 = vunpack.c.h.b16 %v2219
  %v2584 = vunpack.c.l.b16 %v2220
  %v2585 = vunpack.c.h.b16 %v2220
  %v2586 = vunpack.c.l.b16 %v2221
  %v2587 = vunpack.c.h.b16 %v2221
  %v2588 = vunpack.c.l.b16 %v2222
  %v2589 = vunpack.c.h.b16 %v2222
  %v2590 = vunpack.c.l.b16 %v2223
  %v2591 = vunpack.c.h.b16 %v2223
  %v2592 = vunpack.c.l.b16 %v2224
  %v2593 = vunpack.c.h.b16 %v2224
  %v2594 = vunpack.c.l.b16 %v2225
  %v2595 = vunpack.c.h.b16 %v2225
  %v2596 = vunpack.c.l.b16 %v2226
  %v2597 = vunpack.c.h.b16 %v2226
  %v2598 = vunpack.c.l.b16 %v2227
  %v2599 = vunpack.c.h.b16 %v2227
  %v2600 = vunpack.c.l.b16 %v2228
  %v2601 = vunpack.c.h.b16 %v2228
  %v2602 = vunpack.c.l.b16 %v2229
  %v2603 = vunpack.c.h.b16 %v2229
  %v2604 = vunpack.c.l.b16 %v2230
  %v2605 = vunpack.c.h.b16 %v2230
  %v2606 = vunpack.c.l.b16 %v2231
  %v2607 = vunpack.c.h.b16 %v2231
  %v2608 = vunpack.c.l.b16 %v2232
  %v2609 = vunpack.c.h.b16 %v2232
  %v2610 = vunpack.c.l.b16 %v2233
  %v2611 = vunpack.c.h.b16 %v2233
  %v2612 = vunpack.c.l.b16 %v2234
  %v2613 = vunpack.c.h.b16 %v2234
  %v2614 = vunpack.c.l.b16 %v2235
  %v2615 = vunpack.c.h.b16 %v2235
  %v2616 = vunpack.c.l.b16 %v2236
  %v2617 = vunpack.c.h.b16 %v2236
  %v2618 = vunpack.c.l.b16 %v2237
  %v2619 = vunpack.c.h.b16 %v2237
  %v2620 = vunpack.c.l.b16 %v2238
  %v2621 = vunpack.c.h.b16 %v2238
  %v2622 = vunpack.c.l.b16 %v2239
  %v2623 = vunpack.c.h.b16 %v2239
  %v2624 = vpack.c.b16 %v2372, %v2368
  %v2625 = vpack.c.b16 %v2373, %v2369
  %v2626 = vpack.c.b16 %v2374, %v2370
  %v2627 = vpack.c.b16 %v2375, %v2371
  %v2628 = vpack.c.b16 %v2380, %v2376
  %v2629 = vpack.c.b16 %v2381, %v2377
  %v2630 = vpack.c.b16 %v2382, %v2378
  %v2631 = vpack.c.b16 %v2383, %v2379
  %v2632 = vpack.c.b16 %v2388, %v2384
  %v2633 = vpack.c.b16 %v2389, %v2385
  %v2634 = vpack.c.b16 %v2390, %v2386
  %v2635 = vpack.c.b16 %v2391, %v2387
  %v2636 = vpack.c.b16 %v2396, %v2392
  %v2637 = vpack.c.b16 %v2397, %v2393
  %v2638 = vpack.c.b16 %v2398, %v2394
  %v2639 = vpack.c.b16 %v2399, %v2395
  %v2640 = vpack.c.b16 %v2404, %v2400
  %v2641 = vpack.c.b16 %v2405, %v2401
  %v2642 = vpack.c.b16 %v2406, %v2402
  %v2643 = vpack.c.b16 %v2407, %v2403
  %v2644 = vpack.c.b16 %v2412, %v2408
  %v2645 = vpack.c.b16 %v2413, %v2409
  %v2646 = vpack.c.b16 %v2414, %v2410
  %v2647 = vpack.c.b16 %v2415, %v2411
  %v2648 = vpack.c.b16 %v2420, %v2416
  %v2649 = vpack.c.b16 %v2421, %v2417
  %v2650 = vpack.c.b16 %v2422, %v2418
  %v2651 = vpack.c.b16 %v2423, %v2419
  %v2652 = vpack.c.b16 %v2428, %v2424
  %v2653 = vpack.c.b16 %v2429, %v2425
  %v2654 = vpack.c.b16 %v2430, %v2426
  %v2655 = vpack.c.b16 %v2431, %v2427
  %v2656 = vpack.c.b16 %v2436, %v2432
  %v2657 = vpack.c.b16 %v2437, %v2433
  %v2658 = vpack.c.b16 %v2438, %v2434
  %v2659 = vpack.c.b16 %v2439, %v2435
  %v2660 = vpack.c.b16 %v2444, %v2440
  %v2661 = vpack.c.b16 %v2445, %v2441
  %v2662 = vpack.c.b16 %v2446, %v2442
  %v2663 = vpack.c.b16 %v2447, %v2443
  %v2664 = vpack.c.b16 %v2452, %v2448
  %v2665 = vpack.c.b16 %v2453, %v2449
  %v2666 = vpack.c.b16 %v2454, %v2450
  %v2667 = vpack.c.b16 %v2455, %v2451
  %v2668 = vpack.c.b16 %v2460, %v2456
  %v2669 = vpack.c.b16 %v2461, %v2457
  %v2670 = vpack.c.b16 %v2462, %v2458
  %v2671 = vpack.c.b16 %v2463, %v2459
  %v2672 = vpack.c.b16 %v2468, %v2464
  %v2673 = vpack.c.b16 %v2469, %v2465
  %v2674 = vpack.c.b16 %v2470, %v2466
  %v2675 = vpack.c.b16 %v2471, %v2467
  %v2676 = vpack.c.b16 %v2476, %v2472
  %v2677 = vpack.c.b16 %v2477, %v2473
  %v2678 = vpack.c.b16 %v2478, %v2474
  %v2679 = vpack.c.b16 %v2479, %v2475
  %v2680 = vpack.c.b16 %v2484, %v2480
  %v2681 = vpack.c.b16 %v2485, %v2481
  %v2682 = vpack.c.b16 %v2486, %v2482
  %v2683 = vpack.c.b16 %v2487, %v2483
  %v2684 = vpack.c.b16 %v2492, %v2488
  %v2685 = vpack.c.b16 %v2493, %v2489
  %v2686 = vpack.c.b16 %v2494, %v2490
  %v2687 = vpack.c.b16 %v2495, %v2491
  %v2688 = vpack.c.b16 %v2500, %v2496
  %v2689 = vpack.c.b16 %v2501, %v2497
  %v2690 = vpack.c.b16 %v2502, %v2498
  %v2691 = vpack.c.b16 %v2503, %v2499
  %v2692 = vpack.c.b16 %v2508, %v2504
  %v2693 = vpack.c.b16 %v2509, %v2505
  %v2694 = vpack.c.b16 %v2510, %v2506
  %v2695 = vpack.c.b16 %v2511, %v2507
  %v2696 = vpack.c.b16 %v2516, %v2512
  %v2697 = vpack.c.b16 %v2517, %v2513
  %v2698 = vpack.c.b16 %v2518, %v2514
  %v2699 = vpack.c.b16 %v2519, %v2515
  %v2700 = vpack.c.b16 %v2524, %v2520
  %v2701 = vpack.c.b16 %v2525, %v2521
  %v2702 = vpack.c.b16 %v2526, %v2522
  %v2703 = vpack.c.b16 %v2527, %v2523
  %v2704 = vpack.c.b16 %v2532, %v2528
  %v2705 = vpack.c.b16 %v2533, %v2529
  %v2706 = vpack.c.b16 %v2534, %v2530
  %v2707 = vpack.c.b16 %v2535, %v2531
  %v2708 = vpack.c.b16 %v2540, %v2536
  %v2709 = vpack.c.b16 %v2541, %v2537
  %v2710 = vpack.c.b16 %v2542, %v2538
  %v2711 = vpack.c.b16 %v2543, %v2539
  %v2712 = vpack.c.b16 %v2548, %v2544
  %v2713 = vpack.c.b16 %v2549, %v2545
  %v2714 = vpack.c.b16 %v2550, %v2546
  %v2715 = vpack.c.b16 %v2551, %v2547
  %v2716 = vpack.c.b16 %v2556, %v2552
  %v2717 = vpack.c.b16 %v2557, %v2553
  %v2718 = vpack.c.b16 %v2558, %v2554
  %v2719 = vpack.c.b16 %v2559, %v2555
  %v2720 = vpack.c.b16 %v2564, %v2560
  %v2721 = vpack.c.b16 %v2565, %v2561
  %v2722 = vpack.c.b16 %v2566, %v2562
  %v2723 = vpack.c.b16 %v2567, %v2563
  %v2724 = vpack.c.b16 %v2572, %v2568
  %v2725 = vpack.c.b16 %v2573, %v2569
  %v2726 = vpack.c.b16 %v2574, %v2570
  %v2727 = vpack.c.b16 %v2575, %v2571
  %v2728 = vpack.c.b16 %v2580, %v2576
  %v2729 = vpack.c.b16 %v2581, %v2577
  %v2730 = vpack.c.b16 %v2582, %v2578
  %v2731 = vpack.c.b16 %v2583, %v2579
  %v2732 = vpack.c.b16 %v2588, %v2584
  %v2733 = vpack.c.b16 %v2589, %v2585
  %v2734 = vpack.c.b16 %v2590, %v2586
  %v2735 = vpack.c.b16 %v2591, %v2587
  %v2736 = vpack.c.b16 %v2596, %v2592
  %v2737 = vpack.c.b16 %v2597, %v2593
  %v2738 = vpack.c.b16 %v2598, %v2594
  %v2739 = vpack.c.b16 %v2599, %v2595
  %v2740 = vpack.c.b16 %v2604, %v2600
  %v2741 = vpack.c.b16 %v2605, %v2601
  %v2742 = vpack.c.b16 %v2606, %v2602
  %v2743 = vpack.c.b16 %v2607, %v2603
  %v2744 = vpack.c.b16 %v2612, %v2608
  %v2745 = vpack.c.b16 %v2613, %v2609
  %v2746 = vpack.c.b16 %v2614, %v2610
  %v2747 = vpack.c.b16 %v2615, %v2611
  %v2748 = vpack.c.b16 %v2620, %v2616
  %v2749 = vpack.c.b16 %v2621, %v2617
  %v2750 = vpack.c.b16 %v2622, %v2618
  %v2751 = vpack.c.b16 %v2623, %v2619
  %2880 = vmatprep.subr.bf16.mxu0 %v2625
  %2881 = vmatpush1.bf16.msra.mxu0 %v2624
  %2882 = vmatprep.subr.bf16.mxu0 %v2629
  %2883 = vmatpush1.bf16.msra.mxu0 %v2628
  %2884 = vmatprep.subr.bf16.mxu0 %v2633
  %2885 = vmatpush1.bf16.msra.mxu0 %v2632
  %2886 = vmatprep.subr.bf16.mxu0 %v2637
  %2887 = vmatpush1.bf16.msra.mxu0 %v2636
  %2888 = vmatprep.subr.bf16.mxu0 %v2641
  %2889 = vmatpush1.bf16.msra.mxu0 %v2640
  %2890 = vmatprep.subr.bf16.mxu0 %v2645
  %2891 = vmatpush1.bf16.msra.mxu0 %v2644
  %2892 = vmatprep.subr.bf16.mxu0 %v2649
  %2893 = vmatpush1.bf16.msra.mxu0 %v2648
  %2894 = vmatprep.subr.bf16.mxu0 %v2653
  %2895 = vmatpush1.bf16.msra.mxu0 %v2652
  %2896 = vmatprep.subr.bf16.mxu0 %v2657
  %2897 = vmatpush1.bf16.msra.mxu0 %v2656
  %2898 = vmatprep.subr.bf16.mxu0 %v2661
  %2899 = vmatpush1.bf16.msra.mxu0 %v2660
  %2900 = vmatprep.subr.bf16.mxu0 %v2665
  %2901 = vmatpush1.bf16.msra.mxu0 %v2664
  %2902 = vmatprep.subr.bf16.mxu0 %v2669
  %2903 = vmatpush1.bf16.msra.mxu0 %v2668
  %2904 = vmatprep.subr.bf16.mxu0 %v2673
  %2905 = vmatpush1.bf16.msra.mxu0 %v2672
  %2906 = vmatprep.subr.bf16.mxu0 %v2677
  %2907 = vmatpush1.bf16.msra.mxu0 %v2676
  %2908 = vmatprep.subr.bf16.mxu0 %v2681
  %2909 = vmatpush1.bf16.msra.mxu0 %v2680
  %2910 = vmatprep.subr.bf16.mxu0 %v2685
  %2911 = vmatpush1.bf16.msra.mxu0 %v2684
  %2912 = vmatprep.mubr.bf16.mxu0 %v143
  %2913 = vmatmul.mubr.bf16.gmra.mrb[0].mxu0 %v142
  %v2914 = vpop.f32.mrb[0].mxu0
  %v2915 = vadd.f32 0.0, %v2914
  %v2916 = vpop.f32.mrb[0].mxu0
  %v2917 = vadd.f32 0.0, %v2916
  %v2918 = vpop.f32.mrb[0].mxu0
  %v2919 = vadd.f32 0.0, %v2918
  %v2920 = vpop.f32.mrb[0].mxu0
  %v2921 = vadd.f32 0.0, %v2920
  %2922 = vmatprep.mubr.bf16.mxu0 %v147
  %2923 = vmatmul.mubr.bf16.gmra.mrb[0].mxu0 %v146
  %v2924 = vpop.f32.mrb[0].mxu0
  %v2925 = vadd.f32 0.0, %v2924
  %v2926 = vpop.f32.mrb[0].mxu0
  %v2927 = vadd.f32 0.0, %v2926
  %v2928 = vpop.f32.mrb[0].mxu0
  %v2929 = vadd.f32 0.0, %v2928
  %v2930 = vpop.f32.mrb[0].mxu0
  %v2931 = vadd.f32 0.0, %v2930
  %2932 = vdwg.mxu0
  %2933 = vmatprep.subr.bf16.mxu0 %v2689
  %2934 = vmatpush1.bf16.msra.mxu0 %v2688
  %2935 = vmatprep.subr.bf16.mxu0 %v2693
  %2936 = vmatpush1.bf16.msra.mxu0 %v2692
  %2937 = vmatprep.subr.bf16.mxu0 %v2697
  %2938 = vmatpush1.bf16.msra.mxu0 %v2696
  %2939 = vmatprep.subr.bf16.mxu0 %v2701
  %2940 = vmatpush1.bf16.msra.mxu0 %v2700
  %2941 = vmatprep.subr.bf16.mxu0 %v2705
  %2942 = vmatpush1.bf16.msra.mxu0 %v2704
  %2943 = vmatprep.subr.bf16.mxu0 %v2709
  %2944 = vmatpush1.bf16.msra.mxu0 %v2708
  %2945 = vmatprep.subr.bf16.mxu0 %v2713
  %2946 = vmatpush1.bf16.msra.mxu0 %v2712
  %2947 = vmatprep.subr.bf16.mxu0 %v2717
  %2948 = vmatpush1.bf16.msra.mxu0 %v2716
  %2949 = vmatprep.subr.bf16.mxu0 %v2721
  %2950 = vmatpush1.bf16.msra.mxu0 %v2720
  %2951 = vmatprep.subr.bf16.mxu0 %v2725
  %2952 = vmatpush1.bf16.msra.mxu0 %v2724
  %2953 = vmatprep.subr.bf16.mxu0 %v2729
  %2954 = vmatpush1.bf16.msra.mxu0 %v2728
  %2955 = vmatprep.subr.bf16.mxu0 %v2733
  %2956 = vmatpush1.bf16.msra.mxu0 %v2732
  %2957 = vmatprep.subr.bf16.mxu0 %v2737
  %2958 = vmatpush1.bf16.msra.mxu0 %v2736
  %2959 = vmatprep.subr.bf16.mxu0 %v2741
  %2960 = vmatpush1.bf16.msra.mxu0 %v2740
  %2961 = vmatprep.subr.bf16.mxu0 %v2745
  %2962 = vmatpush1.bf16.msra.mxu0 %v2744
  %2963 = vmatprep.subr.bf16.mxu0 %v2749
  %2964 = vmatpush1.bf16.msra.mxu0 %v2748
  %2965 = vmatprep.mubr.bf16.mxu0 %v145
  %2966 = vmatmul.mubr.bf16.gmra.mrb[0].mxu0 %v144
  %v2967 = vpop.f32.mrb[0].mxu0
  %v2968 = vadd.f32 %v2915, %v2967
  %v2969 = vpop.f32.mrb[0].mxu0
  %v2970 = vadd.f32 %v2917, %v2969
  %v2971 = vpop.f32.mrb[0].mxu0
  %v2972 = vadd.f32 %v2919, %v2971
  %v2973 = vpop.f32.mrb[0].mxu0
  %v2974 = vadd.f32 %v2921, %v2973
  %2975 = vmatprep.mubr.bf16.mxu0 %v149
  %2976 = vmatmul.mubr.bf16.gmra.mrb[0].mxu0 %v148
  %v2977 = vpop.f32.mrb[0].mxu0
  %v2978 = vadd.f32 %v2925, %v2977
  %v2979 = vpop.f32.mrb[0].mxu0
  %v2980 = vadd.f32 %v2927, %v2979
  %v2981 = vpop.f32.mrb[0].mxu0
  %v2982 = vadd.f32 %v2929, %v2981
  %v2983 = vpop.f32.mrb[0].mxu0
  %v2984 = vadd.f32 %v2931, %v2983
  %2985 = vdwg.mxu0
  %2986 = vmatprep.subr.bf16.mxu0 %v2627
  %2987 = vmatpush1.bf16.msra.mxu0 %v2626
  %2988 = vmatprep.subr.bf16.mxu0 %v2631
  %2989 = vmatpush1.bf16.msra.mxu0 %v2630
  %2990 = vmatprep.subr.bf16.mxu0 %v2635
  %2991 = vmatpush1.bf16.msra.mxu0 %v2634
  %2992 = vmatprep.subr.bf16.mxu0 %v2639
  %2993 = vmatpush1.bf16.msra.mxu0 %v2638
  %2994 = vmatprep.subr.bf16.mxu0 %v2643
  %2995 = vmatpush1.bf16.msra.mxu0 %v2642
  %2996 = vmatprep.subr.bf16.mxu0 %v2647
  %2997 = vmatpush1.bf16.msra.mxu0 %v2646
  %2998 = vmatprep.subr.bf16.mxu0 %v2651
  %2999 = vmatpush1.bf16.msra.mxu0 %v2650
  %3000 = vmatprep.subr.bf16.mxu0 %v2655
  %3001 = vmatpush1.bf16.msra.mxu0 %v2654
  %3002 = vmatprep.subr.bf16.mxu0 %v2659
  %3003 = vmatpush1.bf16.msra.mxu0 %v2658
  %3004 = vmatprep.subr.bf16.mxu0 %v2663
  %3005 = vmatpush1.bf16.msra.mxu0 %v2662
  %3006 = vmatprep.subr.bf16.mxu0 %v2667
  %3007 = vmatpush1.bf16.msra.mxu0 %v2666
  %3008 = vmatprep.subr.bf16.mxu0 %v2671
  %3009 = vmatpush1.bf16.msra.mxu0 %v2670
  %3010 = vmatprep.subr.bf16.mxu0 %v2675
  %3011 = vmatpush1.bf16.msra.mxu0 %v2674
  %3012 = vmatprep.subr.bf16.mxu0 %v2679
  %3013 = vmatpush1.bf16.msra.mxu0 %v2678
  %3014 = vmatprep.subr.bf16.mxu0 %v2683
  %3015 = vmatpush1.bf16.msra.mxu0 %v2682
  %3016 = vmatprep.subr.bf16.mxu0 %v2687
  %3017 = vmatpush1.bf16.msra.mxu0 %v2686
  %3018 = vmatprep.mubr.bf16.mxu0 %v143
  %3019 = vmatmul.mubr.bf16.gmra.mrb[0].mxu0 %v142
  %v3020 = vpop.f32.mrb[0].mxu0
  %v3021 = vadd.f32 0.0, %v3020
  %v3022 = vpop.f32.mrb[0].mxu0
  %v3023 = vadd.f32 0.0, %v3022
  %v3024 = vpop.f32.mrb[0].mxu0
  %v3025 = vadd.f32 0.0, %v3024
  %v3026 = vpop.f32.mrb[0].mxu0
  %v3027 = vadd.f32 0.0, %v3026
  %3028 = vmatprep.mubr.bf16.mxu0 %v147
  %3029 = vmatmul.mubr.bf16.gmra.mrb[0].mxu0 %v146
  %v3030 = vpop.f32.mrb[0].mxu0
  %v3031 = vadd.f32 0.0, %v3030
  %v3032 = vpop.f32.mrb[0].mxu0
  %v3033 = vadd.f32 0.0, %v3032
  %v3034 = vpop.f32.mrb[0].mxu0
  %v3035 = vadd.f32 0.0, %v3034
  %v3036 = vpop.f32.mrb[0].mxu0
  %v3037 = vadd.f32 0.0, %v3036
  %3038 = vdwg.mxu0
  %3039 = vmatprep.subr.bf16.mxu0 %v2691
  %3040 = vmatpush1.bf16.msra.mxu0 %v2690
  %3041 = vmatprep.subr.bf16.mxu0 %v2695
  %3042 = vmatpush1.bf16.msra.mxu0 %v2694
  %3043 = vmatprep.subr.bf16.mxu0 %v2699
  %3044 = vmatpush1.bf16.msra.mxu0 %v2698
  %3045 = vmatprep.subr.bf16.mxu0 %v2703
  %3046 = vmatpush1.bf16.msra.mxu0 %v2702
  %3047 = vmatprep.subr.bf16.mxu0 %v2707
  %3048 = vmatpush1.bf16.msra.mxu0 %v2706
  %3049 = vmatprep.subr.bf16.mxu0 %v2711
  %3050 = vmatpush1.bf16.msra.mxu0 %v2710
  %3051 = vmatprep.subr.bf16.mxu0 %v2715
  %3052 = vmatpush1.bf16.msra.mxu0 %v2714
  %3053 = vmatprep.subr.bf16.mxu0 %v2719
  %3054 = vmatpush1.bf16.msra.mxu0 %v2718
  %3055 = vmatprep.subr.bf16.mxu0 %v2723
  %3056 = vmatpush1.bf16.msra.mxu0 %v2722
  %3057 = vmatprep.subr.bf16.mxu0 %v2727
  %3058 = vmatpush1.bf16.msra.mxu0 %v2726
  %3059 = vmatprep.subr.bf16.mxu0 %v2731
  %3060 = vmatpush1.bf16.msra.mxu0 %v2730
  %3061 = vmatprep.subr.bf16.mxu0 %v2735
  %3062 = vmatpush1.bf16.msra.mxu0 %v2734
  %3063 = vmatprep.subr.bf16.mxu0 %v2739
  %3064 = vmatpush1.bf16.msra.mxu0 %v2738
  %3065 = vmatprep.subr.bf16.mxu0 %v2743
  %3066 = vmatpush1.bf16.msra.mxu0 %v2742
  %3067 = vmatprep.subr.bf16.mxu0 %v2747
  %3068 = vmatpush1.bf16.msra.mxu0 %v2746
  %3069 = vmatprep.subr.bf16.mxu0 %v2751
  %3070 = vmatpush1.bf16.msra.mxu0 %v2750
  %3071 = vmatprep.mubr.bf16.mxu0 %v145
  %3072 = vmatmul.mubr.bf16.gmra.mrb[0].mxu0 %v144
  %v3073 = vpop.f32.mrb[0].mxu0
  %v3074 = vadd.f32 %v3021, %v3073
  %v3075 = vpop.f32.mrb[0].mxu0
  %v3076 = vadd.f32 %v3023, %v3075
  %v3077 = vpop.f32.mrb[0].mxu0
  %v3078 = vadd.f32 %v3025, %v3077
  %v3079 = vpop.f32.mrb[0].mxu0
  %v3080 = vadd.f32 %v3027, %v3079
  %3081 = vmatprep.mubr.bf16.mxu0 %v149
  %3082 = vmatmul.mubr.bf16.gmra.mrb[0].mxu0 %v148
  %v3083 = vpop.f32.mrb[0].mxu0
  %v3084 = vadd.f32 %v3031, %v3083
  %v3085 = vpop.f32.mrb[0].mxu0
  %v3086 = vadd.f32 %v3033, %v3085
  %v3087 = vpop.f32.mrb[0].mxu0
  %v3088 = vadd.f32 %v3035, %v3087
  %v3089 = vpop.f32.mrb[0].mxu0
  %v3090 = vadd.f32 %v3037, %v3089
  %3091 = vdwg.mxu0
  %vm3092 = vcmask 261120
  %v3094 = vsel %vm3092, %v54, 0
  %v3097 = vsel %vm3092, %v55, 0
  %v3100 = vsel %vm3092, %v56, 0
  %v3103 = vsel %vm3092, %v57, 0
  %3105 = vmatprep.subr.mxu0 %v1008
  %3106 = vmatpush1.msra.mxu0 %v1006
  %3107 = vmatprep.subr.mxu0 %v1012
  %3108 = vmatpush1.msra.mxu0 %v1010
  %3109 = vmatprep.subr.mxu0 %v1018
  %3110 = vmatpush1.msra.mxu0 %v1016
  %3111 = vmatprep.subr.mxu0 %v1022
  %3112 = vmatpush1.msra.mxu0 %v1020
  %3113 = vmatprep.subr.mxu0 0.0
  %3114 = vmatpush1.msra.mxu0 0.0
  %3115 = vmatprep.subr.mxu0 0.0
  %3116 = vmatpush1.msra.mxu0 0.0
  %3117 = vmatprep.subr.mxu0 0.0
  %3118 = vmatpush1.msra.mxu0 0.0
  %3119 = vmatprep.subr.mxu0 0.0
  %3120 = vmatpush1.msra.mxu0 0.0
  %3121 = vmatprep.subr.mxu0 0.0
  %3122 = vmatpush1.msra.mxu0 0.0
  %3123 = vmatprep.subr.mxu0 0.0
  %3124 = vmatpush1.msra.mxu0 0.0
  %3125 = vmatprep.subr.mxu0 0.0
  %3126 = vmatpush1.msra.mxu0 0.0
  %3127 = vmatprep.subr.mxu0 0.0
  %3128 = vmatpush1.msra.mxu0 0.0
  %3129 = vmatprep.subr.mxu0 0.0
  %3130 = vmatpush1.msra.mxu0 0.0
  %3131 = vmatprep.subr.mxu0 0.0
  %3132 = vmatpush1.msra.mxu0 0.0
  %3133 = vmatprep.subr.mxu0 0.0
  %3134 = vmatpush1.msra.mxu0 0.0
  %3135 = vmatprep.subr.mxu0 0.0
  %3136 = vmatpush1.msra.mxu0 0.0
  %3137 = vmatprep.subr.mxu0 0.0
  %3138 = vmatpush1.msra.mxu0 0.0
  %3139 = vmatprep.subr.mxu0 0.0
  %3140 = vmatpush1.msra.mxu0 0.0
  %3141 = vmatprep.subr.mxu0 0.0
  %3142 = vmatpush1.msra.mxu0 0.0
  %3143 = vmatprep.subr.mxu0 0.0
  %3144 = vmatpush1.msra.mxu0 0.0
  %3145 = vmatprep.subr.mxu0 0.0
  %3146 = vmatpush1.msra.mxu0 0.0
  %3147 = vmatprep.subr.mxu0 0.0
  %3148 = vmatpush1.msra.mxu0 0.0
  %3149 = vmatprep.subr.mxu0 0.0
  %3150 = vmatpush1.msra.mxu0 0.0
  %3151 = vmatprep.subr.mxu0 0.0
  %3152 = vmatpush1.msra.mxu0 0.0
  %3153 = vmatprep.subr.mxu0 0.0
  %3154 = vmatpush1.msra.mxu0 0.0
  %3155 = vmatprep.subr.mxu0 0.0
  %3156 = vmatpush1.msra.mxu0 0.0
  %3157 = vmatprep.subr.mxu0 0.0
  %3158 = vmatpush1.msra.mxu0 0.0
  %3159 = vmatprep.subr.mxu0 0.0
  %3160 = vmatpush1.msra.mxu0 0.0
  %3161 = vmatprep.subr.mxu0 0.0
  %3162 = vmatpush1.msra.mxu0 0.0
  %3163 = vmatprep.subr.mxu0 0.0
  %3164 = vmatpush1.msra.mxu0 0.0
  %3165 = vmatprep.subr.mxu0 0.0
  %3166 = vmatpush1.msra.mxu0 0.0
  %3167 = vmatprep.subr.mxu0 0.0
  %3168 = vmatpush1.msra.mxu0 0.0
  %3169 = vmatprep.mubr.f32.mxu0 0.0
  %3170 = vmatmul.mubr.f32.gmra.mrb[0].mxu0 %v3094
  %v3171 = vpop.f32.mrb[0].mxu0
  %v3172 = vadd.f32 %v1987, %v3171
  %v3173 = vpop.f32.mrb[0].mxu0
  %v3174 = vadd.f32 %v1989, %v3173
  %3175 = vmatprep.mubr.f32.mxu0 0.0
  %3176 = vmatmul.mubr.f32.gmra.mrb[0].mxu0 %v3097
  %v3177 = vpop.f32.mrb[0].mxu0
  %v3178 = vadd.f32 %v1991, %v3177
  %v3179 = vpop.f32.mrb[0].mxu0
  %v3180 = vadd.f32 %v1993, %v3179
  %3181 = vmatprep.mubr.f32.mxu0 0.0
  %3182 = vmatmul.mubr.f32.gmra.mrb[0].mxu0 %v3100
  %v3183 = vpop.f32.mrb[0].mxu0
  %v3184 = vadd.f32 %v1997, %v3183
  %v3185 = vpop.f32.mrb[0].mxu0
  %v3186 = vadd.f32 %v1999, %v3185
  %3187 = vmatprep.mubr.f32.mxu0 0.0
  %3188 = vmatmul.mubr.f32.gmra.mrb[0].mxu0 %v3103
  %v3189 = vpop.f32.mrb[0].mxu0
  %v3190 = vadd.f32 %v2001, %v3189
  %v3191 = vpop.f32.mrb[0].mxu0
  %v3192 = vadd.f32 %v2003, %v3191
  %3193 = vdwg.mxu0
  %3194 = vmatprep.subr.mxu0 %v1114
  %3195 = vmatpush1.msra.mxu0 %v1112
  %3196 = vmatprep.subr.mxu0 %v1118
  %3197 = vmatpush1.msra.mxu0 %v1116
  %3198 = vmatprep.subr.mxu0 %v1124
  %3199 = vmatpush1.msra.mxu0 %v1122
  %3200 = vmatprep.subr.mxu0 %v1128
  %3201 = vmatpush1.msra.mxu0 %v1126
  %3202 = vmatprep.subr.mxu0 0.0
  %3203 = vmatpush1.msra.mxu0 0.0
  %3204 = vmatprep.subr.mxu0 0.0
  %3205 = vmatpush1.msra.mxu0 0.0
  %3206 = vmatprep.subr.mxu0 0.0
  %3207 = vmatpush1.msra.mxu0 0.0
  %3208 = vmatprep.subr.mxu0 0.0
  %3209 = vmatpush1.msra.mxu0 0.0
  %3210 = vmatprep.subr.mxu0 0.0
  %3211 = vmatpush1.msra.mxu0 0.0
  %3212 = vmatprep.subr.mxu0 0.0
  %3213 = vmatpush1.msra.mxu0 0.0
  %3214 = vmatprep.subr.mxu0 0.0
  %3215 = vmatpush1.msra.mxu0 0.0
  %3216 = vmatprep.subr.mxu0 0.0
  %3217 = vmatpush1.msra.mxu0 0.0
  %3218 = vmatprep.subr.mxu0 0.0
  %3219 = vmatpush1.msra.mxu0 0.0
  %3220 = vmatprep.subr.mxu0 0.0
  %3221 = vmatpush1.msra.mxu0 0.0
  %3222 = vmatprep.subr.mxu0 0.0
  %3223 = vmatpush1.msra.mxu0 0.0
  %3224 = vmatprep.subr.mxu0 0.0
  %3225 = vmatpush1.msra.mxu0 0.0
  %3226 = vmatprep.subr.mxu0 0.0
  %3227 = vmatpush1.msra.mxu0 0.0
  %3228 = vmatprep.subr.mxu0 0.0
  %3229 = vmatpush1.msra.mxu0 0.0
  %3230 = vmatprep.subr.mxu0 0.0
  %3231 = vmatpush1.msra.mxu0 0.0
  %3232 = vmatprep.subr.mxu0 0.0
  %3233 = vmatpush1.msra.mxu0 0.0
  %3234 = vmatprep.subr.mxu0 0.0
  %3235 = vmatpush1.msra.mxu0 0.0
  %3236 = vmatprep.subr.mxu0 0.0
  %3237 = vmatpush1.msra.mxu0 0.0
  %3238 = vmatprep.subr.mxu0 0.0
  %3239 = vmatpush1.msra.mxu0 0.0
  %3240 = vmatprep.subr.mxu0 0.0
  %3241 = vmatpush1.msra.mxu0 0.0
  %3242 = vmatprep.subr.mxu0 0.0
  %3243 = vmatpush1.msra.mxu0 0.0
  %3244 = vmatprep.subr.mxu0 0.0
  %3245 = vmatpush1.msra.mxu0 0.0
  %3246 = vmatprep.subr.mxu0 0.0
  %3247 = vmatpush1.msra.mxu0 0.0
  %3248 = vmatprep.subr.mxu0 0.0
  %3249 = vmatpush1.msra.mxu0 0.0
  %3250 = vmatprep.subr.mxu0 0.0
  %3251 = vmatpush1.msra.mxu0 0.0
  %3252 = vmatprep.subr.mxu0 0.0
  %3253 = vmatpush1.msra.mxu0 0.0
  %3254 = vmatprep.subr.mxu0 0.0
  %3255 = vmatpush1.msra.mxu0 0.0
  %3256 = vmatprep.subr.mxu0 0.0
  %3257 = vmatpush1.msra.mxu0 0.0
  %3258 = vmatprep.mubr.f32.mxu0 0.0
  %3259 = vmatmul.mubr.f32.gmra.mrb[0].mxu0 %v3094
  %v3260 = vpop.f32.mrb[0].mxu0
  %v3261 = vadd.f32 %v2093, %v3260
  %v3262 = vpop.f32.mrb[0].mxu0
  %v3263 = vadd.f32 %v2095, %v3262
  %3264 = vmatprep.mubr.f32.mxu0 0.0
  %3265 = vmatmul.mubr.f32.gmra.mrb[0].mxu0 %v3097
  %v3266 = vpop.f32.mrb[0].mxu0
  %v3267 = vadd.f32 %v2097, %v3266
  %v3268 = vpop.f32.mrb[0].mxu0
  %v3269 = vadd.f32 %v2099, %v3268
  %3270 = vmatprep.mubr.f32.mxu0 0.0
  %3271 = vmatmul.mubr.f32.gmra.mrb[0].mxu0 %v3100
  %v3272 = vpop.f32.mrb[0].mxu0
  %v3273 = vadd.f32 %v2103, %v3272
  %v3274 = vpop.f32.mrb[0].mxu0
  %v3275 = vadd.f32 %v2105, %v3274
  %3276 = vmatprep.mubr.f32.mxu0 0.0
  %3277 = vmatmul.mubr.f32.gmra.mrb[0].mxu0 %v3103
  %v3278 = vpop.f32.mrb[0].mxu0
  %v3279 = vadd.f32 %v2107, %v3278
  %v3280 = vpop.f32.mrb[0].mxu0
  %v3281 = vadd.f32 %v2109, %v3280
  %3282 = vdwg.mxu0
  %v3284 = vsel %vm3092, %v58, 0
  %v3287 = vsel %vm3092, %v59, 0
  %v3290 = vsel %vm3092, %v60, 0
  %v3293 = vsel %vm3092, %v61, 0
  %3295 = vmatprep.subr.mxu0 %v2970
  %3296 = vmatpush1.msra.mxu0 %v2968
  %3297 = vmatprep.subr.mxu0 %v2974
  %3298 = vmatpush1.msra.mxu0 %v2972
  %3299 = vmatprep.subr.mxu0 %v2980
  %3300 = vmatpush1.msra.mxu0 %v2978
  %3301 = vmatprep.subr.mxu0 %v2984
  %3302 = vmatpush1.msra.mxu0 %v2982
  %3303 = vmatprep.subr.mxu0 0.0
  %3304 = vmatpush1.msra.mxu0 0.0
  %3305 = vmatprep.subr.mxu0 0.0
  %3306 = vmatpush1.msra.mxu0 0.0
  %3307 = vmatprep.subr.mxu0 0.0
  %3308 = vmatpush1.msra.mxu0 0.0
  %3309 = vmatprep.subr.mxu0 0.0
  %3310 = vmatpush1.msra.mxu0 0.0
  %3311 = vmatprep.subr.mxu0 0.0
  %3312 = vmatpush1.msra.mxu0 0.0
  %3313 = vmatprep.subr.mxu0 0.0
  %3314 = vmatpush1.msra.mxu0 0.0
  %3315 = vmatprep.subr.mxu0 0.0
  %3316 = vmatpush1.msra.mxu0 0.0
  %3317 = vmatprep.subr.mxu0 0.0
  %3318 = vmatpush1.msra.mxu0 0.0
  %3319 = vmatprep.subr.mxu0 0.0
  %3320 = vmatpush1.msra.mxu0 0.0
  %3321 = vmatprep.subr.mxu0 0.0
  %3322 = vmatpush1.msra.mxu0 0.0
  %3323 = vmatprep.subr.mxu0 0.0
  %3324 = vmatpush1.msra.mxu0 0.0
  %3325 = vmatprep.subr.mxu0 0.0
  %3326 = vmatpush1.msra.mxu0 0.0
  %3327 = vmatprep.subr.mxu0 0.0
  %3328 = vmatpush1.msra.mxu0 0.0
  %3329 = vmatprep.subr.mxu0 0.0
  %3330 = vmatpush1.msra.mxu0 0.0
  %3331 = vmatprep.subr.mxu0 0.0
  %3332 = vmatpush1.msra.mxu0 0.0
  %3333 = vmatprep.subr.mxu0 0.0
  %3334 = vmatpush1.msra.mxu0 0.0
  %3335 = vmatprep.subr.mxu0 0.0
  %3336 = vmatpush1.msra.mxu0 0.0
  %3337 = vmatprep.subr.mxu0 0.0
  %3338 = vmatpush1.msra.mxu0 0.0
  %3339 = vmatprep.subr.mxu0 0.0
  %3340 = vmatpush1.msra.mxu0 0.0
  %3341 = vmatprep.subr.mxu0 0.0
  %3342 = vmatpush1.msra.mxu0 0.0
  %3343 = vmatprep.subr.mxu0 0.0
  %3344 = vmatpush1.msra.mxu0 0.0
  %3345 = vmatprep.subr.mxu0 0.0
  %3346 = vmatpush1.msra.mxu0 0.0
  %3347 = vmatprep.subr.mxu0 0.0
  %3348 = vmatpush1.msra.mxu0 0.0
  %3349 = vmatprep.subr.mxu0 0.0
  %3350 = vmatpush1.msra.mxu0 0.0
  %3351 = vmatprep.subr.mxu0 0.0
  %3352 = vmatpush1.msra.mxu0 0.0
  %3353 = vmatprep.subr.mxu0 0.0
  %3354 = vmatpush1.msra.mxu0 0.0
  %3355 = vmatprep.subr.mxu0 0.0
  %3356 = vmatpush1.msra.mxu0 0.0
  %3357 = vmatprep.subr.mxu0 0.0
  %3358 = vmatpush1.msra.mxu0 0.0
  %3359 = vmatprep.mubr.f32.mxu0 0.0
  %3360 = vmatmul.mubr.f32.gmra.mrb[0].mxu0 %v3284
  %v3361 = vpop.f32.mrb[0].mxu0
  %v3362 = vadd.f32 0.0, %v3361
  %v3363 = vpop.f32.mrb[0].mxu0
  %v3364 = vadd.f32 0.0, %v3363
  %3365 = vmatprep.mubr.f32.mxu0 0.0
  %3366 = vmatmul.mubr.f32.gmra.mrb[0].mxu0 %v3287
  %v3367 = vpop.f32.mrb[0].mxu0
  %v3368 = vadd.f32 0.0, %v3367
  %v3369 = vpop.f32.mrb[0].mxu0
  %v3370 = vadd.f32 0.0, %v3369
  %3371 = vmatprep.mubr.f32.mxu0 0.0
  %3372 = vmatmul.mubr.f32.gmra.mrb[0].mxu0 %v3290
  %v3373 = vpop.f32.mrb[0].mxu0
  %v3374 = vadd.f32 0.0, %v3373
  %v3375 = vpop.f32.mrb[0].mxu0
  %v3376 = vadd.f32 0.0, %v3375
  %3377 = vmatprep.mubr.f32.mxu0 0.0
  %3378 = vmatmul.mubr.f32.gmra.mrb[0].mxu0 %v3293
  %v3379 = vpop.f32.mrb[0].mxu0
  %v3380 = vadd.f32 0.0, %v3379
  %v3381 = vpop.f32.mrb[0].mxu0
  %v3382 = vadd.f32 0.0, %v3381
  %3383 = vdwg.mxu0
  %3384 = vmatprep.subr.mxu0 %v3076
  %3385 = vmatpush1.msra.mxu0 %v3074
  %3386 = vmatprep.subr.mxu0 %v3080
  %3387 = vmatpush1.msra.mxu0 %v3078
  %3388 = vmatprep.subr.mxu0 %v3086
  %3389 = vmatpush1.msra.mxu0 %v3084
  %3390 = vmatprep.subr.mxu0 %v3090
  %3391 = vmatpush1.msra.mxu0 %v3088
  %3392 = vmatprep.subr.mxu0 0.0
  %3393 = vmatpush1.msra.mxu0 0.0
  %3394 = vmatprep.subr.mxu0 0.0
  %3395 = vmatpush1.msra.mxu0 0.0
  %3396 = vmatprep.subr.mxu0 0.0
  %3397 = vmatpush1.msra.mxu0 0.0
  %3398 = vmatprep.subr.mxu0 0.0
  %3399 = vmatpush1.msra.mxu0 0.0
  %3400 = vmatprep.subr.mxu0 0.0
  %3401 = vmatpush1.msra.mxu0 0.0
  %3402 = vmatprep.subr.mxu0 0.0
  %3403 = vmatpush1.msra.mxu0 0.0
  %3404 = vmatprep.subr.mxu0 0.0
  %3405 = vmatpush1.msra.mxu0 0.0
  %3406 = vmatprep.subr.mxu0 0.0
  %3407 = vmatpush1.msra.mxu0 0.0
  %3408 = vmatprep.subr.mxu0 0.0
  %3409 = vmatpush1.msra.mxu0 0.0
  %3410 = vmatprep.subr.mxu0 0.0
  %3411 = vmatpush1.msra.mxu0 0.0
  %3412 = vmatprep.subr.mxu0 0.0
  %3413 = vmatpush1.msra.mxu0 0.0
  %3414 = vmatprep.subr.mxu0 0.0
  %3415 = vmatpush1.msra.mxu0 0.0
  %3416 = vmatprep.subr.mxu0 0.0
  %3417 = vmatpush1.msra.mxu0 0.0
  %3418 = vmatprep.subr.mxu0 0.0
  %3419 = vmatpush1.msra.mxu0 0.0
  %3420 = vmatprep.subr.mxu0 0.0
  %3421 = vmatpush1.msra.mxu0 0.0
  %3422 = vmatprep.subr.mxu0 0.0
  %3423 = vmatpush1.msra.mxu0 0.0
  %3424 = vmatprep.subr.mxu0 0.0
  %3425 = vmatpush1.msra.mxu0 0.0
  %3426 = vmatprep.subr.mxu0 0.0
  %3427 = vmatpush1.msra.mxu0 0.0
  %3428 = vmatprep.subr.mxu0 0.0
  %3429 = vmatpush1.msra.mxu0 0.0
  %3430 = vmatprep.subr.mxu0 0.0
  %3431 = vmatpush1.msra.mxu0 0.0
  %3432 = vmatprep.subr.mxu0 0.0
  %3433 = vmatpush1.msra.mxu0 0.0
  %3434 = vmatprep.subr.mxu0 0.0
  %3435 = vmatpush1.msra.mxu0 0.0
  %3436 = vmatprep.subr.mxu0 0.0
  %3437 = vmatpush1.msra.mxu0 0.0
  %3438 = vmatprep.subr.mxu0 0.0
  %3439 = vmatpush1.msra.mxu0 0.0
  %3440 = vmatprep.subr.mxu0 0.0
  %3441 = vmatpush1.msra.mxu0 0.0
  %3442 = vmatprep.subr.mxu0 0.0
  %3443 = vmatpush1.msra.mxu0 0.0
  %3444 = vmatprep.subr.mxu0 0.0
  %3445 = vmatpush1.msra.mxu0 0.0
  %3446 = vmatprep.subr.mxu0 0.0
  %3447 = vmatpush1.msra.mxu0 0.0
  %3448 = vmatprep.mubr.f32.mxu0 0.0
  %3449 = vmatmul.mubr.f32.gmra.mrb[0].mxu0 %v3284
  %v3450 = vpop.f32.mrb[0].mxu0
  %v3451 = vadd.f32 0.0, %v3450
  %v3452 = vpop.f32.mrb[0].mxu0
  %v3453 = vadd.f32 0.0, %v3452
  %3454 = vmatprep.mubr.f32.mxu0 0.0
  %3455 = vmatmul.mubr.f32.gmra.mrb[0].mxu0 %v3287
  %v3456 = vpop.f32.mrb[0].mxu0
  %v3457 = vadd.f32 0.0, %v3456
  %v3458 = vpop.f32.mrb[0].mxu0
  %v3459 = vadd.f32 0.0, %v3458
  %3460 = vmatprep.mubr.f32.mxu0 0.0
  %3461 = vmatmul.mubr.f32.gmra.mrb[0].mxu0 %v3290
  %v3462 = vpop.f32.mrb[0].mxu0
  %v3463 = vadd.f32 0.0, %v3462
  %v3464 = vpop.f32.mrb[0].mxu0
  %v3465 = vadd.f32 0.0, %v3464
  %3466 = vmatprep.mubr.f32.mxu0 0.0
  %3467 = vmatmul.mubr.f32.gmra.mrb[0].mxu0 %v3293
  %v3468 = vpop.f32.mrb[0].mxu0
  %v3469 = vadd.f32 0.0, %v3468
  %v3470 = vpop.f32.mrb[0].mxu0
  %v3471 = vadd.f32 0.0, %v3470
  %3472 = vdwg.mxu0
  %v3473 = vadd.f32 %v3172, %v3362
  %v3474 = vadd.f32 %v3174, %v3364
  %v3475 = vadd.f32 %v3261, %v3451
  %v3476 = vadd.f32 %v3263, %v3453
  %v3477 = vadd.f32 %v3178, %v3368
  %v3478 = vadd.f32 %v3180, %v3370
  %v3479 = vadd.f32 %v3267, %v3457
  %v3480 = vadd.f32 %v3269, %v3459
  %v3481 = vadd.f32 %v3184, %v3374
  %v3482 = vadd.f32 %v3186, %v3376
  %v3483 = vadd.f32 %v3273, %v3463
  %v3484 = vadd.f32 %v3275, %v3465
  %v3485 = vadd.f32 %v3190, %v3380
  %v3486 = vadd.f32 %v3192, %v3382
  %v3487 = vadd.f32 %v3279, %v3469
  %v3488 = vadd.f32 %v3281, %v3471
  %v3489 = vadd.f32 %v3473, %v3477
  %v3490 = vadd.f32 %v3489, %v3481
  %v3491 = vadd.f32 %v3490, %v3485
  %v3492 = vrot.slane %v3491, 4
  %v3493 = vadd.f32 %v3491, %v3492
  %v3494 = vrot.slane %v3493, 2
  %v3495 = vadd.f32 %v3493, %v3494
  %v3496 = vrot.slane %v3495, 1
  %v3497 = vadd.f32 %v3495, %v3496
  %v3498 = vadd.f32 %v3474, %v3478
  %v3499 = vadd.f32 %v3498, %v3482
  %v3500 = vadd.f32 %v3499, %v3486
  %v3501 = vrot.slane %v3500, 4
  %v3502 = vadd.f32 %v3500, %v3501
  %v3503 = vrot.slane %v3502, 2
  %v3504 = vadd.f32 %v3502, %v3503
  %v3505 = vrot.slane %v3504, 1
  %v3506 = vadd.f32 %v3504, %v3505
  %v3507 = vadd.f32 %v3475, %v3479
  %v3508 = vadd.f32 %v3507, %v3483
  %v3509 = vadd.f32 %v3508, %v3487
  %v3510 = vrot.slane %v3509, 4
  %v3511 = vadd.f32 %v3509, %v3510
  %v3512 = vrot.slane %v3511, 2
  %v3513 = vadd.f32 %v3511, %v3512
  %v3514 = vrot.slane %v3513, 1
  %v3515 = vadd.f32 %v3513, %v3514
  %v3516 = vadd.f32 %v3476, %v3480
  %v3517 = vadd.f32 %v3516, %v3484
  %v3518 = vadd.f32 %v3517, %v3488
  %v3519 = vrot.slane %v3518, 4
  %v3520 = vadd.f32 %v3518, %v3519
  %v3521 = vrot.slane %v3520, 2
  %v3522 = vadd.f32 %v3520, %v3521
  %v3523 = vrot.slane %v3522, 1
  %v3524 = vadd.f32 %v3522, %v3523
  %v3525 = vmul.f32 %v3473, %v3473
  %v3526 = vmul.f32 %v3474, %v3474
  %v3527 = vmul.f32 %v3475, %v3475
  %v3528 = vmul.f32 %v3476, %v3476
  %v3529 = vmul.f32 %v3477, %v3477
  %v3530 = vmul.f32 %v3478, %v3478
  %v3531 = vmul.f32 %v3479, %v3479
  %v3532 = vmul.f32 %v3480, %v3480
  %v3533 = vmul.f32 %v3481, %v3481
  %v3534 = vmul.f32 %v3482, %v3482
  %v3535 = vmul.f32 %v3483, %v3483
  %v3536 = vmul.f32 %v3484, %v3484
  %v3537 = vmul.f32 %v3485, %v3485
  %v3538 = vmul.f32 %v3486, %v3486
  %v3539 = vmul.f32 %v3487, %v3487
  %v3540 = vmul.f32 %v3488, %v3488
  %v3541 = vadd.f32 %v3525, %v3529
  %v3542 = vadd.f32 %v3541, %v3533
  %v3543 = vadd.f32 %v3542, %v3537
  %v3544 = vrot.slane %v3543, 4
  %v3545 = vadd.f32 %v3543, %v3544
  %v3546 = vrot.slane %v3545, 2
  %v3547 = vadd.f32 %v3545, %v3546
  %v3548 = vrot.slane %v3547, 1
  %v3549 = vadd.f32 %v3547, %v3548
  %v3550 = vadd.f32 %v3526, %v3530
  %v3551 = vadd.f32 %v3550, %v3534
  %v3552 = vadd.f32 %v3551, %v3538
  %v3553 = vrot.slane %v3552, 4
  %v3554 = vadd.f32 %v3552, %v3553
  %v3555 = vrot.slane %v3554, 2
  %v3556 = vadd.f32 %v3554, %v3555
  %v3557 = vrot.slane %v3556, 1
  %v3558 = vadd.f32 %v3556, %v3557
  %v3559 = vadd.f32 %v3527, %v3531
  %v3560 = vadd.f32 %v3559, %v3535
  %v3561 = vadd.f32 %v3560, %v3539
  %v3562 = vrot.slane %v3561, 4
  %v3563 = vadd.f32 %v3561, %v3562
  %v3564 = vrot.slane %v3563, 2
  %v3565 = vadd.f32 %v3563, %v3564
  %v3566 = vrot.slane %v3565, 1
  %v3567 = vadd.f32 %v3565, %v3566
  %v3568 = vadd.f32 %v3528, %v3532
  %v3569 = vadd.f32 %v3568, %v3536
  %v3570 = vadd.f32 %v3569, %v3540
  %v3571 = vrot.slane %v3570, 4
  %v3572 = vadd.f32 %v3570, %v3571
  %v3573 = vrot.slane %v3572, 2
  %v3574 = vadd.f32 %v3572, %v3573
  %v3575 = vrot.slane %v3574, 1
  %v3576 = vadd.f32 %v3574, %v3575
  %3577 = vmatprep.subr.mxu0 0.0
  %3578 = vmatpush1.msra.mxu0 %v62
  %3579 = vmatprep.subr.mxu0 0.0
  %3580 = vmatpush1.msra.mxu0 %v63
  %3581 = vmatprep.subr.mxu0 0.0
  %3582 = vmatpush1.msra.mxu0 %v64
  %3583 = vmatprep.subr.mxu0 0.0
  %3584 = vmatpush1.msra.mxu0 %v65
  %3585 = vmatprep.subr.mxu0 0.0
  %3586 = vmatpush1.msra.mxu0 %v66
  %3587 = vmatprep.subr.mxu0 0.0
  %3588 = vmatpush1.msra.mxu0 %v67
  %3589 = vmatprep.subr.mxu0 0.0
  %3590 = vmatpush1.msra.mxu0 %v68
  %3591 = vmatprep.subr.mxu0 0.0
  %3592 = vmatpush1.msra.mxu0 %v69
  %3593 = vmatprep.subr.mxu0 0.0
  %3594 = vmatpush1.msra.mxu0 %v70
  %3595 = vmatprep.subr.mxu0 0.0
  %3596 = vmatpush1.msra.mxu0 %v71
  %3597 = vmatprep.subr.mxu0 0.0
  %3598 = vmatpush1.msra.mxu0 %v72
  %3599 = vmatprep.subr.mxu0 0.0
  %3600 = vmatpush1.msra.mxu0 %v73
  %3601 = vmatprep.subr.mxu0 0.0
  %3602 = vmatpush1.msra.mxu0 %v74
  %3603 = vmatprep.subr.mxu0 0.0
  %3604 = vmatpush1.msra.mxu0 %v75
  %3605 = vmatprep.subr.mxu0 0.0
  %3606 = vmatpush1.msra.mxu0 %v76
  %3607 = vmatprep.subr.mxu0 0.0
  %3608 = vmatpush1.msra.mxu0 %v77
  %3609 = vmatprep.subr.mxu0 0.0
  %3610 = vmatpush1.msra.mxu0 %v78
  %3611 = vmatprep.subr.mxu0 0.0
  %3612 = vmatpush1.msra.mxu0 %v79
  %3613 = vmatprep.subr.mxu0 0.0
  %3614 = vmatpush1.msra.mxu0 %v80
  %3615 = vmatprep.subr.mxu0 0.0
  %3616 = vmatpush1.msra.mxu0 %v81
  %3617 = vmatprep.subr.mxu0 0.0
  %3618 = vmatpush1.msra.mxu0 %v82
  %3619 = vmatprep.subr.mxu0 0.0
  %3620 = vmatpush1.msra.mxu0 %v83
  %3621 = vmatprep.subr.mxu0 0.0
  %3622 = vmatpush1.msra.mxu0 %v84
  %3623 = vmatprep.subr.mxu0 0.0
  %3624 = vmatpush1.msra.mxu0 %v85
  %3625 = vmatprep.subr.mxu0 0.0
  %3626 = vmatpush1.msra.mxu0 %v86
  %3627 = vmatprep.subr.mxu0 0.0
  %3628 = vmatpush1.msra.mxu0 %v87
  %3629 = vmatprep.subr.mxu0 0.0
  %3630 = vmatpush1.msra.mxu0 %v88
  %3631 = vmatprep.subr.mxu0 0.0
  %3632 = vmatpush1.msra.mxu0 %v89
  %3633 = vmatprep.subr.mxu0 0.0
  %3634 = vmatpush1.msra.mxu0 %v90
  %3635 = vmatprep.subr.mxu0 0.0
  %3636 = vmatpush1.msra.mxu0 %v91
  %3637 = vmatprep.subr.mxu0 0.0
  %3638 = vmatpush1.msra.mxu0 %v92
  %3639 = vmatprep.subr.mxu0 0.0
  %3640 = vmatpush1.msra.mxu0 %v93
  %3641 = vmatprep.mubr.f32.mxu0 %v3506
  %3642 = vmatmul.mubr.f32.gmra.mrb[0].mxu0 %v3497
  %v3643 = vpop.f32.mrb[0].mxu0
  %v3644 = vadd.f32 0.0, %v3643
  %v3645 = vpop.f32.mrb[0].mxu0
  %3646 = vdwg.mxu0
  %3647 = vmatprep.subr.mxu0 0.0
  %3648 = vmatpush1.msra.mxu0 %v94
  %3649 = vmatprep.subr.mxu0 0.0
  %3650 = vmatpush1.msra.mxu0 %v95
  %3651 = vmatprep.subr.mxu0 0.0
  %3652 = vmatpush1.msra.mxu0 %v96
  %3653 = vmatprep.subr.mxu0 0.0
  %3654 = vmatpush1.msra.mxu0 %v97
  %3655 = vmatprep.subr.mxu0 0.0
  %3656 = vmatpush1.msra.mxu0 %v98
  %3657 = vmatprep.subr.mxu0 0.0
  %3658 = vmatpush1.msra.mxu0 %v99
  %3659 = vmatprep.subr.mxu0 0.0
  %3660 = vmatpush1.msra.mxu0 %v100
  %3661 = vmatprep.subr.mxu0 0.0
  %3662 = vmatpush1.msra.mxu0 %v101
  %3663 = vmatprep.subr.mxu0 0.0
  %3664 = vmatpush1.msra.mxu0 %v102
  %3665 = vmatprep.subr.mxu0 0.0
  %3666 = vmatpush1.msra.mxu0 %v103
  %3667 = vmatprep.subr.mxu0 0.0
  %3668 = vmatpush1.msra.mxu0 %v104
  %3669 = vmatprep.subr.mxu0 0.0
  %3670 = vmatpush1.msra.mxu0 %v105
  %3671 = vmatprep.subr.mxu0 0.0
  %3672 = vmatpush1.msra.mxu0 %v106
  %3673 = vmatprep.subr.mxu0 0.0
  %3674 = vmatpush1.msra.mxu0 %v107
  %3675 = vmatprep.subr.mxu0 0.0
  %3676 = vmatpush1.msra.mxu0 %v108
  %3677 = vmatprep.subr.mxu0 0.0
  %3678 = vmatpush1.msra.mxu0 %v109
  %3679 = vmatprep.subr.mxu0 0.0
  %3680 = vmatpush1.msra.mxu0 %v110
  %3681 = vmatprep.subr.mxu0 0.0
  %3682 = vmatpush1.msra.mxu0 %v111
  %3683 = vmatprep.subr.mxu0 0.0
  %3684 = vmatpush1.msra.mxu0 %v112
  %3685 = vmatprep.subr.mxu0 0.0
  %3686 = vmatpush1.msra.mxu0 %v113
  %3687 = vmatprep.subr.mxu0 0.0
  %3688 = vmatpush1.msra.mxu0 %v114
  %3689 = vmatprep.subr.mxu0 0.0
  %3690 = vmatpush1.msra.mxu0 %v115
  %3691 = vmatprep.subr.mxu0 0.0
  %3692 = vmatpush1.msra.mxu0 %v116
  %3693 = vmatprep.subr.mxu0 0.0
  %3694 = vmatpush1.msra.mxu0 %v117
  %3695 = vmatprep.subr.mxu0 0.0
  %3696 = vmatpush1.msra.mxu0 %v118
  %3697 = vmatprep.subr.mxu0 0.0
  %3698 = vmatpush1.msra.mxu0 %v119
  %3699 = vmatprep.subr.mxu0 0.0
  %3700 = vmatpush1.msra.mxu0 %v120
  %3701 = vmatprep.subr.mxu0 0.0
  %3702 = vmatpush1.msra.mxu0 %v121
  %3703 = vmatprep.subr.mxu0 0.0
  %3704 = vmatpush1.msra.mxu0 %v122
  %3705 = vmatprep.subr.mxu0 0.0
  %3706 = vmatpush1.msra.mxu0 %v123
  %3707 = vmatprep.subr.mxu0 0.0
  %3708 = vmatpush1.msra.mxu0 %v124
  %3709 = vmatprep.subr.mxu0 0.0
  %3710 = vmatpush1.msra.mxu0 %v125
  %3711 = vmatprep.mubr.f32.mxu0 %v3524
  %3712 = vmatmul.mubr.f32.gmra.mrb[0].mxu0 %v3515
  %v3713 = vpop.f32.mrb[0].mxu0
  %v3714 = vadd.f32 %v3644, %v3713
  %v3715 = vpop.f32.mrb[0].mxu0
  %3716 = vdwg.mxu0
  %3717 = vmatprep.subr.mxu0 0.0
  %3718 = vmatpush1.msra.mxu0 %v62
  %3719 = vmatprep.subr.mxu0 0.0
  %3720 = vmatpush1.msra.mxu0 %v63
  %3721 = vmatprep.subr.mxu0 0.0
  %3722 = vmatpush1.msra.mxu0 %v64
  %3723 = vmatprep.subr.mxu0 0.0
  %3724 = vmatpush1.msra.mxu0 %v65
  %3725 = vmatprep.subr.mxu0 0.0
  %3726 = vmatpush1.msra.mxu0 %v66
  %3727 = vmatprep.subr.mxu0 0.0
  %3728 = vmatpush1.msra.mxu0 %v67
  %3729 = vmatprep.subr.mxu0 0.0
  %3730 = vmatpush1.msra.mxu0 %v68
  %3731 = vmatprep.subr.mxu0 0.0
  %3732 = vmatpush1.msra.mxu0 %v69
  %3733 = vmatprep.subr.mxu0 0.0
  %3734 = vmatpush1.msra.mxu0 %v70
  %3735 = vmatprep.subr.mxu0 0.0
  %3736 = vmatpush1.msra.mxu0 %v71
  %3737 = vmatprep.subr.mxu0 0.0
  %3738 = vmatpush1.msra.mxu0 %v72
  %3739 = vmatprep.subr.mxu0 0.0
  %3740 = vmatpush1.msra.mxu0 %v73
  %3741 = vmatprep.subr.mxu0 0.0
  %3742 = vmatpush1.msra.mxu0 %v74
  %3743 = vmatprep.subr.mxu0 0.0
  %3744 = vmatpush1.msra.mxu0 %v75
  %3745 = vmatprep.subr.mxu0 0.0
  %3746 = vmatpush1.msra.mxu0 %v76
  %3747 = vmatprep.subr.mxu0 0.0
  %3748 = vmatpush1.msra.mxu0 %v77
  %3749 = vmatprep.subr.mxu0 0.0
  %3750 = vmatpush1.msra.mxu0 %v78
  %3751 = vmatprep.subr.mxu0 0.0
  %3752 = vmatpush1.msra.mxu0 %v79
  %3753 = vmatprep.subr.mxu0 0.0
  %3754 = vmatpush1.msra.mxu0 %v80
  %3755 = vmatprep.subr.mxu0 0.0
  %3756 = vmatpush1.msra.mxu0 %v81
  %3757 = vmatprep.subr.mxu0 0.0
  %3758 = vmatpush1.msra.mxu0 %v82
  %3759 = vmatprep.subr.mxu0 0.0
  %3760 = vmatpush1.msra.mxu0 %v83
  %3761 = vmatprep.subr.mxu0 0.0
  %3762 = vmatpush1.msra.mxu0 %v84
  %3763 = vmatprep.subr.mxu0 0.0
  %3764 = vmatpush1.msra.mxu0 %v85
  %3765 = vmatprep.subr.mxu0 0.0
  %3766 = vmatpush1.msra.mxu0 %v86
  %3767 = vmatprep.subr.mxu0 0.0
  %3768 = vmatpush1.msra.mxu0 %v87
  %3769 = vmatprep.subr.mxu0 0.0
  %3770 = vmatpush1.msra.mxu0 %v88
  %3771 = vmatprep.subr.mxu0 0.0
  %3772 = vmatpush1.msra.mxu0 %v89
  %3773 = vmatprep.subr.mxu0 0.0
  %3774 = vmatpush1.msra.mxu0 %v90
  %3775 = vmatprep.subr.mxu0 0.0
  %3776 = vmatpush1.msra.mxu0 %v91
  %3777 = vmatprep.subr.mxu0 0.0
  %3778 = vmatpush1.msra.mxu0 %v92
  %3779 = vmatprep.subr.mxu0 0.0
  %3780 = vmatpush1.msra.mxu0 %v93
  %3781 = vmatprep.mubr.f32.mxu0 %v3558
  %3782 = vmatmul.mubr.f32.gmra.mrb[0].mxu0 %v3549
  %v3783 = vpop.f32.mrb[0].mxu0
  %v3784 = vadd.f32 0.0, %v3783
  %v3785 = vpop.f32.mrb[0].mxu0
  %3786 = vdwg.mxu0
  %3787 = vmatprep.subr.mxu0 0.0
  %3788 = vmatpush1.msra.mxu0 %v94
  %3789 = vmatprep.subr.mxu0 0.0
  %3790 = vmatpush1.msra.mxu0 %v95
  %3791 = vmatprep.subr.mxu0 0.0
  %3792 = vmatpush1.msra.mxu0 %v96
  %3793 = vmatprep.subr.mxu0 0.0
  %3794 = vmatpush1.msra.mxu0 %v97
  %3795 = vmatprep.subr.mxu0 0.0
  %3796 = vmatpush1.msra.mxu0 %v98
  %3797 = vmatprep.subr.mxu0 0.0
  %3798 = vmatpush1.msra.mxu0 %v99
  %3799 = vmatprep.subr.mxu0 0.0
  %3800 = vmatpush1.msra.mxu0 %v100
  %3801 = vmatprep.subr.mxu0 0.0
  %3802 = vmatpush1.msra.mxu0 %v101
  %3803 = vmatprep.subr.mxu0 0.0
  %3804 = vmatpush1.msra.mxu0 %v102
  %3805 = vmatprep.subr.mxu0 0.0
  %3806 = vmatpush1.msra.mxu0 %v103
  %3807 = vmatprep.subr.mxu0 0.0
  %3808 = vmatpush1.msra.mxu0 %v104
  %3809 = vmatprep.subr.mxu0 0.0
  %3810 = vmatpush1.msra.mxu0 %v105
  %3811 = vmatprep.subr.mxu0 0.0
  %3812 = vmatpush1.msra.mxu0 %v106
  %3813 = vmatprep.subr.mxu0 0.0
  %3814 = vmatpush1.msra.mxu0 %v107
  %3815 = vmatprep.subr.mxu0 0.0
  %3816 = vmatpush1.msra.mxu0 %v108
  %3817 = vmatprep.subr.mxu0 0.0
  %3818 = vmatpush1.msra.mxu0 %v109
  %3819 = vmatprep.subr.mxu0 0.0
  %3820 = vmatpush1.msra.mxu0 %v110
  %3821 = vmatprep.subr.mxu0 0.0
  %3822 = vmatpush1.msra.mxu0 %v111
  %3823 = vmatprep.subr.mxu0 0.0
  %3824 = vmatpush1.msra.mxu0 %v112
  %3825 = vmatprep.subr.mxu0 0.0
  %3826 = vmatpush1.msra.mxu0 %v113
  %3827 = vmatprep.subr.mxu0 0.0
  %3828 = vmatpush1.msra.mxu0 %v114
  %3829 = vmatprep.subr.mxu0 0.0
  %3830 = vmatpush1.msra.mxu0 %v115
  %3831 = vmatprep.subr.mxu0 0.0
  %3832 = vmatpush1.msra.mxu0 %v116
  %3833 = vmatprep.subr.mxu0 0.0
  %3834 = vmatpush1.msra.mxu0 %v117
  %3835 = vmatprep.subr.mxu0 0.0
  %3836 = vmatpush1.msra.mxu0 %v118
  %3837 = vmatprep.subr.mxu0 0.0
  %3838 = vmatpush1.msra.mxu0 %v119
  %3839 = vmatprep.subr.mxu0 0.0
  %3840 = vmatpush1.msra.mxu0 %v120
  %3841 = vmatprep.subr.mxu0 0.0
  %3842 = vmatpush1.msra.mxu0 %v121
  %3843 = vmatprep.subr.mxu0 0.0
  %3844 = vmatpush1.msra.mxu0 %v122
  %3845 = vmatprep.subr.mxu0 0.0
  %3846 = vmatpush1.msra.mxu0 %v123
  %3847 = vmatprep.subr.mxu0 0.0
  %3848 = vmatpush1.msra.mxu0 %v124
  %3849 = vmatprep.subr.mxu0 0.0
  %3850 = vmatpush1.msra.mxu0 %v125
  %3851 = vmatprep.mubr.f32.mxu0 %v3576
  %3852 = vmatmul.mubr.f32.gmra.mrb[0].mxu0 %v3567
  %v3853 = vpop.f32.mrb[0].mxu0
  %v3854 = vadd.f32 %v3784, %v3853
  %v3855 = vpop.f32.mrb[0].mxu0
  %3856 = vdwg.mxu0
  %v3857 = vmul.f32 %v3714, 0.001953125
  %v3858 = vmul.f32 %v3854, 0.001953125
  %v3859 = vmul.f32 %v3857, %v3857
  %v3860 = vsub.f32 %v3858, %v3859
  %v3861 = vmax.f32 %v3860, 0.0
  %v3862 = vld [vmem:[%s6] sm:$0x1]
  %v3863 = vadd.f32 %v3861, 1e-05
  %v3864 = vrsqrt.pop %v3863
  %v3865 = vmul.f32 %v3862, %v3864
  %v3866 = vld [vmem:[%s7] sm:$0x1]
  %v3867 = vmul.f32 %v3857, %v3865
  %v3868 = vsub.f32 %v3866, %v3867
  %v3870 = vsel %vm3092, %v3865, 0
  %3872 = vmatprep.subr.mxu0 %v127
  %3873 = vmatpush1.msra.mxu0 %v126
  %3874 = vmatprep.subr.mxu0 %v131
  %3875 = vmatpush1.msra.mxu0 %v130
  %3876 = vmatprep.subr.mxu0 %v135
  %3877 = vmatpush1.msra.mxu0 %v134
  %3878 = vmatprep.subr.mxu0 %v139
  %3879 = vmatpush1.msra.mxu0 %v138
  %3880 = vmatprep.subr.mxu0 0.0
  %3881 = vmatpush1.msra.mxu0 0.0
  %3882 = vmatprep.subr.mxu0 0.0
  %3883 = vmatpush1.msra.mxu0 0.0
  %3884 = vmatprep.subr.mxu0 0.0
  %3885 = vmatpush1.msra.mxu0 0.0
  %3886 = vmatprep.subr.mxu0 0.0
  %3887 = vmatpush1.msra.mxu0 0.0
  %3888 = vmatprep.subr.mxu0 0.0
  %3889 = vmatpush1.msra.mxu0 0.0
  %3890 = vmatprep.subr.mxu0 0.0
  %3891 = vmatpush1.msra.mxu0 0.0
  %3892 = vmatprep.subr.mxu0 0.0
  %3893 = vmatpush1.msra.mxu0 0.0
  %3894 = vmatprep.subr.mxu0 0.0
  %3895 = vmatpush1.msra.mxu0 0.0
  %3896 = vmatprep.subr.mxu0 0.0
  %3897 = vmatpush1.msra.mxu0 0.0
  %3898 = vmatprep.subr.mxu0 0.0
  %3899 = vmatpush1.msra.mxu0 0.0
  %3900 = vmatprep.subr.mxu0 0.0
  %3901 = vmatpush1.msra.mxu0 0.0
  %3902 = vmatprep.subr.mxu0 0.0
  %3903 = vmatpush1.msra.mxu0 0.0
  %3904 = vmatprep.subr.mxu0 0.0
  %3905 = vmatpush1.msra.mxu0 0.0
  %3906 = vmatprep.subr.mxu0 0.0
  %3907 = vmatpush1.msra.mxu0 0.0
  %3908 = vmatprep.subr.mxu0 0.0
  %3909 = vmatpush1.msra.mxu0 0.0
  %3910 = vmatprep.subr.mxu0 0.0
  %3911 = vmatpush1.msra.mxu0 0.0
  %3912 = vmatprep.subr.mxu0 0.0
  %3913 = vmatpush1.msra.mxu0 0.0
  %3914 = vmatprep.subr.mxu0 0.0
  %3915 = vmatpush1.msra.mxu0 0.0
  %3916 = vmatprep.subr.mxu0 0.0
  %3917 = vmatpush1.msra.mxu0 0.0
  %3918 = vmatprep.subr.mxu0 0.0
  %3919 = vmatpush1.msra.mxu0 0.0
  %3920 = vmatprep.subr.mxu0 0.0
  %3921 = vmatpush1.msra.mxu0 0.0
  %3922 = vmatprep.subr.mxu0 0.0
  %3923 = vmatpush1.msra.mxu0 0.0
  %3924 = vmatprep.subr.mxu0 0.0
  %3925 = vmatpush1.msra.mxu0 0.0
  %3926 = vmatprep.subr.mxu0 0.0
  %3927 = vmatpush1.msra.mxu0 0.0
  %3928 = vmatprep.subr.mxu0 0.0
  %3929 = vmatpush1.msra.mxu0 0.0
  %3930 = vmatprep.subr.mxu0 0.0
  %3931 = vmatpush1.msra.mxu0 0.0
  %3932 = vmatprep.subr.mxu0 0.0
  %3933 = vmatpush1.msra.mxu0 0.0
  %3934 = vmatprep.subr.mxu0 0.0
  %3935 = vmatpush1.msra.mxu0 0.0
  %3936 = vmatprep.mubr.f32.mxu0 0.0
  %3937 = vmatmul.mubr.f32.gmra.mrb[0].mxu0 %v3870
  %v3938 = vpop.f32.mrb[0].mxu0
  %v3939 = vadd.f32 0.0, %v3938
  %v3940 = vpop.f32.mrb[0].mxu0
  %v3941 = vadd.f32 0.0, %v3940
  %3942 = vdwg.mxu0
  %3943 = vmatprep.subr.mxu0 %v129
  %3944 = vmatpush1.msra.mxu0 %v128
  %3945 = vmatprep.subr.mxu0 %v133
  %3946 = vmatpush1.msra.mxu0 %v132
  %3947 = vmatprep.subr.mxu0 %v137
  %3948 = vmatpush1.msra.mxu0 %v136
  %3949 = vmatprep.subr.mxu0 %v141
  %3950 = vmatpush1.msra.mxu0 %v140
  %3951 = vmatprep.subr.mxu0 0.0
  %3952 = vmatpush1.msra.mxu0 0.0
  %3953 = vmatprep.subr.mxu0 0.0
  %3954 = vmatpush1.msra.mxu0 0.0
  %3955 = vmatprep.subr.mxu0 0.0
  %3956 = vmatpush1.msra.mxu0 0.0
  %3957 = vmatprep.subr.mxu0 0.0
  %3958 = vmatpush1.msra.mxu0 0.0
  %3959 = vmatprep.subr.mxu0 0.0
  %3960 = vmatpush1.msra.mxu0 0.0
  %3961 = vmatprep.subr.mxu0 0.0
  %3962 = vmatpush1.msra.mxu0 0.0
  %3963 = vmatprep.subr.mxu0 0.0
  %3964 = vmatpush1.msra.mxu0 0.0
  %3965 = vmatprep.subr.mxu0 0.0
  %3966 = vmatpush1.msra.mxu0 0.0
  %3967 = vmatprep.subr.mxu0 0.0
  %3968 = vmatpush1.msra.mxu0 0.0
  %3969 = vmatprep.subr.mxu0 0.0
  %3970 = vmatpush1.msra.mxu0 0.0
  %3971 = vmatprep.subr.mxu0 0.0
  %3972 = vmatpush1.msra.mxu0 0.0
  %3973 = vmatprep.subr.mxu0 0.0
  %3974 = vmatpush1.msra.mxu0 0.0
  %3975 = vmatprep.subr.mxu0 0.0
  %3976 = vmatpush1.msra.mxu0 0.0
  %3977 = vmatprep.subr.mxu0 0.0
  %3978 = vmatpush1.msra.mxu0 0.0
  %3979 = vmatprep.subr.mxu0 0.0
  %3980 = vmatpush1.msra.mxu0 0.0
  %3981 = vmatprep.subr.mxu0 0.0
  %3982 = vmatpush1.msra.mxu0 0.0
  %3983 = vmatprep.subr.mxu0 0.0
  %3984 = vmatpush1.msra.mxu0 0.0
  %3985 = vmatprep.subr.mxu0 0.0
  %3986 = vmatpush1.msra.mxu0 0.0
  %3987 = vmatprep.subr.mxu0 0.0
  %3988 = vmatpush1.msra.mxu0 0.0
  %3989 = vmatprep.subr.mxu0 0.0
  %3990 = vmatpush1.msra.mxu0 0.0
  %3991 = vmatprep.subr.mxu0 0.0
  %3992 = vmatpush1.msra.mxu0 0.0
  %3993 = vmatprep.subr.mxu0 0.0
  %3994 = vmatpush1.msra.mxu0 0.0
  %3995 = vmatprep.subr.mxu0 0.0
  %3996 = vmatpush1.msra.mxu0 0.0
  %3997 = vmatprep.subr.mxu0 0.0
  %3998 = vmatpush1.msra.mxu0 0.0
  %3999 = vmatprep.subr.mxu0 0.0
  %4000 = vmatpush1.msra.mxu0 0.0
  %4001 = vmatprep.subr.mxu0 0.0
  %4002 = vmatpush1.msra.mxu0 0.0
  %4003 = vmatprep.subr.mxu0 0.0
  %4004 = vmatpush1.msra.mxu0 0.0
  %4005 = vmatprep.subr.mxu0 0.0
  %4006 = vmatpush1.msra.mxu0 0.0
  %4007 = vmatprep.mubr.f32.mxu0 0.0
  %4008 = vmatmul.mubr.f32.gmra.mrb[0].mxu0 %v3870
  %v4009 = vpop.f32.mrb[0].mxu0
  %v4010 = vadd.f32 0.0, %v4009
  %v4011 = vpop.f32.mrb[0].mxu0
  %v4012 = vadd.f32 0.0, %v4011
  %4013 = vdwg.mxu0
  %v4015 = vsel %vm3092, %v3868, 0
  %4017 = vmatprep.subr.mxu0 %v127
  %4018 = vmatpush1.msra.mxu0 %v126
  %4019 = vmatprep.subr.mxu0 %v131
  %4020 = vmatpush1.msra.mxu0 %v130
  %4021 = vmatprep.subr.mxu0 %v135
  %4022 = vmatpush1.msra.mxu0 %v134
  %4023 = vmatprep.subr.mxu0 %v139
  %4024 = vmatpush1.msra.mxu0 %v138
  %4025 = vmatprep.subr.mxu0 0.0
  %4026 = vmatpush1.msra.mxu0 0.0
  %4027 = vmatprep.subr.mxu0 0.0
  %4028 = vmatpush1.msra.mxu0 0.0
  %4029 = vmatprep.subr.mxu0 0.0
  %4030 = vmatpush1.msra.mxu0 0.0
  %4031 = vmatprep.subr.mxu0 0.0
  %4032 = vmatpush1.msra.mxu0 0.0
  %4033 = vmatprep.subr.mxu0 0.0
  %4034 = vmatpush1.msra.mxu0 0.0
  %4035 = vmatprep.subr.mxu0 0.0
  %4036 = vmatpush1.msra.mxu0 0.0
  %4037 = vmatprep.subr.mxu0 0.0
  %4038 = vmatpush1.msra.mxu0 0.0
  %4039 = vmatprep.subr.mxu0 0.0
  %4040 = vmatpush1.msra.mxu0 0.0
  %4041 = vmatprep.subr.mxu0 0.0
  %4042 = vmatpush1.msra.mxu0 0.0
  %4043 = vmatprep.subr.mxu0 0.0
  %4044 = vmatpush1.msra.mxu0 0.0
  %4045 = vmatprep.subr.mxu0 0.0
  %4046 = vmatpush1.msra.mxu0 0.0
  %4047 = vmatprep.subr.mxu0 0.0
  %4048 = vmatpush1.msra.mxu0 0.0
  %4049 = vmatprep.subr.mxu0 0.0
  %4050 = vmatpush1.msra.mxu0 0.0
  %4051 = vmatprep.subr.mxu0 0.0
  %4052 = vmatpush1.msra.mxu0 0.0
  %4053 = vmatprep.subr.mxu0 0.0
  %4054 = vmatpush1.msra.mxu0 0.0
  %4055 = vmatprep.subr.mxu0 0.0
  %4056 = vmatpush1.msra.mxu0 0.0
  %4057 = vmatprep.subr.mxu0 0.0
  %4058 = vmatpush1.msra.mxu0 0.0
  %4059 = vmatprep.subr.mxu0 0.0
  %4060 = vmatpush1.msra.mxu0 0.0
  %4061 = vmatprep.subr.mxu0 0.0
  %4062 = vmatpush1.msra.mxu0 0.0
  %4063 = vmatprep.subr.mxu0 0.0
  %4064 = vmatpush1.msra.mxu0 0.0
  %4065 = vmatprep.subr.mxu0 0.0
  %4066 = vmatpush1.msra.mxu0 0.0
  %4067 = vmatprep.subr.mxu0 0.0
  %4068 = vmatpush1.msra.mxu0 0.0
  %4069 = vmatprep.subr.mxu0 0.0
  %4070 = vmatpush1.msra.mxu0 0.0
  %4071 = vmatprep.subr.mxu0 0.0
  %4072 = vmatpush1.msra.mxu0 0.0
  %4073 = vmatprep.subr.mxu0 0.0
  %4074 = vmatpush1.msra.mxu0 0.0
  %4075 = vmatprep.subr.mxu0 0.0
  %4076 = vmatpush1.msra.mxu0 0.0
  %4077 = vmatprep.subr.mxu0 0.0
  %4078 = vmatpush1.msra.mxu0 0.0
  %4079 = vmatprep.subr.mxu0 0.0
  %4080 = vmatpush1.msra.mxu0 0.0
  %4081 = vmatprep.mubr.f32.mxu0 0.0
  %4082 = vmatmul.mubr.f32.gmra.mrb[0].mxu0 %v4015
  %v4083 = vpop.f32.mrb[0].mxu0
  %v4084 = vadd.f32 0.0, %v4083
  %v4085 = vpop.f32.mrb[0].mxu0
  %v4086 = vadd.f32 0.0, %v4085
  %4087 = vdwg.mxu0
  %4088 = vmatprep.subr.mxu0 %v129
  %4089 = vmatpush1.msra.mxu0 %v128
  %4090 = vmatprep.subr.mxu0 %v133
  %4091 = vmatpush1.msra.mxu0 %v132
  %4092 = vmatprep.subr.mxu0 %v137
  %4093 = vmatpush1.msra.mxu0 %v136
  %4094 = vmatprep.subr.mxu0 %v141
  %4095 = vmatpush1.msra.mxu0 %v140
  %4096 = vmatprep.subr.mxu0 0.0
  %4097 = vmatpush1.msra.mxu0 0.0
  %4098 = vmatprep.subr.mxu0 0.0
  %4099 = vmatpush1.msra.mxu0 0.0
  %4100 = vmatprep.subr.mxu0 0.0
  %4101 = vmatpush1.msra.mxu0 0.0
  %4102 = vmatprep.subr.mxu0 0.0
  %4103 = vmatpush1.msra.mxu0 0.0
  %4104 = vmatprep.subr.mxu0 0.0
  %4105 = vmatpush1.msra.mxu0 0.0
  %4106 = vmatprep.subr.mxu0 0.0
  %4107 = vmatpush1.msra.mxu0 0.0
  %4108 = vmatprep.subr.mxu0 0.0
  %4109 = vmatpush1.msra.mxu0 0.0
  %4110 = vmatprep.subr.mxu0 0.0
  %4111 = vmatpush1.msra.mxu0 0.0
  %4112 = vmatprep.subr.mxu0 0.0
  %4113 = vmatpush1.msra.mxu0 0.0
  %4114 = vmatprep.subr.mxu0 0.0
  %4115 = vmatpush1.msra.mxu0 0.0
  %4116 = vmatprep.subr.mxu0 0.0
  %4117 = vmatpush1.msra.mxu0 0.0
  %4118 = vmatprep.subr.mxu0 0.0
  %4119 = vmatpush1.msra.mxu0 0.0
  %4120 = vmatprep.subr.mxu0 0.0
  %4121 = vmatpush1.msra.mxu0 0.0
  %4122 = vmatprep.subr.mxu0 0.0
  %4123 = vmatpush1.msra.mxu0 0.0
  %4124 = vmatprep.subr.mxu0 0.0
  %4125 = vmatpush1.msra.mxu0 0.0
  %4126 = vmatprep.subr.mxu0 0.0
  %4127 = vmatpush1.msra.mxu0 0.0
  %4128 = vmatprep.subr.mxu0 0.0
  %4129 = vmatpush1.msra.mxu0 0.0
  %4130 = vmatprep.subr.mxu0 0.0
  %4131 = vmatpush1.msra.mxu0 0.0
  %4132 = vmatprep.subr.mxu0 0.0
  %4133 = vmatpush1.msra.mxu0 0.0
  %4134 = vmatprep.subr.mxu0 0.0
  %4135 = vmatpush1.msra.mxu0 0.0
  %4136 = vmatprep.subr.mxu0 0.0
  %4137 = vmatpush1.msra.mxu0 0.0
  %4138 = vmatprep.subr.mxu0 0.0
  %4139 = vmatpush1.msra.mxu0 0.0
  %4140 = vmatprep.subr.mxu0 0.0
  %4141 = vmatpush1.msra.mxu0 0.0
  %4142 = vmatprep.subr.mxu0 0.0
  %4143 = vmatpush1.msra.mxu0 0.0
  %4144 = vmatprep.subr.mxu0 0.0
  %4145 = vmatpush1.msra.mxu0 0.0
  %4146 = vmatprep.subr.mxu0 0.0
  %4147 = vmatpush1.msra.mxu0 0.0
  %4148 = vmatprep.subr.mxu0 0.0
  %4149 = vmatpush1.msra.mxu0 0.0
  %4150 = vmatprep.subr.mxu0 0.0
  %4151 = vmatpush1.msra.mxu0 0.0
  %4152 = vmatprep.mubr.f32.mxu0 0.0
  %4153 = vmatmul.mubr.f32.gmra.mrb[0].mxu0 %v4015
  %v4154 = vpop.f32.mrb[0].mxu0
  %v4155 = vadd.f32 0.0, %v4154
  %v4156 = vpop.f32.mrb[0].mxu0
  %v4157 = vadd.f32 0.0, %v4156
  %4158 = vdwg.mxu0
  %v4159 = vlaneseq
  %v4160 = vshrl.u32 %v4159, 7
  %v4161 = vsub.s32 0, %v4160
  %v4162 = vrot.slane %v3939, %v4161
  %v4163 = vlaneseq
  %v4164 = vshrl.u32 %v4163, 7
  %v4165 = vsub.s32 0, %v4164
  %v4166 = vrot.slane %v3941, %v4165
  %v4167 = vlaneseq
  %v4168 = vshrl.u32 %v4167, 7
  %v4169 = vsub.s32 0, %v4168
  %v4170 = vrot.slane %v4010, %v4169
  %v4171 = vlaneseq
  %v4172 = vshrl.u32 %v4171, 7
  %v4173 = vsub.s32 0, %v4172
  %v4174 = vrot.slane %v4012, %v4173
  %v4175 = vmul.f32 %v3473, %v4162
  %v4176 = vmul.f32 %v3474, %v4166
  %v4177 = vmul.f32 %v3475, %v4170
  %v4178 = vmul.f32 %v3476, %v4174
  %v4179 = vmul.f32 %v3477, %v4162
  %v4180 = vmul.f32 %v3478, %v4166
  %v4181 = vmul.f32 %v3479, %v4170
  %v4182 = vmul.f32 %v3480, %v4174
  %v4183 = vmul.f32 %v3481, %v4162
  %v4184 = vmul.f32 %v3482, %v4166
  %v4185 = vmul.f32 %v3483, %v4170
  %v4186 = vmul.f32 %v3484, %v4174
  %v4187 = vmul.f32 %v3485, %v4162
  %v4188 = vmul.f32 %v3486, %v4166
  %v4189 = vmul.f32 %v3487, %v4170
  %v4190 = vmul.f32 %v3488, %v4174
  %v4191 = vlaneseq
  %v4192 = vshrl.u32 %v4191, 7
  %v4193 = vsub.s32 0, %v4192
  %v4194 = vrot.slane %v4084, %v4193
  %v4195 = vlaneseq
  %v4196 = vshrl.u32 %v4195, 7
  %v4197 = vsub.s32 0, %v4196
  %v4198 = vrot.slane %v4086, %v4197
  %v4199 = vlaneseq
  %v4200 = vshrl.u32 %v4199, 7
  %v4201 = vsub.s32 0, %v4200
  %v4202 = vrot.slane %v4155, %v4201
  %v4203 = vlaneseq
  %v4204 = vshrl.u32 %v4203, 7
  %v4205 = vsub.s32 0, %v4204
  %v4206 = vrot.slane %v4157, %v4205
  %v4207 = vadd.f32 %v4175, %v4194
  %v4208 = vadd.f32 %v4176, %v4198
  %v4209 = vadd.f32 %v4177, %v4202
  %v4210 = vadd.f32 %v4178, %v4206
  %v4211 = vadd.f32 %v4179, %v4194
  %v4212 = vadd.f32 %v4180, %v4198
  %v4213 = vadd.f32 %v4181, %v4202
  %v4214 = vadd.f32 %v4182, %v4206
  %v4215 = vadd.f32 %v4183, %v4194
  %v4216 = vadd.f32 %v4184, %v4198
  %v4217 = vadd.f32 %v4185, %v4202
  %v4218 = vadd.f32 %v4186, %v4206
  %v4219 = vadd.f32 %v4187, %v4194
  %v4220 = vadd.f32 %v4188, %v4198
  %v4221 = vadd.f32 %v4189, %v4202
  %v4222 = vadd.f32 %v4190, %v4206
  %v4223 = vmax.f32 %v4207, 0.0
  %v4224 = vmax.f32 %v4208, 0.0
  %v4225 = vmax.f32 %v4209, 0.0
  %v4226 = vmax.f32 %v4210, 0.0
  %v4227 = vmax.f32 %v4211, 0.0
  %v4228 = vmax.f32 %v4212, 0.0
  %v4229 = vmax.f32 %v4213, 0.0
  %v4230 = vmax.f32 %v4214, 0.0
  %v4231 = vmax.f32 %v4215, 0.0
  %v4232 = vmax.f32 %v4216, 0.0
  %v4233 = vmax.f32 %v4217, 0.0
  %v4234 = vmax.f32 %v4218, 0.0
  %v4235 = vmax.f32 %v4219, 0.0
  %v4236 = vmax.f32 %v4220, 0.0
  %v4237 = vmax.f32 %v4221, 0.0
  %v4238 = vmax.f32 %v4222, 0.0
  %v4239 = vpack.c.bf16 %v4227, %v4223
  %v4240 = vpack.c.bf16 %v4228, %v4224
  %v4241 = vpack.c.bf16 %v4229, %v4225
  %v4242 = vpack.c.bf16 %v4230, %v4226
  %v4243 = vpack.c.bf16 %v4235, %v4231
  %v4244 = vpack.c.bf16 %v4236, %v4232
  %v4245 = vpack.c.bf16 %v4237, %v4233
  %v4246 = vpack.c.bf16 %v4238, %v4234
  %v4247 = vld [vmem:[%s8] sm:$0xff]
  %v4248 = vld [vmem:[%s8 + $0x8] sm:$0xff]
  %v4249 = vld [vmem:[%s8 + $0x10] sm:$0xff]
  %v4250 = vld [vmem:[%s8 + $0x18] sm:$0xff]
  %v4251 = vld [vmem:[%s8 + $0x20] sm:$0xff]
  %v4252 = vld [vmem:[%s8 + $0x28] sm:$0xff]
  %v4253 = vld [vmem:[%s8 + $0x30] sm:$0xff]
  %v4254 = vld [vmem:[%s8 + $0x38] sm:$0xff]
  %v4255 = vld [vmem:[%s8 + $0x40] sm:$0xff]
  %v4256 = vld [vmem:[%s8 + $0x48] sm:$0xff]
  %v4257 = vld [vmem:[%s8 + $0x50] sm:$0xff]
  %v4258 = vld [vmem:[%s8 + $0x58] sm:$0xff]
  %v4259 = vld [vmem:[%s8 + $0x60] sm:$0xff]
  %v4260 = vld [vmem:[%s8 + $0x68] sm:$0xff]
  %v4261 = vld [vmem:[%s8 + $0x70] sm:$0xff]
  %v4262 = vld [vmem:[%s8 + $0x78] sm:$0xff]
  %v4263 = vld [vmem:[%s8 + $0x80] sm:$0xff]
  %v4264 = vld [vmem:[%s8 + $0x88] sm:$0xff]
  %v4265 = vld [vmem:[%s8 + $0x90] sm:$0xff]
  %v4266 = vld [vmem:[%s8 + $0x98] sm:$0xff]
  %v4267 = vld [vmem:[%s8 + $0xa0] sm:$0xff]
  %v4268 = vld [vmem:[%s8 + $0xa8] sm:$0xff]
  %v4269 = vld [vmem:[%s8 + $0xb0] sm:$0xff]
  %v4270 = vld [vmem:[%s8 + $0xb8] sm:$0xff]
  %v4271 = vld [vmem:[%s8 + $0xc0] sm:$0xff]
  %v4272 = vld [vmem:[%s8 + $0xc8] sm:$0xff]
  %v4273 = vld [vmem:[%s8 + $0xd0] sm:$0xff]
  %v4274 = vld [vmem:[%s8 + $0xd8] sm:$0xff]
  %v4275 = vld [vmem:[%s8 + $0xe0] sm:$0xff]
  %v4276 = vld [vmem:[%s8 + $0xe8] sm:$0xff]
  %v4277 = vld [vmem:[%s8 + $0xf0] sm:$0xff]
  %v4278 = vld [vmem:[%s8 + $0xf8] sm:$0xff]
  %v4279 = vld [vmem:[%s8 + $0x100] sm:$0xff]
  %v4280 = vld [vmem:[%s8 + $0x108] sm:$0xff]
  %v4281 = vld [vmem:[%s8 + $0x110] sm:$0xff]
  %v4282 = vld [vmem:[%s8 + $0x118] sm:$0xff]
  %v4283 = vld [vmem:[%s8 + $0x120] sm:$0xff]
  %v4284 = vld [vmem:[%s8 + $0x128] sm:$0xff]
  %v4285 = vld [vmem:[%s8 + $0x130] sm:$0xff]
  %v4286 = vld [vmem:[%s8 + $0x138] sm:$0xff]
  %v4287 = vld [vmem:[%s8 + $0x140] sm:$0xff]
  %v4288 = vld [vmem:[%s8 + $0x148] sm:$0xff]
  %v4289 = vld [vmem:[%s8 + $0x150] sm:$0xff]
  %v4290 = vld [vmem:[%s8 + $0x158] sm:$0xff]
  %v4291 = vld [vmem:[%s8 + $0x160] sm:$0xff]
  %v4292 = vld [vmem:[%s8 + $0x168] sm:$0xff]
  %v4293 = vld [vmem:[%s8 + $0x170] sm:$0xff]
  %v4294 = vld [vmem:[%s8 + $0x178] sm:$0xff]
  %v4295 = vld [vmem:[%s8 + $0x180] sm:$0xff]
  %v4296 = vld [vmem:[%s8 + $0x188] sm:$0xff]
  %v4297 = vld [vmem:[%s8 + $0x190] sm:$0xff]
  %v4298 = vld [vmem:[%s8 + $0x198] sm:$0xff]
  %v4299 = vld [vmem:[%s8 + $0x1a0] sm:$0xff]
  %v4300 = vld [vmem:[%s8 + $0x1a8] sm:$0xff]
  %v4301 = vld [vmem:[%s8 + $0x1b0] sm:$0xff]
  %v4302 = vld [vmem:[%s8 + $0x1b8] sm:$0xff]
  %v4303 = vld [vmem:[%s8 + $0x1c0] sm:$0xff]
  %v4304 = vld [vmem:[%s8 + $0x1c8] sm:$0xff]
  %v4305 = vld [vmem:[%s8 + $0x1d0] sm:$0xff]
  %v4306 = vld [vmem:[%s8 + $0x1d8] sm:$0xff]
  %v4307 = vld [vmem:[%s8 + $0x1e0] sm:$0xff]
  %v4308 = vld [vmem:[%s8 + $0x1e8] sm:$0xff]
  %v4309 = vld [vmem:[%s8 + $0x1f0] sm:$0xff]
  %v4310 = vld [vmem:[%s8 + $0x1f8] sm:$0xff]
  %v4311 = vld [vmem:[%s8 + $0x200] sm:$0xff]
  %v4312 = vld [vmem:[%s8 + $0x208] sm:$0xff]
  %v4313 = vld [vmem:[%s8 + $0x210] sm:$0xff]
  %v4314 = vld [vmem:[%s8 + $0x218] sm:$0xff]
  %v4315 = vld [vmem:[%s8 + $0x220] sm:$0xff]
  %v4316 = vld [vmem:[%s8 + $0x228] sm:$0xff]
  %v4317 = vld [vmem:[%s8 + $0x230] sm:$0xff]
  %v4318 = vld [vmem:[%s8 + $0x238] sm:$0xff]
  %v4319 = vld [vmem:[%s8 + $0x240] sm:$0xff]
  %v4320 = vld [vmem:[%s8 + $0x248] sm:$0xff]
  %v4321 = vld [vmem:[%s8 + $0x250] sm:$0xff]
  %v4322 = vld [vmem:[%s8 + $0x258] sm:$0xff]
  %v4323 = vld [vmem:[%s8 + $0x260] sm:$0xff]
  %v4324 = vld [vmem:[%s8 + $0x268] sm:$0xff]
  %v4325 = vld [vmem:[%s8 + $0x270] sm:$0xff]
  %v4326 = vld [vmem:[%s8 + $0x278] sm:$0xff]
  %v4327 = vld [vmem:[%s8 + $0x280] sm:$0xff]
  %v4328 = vld [vmem:[%s8 + $0x288] sm:$0xff]
  %v4329 = vld [vmem:[%s8 + $0x290] sm:$0xff]
  %v4330 = vld [vmem:[%s8 + $0x298] sm:$0xff]
  %v4331 = vld [vmem:[%s8 + $0x2a0] sm:$0xff]
  %v4332 = vld [vmem:[%s8 + $0x2a8] sm:$0xff]
  %v4333 = vld [vmem:[%s8 + $0x2b0] sm:$0xff]
  %v4334 = vld [vmem:[%s8 + $0x2b8] sm:$0xff]
  %v4335 = vld [vmem:[%s8 + $0x2c0] sm:$0xff]
  %v4336 = vld [vmem:[%s8 + $0x2c8] sm:$0xff]
  %v4337 = vld [vmem:[%s8 + $0x2d0] sm:$0xff]
  %v4338 = vld [vmem:[%s8 + $0x2d8] sm:$0xff]
  %v4339 = vld [vmem:[%s8 + $0x2e0] sm:$0xff]
  %v4340 = vld [vmem:[%s8 + $0x2e8] sm:$0xff]
  %v4341 = vld [vmem:[%s8 + $0x2f0] sm:$0xff]
  %v4342 = vld [vmem:[%s8 + $0x2f8] sm:$0xff]
  %v4343 = vld [vmem:[%s8 + $0x300] sm:$0xff]
  %v4344 = vld [vmem:[%s8 + $0x308] sm:$0xff]
  %v4345 = vld [vmem:[%s8 + $0x310] sm:$0xff]
  %v4346 = vld [vmem:[%s8 + $0x318] sm:$0xff]
  %v4347 = vld [vmem:[%s8 + $0x320] sm:$0xff]
  %v4348 = vld [vmem:[%s8 + $0x328] sm:$0xff]
  %v4349 = vld [vmem:[%s8 + $0x330] sm:$0xff]
  %v4350 = vld [vmem:[%s8 + $0x338] sm:$0xff]
  %v4351 = vld [vmem:[%s8 + $0x340] sm:$0xff]
  %v4352 = vld [vmem:[%s8 + $0x348] sm:$0xff]
  %v4353 = vld [vmem:[%s8 + $0x350] sm:$0xff]
  %v4354 = vld [vmem:[%s8 + $0x358] sm:$0xff]
  %v4355 = vld [vmem:[%s8 + $0x360] sm:$0xff]
  %v4356 = vld [vmem:[%s8 + $0x368] sm:$0xff]
  %v4357 = vld [vmem:[%s8 + $0x370] sm:$0xff]
  %v4358 = vld [vmem:[%s8 + $0x378] sm:$0xff]
  %v4359 = vld [vmem:[%s8 + $0x380] sm:$0xff]
  %v4360 = vld [vmem:[%s8 + $0x388] sm:$0xff]
  %v4361 = vld [vmem:[%s8 + $0x390] sm:$0xff]
  %v4362 = vld [vmem:[%s8 + $0x398] sm:$0xff]
  %v4363 = vld [vmem:[%s8 + $0x3a0] sm:$0xff]
  %v4364 = vld [vmem:[%s8 + $0x3a8] sm:$0xff]
  %v4365 = vld [vmem:[%s8 + $0x3b0] sm:$0xff]
  %v4366 = vld [vmem:[%s8 + $0x3b8] sm:$0xff]
  %v4367 = vld [vmem:[%s8 + $0x3c0] sm:$0xff]
  %v4368 = vld [vmem:[%s8 + $0x3c8] sm:$0xff]
  %v4369 = vld [vmem:[%s8 + $0x3d0] sm:$0xff]
  %v4370 = vld [vmem:[%s8 + $0x3d8] sm:$0xff]
  %v4371 = vld [vmem:[%s8 + $0x3e0] sm:$0xff]
  %v4372 = vld [vmem:[%s8 + $0x3e8] sm:$0xff]
  %v4373 = vld [vmem:[%s8 + $0x3f0] sm:$0xff]
  %v4374 = vld [vmem:[%s8 + $0x3f8] sm:$0xff]
  %v4503 = vunpack.c.l.b16 %v4247
  %v4504 = vunpack.c.h.b16 %v4247
  %v4505 = vunpack.c.l.b16 %v4248
  %v4506 = vunpack.c.h.b16 %v4248
  %v4507 = vunpack.c.l.b16 %v4249
  %v4508 = vunpack.c.h.b16 %v4249
  %v4509 = vunpack.c.l.b16 %v4250
  %v4510 = vunpack.c.h.b16 %v4250
  %v4511 = vunpack.c.l.b16 %v4251
  %v4512 = vunpack.c.h.b16 %v4251
  %v4513 = vunpack.c.l.b16 %v4252
  %v4514 = vunpack.c.h.b16 %v4252
  %v4515 = vunpack.c.l.b16 %v4253
  %v4516 = vunpack.c.h.b16 %v4253
  %v4517 = vunpack.c.l.b16 %v4254
  %v4518 = vunpack.c.h.b16 %v4254
  %v4519 = vunpack.c.l.b16 %v4255
  %v4520 = vunpack.c.h.b16 %v4255
  %v4521 = vunpack.c.l.b16 %v4256
  %v4522 = vunpack.c.h.b16 %v4256
  %v4523 = vunpack.c.l.b16 %v4257
  %v4524 = vunpack.c.h.b16 %v4257
  %v4525 = vunpack.c.l.b16 %v4258
  %v4526 = vunpack.c.h.b16 %v4258
  %v4527 = vunpack.c.l.b16 %v4259
  %v4528 = vunpack.c.h.b16 %v4259
  %v4529 = vunpack.c.l.b16 %v4260
  %v4530 = vunpack.c.h.b16 %v4260
  %v4531 = vunpack.c.l.b16 %v4261
  %v4532 = vunpack.c.h.b16 %v4261
  %v4533 = vunpack.c.l.b16 %v4262
  %v4534 = vunpack.c.h.b16 %v4262
  %v4535 = vunpack.c.l.b16 %v4263
  %v4536 = vunpack.c.h.b16 %v4263
  %v4537 = vunpack.c.l.b16 %v4264
  %v4538 = vunpack.c.h.b16 %v4264
  %v4539 = vunpack.c.l.b16 %v4265
  %v4540 = vunpack.c.h.b16 %v4265
  %v4541 = vunpack.c.l.b16 %v4266
  %v4542 = vunpack.c.h.b16 %v4266
  %v4543 = vunpack.c.l.b16 %v4267
  %v4544 = vunpack.c.h.b16 %v4267
  %v4545 = vunpack.c.l.b16 %v4268
  %v4546 = vunpack.c.h.b16 %v4268
  %v4547 = vunpack.c.l.b16 %v4269
  %v4548 = vunpack.c.h.b16 %v4269
  %v4549 = vunpack.c.l.b16 %v4270
  %v4550 = vunpack.c.h.b16 %v4270
  %v4551 = vunpack.c.l.b16 %v4271
  %v4552 = vunpack.c.h.b16 %v4271
  %v4553 = vunpack.c.l.b16 %v4272
  %v4554 = vunpack.c.h.b16 %v4272
  %v4555 = vunpack.c.l.b16 %v4273
  %v4556 = vunpack.c.h.b16 %v4273
  %v4557 = vunpack.c.l.b16 %v4274
  %v4558 = vunpack.c.h.b16 %v4274
  %v4559 = vunpack.c.l.b16 %v4275
  %v4560 = vunpack.c.h.b16 %v4275
  %v4561 = vunpack.c.l.b16 %v4276
  %v4562 = vunpack.c.h.b16 %v4276
  %v4563 = vunpack.c.l.b16 %v4277
  %v4564 = vunpack.c.h.b16 %v4277
  %v4565 = vunpack.c.l.b16 %v4278
  %v4566 = vunpack.c.h.b16 %v4278
  %v4567 = vunpack.c.l.b16 %v4279
  %v4568 = vunpack.c.h.b16 %v4279
  %v4569 = vunpack.c.l.b16 %v4280
  %v4570 = vunpack.c.h.b16 %v4280
  %v4571 = vunpack.c.l.b16 %v4281
  %v4572 = vunpack.c.h.b16 %v4281
  %v4573 = vunpack.c.l.b16 %v4282
  %v4574 = vunpack.c.h.b16 %v4282
  %v4575 = vunpack.c.l.b16 %v4283
  %v4576 = vunpack.c.h.b16 %v4283
  %v4577 = vunpack.c.l.b16 %v4284
  %v4578 = vunpack.c.h.b16 %v4284
  %v4579 = vunpack.c.l.b16 %v4285
  %v4580 = vunpack.c.h.b16 %v4285
  %v4581 = vunpack.c.l.b16 %v4286
  %v4582 = vunpack.c.h.b16 %v4286
  %v4583 = vunpack.c.l.b16 %v4287
  %v4584 = vunpack.c.h.b16 %v4287
  %v4585 = vunpack.c.l.b16 %v4288
  %v4586 = vunpack.c.h.b16 %v4288
  %v4587 = vunpack.c.l.b16 %v4289
  %v4588 = vunpack.c.h.b16 %v4289
  %v4589 = vunpack.c.l.b16 %v4290
  %v4590 = vunpack.c.h.b16 %v4290
  %v4591 = vunpack.c.l.b16 %v4291
  %v4592 = vunpack.c.h.b16 %v4291
  %v4593 = vunpack.c.l.b16 %v4292
  %v4594 = vunpack.c.h.b16 %v4292
  %v4595 = vunpack.c.l.b16 %v4293
  %v4596 = vunpack.c.h.b16 %v4293
  %v4597 = vunpack.c.l.b16 %v4294
  %v4598 = vunpack.c.h.b16 %v4294
  %v4599 = vunpack.c.l.b16 %v4295
  %v4600 = vunpack.c.h.b16 %v4295
  %v4601 = vunpack.c.l.b16 %v4296
  %v4602 = vunpack.c.h.b16 %v4296
  %v4603 = vunpack.c.l.b16 %v4297
  %v4604 = vunpack.c.h.b16 %v4297
  %v4605 = vunpack.c.l.b16 %v4298
  %v4606 = vunpack.c.h.b16 %v4298
  %v4607 = vunpack.c.l.b16 %v4299
  %v4608 = vunpack.c.h.b16 %v4299
  %v4609 = vunpack.c.l.b16 %v4300
  %v4610 = vunpack.c.h.b16 %v4300
  %v4611 = vunpack.c.l.b16 %v4301
  %v4612 = vunpack.c.h.b16 %v4301
  %v4613 = vunpack.c.l.b16 %v4302
  %v4614 = vunpack.c.h.b16 %v4302
  %v4615 = vunpack.c.l.b16 %v4303
  %v4616 = vunpack.c.h.b16 %v4303
  %v4617 = vunpack.c.l.b16 %v4304
  %v4618 = vunpack.c.h.b16 %v4304
  %v4619 = vunpack.c.l.b16 %v4305
  %v4620 = vunpack.c.h.b16 %v4305
  %v4621 = vunpack.c.l.b16 %v4306
  %v4622 = vunpack.c.h.b16 %v4306
  %v4623 = vunpack.c.l.b16 %v4307
  %v4624 = vunpack.c.h.b16 %v4307
  %v4625 = vunpack.c.l.b16 %v4308
  %v4626 = vunpack.c.h.b16 %v4308
  %v4627 = vunpack.c.l.b16 %v4309
  %v4628 = vunpack.c.h.b16 %v4309
  %v4629 = vunpack.c.l.b16 %v4310
  %v4630 = vunpack.c.h.b16 %v4310
  %v4631 = vunpack.c.l.b16 %v4311
  %v4632 = vunpack.c.h.b16 %v4311
  %v4633 = vunpack.c.l.b16 %v4312
  %v4634 = vunpack.c.h.b16 %v4312
  %v4635 = vunpack.c.l.b16 %v4313
  %v4636 = vunpack.c.h.b16 %v4313
  %v4637 = vunpack.c.l.b16 %v4314
  %v4638 = vunpack.c.h.b16 %v4314
  %v4639 = vunpack.c.l.b16 %v4315
  %v4640 = vunpack.c.h.b16 %v4315
  %v4641 = vunpack.c.l.b16 %v4316
  %v4642 = vunpack.c.h.b16 %v4316
  %v4643 = vunpack.c.l.b16 %v4317
  %v4644 = vunpack.c.h.b16 %v4317
  %v4645 = vunpack.c.l.b16 %v4318
  %v4646 = vunpack.c.h.b16 %v4318
  %v4647 = vunpack.c.l.b16 %v4319
  %v4648 = vunpack.c.h.b16 %v4319
  %v4649 = vunpack.c.l.b16 %v4320
  %v4650 = vunpack.c.h.b16 %v4320
  %v4651 = vunpack.c.l.b16 %v4321
  %v4652 = vunpack.c.h.b16 %v4321
  %v4653 = vunpack.c.l.b16 %v4322
  %v4654 = vunpack.c.h.b16 %v4322
  %v4655 = vunpack.c.l.b16 %v4323
  %v4656 = vunpack.c.h.b16 %v4323
  %v4657 = vunpack.c.l.b16 %v4324
  %v4658 = vunpack.c.h.b16 %v4324
  %v4659 = vunpack.c.l.b16 %v4325
  %v4660 = vunpack.c.h.b16 %v4325
  %v4661 = vunpack.c.l.b16 %v4326
  %v4662 = vunpack.c.h.b16 %v4326
  %v4663 = vunpack.c.l.b16 %v4327
  %v4664 = vunpack.c.h.b16 %v4327
  %v4665 = vunpack.c.l.b16 %v4328
  %v4666 = vunpack.c.h.b16 %v4328
  %v4667 = vunpack.c.l.b16 %v4329
  %v4668 = vunpack.c.h.b16 %v4329
  %v4669 = vunpack.c.l.b16 %v4330
  %v4670 = vunpack.c.h.b16 %v4330
  %v4671 = vunpack.c.l.b16 %v4331
  %v4672 = vunpack.c.h.b16 %v4331
  %v4673 = vunpack.c.l.b16 %v4332
  %v4674 = vunpack.c.h.b16 %v4332
  %v4675 = vunpack.c.l.b16 %v4333
  %v4676 = vunpack.c.h.b16 %v4333
  %v4677 = vunpack.c.l.b16 %v4334
  %v4678 = vunpack.c.h.b16 %v4334
  %v4679 = vunpack.c.l.b16 %v4335
  %v4680 = vunpack.c.h.b16 %v4335
  %v4681 = vunpack.c.l.b16 %v4336
  %v4682 = vunpack.c.h.b16 %v4336
  %v4683 = vunpack.c.l.b16 %v4337
  %v4684 = vunpack.c.h.b16 %v4337
  %v4685 = vunpack.c.l.b16 %v4338
  %v4686 = vunpack.c.h.b16 %v4338
  %v4687 = vunpack.c.l.b16 %v4339
  %v4688 = vunpack.c.h.b16 %v4339
  %v4689 = vunpack.c.l.b16 %v4340
  %v4690 = vunpack.c.h.b16 %v4340
  %v4691 = vunpack.c.l.b16 %v4341
  %v4692 = vunpack.c.h.b16 %v4341
  %v4693 = vunpack.c.l.b16 %v4342
  %v4694 = vunpack.c.h.b16 %v4342
  %v4695 = vunpack.c.l.b16 %v4343
  %v4696 = vunpack.c.h.b16 %v4343
  %v4697 = vunpack.c.l.b16 %v4344
  %v4698 = vunpack.c.h.b16 %v4344
  %v4699 = vunpack.c.l.b16 %v4345
  %v4700 = vunpack.c.h.b16 %v4345
  %v4701 = vunpack.c.l.b16 %v4346
  %v4702 = vunpack.c.h.b16 %v4346
  %v4703 = vunpack.c.l.b16 %v4347
  %v4704 = vunpack.c.h.b16 %v4347
  %v4705 = vunpack.c.l.b16 %v4348
  %v4706 = vunpack.c.h.b16 %v4348
  %v4707 = vunpack.c.l.b16 %v4349
  %v4708 = vunpack.c.h.b16 %v4349
  %v4709 = vunpack.c.l.b16 %v4350
  %v4710 = vunpack.c.h.b16 %v4350
  %v4711 = vunpack.c.l.b16 %v4351
  %v4712 = vunpack.c.h.b16 %v4351
  %v4713 = vunpack.c.l.b16 %v4352
  %v4714 = vunpack.c.h.b16 %v4352
  %v4715 = vunpack.c.l.b16 %v4353
  %v4716 = vunpack.c.h.b16 %v4353
  %v4717 = vunpack.c.l.b16 %v4354
  %v4718 = vunpack.c.h.b16 %v4354
  %v4719 = vunpack.c.l.b16 %v4355
  %v4720 = vunpack.c.h.b16 %v4355
  %v4721 = vunpack.c.l.b16 %v4356
  %v4722 = vunpack.c.h.b16 %v4356
  %v4723 = vunpack.c.l.b16 %v4357
  %v4724 = vunpack.c.h.b16 %v4357
  %v4725 = vunpack.c.l.b16 %v4358
  %v4726 = vunpack.c.h.b16 %v4358
  %v4727 = vunpack.c.l.b16 %v4359
  %v4728 = vunpack.c.h.b16 %v4359
  %v4729 = vunpack.c.l.b16 %v4360
  %v4730 = vunpack.c.h.b16 %v4360
  %v4731 = vunpack.c.l.b16 %v4361
  %v4732 = vunpack.c.h.b16 %v4361
  %v4733 = vunpack.c.l.b16 %v4362
  %v4734 = vunpack.c.h.b16 %v4362
  %v4735 = vunpack.c.l.b16 %v4363
  %v4736 = vunpack.c.h.b16 %v4363
  %v4737 = vunpack.c.l.b16 %v4364
  %v4738 = vunpack.c.h.b16 %v4364
  %v4739 = vunpack.c.l.b16 %v4365
  %v4740 = vunpack.c.h.b16 %v4365
  %v4741 = vunpack.c.l.b16 %v4366
  %v4742 = vunpack.c.h.b16 %v4366
  %v4743 = vunpack.c.l.b16 %v4367
  %v4744 = vunpack.c.h.b16 %v4367
  %v4745 = vunpack.c.l.b16 %v4368
  %v4746 = vunpack.c.h.b16 %v4368
  %v4747 = vunpack.c.l.b16 %v4369
  %v4748 = vunpack.c.h.b16 %v4369
  %v4749 = vunpack.c.l.b16 %v4370
  %v4750 = vunpack.c.h.b16 %v4370
  %v4751 = vunpack.c.l.b16 %v4371
  %v4752 = vunpack.c.h.b16 %v4371
  %v4753 = vunpack.c.l.b16 %v4372
  %v4754 = vunpack.c.h.b16 %v4372
  %v4755 = vunpack.c.l.b16 %v4373
  %v4756 = vunpack.c.h.b16 %v4373
  %v4757 = vunpack.c.l.b16 %v4374
  %v4758 = vunpack.c.h.b16 %v4374
  %v4759 = vpack.c.b16 %v4507, %v4503
  %v4760 = vpack.c.b16 %v4508, %v4504
  %v4761 = vpack.c.b16 %v4509, %v4505
  %v4762 = vpack.c.b16 %v4510, %v4506
  %v4763 = vpack.c.b16 %v4515, %v4511
  %v4764 = vpack.c.b16 %v4516, %v4512
  %v4765 = vpack.c.b16 %v4517, %v4513
  %v4766 = vpack.c.b16 %v4518, %v4514
  %v4767 = vpack.c.b16 %v4523, %v4519
  %v4768 = vpack.c.b16 %v4524, %v4520
  %v4769 = vpack.c.b16 %v4525, %v4521
  %v4770 = vpack.c.b16 %v4526, %v4522
  %v4771 = vpack.c.b16 %v4531, %v4527
  %v4772 = vpack.c.b16 %v4532, %v4528
  %v4773 = vpack.c.b16 %v4533, %v4529
  %v4774 = vpack.c.b16 %v4534, %v4530
  %v4775 = vpack.c.b16 %v4539, %v4535
  %v4776 = vpack.c.b16 %v4540, %v4536
  %v4777 = vpack.c.b16 %v4541, %v4537
  %v4778 = vpack.c.b16 %v4542, %v4538
  %v4779 = vpack.c.b16 %v4547, %v4543
  %v4780 = vpack.c.b16 %v4548, %v4544
  %v4781 = vpack.c.b16 %v4549, %v4545
  %v4782 = vpack.c.b16 %v4550, %v4546
  %v4783 = vpack.c.b16 %v4555, %v4551
  %v4784 = vpack.c.b16 %v4556, %v4552
  %v4785 = vpack.c.b16 %v4557, %v4553
  %v4786 = vpack.c.b16 %v4558, %v4554
  %v4787 = vpack.c.b16 %v4563, %v4559
  %v4788 = vpack.c.b16 %v4564, %v4560
  %v4789 = vpack.c.b16 %v4565, %v4561
  %v4790 = vpack.c.b16 %v4566, %v4562
  %v4791 = vpack.c.b16 %v4571, %v4567
  %v4792 = vpack.c.b16 %v4572, %v4568
  %v4793 = vpack.c.b16 %v4573, %v4569
  %v4794 = vpack.c.b16 %v4574, %v4570
  %v4795 = vpack.c.b16 %v4579, %v4575
  %v4796 = vpack.c.b16 %v4580, %v4576
  %v4797 = vpack.c.b16 %v4581, %v4577
  %v4798 = vpack.c.b16 %v4582, %v4578
  %v4799 = vpack.c.b16 %v4587, %v4583
  %v4800 = vpack.c.b16 %v4588, %v4584
  %v4801 = vpack.c.b16 %v4589, %v4585
  %v4802 = vpack.c.b16 %v4590, %v4586
  %v4803 = vpack.c.b16 %v4595, %v4591
  %v4804 = vpack.c.b16 %v4596, %v4592
  %v4805 = vpack.c.b16 %v4597, %v4593
  %v4806 = vpack.c.b16 %v4598, %v4594
  %v4807 = vpack.c.b16 %v4603, %v4599
  %v4808 = vpack.c.b16 %v4604, %v4600
  %v4809 = vpack.c.b16 %v4605, %v4601
  %v4810 = vpack.c.b16 %v4606, %v4602
  %v4811 = vpack.c.b16 %v4611, %v4607
  %v4812 = vpack.c.b16 %v4612, %v4608
  %v4813 = vpack.c.b16 %v4613, %v4609
  %v4814 = vpack.c.b16 %v4614, %v4610
  %v4815 = vpack.c.b16 %v4619, %v4615
  %v4816 = vpack.c.b16 %v4620, %v4616
  %v4817 = vpack.c.b16 %v4621, %v4617
  %v4818 = vpack.c.b16 %v4622, %v4618
  %v4819 = vpack.c.b16 %v4627, %v4623
  %v4820 = vpack.c.b16 %v4628, %v4624
  %v4821 = vpack.c.b16 %v4629, %v4625
  %v4822 = vpack.c.b16 %v4630, %v4626
  %v4823 = vpack.c.b16 %v4635, %v4631
  %v4824 = vpack.c.b16 %v4636, %v4632
  %v4825 = vpack.c.b16 %v4637, %v4633
  %v4826 = vpack.c.b16 %v4638, %v4634
  %v4827 = vpack.c.b16 %v4643, %v4639
  %v4828 = vpack.c.b16 %v4644, %v4640
  %v4829 = vpack.c.b16 %v4645, %v4641
  %v4830 = vpack.c.b16 %v4646, %v4642
  %v4831 = vpack.c.b16 %v4651, %v4647
  %v4832 = vpack.c.b16 %v4652, %v4648
  %v4833 = vpack.c.b16 %v4653, %v4649
  %v4834 = vpack.c.b16 %v4654, %v4650
  %v4835 = vpack.c.b16 %v4659, %v4655
  %v4836 = vpack.c.b16 %v4660, %v4656
  %v4837 = vpack.c.b16 %v4661, %v4657
  %v4838 = vpack.c.b16 %v4662, %v4658
  %v4839 = vpack.c.b16 %v4667, %v4663
  %v4840 = vpack.c.b16 %v4668, %v4664
  %v4841 = vpack.c.b16 %v4669, %v4665
  %v4842 = vpack.c.b16 %v4670, %v4666
  %v4843 = vpack.c.b16 %v4675, %v4671
  %v4844 = vpack.c.b16 %v4676, %v4672
  %v4845 = vpack.c.b16 %v4677, %v4673
  %v4846 = vpack.c.b16 %v4678, %v4674
  %v4847 = vpack.c.b16 %v4683, %v4679
  %v4848 = vpack.c.b16 %v4684, %v4680
  %v4849 = vpack.c.b16 %v4685, %v4681
  %v4850 = vpack.c.b16 %v4686, %v4682
  %v4851 = vpack.c.b16 %v4691, %v4687
  %v4852 = vpack.c.b16 %v4692, %v4688
  %v4853 = vpack.c.b16 %v4693, %v4689
  %v4854 = vpack.c.b16 %v4694, %v4690
  %v4855 = vpack.c.b16 %v4699, %v4695
  %v4856 = vpack.c.b16 %v4700, %v4696
  %v4857 = vpack.c.b16 %v4701, %v4697
  %v4858 = vpack.c.b16 %v4702, %v4698
  %v4859 = vpack.c.b16 %v4707, %v4703
  %v4860 = vpack.c.b16 %v4708, %v4704
  %v4861 = vpack.c.b16 %v4709, %v4705
  %v4862 = vpack.c.b16 %v4710, %v4706
  %v4863 = vpack.c.b16 %v4715, %v4711
  %v4864 = vpack.c.b16 %v4716, %v4712
  %v4865 = vpack.c.b16 %v4717, %v4713
  %v4866 = vpack.c.b16 %v4718, %v4714
  %v4867 = vpack.c.b16 %v4723, %v4719
  %v4868 = vpack.c.b16 %v4724, %v4720
  %v4869 = vpack.c.b16 %v4725, %v4721
  %v4870 = vpack.c.b16 %v4726, %v4722
  %v4871 = vpack.c.b16 %v4731, %v4727
  %v4872 = vpack.c.b16 %v4732, %v4728
  %v4873 = vpack.c.b16 %v4733, %v4729
  %v4874 = vpack.c.b16 %v4734, %v4730
  %v4875 = vpack.c.b16 %v4739, %v4735
  %v4876 = vpack.c.b16 %v4740, %v4736
  %v4877 = vpack.c.b16 %v4741, %v4737
  %v4878 = vpack.c.b16 %v4742, %v4738
  %v4879 = vpack.c.b16 %v4747, %v4743
  %v4880 = vpack.c.b16 %v4748, %v4744
  %v4881 = vpack.c.b16 %v4749, %v4745
  %v4882 = vpack.c.b16 %v4750, %v4746
  %v4883 = vpack.c.b16 %v4755, %v4751
  %v4884 = vpack.c.b16 %v4756, %v4752
  %v4885 = vpack.c.b16 %v4757, %v4753
  %v4886 = vpack.c.b16 %v4758, %v4754
  %5015 = vmatprep.subr.bf16.mxu0 %v4760
  %5016 = vmatpush1.bf16.msra.mxu0 %v4759
  %5017 = vmatprep.subr.bf16.mxu0 %v4764
  %5018 = vmatpush1.bf16.msra.mxu0 %v4763
  %5019 = vmatprep.subr.bf16.mxu0 %v4768
  %5020 = vmatpush1.bf16.msra.mxu0 %v4767
  %5021 = vmatprep.subr.bf16.mxu0 %v4772
  %5022 = vmatpush1.bf16.msra.mxu0 %v4771
  %5023 = vmatprep.subr.bf16.mxu0 %v4776
  %5024 = vmatpush1.bf16.msra.mxu0 %v4775
  %5025 = vmatprep.subr.bf16.mxu0 %v4780
  %5026 = vmatpush1.bf16.msra.mxu0 %v4779
  %5027 = vmatprep.subr.bf16.mxu0 %v4784
  %5028 = vmatpush1.bf16.msra.mxu0 %v4783
  %5029 = vmatprep.subr.bf16.mxu0 %v4788
  %5030 = vmatpush1.bf16.msra.mxu0 %v4787
  %5031 = vmatprep.subr.bf16.mxu0 %v4792
  %5032 = vmatpush1.bf16.msra.mxu0 %v4791
  %5033 = vmatprep.subr.bf16.mxu0 %v4796
  %5034 = vmatpush1.bf16.msra.mxu0 %v4795
  %5035 = vmatprep.subr.bf16.mxu0 %v4800
  %5036 = vmatpush1.bf16.msra.mxu0 %v4799
  %5037 = vmatprep.subr.bf16.mxu0 %v4804
  %5038 = vmatpush1.bf16.msra.mxu0 %v4803
  %5039 = vmatprep.subr.bf16.mxu0 %v4808
  %5040 = vmatpush1.bf16.msra.mxu0 %v4807
  %5041 = vmatprep.subr.bf16.mxu0 %v4812
  %5042 = vmatpush1.bf16.msra.mxu0 %v4811
  %5043 = vmatprep.subr.bf16.mxu0 %v4816
  %5044 = vmatpush1.bf16.msra.mxu0 %v4815
  %5045 = vmatprep.subr.bf16.mxu0 %v4820
  %5046 = vmatpush1.bf16.msra.mxu0 %v4819
  %5047 = vmatprep.mubr.bf16.mxu0 %v4240
  %5048 = vmatmul.mubr.bf16.gmra.mrb[0].mxu0 %v4239
  %v5049 = vpop.f32.mrb[0].mxu0
  %v5050 = vadd.f32 0.0, %v5049
  %v5051 = vpop.f32.mrb[0].mxu0
  %v5052 = vadd.f32 0.0, %v5051
  %v5053 = vpop.f32.mrb[0].mxu0
  %v5054 = vadd.f32 0.0, %v5053
  %v5055 = vpop.f32.mrb[0].mxu0
  %v5056 = vadd.f32 0.0, %v5055
  %5057 = vmatprep.mubr.bf16.mxu0 %v4244
  %5058 = vmatmul.mubr.bf16.gmra.mrb[0].mxu0 %v4243
  %v5059 = vpop.f32.mrb[0].mxu0
  %v5060 = vadd.f32 0.0, %v5059
  %v5061 = vpop.f32.mrb[0].mxu0
  %v5062 = vadd.f32 0.0, %v5061
  %v5063 = vpop.f32.mrb[0].mxu0
  %v5064 = vadd.f32 0.0, %v5063
  %v5065 = vpop.f32.mrb[0].mxu0
  %v5066 = vadd.f32 0.0, %v5065
  %5067 = vdwg.mxu0
  %5068 = vmatprep.subr.bf16.mxu0 %v4824
  %5069 = vmatpush1.bf16.msra.mxu0 %v4823
  %5070 = vmatprep.subr.bf16.mxu0 %v4828
  %5071 = vmatpush1.bf16.msra.mxu0 %v4827
  %5072 = vmatprep.subr.bf16.mxu0 %v4832
  %5073 = vmatpush1.bf16.msra.mxu0 %v4831
  %5074 = vmatprep.subr.bf16.mxu0 %v4836
  %5075 = vmatpush1.bf16.msra.mxu0 %v4835
  %5076 = vmatprep.subr.bf16.mxu0 %v4840
  %5077 = vmatpush1.bf16.msra.mxu0 %v4839
  %5078 = vmatprep.subr.bf16.mxu0 %v4844
  %5079 = vmatpush1.bf16.msra.mxu0 %v4843
  %5080 = vmatprep.subr.bf16.mxu0 %v4848
  %5081 = vmatpush1.bf16.msra.mxu0 %v4847
  %5082 = vmatprep.subr.bf16.mxu0 %v4852
  %5083 = vmatpush1.bf16.msra.mxu0 %v4851
  %5084 = vmatprep.subr.bf16.mxu0 %v4856
  %5085 = vmatpush1.bf16.msra.mxu0 %v4855
  %5086 = vmatprep.subr.bf16.mxu0 %v4860
  %5087 = vmatpush1.bf16.msra.mxu0 %v4859
  %5088 = vmatprep.subr.bf16.mxu0 %v4864
  %5089 = vmatpush1.bf16.msra.mxu0 %v4863
  %5090 = vmatprep.subr.bf16.mxu0 %v4868
  %5091 = vmatpush1.bf16.msra.mxu0 %v4867
  %5092 = vmatprep.subr.bf16.mxu0 %v4872
  %5093 = vmatpush1.bf16.msra.mxu0 %v4871
  %5094 = vmatprep.subr.bf16.mxu0 %v4876
  %5095 = vmatpush1.bf16.msra.mxu0 %v4875
  %5096 = vmatprep.subr.bf16.mxu0 %v4880
  %5097 = vmatpush1.bf16.msra.mxu0 %v4879
  %5098 = vmatprep.subr.bf16.mxu0 %v4884
  %5099 = vmatpush1.bf16.msra.mxu0 %v4883
  %5100 = vmatprep.mubr.bf16.mxu0 %v4242
  %5101 = vmatmul.mubr.bf16.gmra.mrb[0].mxu0 %v4241
  %v5102 = vpop.f32.mrb[0].mxu0
  %v5103 = vadd.f32 %v5050, %v5102
  %v5104 = vpop.f32.mrb[0].mxu0
  %v5105 = vadd.f32 %v5052, %v5104
  %v5106 = vpop.f32.mrb[0].mxu0
  %v5107 = vadd.f32 %v5054, %v5106
  %v5108 = vpop.f32.mrb[0].mxu0
  %v5109 = vadd.f32 %v5056, %v5108
  %5110 = vmatprep.mubr.bf16.mxu0 %v4246
  %5111 = vmatmul.mubr.bf16.gmra.mrb[0].mxu0 %v4245
  %v5112 = vpop.f32.mrb[0].mxu0
  %v5113 = vadd.f32 %v5060, %v5112
  %v5114 = vpop.f32.mrb[0].mxu0
  %v5115 = vadd.f32 %v5062, %v5114
  %v5116 = vpop.f32.mrb[0].mxu0
  %v5117 = vadd.f32 %v5064, %v5116
  %v5118 = vpop.f32.mrb[0].mxu0
  %v5119 = vadd.f32 %v5066, %v5118
  %5120 = vdwg.mxu0
  %5121 = vmatprep.subr.bf16.mxu0 %v4762
  %5122 = vmatpush1.bf16.msra.mxu0 %v4761
  %5123 = vmatprep.subr.bf16.mxu0 %v4766
  %5124 = vmatpush1.bf16.msra.mxu0 %v4765
  %5125 = vmatprep.subr.bf16.mxu0 %v4770
  %5126 = vmatpush1.bf16.msra.mxu0 %v4769
  %5127 = vmatprep.subr.bf16.mxu0 %v4774
  %5128 = vmatpush1.bf16.msra.mxu0 %v4773
  %5129 = vmatprep.subr.bf16.mxu0 %v4778
  %5130 = vmatpush1.bf16.msra.mxu0 %v4777
  %5131 = vmatprep.subr.bf16.mxu0 %v4782
  %5132 = vmatpush1.bf16.msra.mxu0 %v4781
  %5133 = vmatprep.subr.bf16.mxu0 %v4786
  %5134 = vmatpush1.bf16.msra.mxu0 %v4785
  %5135 = vmatprep.subr.bf16.mxu0 %v4790
  %5136 = vmatpush1.bf16.msra.mxu0 %v4789
  %5137 = vmatprep.subr.bf16.mxu0 %v4794
  %5138 = vmatpush1.bf16.msra.mxu0 %v4793
  %5139 = vmatprep.subr.bf16.mxu0 %v4798
  %5140 = vmatpush1.bf16.msra.mxu0 %v4797
  %5141 = vmatprep.subr.bf16.mxu0 %v4802
  %5142 = vmatpush1.bf16.msra.mxu0 %v4801
  %5143 = vmatprep.subr.bf16.mxu0 %v4806
  %5144 = vmatpush1.bf16.msra.mxu0 %v4805
  %5145 = vmatprep.subr.bf16.mxu0 %v4810
  %5146 = vmatpush1.bf16.msra.mxu0 %v4809
  %5147 = vmatprep.subr.bf16.mxu0 %v4814
  %5148 = vmatpush1.bf16.msra.mxu0 %v4813
  %5149 = vmatprep.subr.bf16.mxu0 %v4818
  %5150 = vmatpush1.bf16.msra.mxu0 %v4817
  %5151 = vmatprep.subr.bf16.mxu0 %v4822
  %5152 = vmatpush1.bf16.msra.mxu0 %v4821
  %5153 = vmatprep.mubr.bf16.mxu0 %v4240
  %5154 = vmatmul.mubr.bf16.gmra.mrb[0].mxu0 %v4239
  %v5155 = vpop.f32.mrb[0].mxu0
  %v5156 = vadd.f32 0.0, %v5155
  %v5157 = vpop.f32.mrb[0].mxu0
  %v5158 = vadd.f32 0.0, %v5157
  %v5159 = vpop.f32.mrb[0].mxu0
  %v5160 = vadd.f32 0.0, %v5159
  %v5161 = vpop.f32.mrb[0].mxu0
  %v5162 = vadd.f32 0.0, %v5161
  %5163 = vmatprep.mubr.bf16.mxu0 %v4244
  %5164 = vmatmul.mubr.bf16.gmra.mrb[0].mxu0 %v4243
  %v5165 = vpop.f32.mrb[0].mxu0
  %v5166 = vadd.f32 0.0, %v5165
  %v5167 = vpop.f32.mrb[0].mxu0
  %v5168 = vadd.f32 0.0, %v5167
  %v5169 = vpop.f32.mrb[0].mxu0
  %v5170 = vadd.f32 0.0, %v5169
  %v5171 = vpop.f32.mrb[0].mxu0
  %v5172 = vadd.f32 0.0, %v5171
  %5173 = vdwg.mxu0
  %5174 = vmatprep.subr.bf16.mxu0 %v4826
  %5175 = vmatpush1.bf16.msra.mxu0 %v4825
  %5176 = vmatprep.subr.bf16.mxu0 %v4830
  %5177 = vmatpush1.bf16.msra.mxu0 %v4829
  %5178 = vmatprep.subr.bf16.mxu0 %v4834
  %5179 = vmatpush1.bf16.msra.mxu0 %v4833
  %5180 = vmatprep.subr.bf16.mxu0 %v4838
  %5181 = vmatpush1.bf16.msra.mxu0 %v4837
  %5182 = vmatprep.subr.bf16.mxu0 %v4842
  %5183 = vmatpush1.bf16.msra.mxu0 %v4841
  %5184 = vmatprep.subr.bf16.mxu0 %v4846
  %5185 = vmatpush1.bf16.msra.mxu0 %v4845
  %5186 = vmatprep.subr.bf16.mxu0 %v4850
  %5187 = vmatpush1.bf16.msra.mxu0 %v4849
  %5188 = vmatprep.subr.bf16.mxu0 %v4854
  %5189 = vmatpush1.bf16.msra.mxu0 %v4853
  %5190 = vmatprep.subr.bf16.mxu0 %v4858
  %5191 = vmatpush1.bf16.msra.mxu0 %v4857
  %5192 = vmatprep.subr.bf16.mxu0 %v4862
  %5193 = vmatpush1.bf16.msra.mxu0 %v4861
  %5194 = vmatprep.subr.bf16.mxu0 %v4866
  %5195 = vmatpush1.bf16.msra.mxu0 %v4865
  %5196 = vmatprep.subr.bf16.mxu0 %v4870
  %5197 = vmatpush1.bf16.msra.mxu0 %v4869
  %5198 = vmatprep.subr.bf16.mxu0 %v4874
  %5199 = vmatpush1.bf16.msra.mxu0 %v4873
  %5200 = vmatprep.subr.bf16.mxu0 %v4878
  %5201 = vmatpush1.bf16.msra.mxu0 %v4877
  %5202 = vmatprep.subr.bf16.mxu0 %v4882
  %5203 = vmatpush1.bf16.msra.mxu0 %v4881
  %5204 = vmatprep.subr.bf16.mxu0 %v4886
  %5205 = vmatpush1.bf16.msra.mxu0 %v4885
  %5206 = vmatprep.mubr.bf16.mxu0 %v4242
  %5207 = vmatmul.mubr.bf16.gmra.mrb[0].mxu0 %v4241
  %v5208 = vpop.f32.mrb[0].mxu0
  %v5209 = vadd.f32 %v5156, %v5208
  %v5210 = vpop.f32.mrb[0].mxu0
  %v5211 = vadd.f32 %v5158, %v5210
  %v5212 = vpop.f32.mrb[0].mxu0
  %v5213 = vadd.f32 %v5160, %v5212
  %v5214 = vpop.f32.mrb[0].mxu0
  %v5215 = vadd.f32 %v5162, %v5214
  %5216 = vmatprep.mubr.bf16.mxu0 %v4246
  %5217 = vmatmul.mubr.bf16.gmra.mrb[0].mxu0 %v4245
  %v5218 = vpop.f32.mrb[0].mxu0
  %v5219 = vadd.f32 %v5166, %v5218
  %v5220 = vpop.f32.mrb[0].mxu0
  %v5221 = vadd.f32 %v5168, %v5220
  %v5222 = vpop.f32.mrb[0].mxu0
  %v5223 = vadd.f32 %v5170, %v5222
  %v5224 = vpop.f32.mrb[0].mxu0
  %v5225 = vadd.f32 %v5172, %v5224
  %5226 = vdwg.mxu0
  %s5227 = scalar_lea.vmem %s8, 1024
  %v5228 = vld [vmem:[%s5227] sm:$0xff]
  %v5229 = vld [vmem:[%s5227 + $0x8] sm:$0xff]
  %v5230 = vld [vmem:[%s5227 + $0x10] sm:$0xff]
  %v5231 = vld [vmem:[%s5227 + $0x18] sm:$0xff]
  %v5232 = vld [vmem:[%s5227 + $0x20] sm:$0xff]
  %v5233 = vld [vmem:[%s5227 + $0x28] sm:$0xff]
  %v5234 = vld [vmem:[%s5227 + $0x30] sm:$0xff]
  %v5235 = vld [vmem:[%s5227 + $0x38] sm:$0xff]
  %v5236 = vld [vmem:[%s5227 + $0x40] sm:$0xff]
  %v5237 = vld [vmem:[%s5227 + $0x48] sm:$0xff]
  %v5238 = vld [vmem:[%s5227 + $0x50] sm:$0xff]
  %v5239 = vld [vmem:[%s5227 + $0x58] sm:$0xff]
  %v5240 = vld [vmem:[%s5227 + $0x60] sm:$0xff]
  %v5241 = vld [vmem:[%s5227 + $0x68] sm:$0xff]
  %v5242 = vld [vmem:[%s5227 + $0x70] sm:$0xff]
  %v5243 = vld [vmem:[%s5227 + $0x78] sm:$0xff]
  %v5244 = vld [vmem:[%s5227 + $0x80] sm:$0xff]
  %v5245 = vld [vmem:[%s5227 + $0x88] sm:$0xff]
  %v5246 = vld [vmem:[%s5227 + $0x90] sm:$0xff]
  %v5247 = vld [vmem:[%s5227 + $0x98] sm:$0xff]
  %v5248 = vld [vmem:[%s5227 + $0xa0] sm:$0xff]
  %v5249 = vld [vmem:[%s5227 + $0xa8] sm:$0xff]
  %v5250 = vld [vmem:[%s5227 + $0xb0] sm:$0xff]
  %v5251 = vld [vmem:[%s5227 + $0xb8] sm:$0xff]
  %v5252 = vld [vmem:[%s5227 + $0xc0] sm:$0xff]
  %v5253 = vld [vmem:[%s5227 + $0xc8] sm:$0xff]
  %v5254 = vld [vmem:[%s5227 + $0xd0] sm:$0xff]
  %v5255 = vld [vmem:[%s5227 + $0xd8] sm:$0xff]
  %v5256 = vld [vmem:[%s5227 + $0xe0] sm:$0xff]
  %v5257 = vld [vmem:[%s5227 + $0xe8] sm:$0xff]
  %v5258 = vld [vmem:[%s5227 + $0xf0] sm:$0xff]
  %v5259 = vld [vmem:[%s5227 + $0xf8] sm:$0xff]
  %v5260 = vld [vmem:[%s5227 + $0x100] sm:$0xff]
  %v5261 = vld [vmem:[%s5227 + $0x108] sm:$0xff]
  %v5262 = vld [vmem:[%s5227 + $0x110] sm:$0xff]
  %v5263 = vld [vmem:[%s5227 + $0x118] sm:$0xff]
  %v5264 = vld [vmem:[%s5227 + $0x120] sm:$0xff]
  %v5265 = vld [vmem:[%s5227 + $0x128] sm:$0xff]
  %v5266 = vld [vmem:[%s5227 + $0x130] sm:$0xff]
  %v5267 = vld [vmem:[%s5227 + $0x138] sm:$0xff]
  %v5268 = vld [vmem:[%s5227 + $0x140] sm:$0xff]
  %v5269 = vld [vmem:[%s5227 + $0x148] sm:$0xff]
  %v5270 = vld [vmem:[%s5227 + $0x150] sm:$0xff]
  %v5271 = vld [vmem:[%s5227 + $0x158] sm:$0xff]
  %v5272 = vld [vmem:[%s5227 + $0x160] sm:$0xff]
  %v5273 = vld [vmem:[%s5227 + $0x168] sm:$0xff]
  %v5274 = vld [vmem:[%s5227 + $0x170] sm:$0xff]
  %v5275 = vld [vmem:[%s5227 + $0x178] sm:$0xff]
  %v5276 = vld [vmem:[%s5227 + $0x180] sm:$0xff]
  %v5277 = vld [vmem:[%s5227 + $0x188] sm:$0xff]
  %v5278 = vld [vmem:[%s5227 + $0x190] sm:$0xff]
  %v5279 = vld [vmem:[%s5227 + $0x198] sm:$0xff]
  %v5280 = vld [vmem:[%s5227 + $0x1a0] sm:$0xff]
  %v5281 = vld [vmem:[%s5227 + $0x1a8] sm:$0xff]
  %v5282 = vld [vmem:[%s5227 + $0x1b0] sm:$0xff]
  %v5283 = vld [vmem:[%s5227 + $0x1b8] sm:$0xff]
  %v5284 = vld [vmem:[%s5227 + $0x1c0] sm:$0xff]
  %v5285 = vld [vmem:[%s5227 + $0x1c8] sm:$0xff]
  %v5286 = vld [vmem:[%s5227 + $0x1d0] sm:$0xff]
  %v5287 = vld [vmem:[%s5227 + $0x1d8] sm:$0xff]
  %v5288 = vld [vmem:[%s5227 + $0x1e0] sm:$0xff]
  %v5289 = vld [vmem:[%s5227 + $0x1e8] sm:$0xff]
  %v5290 = vld [vmem:[%s5227 + $0x1f0] sm:$0xff]
  %v5291 = vld [vmem:[%s5227 + $0x1f8] sm:$0xff]
  %v5292 = vld [vmem:[%s5227 + $0x200] sm:$0xff]
  %v5293 = vld [vmem:[%s5227 + $0x208] sm:$0xff]
  %v5294 = vld [vmem:[%s5227 + $0x210] sm:$0xff]
  %v5295 = vld [vmem:[%s5227 + $0x218] sm:$0xff]
  %v5296 = vld [vmem:[%s5227 + $0x220] sm:$0xff]
  %v5297 = vld [vmem:[%s5227 + $0x228] sm:$0xff]
  %v5298 = vld [vmem:[%s5227 + $0x230] sm:$0xff]
  %v5299 = vld [vmem:[%s5227 + $0x238] sm:$0xff]
  %v5300 = vld [vmem:[%s5227 + $0x240] sm:$0xff]
  %v5301 = vld [vmem:[%s5227 + $0x248] sm:$0xff]
  %v5302 = vld [vmem:[%s5227 + $0x250] sm:$0xff]
  %v5303 = vld [vmem:[%s5227 + $0x258] sm:$0xff]
  %v5304 = vld [vmem:[%s5227 + $0x260] sm:$0xff]
  %v5305 = vld [vmem:[%s5227 + $0x268] sm:$0xff]
  %v5306 = vld [vmem:[%s5227 + $0x270] sm:$0xff]
  %v5307 = vld [vmem:[%s5227 + $0x278] sm:$0xff]
  %v5308 = vld [vmem:[%s5227 + $0x280] sm:$0xff]
  %v5309 = vld [vmem:[%s5227 + $0x288] sm:$0xff]
  %v5310 = vld [vmem:[%s5227 + $0x290] sm:$0xff]
  %v5311 = vld [vmem:[%s5227 + $0x298] sm:$0xff]
  %v5312 = vld [vmem:[%s5227 + $0x2a0] sm:$0xff]
  %v5313 = vld [vmem:[%s5227 + $0x2a8] sm:$0xff]
  %v5314 = vld [vmem:[%s5227 + $0x2b0] sm:$0xff]
  %v5315 = vld [vmem:[%s5227 + $0x2b8] sm:$0xff]
  %v5316 = vld [vmem:[%s5227 + $0x2c0] sm:$0xff]
  %v5317 = vld [vmem:[%s5227 + $0x2c8] sm:$0xff]
  %v5318 = vld [vmem:[%s5227 + $0x2d0] sm:$0xff]
  %v5319 = vld [vmem:[%s5227 + $0x2d8] sm:$0xff]
  %v5320 = vld [vmem:[%s5227 + $0x2e0] sm:$0xff]
  %v5321 = vld [vmem:[%s5227 + $0x2e8] sm:$0xff]
  %v5322 = vld [vmem:[%s5227 + $0x2f0] sm:$0xff]
  %v5323 = vld [vmem:[%s5227 + $0x2f8] sm:$0xff]
  %v5324 = vld [vmem:[%s5227 + $0x300] sm:$0xff]
  %v5325 = vld [vmem:[%s5227 + $0x308] sm:$0xff]
  %v5326 = vld [vmem:[%s5227 + $0x310] sm:$0xff]
  %v5327 = vld [vmem:[%s5227 + $0x318] sm:$0xff]
  %v5328 = vld [vmem:[%s5227 + $0x320] sm:$0xff]
  %v5329 = vld [vmem:[%s5227 + $0x328] sm:$0xff]
  %v5330 = vld [vmem:[%s5227 + $0x330] sm:$0xff]
  %v5331 = vld [vmem:[%s5227 + $0x338] sm:$0xff]
  %v5332 = vld [vmem:[%s5227 + $0x340] sm:$0xff]
  %v5333 = vld [vmem:[%s5227 + $0x348] sm:$0xff]
  %v5334 = vld [vmem:[%s5227 + $0x350] sm:$0xff]
  %v5335 = vld [vmem:[%s5227 + $0x358] sm:$0xff]
  %v5336 = vld [vmem:[%s5227 + $0x360] sm:$0xff]
  %v5337 = vld [vmem:[%s5227 + $0x368] sm:$0xff]
  %v5338 = vld [vmem:[%s5227 + $0x370] sm:$0xff]
  %v5339 = vld [vmem:[%s5227 + $0x378] sm:$0xff]
  %v5340 = vld [vmem:[%s5227 + $0x380] sm:$0xff]
  %v5341 = vld [vmem:[%s5227 + $0x388] sm:$0xff]
  %v5342 = vld [vmem:[%s5227 + $0x390] sm:$0xff]
  %v5343 = vld [vmem:[%s5227 + $0x398] sm:$0xff]
  %v5344 = vld [vmem:[%s5227 + $0x3a0] sm:$0xff]
  %v5345 = vld [vmem:[%s5227 + $0x3a8] sm:$0xff]
  %v5346 = vld [vmem:[%s5227 + $0x3b0] sm:$0xff]
  %v5347 = vld [vmem:[%s5227 + $0x3b8] sm:$0xff]
  %v5348 = vld [vmem:[%s5227 + $0x3c0] sm:$0xff]
  %v5349 = vld [vmem:[%s5227 + $0x3c8] sm:$0xff]
  %v5350 = vld [vmem:[%s5227 + $0x3d0] sm:$0xff]
  %v5351 = vld [vmem:[%s5227 + $0x3d8] sm:$0xff]
  %v5352 = vld [vmem:[%s5227 + $0x3e0] sm:$0xff]
  %v5353 = vld [vmem:[%s5227 + $0x3e8] sm:$0xff]
  %v5354 = vld [vmem:[%s5227 + $0x3f0] sm:$0xff]
  %v5355 = vld [vmem:[%s5227 + $0x3f8] sm:$0xff]
  %v5484 = vunpack.c.l.b16 %v5228
  %v5485 = vunpack.c.h.b16 %v5228
  %v5486 = vunpack.c.l.b16 %v5229
  %v5487 = vunpack.c.h.b16 %v5229
  %v5488 = vunpack.c.l.b16 %v5230
  %v5489 = vunpack.c.h.b16 %v5230
  %v5490 = vunpack.c.l.b16 %v5231
  %v5491 = vunpack.c.h.b16 %v5231
  %v5492 = vunpack.c.l.b16 %v5232
  %v5493 = vunpack.c.h.b16 %v5232
  %v5494 = vunpack.c.l.b16 %v5233
  %v5495 = vunpack.c.h.b16 %v5233
  %v5496 = vunpack.c.l.b16 %v5234
  %v5497 = vunpack.c.h.b16 %v5234
  %v5498 = vunpack.c.l.b16 %v5235
  %v5499 = vunpack.c.h.b16 %v5235
  %v5500 = vunpack.c.l.b16 %v5236
  %v5501 = vunpack.c.h.b16 %v5236
  %v5502 = vunpack.c.l.b16 %v5237
  %v5503 = vunpack.c.h.b16 %v5237
  %v5504 = vunpack.c.l.b16 %v5238
  %v5505 = vunpack.c.h.b16 %v5238
  %v5506 = vunpack.c.l.b16 %v5239
  %v5507 = vunpack.c.h.b16 %v5239
  %v5508 = vunpack.c.l.b16 %v5240
  %v5509 = vunpack.c.h.b16 %v5240
  %v5510 = vunpack.c.l.b16 %v5241
  %v5511 = vunpack.c.h.b16 %v5241
  %v5512 = vunpack.c.l.b16 %v5242
  %v5513 = vunpack.c.h.b16 %v5242
  %v5514 = vunpack.c.l.b16 %v5243
  %v5515 = vunpack.c.h.b16 %v5243
  %v5516 = vunpack.c.l.b16 %v5244
  %v5517 = vunpack.c.h.b16 %v5244
  %v5518 = vunpack.c.l.b16 %v5245
  %v5519 = vunpack.c.h.b16 %v5245
  %v5520 = vunpack.c.l.b16 %v5246
  %v5521 = vunpack.c.h.b16 %v5246
  %v5522 = vunpack.c.l.b16 %v5247
  %v5523 = vunpack.c.h.b16 %v5247
  %v5524 = vunpack.c.l.b16 %v5248
  %v5525 = vunpack.c.h.b16 %v5248
  %v5526 = vunpack.c.l.b16 %v5249
  %v5527 = vunpack.c.h.b16 %v5249
  %v5528 = vunpack.c.l.b16 %v5250
  %v5529 = vunpack.c.h.b16 %v5250
  %v5530 = vunpack.c.l.b16 %v5251
  %v5531 = vunpack.c.h.b16 %v5251
  %v5532 = vunpack.c.l.b16 %v5252
  %v5533 = vunpack.c.h.b16 %v5252
  %v5534 = vunpack.c.l.b16 %v5253
  %v5535 = vunpack.c.h.b16 %v5253
  %v5536 = vunpack.c.l.b16 %v5254
  %v5537 = vunpack.c.h.b16 %v5254
  %v5538 = vunpack.c.l.b16 %v5255
  %v5539 = vunpack.c.h.b16 %v5255
  %v5540 = vunpack.c.l.b16 %v5256
  %v5541 = vunpack.c.h.b16 %v5256
  %v5542 = vunpack.c.l.b16 %v5257
  %v5543 = vunpack.c.h.b16 %v5257
  %v5544 = vunpack.c.l.b16 %v5258
  %v5545 = vunpack.c.h.b16 %v5258
  %v5546 = vunpack.c.l.b16 %v5259
  %v5547 = vunpack.c.h.b16 %v5259
  %v5548 = vunpack.c.l.b16 %v5260
  %v5549 = vunpack.c.h.b16 %v5260
  %v5550 = vunpack.c.l.b16 %v5261
  %v5551 = vunpack.c.h.b16 %v5261
  %v5552 = vunpack.c.l.b16 %v5262
  %v5553 = vunpack.c.h.b16 %v5262
  %v5554 = vunpack.c.l.b16 %v5263
  %v5555 = vunpack.c.h.b16 %v5263
  %v5556 = vunpack.c.l.b16 %v5264
  %v5557 = vunpack.c.h.b16 %v5264
  %v5558 = vunpack.c.l.b16 %v5265
  %v5559 = vunpack.c.h.b16 %v5265
  %v5560 = vunpack.c.l.b16 %v5266
  %v5561 = vunpack.c.h.b16 %v5266
  %v5562 = vunpack.c.l.b16 %v5267
  %v5563 = vunpack.c.h.b16 %v5267
  %v5564 = vunpack.c.l.b16 %v5268
  %v5565 = vunpack.c.h.b16 %v5268
  %v5566 = vunpack.c.l.b16 %v5269
  %v5567 = vunpack.c.h.b16 %v5269
  %v5568 = vunpack.c.l.b16 %v5270
  %v5569 = vunpack.c.h.b16 %v5270
  %v5570 = vunpack.c.l.b16 %v5271
  %v5571 = vunpack.c.h.b16 %v5271
  %v5572 = vunpack.c.l.b16 %v5272
  %v5573 = vunpack.c.h.b16 %v5272
  %v5574 = vunpack.c.l.b16 %v5273
  %v5575 = vunpack.c.h.b16 %v5273
  %v5576 = vunpack.c.l.b16 %v5274
  %v5577 = vunpack.c.h.b16 %v5274
  %v5578 = vunpack.c.l.b16 %v5275
  %v5579 = vunpack.c.h.b16 %v5275
  %v5580 = vunpack.c.l.b16 %v5276
  %v5581 = vunpack.c.h.b16 %v5276
  %v5582 = vunpack.c.l.b16 %v5277
  %v5583 = vunpack.c.h.b16 %v5277
  %v5584 = vunpack.c.l.b16 %v5278
  %v5585 = vunpack.c.h.b16 %v5278
  %v5586 = vunpack.c.l.b16 %v5279
  %v5587 = vunpack.c.h.b16 %v5279
  %v5588 = vunpack.c.l.b16 %v5280
  %v5589 = vunpack.c.h.b16 %v5280
  %v5590 = vunpack.c.l.b16 %v5281
  %v5591 = vunpack.c.h.b16 %v5281
  %v5592 = vunpack.c.l.b16 %v5282
  %v5593 = vunpack.c.h.b16 %v5282
  %v5594 = vunpack.c.l.b16 %v5283
  %v5595 = vunpack.c.h.b16 %v5283
  %v5596 = vunpack.c.l.b16 %v5284
  %v5597 = vunpack.c.h.b16 %v5284
  %v5598 = vunpack.c.l.b16 %v5285
  %v5599 = vunpack.c.h.b16 %v5285
  %v5600 = vunpack.c.l.b16 %v5286
  %v5601 = vunpack.c.h.b16 %v5286
  %v5602 = vunpack.c.l.b16 %v5287
  %v5603 = vunpack.c.h.b16 %v5287
  %v5604 = vunpack.c.l.b16 %v5288
  %v5605 = vunpack.c.h.b16 %v5288
  %v5606 = vunpack.c.l.b16 %v5289
  %v5607 = vunpack.c.h.b16 %v5289
  %v5608 = vunpack.c.l.b16 %v5290
  %v5609 = vunpack.c.h.b16 %v5290
  %v5610 = vunpack.c.l.b16 %v5291
  %v5611 = vunpack.c.h.b16 %v5291
  %v5612 = vunpack.c.l.b16 %v5292
  %v5613 = vunpack.c.h.b16 %v5292
  %v5614 = vunpack.c.l.b16 %v5293
  %v5615 = vunpack.c.h.b16 %v5293
  %v5616 = vunpack.c.l.b16 %v5294
  %v5617 = vunpack.c.h.b16 %v5294
  %v5618 = vunpack.c.l.b16 %v5295
  %v5619 = vunpack.c.h.b16 %v5295
  %v5620 = vunpack.c.l.b16 %v5296
  %v5621 = vunpack.c.h.b16 %v5296
  %v5622 = vunpack.c.l.b16 %v5297
  %v5623 = vunpack.c.h.b16 %v5297
  %v5624 = vunpack.c.l.b16 %v5298
  %v5625 = vunpack.c.h.b16 %v5298
  %v5626 = vunpack.c.l.b16 %v5299
  %v5627 = vunpack.c.h.b16 %v5299
  %v5628 = vunpack.c.l.b16 %v5300
  %v5629 = vunpack.c.h.b16 %v5300
  %v5630 = vunpack.c.l.b16 %v5301
  %v5631 = vunpack.c.h.b16 %v5301
  %v5632 = vunpack.c.l.b16 %v5302
  %v5633 = vunpack.c.h.b16 %v5302
  %v5634 = vunpack.c.l.b16 %v5303
  %v5635 = vunpack.c.h.b16 %v5303
  %v5636 = vunpack.c.l.b16 %v5304
  %v5637 = vunpack.c.h.b16 %v5304
  %v5638 = vunpack.c.l.b16 %v5305
  %v5639 = vunpack.c.h.b16 %v5305
  %v5640 = vunpack.c.l.b16 %v5306
  %v5641 = vunpack.c.h.b16 %v5306
  %v5642 = vunpack.c.l.b16 %v5307
  %v5643 = vunpack.c.h.b16 %v5307
  %v5644 = vunpack.c.l.b16 %v5308
  %v5645 = vunpack.c.h.b16 %v5308
  %v5646 = vunpack.c.l.b16 %v5309
  %v5647 = vunpack.c.h.b16 %v5309
  %v5648 = vunpack.c.l.b16 %v5310
  %v5649 = vunpack.c.h.b16 %v5310
  %v5650 = vunpack.c.l.b16 %v5311
  %v5651 = vunpack.c.h.b16 %v5311
  %v5652 = vunpack.c.l.b16 %v5312
  %v5653 = vunpack.c.h.b16 %v5312
  %v5654 = vunpack.c.l.b16 %v5313
  %v5655 = vunpack.c.h.b16 %v5313
  %v5656 = vunpack.c.l.b16 %v5314
  %v5657 = vunpack.c.h.b16 %v5314
  %v5658 = vunpack.c.l.b16 %v5315
  %v5659 = vunpack.c.h.b16 %v5315
  %v5660 = vunpack.c.l.b16 %v5316
  %v5661 = vunpack.c.h.b16 %v5316
  %v5662 = vunpack.c.l.b16 %v5317
  %v5663 = vunpack.c.h.b16 %v5317
  %v5664 = vunpack.c.l.b16 %v5318
  %v5665 = vunpack.c.h.b16 %v5318
  %v5666 = vunpack.c.l.b16 %v5319
  %v5667 = vunpack.c.h.b16 %v5319
  %v5668 = vunpack.c.l.b16 %v5320
  %v5669 = vunpack.c.h.b16 %v5320
  %v5670 = vunpack.c.l.b16 %v5321
  %v5671 = vunpack.c.h.b16 %v5321
  %v5672 = vunpack.c.l.b16 %v5322
  %v5673 = vunpack.c.h.b16 %v5322
  %v5674 = vunpack.c.l.b16 %v5323
  %v5675 = vunpack.c.h.b16 %v5323
  %v5676 = vunpack.c.l.b16 %v5324
  %v5677 = vunpack.c.h.b16 %v5324
  %v5678 = vunpack.c.l.b16 %v5325
  %v5679 = vunpack.c.h.b16 %v5325
  %v5680 = vunpack.c.l.b16 %v5326
  %v5681 = vunpack.c.h.b16 %v5326
  %v5682 = vunpack.c.l.b16 %v5327
  %v5683 = vunpack.c.h.b16 %v5327
  %v5684 = vunpack.c.l.b16 %v5328
  %v5685 = vunpack.c.h.b16 %v5328
  %v5686 = vunpack.c.l.b16 %v5329
  %v5687 = vunpack.c.h.b16 %v5329
  %v5688 = vunpack.c.l.b16 %v5330
  %v5689 = vunpack.c.h.b16 %v5330
  %v5690 = vunpack.c.l.b16 %v5331
  %v5691 = vunpack.c.h.b16 %v5331
  %v5692 = vunpack.c.l.b16 %v5332
  %v5693 = vunpack.c.h.b16 %v5332
  %v5694 = vunpack.c.l.b16 %v5333
  %v5695 = vunpack.c.h.b16 %v5333
  %v5696 = vunpack.c.l.b16 %v5334
  %v5697 = vunpack.c.h.b16 %v5334
  %v5698 = vunpack.c.l.b16 %v5335
  %v5699 = vunpack.c.h.b16 %v5335
  %v5700 = vunpack.c.l.b16 %v5336
  %v5701 = vunpack.c.h.b16 %v5336
  %v5702 = vunpack.c.l.b16 %v5337
  %v5703 = vunpack.c.h.b16 %v5337
  %v5704 = vunpack.c.l.b16 %v5338
  %v5705 = vunpack.c.h.b16 %v5338
  %v5706 = vunpack.c.l.b16 %v5339
  %v5707 = vunpack.c.h.b16 %v5339
  %v5708 = vunpack.c.l.b16 %v5340
  %v5709 = vunpack.c.h.b16 %v5340
  %v5710 = vunpack.c.l.b16 %v5341
  %v5711 = vunpack.c.h.b16 %v5341
  %v5712 = vunpack.c.l.b16 %v5342
  %v5713 = vunpack.c.h.b16 %v5342
  %v5714 = vunpack.c.l.b16 %v5343
  %v5715 = vunpack.c.h.b16 %v5343
  %v5716 = vunpack.c.l.b16 %v5344
  %v5717 = vunpack.c.h.b16 %v5344
  %v5718 = vunpack.c.l.b16 %v5345
  %v5719 = vunpack.c.h.b16 %v5345
  %v5720 = vunpack.c.l.b16 %v5346
  %v5721 = vunpack.c.h.b16 %v5346
  %v5722 = vunpack.c.l.b16 %v5347
  %v5723 = vunpack.c.h.b16 %v5347
  %v5724 = vunpack.c.l.b16 %v5348
  %v5725 = vunpack.c.h.b16 %v5348
  %v5726 = vunpack.c.l.b16 %v5349
  %v5727 = vunpack.c.h.b16 %v5349
  %v5728 = vunpack.c.l.b16 %v5350
  %v5729 = vunpack.c.h.b16 %v5350
  %v5730 = vunpack.c.l.b16 %v5351
  %v5731 = vunpack.c.h.b16 %v5351
  %v5732 = vunpack.c.l.b16 %v5352
  %v5733 = vunpack.c.h.b16 %v5352
  %v5734 = vunpack.c.l.b16 %v5353
  %v5735 = vunpack.c.h.b16 %v5353
  %v5736 = vunpack.c.l.b16 %v5354
  %v5737 = vunpack.c.h.b16 %v5354
  %v5738 = vunpack.c.l.b16 %v5355
  %v5739 = vunpack.c.h.b16 %v5355
  %v5740 = vpack.c.b16 %v5488, %v5484
  %v5741 = vpack.c.b16 %v5489, %v5485
  %v5742 = vpack.c.b16 %v5490, %v5486
  %v5743 = vpack.c.b16 %v5491, %v5487
  %v5744 = vpack.c.b16 %v5496, %v5492
  %v5745 = vpack.c.b16 %v5497, %v5493
  %v5746 = vpack.c.b16 %v5498, %v5494
  %v5747 = vpack.c.b16 %v5499, %v5495
  %v5748 = vpack.c.b16 %v5504, %v5500
  %v5749 = vpack.c.b16 %v5505, %v5501
  %v5750 = vpack.c.b16 %v5506, %v5502
  %v5751 = vpack.c.b16 %v5507, %v5503
  %v5752 = vpack.c.b16 %v5512, %v5508
  %v5753 = vpack.c.b16 %v5513, %v5509
  %v5754 = vpack.c.b16 %v5514, %v5510
  %v5755 = vpack.c.b16 %v5515, %v5511
  %v5756 = vpack.c.b16 %v5520, %v5516
  %v5757 = vpack.c.b16 %v5521, %v5517
  %v5758 = vpack.c.b16 %v5522, %v5518
  %v5759 = vpack.c.b16 %v5523, %v5519
  %v5760 = vpack.c.b16 %v5528, %v5524
  %v5761 = vpack.c.b16 %v5529, %v5525
  %v5762 = vpack.c.b16 %v5530, %v5526
  %v5763 = vpack.c.b16 %v5531, %v5527
  %v5764 = vpack.c.b16 %v5536, %v5532
  %v5765 = vpack.c.b16 %v5537, %v5533
  %v5766 = vpack.c.b16 %v5538, %v5534
  %v5767 = vpack.c.b16 %v5539, %v5535
  %v5768 = vpack.c.b16 %v5544, %v5540
  %v5769 = vpack.c.b16 %v5545, %v5541
  %v5770 = vpack.c.b16 %v5546, %v5542
  %v5771 = vpack.c.b16 %v5547, %v5543
  %v5772 = vpack.c.b16 %v5552, %v5548
  %v5773 = vpack.c.b16 %v5553, %v5549
  %v5774 = vpack.c.b16 %v5554, %v5550
  %v5775 = vpack.c.b16 %v5555, %v5551
  %v5776 = vpack.c.b16 %v5560, %v5556
  %v5777 = vpack.c.b16 %v5561, %v5557
  %v5778 = vpack.c.b16 %v5562, %v5558
  %v5779 = vpack.c.b16 %v5563, %v5559
  %v5780 = vpack.c.b16 %v5568, %v5564
  %v5781 = vpack.c.b16 %v5569, %v5565
  %v5782 = vpack.c.b16 %v5570, %v5566
  %v5783 = vpack.c.b16 %v5571, %v5567
  %v5784 = vpack.c.b16 %v5576, %v5572
  %v5785 = vpack.c.b16 %v5577, %v5573
  %v5786 = vpack.c.b16 %v5578, %v5574
  %v5787 = vpack.c.b16 %v5579, %v5575
  %v5788 = vpack.c.b16 %v5584, %v5580
  %v5789 = vpack.c.b16 %v5585, %v5581
  %v5790 = vpack.c.b16 %v5586, %v5582
  %v5791 = vpack.c.b16 %v5587, %v5583
  %v5792 = vpack.c.b16 %v5592, %v5588
  %v5793 = vpack.c.b16 %v5593, %v5589
  %v5794 = vpack.c.b16 %v5594, %v5590
  %v5795 = vpack.c.b16 %v5595, %v5591
  %v5796 = vpack.c.b16 %v5600, %v5596
  %v5797 = vpack.c.b16 %v5601, %v5597
  %v5798 = vpack.c.b16 %v5602, %v5598
  %v5799 = vpack.c.b16 %v5603, %v5599
  %v5800 = vpack.c.b16 %v5608, %v5604
  %v5801 = vpack.c.b16 %v5609, %v5605
  %v5802 = vpack.c.b16 %v5610, %v5606
  %v5803 = vpack.c.b16 %v5611, %v5607
  %v5804 = vpack.c.b16 %v5616, %v5612
  %v5805 = vpack.c.b16 %v5617, %v5613
  %v5806 = vpack.c.b16 %v5618, %v5614
  %v5807 = vpack.c.b16 %v5619, %v5615
  %v5808 = vpack.c.b16 %v5624, %v5620
  %v5809 = vpack.c.b16 %v5625, %v5621
  %v5810 = vpack.c.b16 %v5626, %v5622
  %v5811 = vpack.c.b16 %v5627, %v5623
  %v5812 = vpack.c.b16 %v5632, %v5628
  %v5813 = vpack.c.b16 %v5633, %v5629
  %v5814 = vpack.c.b16 %v5634, %v5630
  %v5815 = vpack.c.b16 %v5635, %v5631
  %v5816 = vpack.c.b16 %v5640, %v5636
  %v5817 = vpack.c.b16 %v5641, %v5637
  %v5818 = vpack.c.b16 %v5642, %v5638
  %v5819 = vpack.c.b16 %v5643, %v5639
  %v5820 = vpack.c.b16 %v5648, %v5644
  %v5821 = vpack.c.b16 %v5649, %v5645
  %v5822 = vpack.c.b16 %v5650, %v5646
  %v5823 = vpack.c.b16 %v5651, %v5647
  %v5824 = vpack.c.b16 %v5656, %v5652
  %v5825 = vpack.c.b16 %v5657, %v5653
  %v5826 = vpack.c.b16 %v5658, %v5654
  %v5827 = vpack.c.b16 %v5659, %v5655
  %v5828 = vpack.c.b16 %v5664, %v5660
  %v5829 = vpack.c.b16 %v5665, %v5661
  %v5830 = vpack.c.b16 %v5666, %v5662
  %v5831 = vpack.c.b16 %v5667, %v5663
  %v5832 = vpack.c.b16 %v5672, %v5668
  %v5833 = vpack.c.b16 %v5673, %v5669
  %v5834 = vpack.c.b16 %v5674, %v5670
  %v5835 = vpack.c.b16 %v5675, %v5671
  %v5836 = vpack.c.b16 %v5680, %v5676
  %v5837 = vpack.c.b16 %v5681, %v5677
  %v5838 = vpack.c.b16 %v5682, %v5678
  %v5839 = vpack.c.b16 %v5683, %v5679
  %v5840 = vpack.c.b16 %v5688, %v5684
  %v5841 = vpack.c.b16 %v5689, %v5685
  %v5842 = vpack.c.b16 %v5690, %v5686
  %v5843 = vpack.c.b16 %v5691, %v5687
  %v5844 = vpack.c.b16 %v5696, %v5692
  %v5845 = vpack.c.b16 %v5697, %v5693
  %v5846 = vpack.c.b16 %v5698, %v5694
  %v5847 = vpack.c.b16 %v5699, %v5695
  %v5848 = vpack.c.b16 %v5704, %v5700
  %v5849 = vpack.c.b16 %v5705, %v5701
  %v5850 = vpack.c.b16 %v5706, %v5702
  %v5851 = vpack.c.b16 %v5707, %v5703
  %v5852 = vpack.c.b16 %v5712, %v5708
  %v5853 = vpack.c.b16 %v5713, %v5709
  %v5854 = vpack.c.b16 %v5714, %v5710
  %v5855 = vpack.c.b16 %v5715, %v5711
  %v5856 = vpack.c.b16 %v5720, %v5716
  %v5857 = vpack.c.b16 %v5721, %v5717
  %v5858 = vpack.c.b16 %v5722, %v5718
  %v5859 = vpack.c.b16 %v5723, %v5719
  %v5860 = vpack.c.b16 %v5728, %v5724
  %v5861 = vpack.c.b16 %v5729, %v5725
  %v5862 = vpack.c.b16 %v5730, %v5726
  %v5863 = vpack.c.b16 %v5731, %v5727
  %v5864 = vpack.c.b16 %v5736, %v5732
  %v5865 = vpack.c.b16 %v5737, %v5733
  %v5866 = vpack.c.b16 %v5738, %v5734
  %v5867 = vpack.c.b16 %v5739, %v5735
  %5996 = vmatprep.subr.bf16.mxu0 %v5741
  %5997 = vmatpush1.bf16.msra.mxu0 %v5740
  %5998 = vmatprep.subr.bf16.mxu0 %v5745
  %5999 = vmatpush1.bf16.msra.mxu0 %v5744
  %6000 = vmatprep.subr.bf16.mxu0 %v5749
  %6001 = vmatpush1.bf16.msra.mxu0 %v5748
  %6002 = vmatprep.subr.bf16.mxu0 %v5753
  %6003 = vmatpush1.bf16.msra.mxu0 %v5752
  %6004 = vmatprep.subr.bf16.mxu0 %v5757
  %6005 = vmatpush1.bf16.msra.mxu0 %v5756
  %6006 = vmatprep.subr.bf16.mxu0 %v5761
  %6007 = vmatpush1.bf16.msra.mxu0 %v5760
  %6008 = vmatprep.subr.bf16.mxu0 %v5765
  %6009 = vmatpush1.bf16.msra.mxu0 %v5764
  %6010 = vmatprep.subr.bf16.mxu0 %v5769
  %6011 = vmatpush1.bf16.msra.mxu0 %v5768
  %6012 = vmatprep.subr.bf16.mxu0 %v5773
  %6013 = vmatpush1.bf16.msra.mxu0 %v5772
  %6014 = vmatprep.subr.bf16.mxu0 %v5777
  %6015 = vmatpush1.bf16.msra.mxu0 %v5776
  %6016 = vmatprep.subr.bf16.mxu0 %v5781
  %6017 = vmatpush1.bf16.msra.mxu0 %v5780
  %6018 = vmatprep.subr.bf16.mxu0 %v5785
  %6019 = vmatpush1.bf16.msra.mxu0 %v5784
  %6020 = vmatprep.subr.bf16.mxu0 %v5789
  %6021 = vmatpush1.bf16.msra.mxu0 %v5788
  %6022 = vmatprep.subr.bf16.mxu0 %v5793
  %6023 = vmatpush1.bf16.msra.mxu0 %v5792
  %6024 = vmatprep.subr.bf16.mxu0 %v5797
  %6025 = vmatpush1.bf16.msra.mxu0 %v5796
  %6026 = vmatprep.subr.bf16.mxu0 %v5801
  %6027 = vmatpush1.bf16.msra.mxu0 %v5800
  %6028 = vmatprep.mubr.bf16.mxu0 %v4240
  %6029 = vmatmul.mubr.bf16.gmra.mrb[0].mxu0 %v4239
  %v6030 = vpop.f32.mrb[0].mxu0
  %v6031 = vadd.f32 0.0, %v6030
  %v6032 = vpop.f32.mrb[0].mxu0
  %v6033 = vadd.f32 0.0, %v6032
  %v6034 = vpop.f32.mrb[0].mxu0
  %v6035 = vadd.f32 0.0, %v6034
  %v6036 = vpop.f32.mrb[0].mxu0
  %v6037 = vadd.f32 0.0, %v6036
  %6038 = vmatprep.mubr.bf16.mxu0 %v4244
  %6039 = vmatmul.mubr.bf16.gmra.mrb[0].mxu0 %v4243
  %v6040 = vpop.f32.mrb[0].mxu0
  %v6041 = vadd.f32 0.0, %v6040
  %v6042 = vpop.f32.mrb[0].mxu0
  %v6043 = vadd.f32 0.0, %v6042
  %v6044 = vpop.f32.mrb[0].mxu0
  %v6045 = vadd.f32 0.0, %v6044
  %v6046 = vpop.f32.mrb[0].mxu0
  %v6047 = vadd.f32 0.0, %v6046
  %6048 = vdwg.mxu0
  %6049 = vmatprep.subr.bf16.mxu0 %v5805
  %6050 = vmatpush1.bf16.msra.mxu0 %v5804
  %6051 = vmatprep.subr.bf16.mxu0 %v5809
  %6052 = vmatpush1.bf16.msra.mxu0 %v5808
  %6053 = vmatprep.subr.bf16.mxu0 %v5813
  %6054 = vmatpush1.bf16.msra.mxu0 %v5812
  %6055 = vmatprep.subr.bf16.mxu0 %v5817
  %6056 = vmatpush1.bf16.msra.mxu0 %v5816
  %6057 = vmatprep.subr.bf16.mxu0 %v5821
  %6058 = vmatpush1.bf16.msra.mxu0 %v5820
  %6059 = vmatprep.subr.bf16.mxu0 %v5825
  %6060 = vmatpush1.bf16.msra.mxu0 %v5824
  %6061 = vmatprep.subr.bf16.mxu0 %v5829
  %6062 = vmatpush1.bf16.msra.mxu0 %v5828
  %6063 = vmatprep.subr.bf16.mxu0 %v5833
  %6064 = vmatpush1.bf16.msra.mxu0 %v5832
  %6065 = vmatprep.subr.bf16.mxu0 %v5837
  %6066 = vmatpush1.bf16.msra.mxu0 %v5836
  %6067 = vmatprep.subr.bf16.mxu0 %v5841
  %6068 = vmatpush1.bf16.msra.mxu0 %v5840
  %6069 = vmatprep.subr.bf16.mxu0 %v5845
  %6070 = vmatpush1.bf16.msra.mxu0 %v5844
  %6071 = vmatprep.subr.bf16.mxu0 %v5849
  %6072 = vmatpush1.bf16.msra.mxu0 %v5848
  %6073 = vmatprep.subr.bf16.mxu0 %v5853
  %6074 = vmatpush1.bf16.msra.mxu0 %v5852
  %6075 = vmatprep.subr.bf16.mxu0 %v5857
  %6076 = vmatpush1.bf16.msra.mxu0 %v5856
  %6077 = vmatprep.subr.bf16.mxu0 %v5861
  %6078 = vmatpush1.bf16.msra.mxu0 %v5860
  %6079 = vmatprep.subr.bf16.mxu0 %v5865
  %6080 = vmatpush1.bf16.msra.mxu0 %v5864
  %6081 = vmatprep.mubr.bf16.mxu0 %v4242
  %6082 = vmatmul.mubr.bf16.gmra.mrb[0].mxu0 %v4241
  %v6083 = vpop.f32.mrb[0].mxu0
  %v6084 = vadd.f32 %v6031, %v6083
  %v6085 = vpop.f32.mrb[0].mxu0
  %v6086 = vadd.f32 %v6033, %v6085
  %v6087 = vpop.f32.mrb[0].mxu0
  %v6088 = vadd.f32 %v6035, %v6087
  %v6089 = vpop.f32.mrb[0].mxu0
  %v6090 = vadd.f32 %v6037, %v6089
  %6091 = vmatprep.mubr.bf16.mxu0 %v4246
  %6092 = vmatmul.mubr.bf16.gmra.mrb[0].mxu0 %v4245
  %v6093 = vpop.f32.mrb[0].mxu0
  %v6094 = vadd.f32 %v6041, %v6093
  %v6095 = vpop.f32.mrb[0].mxu0
  %v6096 = vadd.f32 %v6043, %v6095
  %v6097 = vpop.f32.mrb[0].mxu0
  %v6098 = vadd.f32 %v6045, %v6097
  %v6099 = vpop.f32.mrb[0].mxu0
  %v6100 = vadd.f32 %v6047, %v6099
  %6101 = vdwg.mxu0
  %6102 = vmatprep.subr.bf16.mxu0 %v5743
  %6103 = vmatpush1.bf16.msra.mxu0 %v5742
  %6104 = vmatprep.subr.bf16.mxu0 %v5747
  %6105 = vmatpush1.bf16.msra.mxu0 %v5746
  %6106 = vmatprep.subr.bf16.mxu0 %v5751
  %6107 = vmatpush1.bf16.msra.mxu0 %v5750
  %6108 = vmatprep.subr.bf16.mxu0 %v5755
  %6109 = vmatpush1.bf16.msra.mxu0 %v5754
  %6110 = vmatprep.subr.bf16.mxu0 %v5759
  %6111 = vmatpush1.bf16.msra.mxu0 %v5758
  %6112 = vmatprep.subr.bf16.mxu0 %v5763
  %6113 = vmatpush1.bf16.msra.mxu0 %v5762
  %6114 = vmatprep.subr.bf16.mxu0 %v5767
  %6115 = vmatpush1.bf16.msra.mxu0 %v5766
  %6116 = vmatprep.subr.bf16.mxu0 %v5771
  %6117 = vmatpush1.bf16.msra.mxu0 %v5770
  %6118 = vmatprep.subr.bf16.mxu0 %v5775
  %6119 = vmatpush1.bf16.msra.mxu0 %v5774
  %6120 = vmatprep.subr.bf16.mxu0 %v5779
  %6121 = vmatpush1.bf16.msra.mxu0 %v5778
  %6122 = vmatprep.subr.bf16.mxu0 %v5783
  %6123 = vmatpush1.bf16.msra.mxu0 %v5782
  %6124 = vmatprep.subr.bf16.mxu0 %v5787
  %6125 = vmatpush1.bf16.msra.mxu0 %v5786
  %6126 = vmatprep.subr.bf16.mxu0 %v5791
  %6127 = vmatpush1.bf16.msra.mxu0 %v5790
  %6128 = vmatprep.subr.bf16.mxu0 %v5795
  %6129 = vmatpush1.bf16.msra.mxu0 %v5794
  %6130 = vmatprep.subr.bf16.mxu0 %v5799
  %6131 = vmatpush1.bf16.msra.mxu0 %v5798
  %6132 = vmatprep.subr.bf16.mxu0 %v5803
  %6133 = vmatpush1.bf16.msra.mxu0 %v5802
  %6134 = vmatprep.mubr.bf16.mxu0 %v4240
  %6135 = vmatmul.mubr.bf16.gmra.mrb[0].mxu0 %v4239
  %v6136 = vpop.f32.mrb[0].mxu0
  %v6137 = vadd.f32 0.0, %v6136
  %v6138 = vpop.f32.mrb[0].mxu0
  %v6139 = vadd.f32 0.0, %v6138
  %v6140 = vpop.f32.mrb[0].mxu0
  %v6141 = vadd.f32 0.0, %v6140
  %v6142 = vpop.f32.mrb[0].mxu0
  %v6143 = vadd.f32 0.0, %v6142
  %6144 = vmatprep.mubr.bf16.mxu0 %v4244
  %6145 = vmatmul.mubr.bf16.gmra.mrb[0].mxu0 %v4243
  %v6146 = vpop.f32.mrb[0].mxu0
  %v6147 = vadd.f32 0.0, %v6146
  %v6148 = vpop.f32.mrb[0].mxu0
  %v6149 = vadd.f32 0.0, %v6148
  %v6150 = vpop.f32.mrb[0].mxu0
  %v6151 = vadd.f32 0.0, %v6150
  %v6152 = vpop.f32.mrb[0].mxu0
  %v6153 = vadd.f32 0.0, %v6152
  %6154 = vdwg.mxu0
  %6155 = vmatprep.subr.bf16.mxu0 %v5807
  %6156 = vmatpush1.bf16.msra.mxu0 %v5806
  %6157 = vmatprep.subr.bf16.mxu0 %v5811
  %6158 = vmatpush1.bf16.msra.mxu0 %v5810
  %6159 = vmatprep.subr.bf16.mxu0 %v5815
  %6160 = vmatpush1.bf16.msra.mxu0 %v5814
  %6161 = vmatprep.subr.bf16.mxu0 %v5819
  %6162 = vmatpush1.bf16.msra.mxu0 %v5818
  %6163 = vmatprep.subr.bf16.mxu0 %v5823
  %6164 = vmatpush1.bf16.msra.mxu0 %v5822
  %6165 = vmatprep.subr.bf16.mxu0 %v5827
  %6166 = vmatpush1.bf16.msra.mxu0 %v5826
  %6167 = vmatprep.subr.bf16.mxu0 %v5831
  %6168 = vmatpush1.bf16.msra.mxu0 %v5830
  %6169 = vmatprep.subr.bf16.mxu0 %v5835
  %6170 = vmatpush1.bf16.msra.mxu0 %v5834
  %6171 = vmatprep.subr.bf16.mxu0 %v5839
  %6172 = vmatpush1.bf16.msra.mxu0 %v5838
  %6173 = vmatprep.subr.bf16.mxu0 %v5843
  %6174 = vmatpush1.bf16.msra.mxu0 %v5842
  %6175 = vmatprep.subr.bf16.mxu0 %v5847
  %6176 = vmatpush1.bf16.msra.mxu0 %v5846
  %6177 = vmatprep.subr.bf16.mxu0 %v5851
  %6178 = vmatpush1.bf16.msra.mxu0 %v5850
  %6179 = vmatprep.subr.bf16.mxu0 %v5855
  %6180 = vmatpush1.bf16.msra.mxu0 %v5854
  %6181 = vmatprep.subr.bf16.mxu0 %v5859
  %6182 = vmatpush1.bf16.msra.mxu0 %v5858
  %6183 = vmatprep.subr.bf16.mxu0 %v5863
  %6184 = vmatpush1.bf16.msra.mxu0 %v5862
  %6185 = vmatprep.subr.bf16.mxu0 %v5867
  %6186 = vmatpush1.bf16.msra.mxu0 %v5866
  %6187 = vmatprep.mubr.bf16.mxu0 %v4242
  %6188 = vmatmul.mubr.bf16.gmra.mrb[0].mxu0 %v4241
  %v6189 = vpop.f32.mrb[0].mxu0
  %v6190 = vadd.f32 %v6137, %v6189
  %v6191 = vpop.f32.mrb[0].mxu0
  %v6192 = vadd.f32 %v6139, %v6191
  %v6193 = vpop.f32.mrb[0].mxu0
  %v6194 = vadd.f32 %v6141, %v6193
  %v6195 = vpop.f32.mrb[0].mxu0
  %v6196 = vadd.f32 %v6143, %v6195
  %6197 = vmatprep.mubr.bf16.mxu0 %v4246
  %6198 = vmatmul.mubr.bf16.gmra.mrb[0].mxu0 %v4245
  %v6199 = vpop.f32.mrb[0].mxu0
  %v6200 = vadd.f32 %v6147, %v6199
  %v6201 = vpop.f32.mrb[0].mxu0
  %v6202 = vadd.f32 %v6149, %v6201
  %v6203 = vpop.f32.mrb[0].mxu0
  %v6204 = vadd.f32 %v6151, %v6203
  %v6205 = vpop.f32.mrb[0].mxu0
  %v6206 = vadd.f32 %v6153, %v6205
  %6207 = vdwg.mxu0
  %s6208 = scalar_lea.vmem %s8, 2048
  %v6209 = vld [vmem:[%s6208] sm:$0xff]
  %v6210 = vld [vmem:[%s6208 + $0x8] sm:$0xff]
  %v6211 = vld [vmem:[%s6208 + $0x10] sm:$0xff]
  %v6212 = vld [vmem:[%s6208 + $0x18] sm:$0xff]
  %v6213 = vld [vmem:[%s6208 + $0x20] sm:$0xff]
  %v6214 = vld [vmem:[%s6208 + $0x28] sm:$0xff]
  %v6215 = vld [vmem:[%s6208 + $0x30] sm:$0xff]
  %v6216 = vld [vmem:[%s6208 + $0x38] sm:$0xff]
  %v6217 = vld [vmem:[%s6208 + $0x40] sm:$0xff]
  %v6218 = vld [vmem:[%s6208 + $0x48] sm:$0xff]
  %v6219 = vld [vmem:[%s6208 + $0x50] sm:$0xff]
  %v6220 = vld [vmem:[%s6208 + $0x58] sm:$0xff]
  %v6221 = vld [vmem:[%s6208 + $0x60] sm:$0xff]
  %v6222 = vld [vmem:[%s6208 + $0x68] sm:$0xff]
  %v6223 = vld [vmem:[%s6208 + $0x70] sm:$0xff]
  %v6224 = vld [vmem:[%s6208 + $0x78] sm:$0xff]
  %v6225 = vld [vmem:[%s6208 + $0x80] sm:$0xff]
  %v6226 = vld [vmem:[%s6208 + $0x88] sm:$0xff]
  %v6227 = vld [vmem:[%s6208 + $0x90] sm:$0xff]
  %v6228 = vld [vmem:[%s6208 + $0x98] sm:$0xff]
  %v6229 = vld [vmem:[%s6208 + $0xa0] sm:$0xff]
  %v6230 = vld [vmem:[%s6208 + $0xa8] sm:$0xff]
  %v6231 = vld [vmem:[%s6208 + $0xb0] sm:$0xff]
  %v6232 = vld [vmem:[%s6208 + $0xb8] sm:$0xff]
  %v6233 = vld [vmem:[%s6208 + $0xc0] sm:$0xff]
  %v6234 = vld [vmem:[%s6208 + $0xc8] sm:$0xff]
  %v6235 = vld [vmem:[%s6208 + $0xd0] sm:$0xff]
  %v6236 = vld [vmem:[%s6208 + $0xd8] sm:$0xff]
  %v6237 = vld [vmem:[%s6208 + $0xe0] sm:$0xff]
  %v6238 = vld [vmem:[%s6208 + $0xe8] sm:$0xff]
  %v6239 = vld [vmem:[%s6208 + $0xf0] sm:$0xff]
  %v6240 = vld [vmem:[%s6208 + $0xf8] sm:$0xff]
  %v6241 = vld [vmem:[%s6208 + $0x100] sm:$0xff]
  %v6242 = vld [vmem:[%s6208 + $0x108] sm:$0xff]
  %v6243 = vld [vmem:[%s6208 + $0x110] sm:$0xff]
  %v6244 = vld [vmem:[%s6208 + $0x118] sm:$0xff]
  %v6245 = vld [vmem:[%s6208 + $0x120] sm:$0xff]
  %v6246 = vld [vmem:[%s6208 + $0x128] sm:$0xff]
  %v6247 = vld [vmem:[%s6208 + $0x130] sm:$0xff]
  %v6248 = vld [vmem:[%s6208 + $0x138] sm:$0xff]
  %v6249 = vld [vmem:[%s6208 + $0x140] sm:$0xff]
  %v6250 = vld [vmem:[%s6208 + $0x148] sm:$0xff]
  %v6251 = vld [vmem:[%s6208 + $0x150] sm:$0xff]
  %v6252 = vld [vmem:[%s6208 + $0x158] sm:$0xff]
  %v6253 = vld [vmem:[%s6208 + $0x160] sm:$0xff]
  %v6254 = vld [vmem:[%s6208 + $0x168] sm:$0xff]
  %v6255 = vld [vmem:[%s6208 + $0x170] sm:$0xff]
  %v6256 = vld [vmem:[%s6208 + $0x178] sm:$0xff]
  %v6257 = vld [vmem:[%s6208 + $0x180] sm:$0xff]
  %v6258 = vld [vmem:[%s6208 + $0x188] sm:$0xff]
  %v6259 = vld [vmem:[%s6208 + $0x190] sm:$0xff]
  %v6260 = vld [vmem:[%s6208 + $0x198] sm:$0xff]
  %v6261 = vld [vmem:[%s6208 + $0x1a0] sm:$0xff]
  %v6262 = vld [vmem:[%s6208 + $0x1a8] sm:$0xff]
  %v6263 = vld [vmem:[%s6208 + $0x1b0] sm:$0xff]
  %v6264 = vld [vmem:[%s6208 + $0x1b8] sm:$0xff]
  %v6265 = vld [vmem:[%s6208 + $0x1c0] sm:$0xff]
  %v6266 = vld [vmem:[%s6208 + $0x1c8] sm:$0xff]
  %v6267 = vld [vmem:[%s6208 + $0x1d0] sm:$0xff]
  %v6268 = vld [vmem:[%s6208 + $0x1d8] sm:$0xff]
  %v6269 = vld [vmem:[%s6208 + $0x1e0] sm:$0xff]
  %v6270 = vld [vmem:[%s6208 + $0x1e8] sm:$0xff]
  %v6271 = vld [vmem:[%s6208 + $0x1f0] sm:$0xff]
  %v6272 = vld [vmem:[%s6208 + $0x1f8] sm:$0xff]
  %v6273 = vld [vmem:[%s6208 + $0x200] sm:$0xff]
  %v6274 = vld [vmem:[%s6208 + $0x208] sm:$0xff]
  %v6275 = vld [vmem:[%s6208 + $0x210] sm:$0xff]
  %v6276 = vld [vmem:[%s6208 + $0x218] sm:$0xff]
  %v6277 = vld [vmem:[%s6208 + $0x220] sm:$0xff]
  %v6278 = vld [vmem:[%s6208 + $0x228] sm:$0xff]
  %v6279 = vld [vmem:[%s6208 + $0x230] sm:$0xff]
  %v6280 = vld [vmem:[%s6208 + $0x238] sm:$0xff]
  %v6281 = vld [vmem:[%s6208 + $0x240] sm:$0xff]
  %v6282 = vld [vmem:[%s6208 + $0x248] sm:$0xff]
  %v6283 = vld [vmem:[%s6208 + $0x250] sm:$0xff]
  %v6284 = vld [vmem:[%s6208 + $0x258] sm:$0xff]
  %v6285 = vld [vmem:[%s6208 + $0x260] sm:$0xff]
  %v6286 = vld [vmem:[%s6208 + $0x268] sm:$0xff]
  %v6287 = vld [vmem:[%s6208 + $0x270] sm:$0xff]
  %v6288 = vld [vmem:[%s6208 + $0x278] sm:$0xff]
  %v6289 = vld [vmem:[%s6208 + $0x280] sm:$0xff]
  %v6290 = vld [vmem:[%s6208 + $0x288] sm:$0xff]
  %v6291 = vld [vmem:[%s6208 + $0x290] sm:$0xff]
  %v6292 = vld [vmem:[%s6208 + $0x298] sm:$0xff]
  %v6293 = vld [vmem:[%s6208 + $0x2a0] sm:$0xff]
  %v6294 = vld [vmem:[%s6208 + $0x2a8] sm:$0xff]
  %v6295 = vld [vmem:[%s6208 + $0x2b0] sm:$0xff]
  %v6296 = vld [vmem:[%s6208 + $0x2b8] sm:$0xff]
  %v6297 = vld [vmem:[%s6208 + $0x2c0] sm:$0xff]
  %v6298 = vld [vmem:[%s6208 + $0x2c8] sm:$0xff]
  %v6299 = vld [vmem:[%s6208 + $0x2d0] sm:$0xff]
  %v6300 = vld [vmem:[%s6208 + $0x2d8] sm:$0xff]
  %v6301 = vld [vmem:[%s6208 + $0x2e0] sm:$0xff]
  %v6302 = vld [vmem:[%s6208 + $0x2e8] sm:$0xff]
  %v6303 = vld [vmem:[%s6208 + $0x2f0] sm:$0xff]
  %v6304 = vld [vmem:[%s6208 + $0x2f8] sm:$0xff]
  %v6305 = vld [vmem:[%s6208 + $0x300] sm:$0xff]
  %v6306 = vld [vmem:[%s6208 + $0x308] sm:$0xff]
  %v6307 = vld [vmem:[%s6208 + $0x310] sm:$0xff]
  %v6308 = vld [vmem:[%s6208 + $0x318] sm:$0xff]
  %v6309 = vld [vmem:[%s6208 + $0x320] sm:$0xff]
  %v6310 = vld [vmem:[%s6208 + $0x328] sm:$0xff]
  %v6311 = vld [vmem:[%s6208 + $0x330] sm:$0xff]
  %v6312 = vld [vmem:[%s6208 + $0x338] sm:$0xff]
  %v6313 = vld [vmem:[%s6208 + $0x340] sm:$0xff]
  %v6314 = vld [vmem:[%s6208 + $0x348] sm:$0xff]
  %v6315 = vld [vmem:[%s6208 + $0x350] sm:$0xff]
  %v6316 = vld [vmem:[%s6208 + $0x358] sm:$0xff]
  %v6317 = vld [vmem:[%s6208 + $0x360] sm:$0xff]
  %v6318 = vld [vmem:[%s6208 + $0x368] sm:$0xff]
  %v6319 = vld [vmem:[%s6208 + $0x370] sm:$0xff]
  %v6320 = vld [vmem:[%s6208 + $0x378] sm:$0xff]
  %v6321 = vld [vmem:[%s6208 + $0x380] sm:$0xff]
  %v6322 = vld [vmem:[%s6208 + $0x388] sm:$0xff]
  %v6323 = vld [vmem:[%s6208 + $0x390] sm:$0xff]
  %v6324 = vld [vmem:[%s6208 + $0x398] sm:$0xff]
  %v6325 = vld [vmem:[%s6208 + $0x3a0] sm:$0xff]
  %v6326 = vld [vmem:[%s6208 + $0x3a8] sm:$0xff]
  %v6327 = vld [vmem:[%s6208 + $0x3b0] sm:$0xff]
  %v6328 = vld [vmem:[%s6208 + $0x3b8] sm:$0xff]
  %v6329 = vld [vmem:[%s6208 + $0x3c0] sm:$0xff]
  %v6330 = vld [vmem:[%s6208 + $0x3c8] sm:$0xff]
  %v6331 = vld [vmem:[%s6208 + $0x3d0] sm:$0xff]
  %v6332 = vld [vmem:[%s6208 + $0x3d8] sm:$0xff]
  %v6333 = vld [vmem:[%s6208 + $0x3e0] sm:$0xff]
  %v6334 = vld [vmem:[%s6208 + $0x3e8] sm:$0xff]
  %v6335 = vld [vmem:[%s6208 + $0x3f0] sm:$0xff]
  %v6336 = vld [vmem:[%s6208 + $0x3f8] sm:$0xff]
  %v6465 = vunpack.c.l.b16 %v6209
  %v6466 = vunpack.c.h.b16 %v6209
  %v6467 = vunpack.c.l.b16 %v6210
  %v6468 = vunpack.c.h.b16 %v6210
  %v6469 = vunpack.c.l.b16 %v6211
  %v6470 = vunpack.c.h.b16 %v6211
  %v6471 = vunpack.c.l.b16 %v6212
  %v6472 = vunpack.c.h.b16 %v6212
  %v6473 = vunpack.c.l.b16 %v6213
  %v6474 = vunpack.c.h.b16 %v6213
  %v6475 = vunpack.c.l.b16 %v6214
  %v6476 = vunpack.c.h.b16 %v6214
  %v6477 = vunpack.c.l.b16 %v6215
  %v6478 = vunpack.c.h.b16 %v6215
  %v6479 = vunpack.c.l.b16 %v6216
  %v6480 = vunpack.c.h.b16 %v6216
  %v6481 = vunpack.c.l.b16 %v6217
  %v6482 = vunpack.c.h.b16 %v6217
  %v6483 = vunpack.c.l.b16 %v6218
  %v6484 = vunpack.c.h.b16 %v6218
  %v6485 = vunpack.c.l.b16 %v6219
  %v6486 = vunpack.c.h.b16 %v6219
  %v6487 = vunpack.c.l.b16 %v6220
  %v6488 = vunpack.c.h.b16 %v6220
  %v6489 = vunpack.c.l.b16 %v6221
  %v6490 = vunpack.c.h.b16 %v6221
  %v6491 = vunpack.c.l.b16 %v6222
  %v6492 = vunpack.c.h.b16 %v6222
  %v6493 = vunpack.c.l.b16 %v6223
  %v6494 = vunpack.c.h.b16 %v6223
  %v6495 = vunpack.c.l.b16 %v6224
  %v6496 = vunpack.c.h.b16 %v6224
  %v6497 = vunpack.c.l.b16 %v6225
  %v6498 = vunpack.c.h.b16 %v6225
  %v6499 = vunpack.c.l.b16 %v6226
  %v6500 = vunpack.c.h.b16 %v6226
  %v6501 = vunpack.c.l.b16 %v6227
  %v6502 = vunpack.c.h.b16 %v6227
  %v6503 = vunpack.c.l.b16 %v6228
  %v6504 = vunpack.c.h.b16 %v6228
  %v6505 = vunpack.c.l.b16 %v6229
  %v6506 = vunpack.c.h.b16 %v6229
  %v6507 = vunpack.c.l.b16 %v6230
  %v6508 = vunpack.c.h.b16 %v6230
  %v6509 = vunpack.c.l.b16 %v6231
  %v6510 = vunpack.c.h.b16 %v6231
  %v6511 = vunpack.c.l.b16 %v6232
  %v6512 = vunpack.c.h.b16 %v6232
  %v6513 = vunpack.c.l.b16 %v6233
  %v6514 = vunpack.c.h.b16 %v6233
  %v6515 = vunpack.c.l.b16 %v6234
  %v6516 = vunpack.c.h.b16 %v6234
  %v6517 = vunpack.c.l.b16 %v6235
  %v6518 = vunpack.c.h.b16 %v6235
  %v6519 = vunpack.c.l.b16 %v6236
  %v6520 = vunpack.c.h.b16 %v6236
  %v6521 = vunpack.c.l.b16 %v6237
  %v6522 = vunpack.c.h.b16 %v6237
  %v6523 = vunpack.c.l.b16 %v6238
  %v6524 = vunpack.c.h.b16 %v6238
  %v6525 = vunpack.c.l.b16 %v6239
  %v6526 = vunpack.c.h.b16 %v6239
  %v6527 = vunpack.c.l.b16 %v6240
  %v6528 = vunpack.c.h.b16 %v6240
  %v6529 = vunpack.c.l.b16 %v6241
  %v6530 = vunpack.c.h.b16 %v6241
  %v6531 = vunpack.c.l.b16 %v6242
  %v6532 = vunpack.c.h.b16 %v6242
  %v6533 = vunpack.c.l.b16 %v6243
  %v6534 = vunpack.c.h.b16 %v6243
  %v6535 = vunpack.c.l.b16 %v6244
  %v6536 = vunpack.c.h.b16 %v6244
  %v6537 = vunpack.c.l.b16 %v6245
  %v6538 = vunpack.c.h.b16 %v6245
  %v6539 = vunpack.c.l.b16 %v6246
  %v6540 = vunpack.c.h.b16 %v6246
  %v6541 = vunpack.c.l.b16 %v6247
  %v6542 = vunpack.c.h.b16 %v6247
  %v6543 = vunpack.c.l.b16 %v6248
  %v6544 = vunpack.c.h.b16 %v6248
  %v6545 = vunpack.c.l.b16 %v6249
  %v6546 = vunpack.c.h.b16 %v6249
  %v6547 = vunpack.c.l.b16 %v6250
  %v6548 = vunpack.c.h.b16 %v6250
  %v6549 = vunpack.c.l.b16 %v6251
  %v6550 = vunpack.c.h.b16 %v6251
  %v6551 = vunpack.c.l.b16 %v6252
  %v6552 = vunpack.c.h.b16 %v6252
  %v6553 = vunpack.c.l.b16 %v6253
  %v6554 = vunpack.c.h.b16 %v6253
  %v6555 = vunpack.c.l.b16 %v6254
  %v6556 = vunpack.c.h.b16 %v6254
  %v6557 = vunpack.c.l.b16 %v6255
  %v6558 = vunpack.c.h.b16 %v6255
  %v6559 = vunpack.c.l.b16 %v6256
  %v6560 = vunpack.c.h.b16 %v6256
  %v6561 = vunpack.c.l.b16 %v6257
  %v6562 = vunpack.c.h.b16 %v6257
  %v6563 = vunpack.c.l.b16 %v6258
  %v6564 = vunpack.c.h.b16 %v6258
  %v6565 = vunpack.c.l.b16 %v6259
  %v6566 = vunpack.c.h.b16 %v6259
  %v6567 = vunpack.c.l.b16 %v6260
  %v6568 = vunpack.c.h.b16 %v6260
  %v6569 = vunpack.c.l.b16 %v6261
  %v6570 = vunpack.c.h.b16 %v6261
  %v6571 = vunpack.c.l.b16 %v6262
  %v6572 = vunpack.c.h.b16 %v6262
  %v6573 = vunpack.c.l.b16 %v6263
  %v6574 = vunpack.c.h.b16 %v6263
  %v6575 = vunpack.c.l.b16 %v6264
  %v6576 = vunpack.c.h.b16 %v6264
  %v6577 = vunpack.c.l.b16 %v6265
  %v6578 = vunpack.c.h.b16 %v6265
  %v6579 = vunpack.c.l.b16 %v6266
  %v6580 = vunpack.c.h.b16 %v6266
  %v6581 = vunpack.c.l.b16 %v6267
  %v6582 = vunpack.c.h.b16 %v6267
  %v6583 = vunpack.c.l.b16 %v6268
  %v6584 = vunpack.c.h.b16 %v6268
  %v6585 = vunpack.c.l.b16 %v6269
  %v6586 = vunpack.c.h.b16 %v6269
  %v6587 = vunpack.c.l.b16 %v6270
  %v6588 = vunpack.c.h.b16 %v6270
  %v6589 = vunpack.c.l.b16 %v6271
  %v6590 = vunpack.c.h.b16 %v6271
  %v6591 = vunpack.c.l.b16 %v6272
  %v6592 = vunpack.c.h.b16 %v6272
  %v6593 = vunpack.c.l.b16 %v6273
  %v6594 = vunpack.c.h.b16 %v6273
  %v6595 = vunpack.c.l.b16 %v6274
  %v6596 = vunpack.c.h.b16 %v6274
  %v6597 = vunpack.c.l.b16 %v6275
  %v6598 = vunpack.c.h.b16 %v6275
  %v6599 = vunpack.c.l.b16 %v6276
  %v6600 = vunpack.c.h.b16 %v6276
  %v6601 = vunpack.c.l.b16 %v6277
  %v6602 = vunpack.c.h.b16 %v6277
  %v6603 = vunpack.c.l.b16 %v6278
  %v6604 = vunpack.c.h.b16 %v6278
  %v6605 = vunpack.c.l.b16 %v6279
  %v6606 = vunpack.c.h.b16 %v6279
  %v6607 = vunpack.c.l.b16 %v6280
  %v6608 = vunpack.c.h.b16 %v6280
  %v6609 = vunpack.c.l.b16 %v6281
  %v6610 = vunpack.c.h.b16 %v6281
  %v6611 = vunpack.c.l.b16 %v6282
  %v6612 = vunpack.c.h.b16 %v6282
  %v6613 = vunpack.c.l.b16 %v6283
  %v6614 = vunpack.c.h.b16 %v6283
  %v6615 = vunpack.c.l.b16 %v6284
  %v6616 = vunpack.c.h.b16 %v6284
  %v6617 = vunpack.c.l.b16 %v6285
  %v6618 = vunpack.c.h.b16 %v6285
  %v6619 = vunpack.c.l.b16 %v6286
  %v6620 = vunpack.c.h.b16 %v6286
  %v6621 = vunpack.c.l.b16 %v6287
  %v6622 = vunpack.c.h.b16 %v6287
  %v6623 = vunpack.c.l.b16 %v6288
  %v6624 = vunpack.c.h.b16 %v6288
  %v6625 = vunpack.c.l.b16 %v6289
  %v6626 = vunpack.c.h.b16 %v6289
  %v6627 = vunpack.c.l.b16 %v6290
  %v6628 = vunpack.c.h.b16 %v6290
  %v6629 = vunpack.c.l.b16 %v6291
  %v6630 = vunpack.c.h.b16 %v6291
  %v6631 = vunpack.c.l.b16 %v6292
  %v6632 = vunpack.c.h.b16 %v6292
  %v6633 = vunpack.c.l.b16 %v6293
  %v6634 = vunpack.c.h.b16 %v6293
  %v6635 = vunpack.c.l.b16 %v6294
  %v6636 = vunpack.c.h.b16 %v6294
  %v6637 = vunpack.c.l.b16 %v6295
  %v6638 = vunpack.c.h.b16 %v6295
  %v6639 = vunpack.c.l.b16 %v6296
  %v6640 = vunpack.c.h.b16 %v6296
  %v6641 = vunpack.c.l.b16 %v6297
  %v6642 = vunpack.c.h.b16 %v6297
  %v6643 = vunpack.c.l.b16 %v6298
  %v6644 = vunpack.c.h.b16 %v6298
  %v6645 = vunpack.c.l.b16 %v6299
  %v6646 = vunpack.c.h.b16 %v6299
  %v6647 = vunpack.c.l.b16 %v6300
  %v6648 = vunpack.c.h.b16 %v6300
  %v6649 = vunpack.c.l.b16 %v6301
  %v6650 = vunpack.c.h.b16 %v6301
  %v6651 = vunpack.c.l.b16 %v6302
  %v6652 = vunpack.c.h.b16 %v6302
  %v6653 = vunpack.c.l.b16 %v6303
  %v6654 = vunpack.c.h.b16 %v6303
  %v6655 = vunpack.c.l.b16 %v6304
  %v6656 = vunpack.c.h.b16 %v6304
  %v6657 = vunpack.c.l.b16 %v6305
  %v6658 = vunpack.c.h.b16 %v6305
  %v6659 = vunpack.c.l.b16 %v6306
  %v6660 = vunpack.c.h.b16 %v6306
  %v6661 = vunpack.c.l.b16 %v6307
  %v6662 = vunpack.c.h.b16 %v6307
  %v6663 = vunpack.c.l.b16 %v6308
  %v6664 = vunpack.c.h.b16 %v6308
  %v6665 = vunpack.c.l.b16 %v6309
  %v6666 = vunpack.c.h.b16 %v6309
  %v6667 = vunpack.c.l.b16 %v6310
  %v6668 = vunpack.c.h.b16 %v6310
  %v6669 = vunpack.c.l.b16 %v6311
  %v6670 = vunpack.c.h.b16 %v6311
  %v6671 = vunpack.c.l.b16 %v6312
  %v6672 = vunpack.c.h.b16 %v6312
  %v6673 = vunpack.c.l.b16 %v6313
  %v6674 = vunpack.c.h.b16 %v6313
  %v6675 = vunpack.c.l.b16 %v6314
  %v6676 = vunpack.c.h.b16 %v6314
  %v6677 = vunpack.c.l.b16 %v6315
  %v6678 = vunpack.c.h.b16 %v6315
  %v6679 = vunpack.c.l.b16 %v6316
  %v6680 = vunpack.c.h.b16 %v6316
  %v6681 = vunpack.c.l.b16 %v6317
  %v6682 = vunpack.c.h.b16 %v6317
  %v6683 = vunpack.c.l.b16 %v6318
  %v6684 = vunpack.c.h.b16 %v6318
  %v6685 = vunpack.c.l.b16 %v6319
  %v6686 = vunpack.c.h.b16 %v6319
  %v6687 = vunpack.c.l.b16 %v6320
  %v6688 = vunpack.c.h.b16 %v6320
  %v6689 = vunpack.c.l.b16 %v6321
  %v6690 = vunpack.c.h.b16 %v6321
  %v6691 = vunpack.c.l.b16 %v6322
  %v6692 = vunpack.c.h.b16 %v6322
  %v6693 = vunpack.c.l.b16 %v6323
  %v6694 = vunpack.c.h.b16 %v6323
  %v6695 = vunpack.c.l.b16 %v6324
  %v6696 = vunpack.c.h.b16 %v6324
  %v6697 = vunpack.c.l.b16 %v6325
  %v6698 = vunpack.c.h.b16 %v6325
  %v6699 = vunpack.c.l.b16 %v6326
  %v6700 = vunpack.c.h.b16 %v6326
  %v6701 = vunpack.c.l.b16 %v6327
  %v6702 = vunpack.c.h.b16 %v6327
  %v6703 = vunpack.c.l.b16 %v6328
  %v6704 = vunpack.c.h.b16 %v6328
  %v6705 = vunpack.c.l.b16 %v6329
  %v6706 = vunpack.c.h.b16 %v6329
  %v6707 = vunpack.c.l.b16 %v6330
  %v6708 = vunpack.c.h.b16 %v6330
  %v6709 = vunpack.c.l.b16 %v6331
  %v6710 = vunpack.c.h.b16 %v6331
  %v6711 = vunpack.c.l.b16 %v6332
  %v6712 = vunpack.c.h.b16 %v6332
  %v6713 = vunpack.c.l.b16 %v6333
  %v6714 = vunpack.c.h.b16 %v6333
  %v6715 = vunpack.c.l.b16 %v6334
  %v6716 = vunpack.c.h.b16 %v6334
  %v6717 = vunpack.c.l.b16 %v6335
  %v6718 = vunpack.c.h.b16 %v6335
  %v6719 = vunpack.c.l.b16 %v6336
  %v6720 = vunpack.c.h.b16 %v6336
  %v6721 = vpack.c.b16 %v6469, %v6465
  %v6722 = vpack.c.b16 %v6470, %v6466
  %v6723 = vpack.c.b16 %v6471, %v6467
  %v6724 = vpack.c.b16 %v6472, %v6468
  %v6725 = vpack.c.b16 %v6477, %v6473
  %v6726 = vpack.c.b16 %v6478, %v6474
  %v6727 = vpack.c.b16 %v6479, %v6475
  %v6728 = vpack.c.b16 %v6480, %v6476
  %v6729 = vpack.c.b16 %v6485, %v6481
  %v6730 = vpack.c.b16 %v6486, %v6482
  %v6731 = vpack.c.b16 %v6487, %v6483
  %v6732 = vpack.c.b16 %v6488, %v6484
  %v6733 = vpack.c.b16 %v6493, %v6489
  %v6734 = vpack.c.b16 %v6494, %v6490
  %v6735 = vpack.c.b16 %v6495, %v6491
  %v6736 = vpack.c.b16 %v6496, %v6492
  %v6737 = vpack.c.b16 %v6501, %v6497
  %v6738 = vpack.c.b16 %v6502, %v6498
  %v6739 = vpack.c.b16 %v6503, %v6499
  %v6740 = vpack.c.b16 %v6504, %v6500
  %v6741 = vpack.c.b16 %v6509, %v6505
  %v6742 = vpack.c.b16 %v6510, %v6506
  %v6743 = vpack.c.b16 %v6511, %v6507
  %v6744 = vpack.c.b16 %v6512, %v6508
  %v6745 = vpack.c.b16 %v6517, %v6513
  %v6746 = vpack.c.b16 %v6518, %v6514
  %v6747 = vpack.c.b16 %v6519, %v6515
  %v6748 = vpack.c.b16 %v6520, %v6516
  %v6749 = vpack.c.b16 %v6525, %v6521
  %v6750 = vpack.c.b16 %v6526, %v6522
  %v6751 = vpack.c.b16 %v6527, %v6523
  %v6752 = vpack.c.b16 %v6528, %v6524
  %v6753 = vpack.c.b16 %v6533, %v6529
  %v6754 = vpack.c.b16 %v6534, %v6530
  %v6755 = vpack.c.b16 %v6535, %v6531
  %v6756 = vpack.c.b16 %v6536, %v6532
  %v6757 = vpack.c.b16 %v6541, %v6537
  %v6758 = vpack.c.b16 %v6542, %v6538
  %v6759 = vpack.c.b16 %v6543, %v6539
  %v6760 = vpack.c.b16 %v6544, %v6540
  %v6761 = vpack.c.b16 %v6549, %v6545
  %v6762 = vpack.c.b16 %v6550, %v6546
  %v6763 = vpack.c.b16 %v6551, %v6547
  %v6764 = vpack.c.b16 %v6552, %v6548
  %v6765 = vpack.c.b16 %v6557, %v6553
  %v6766 = vpack.c.b16 %v6558, %v6554
  %v6767 = vpack.c.b16 %v6559, %v6555
  %v6768 = vpack.c.b16 %v6560, %v6556
  %v6769 = vpack.c.b16 %v6565, %v6561
  %v6770 = vpack.c.b16 %v6566, %v6562
  %v6771 = vpack.c.b16 %v6567, %v6563
  %v6772 = vpack.c.b16 %v6568, %v6564
  %v6773 = vpack.c.b16 %v6573, %v6569
  %v6774 = vpack.c.b16 %v6574, %v6570
  %v6775 = vpack.c.b16 %v6575, %v6571
  %v6776 = vpack.c.b16 %v6576, %v6572
  %v6777 = vpack.c.b16 %v6581, %v6577
  %v6778 = vpack.c.b16 %v6582, %v6578
  %v6779 = vpack.c.b16 %v6583, %v6579
  %v6780 = vpack.c.b16 %v6584, %v6580
  %v6781 = vpack.c.b16 %v6589, %v6585
  %v6782 = vpack.c.b16 %v6590, %v6586
  %v6783 = vpack.c.b16 %v6591, %v6587
  %v6784 = vpack.c.b16 %v6592, %v6588
  %v6785 = vpack.c.b16 %v6597, %v6593
  %v6786 = vpack.c.b16 %v6598, %v6594
  %v6787 = vpack.c.b16 %v6599, %v6595
  %v6788 = vpack.c.b16 %v6600, %v6596
  %v6789 = vpack.c.b16 %v6605, %v6601
  %v6790 = vpack.c.b16 %v6606, %v6602
  %v6791 = vpack.c.b16 %v6607, %v6603
  %v6792 = vpack.c.b16 %v6608, %v6604
  %v6793 = vpack.c.b16 %v6613, %v6609
  %v6794 = vpack.c.b16 %v6614, %v6610
  %v6795 = vpack.c.b16 %v6615, %v6611
  %v6796 = vpack.c.b16 %v6616, %v6612
  %v6797 = vpack.c.b16 %v6621, %v6617
  %v6798 = vpack.c.b16 %v6622, %v6618
  %v6799 = vpack.c.b16 %v6623, %v6619
  %v6800 = vpack.c.b16 %v6624, %v6620
  %v6801 = vpack.c.b16 %v6629, %v6625
  %v6802 = vpack.c.b16 %v6630, %v6626
  %v6803 = vpack.c.b16 %v6631, %v6627
  %v6804 = vpack.c.b16 %v6632, %v6628
  %v6805 = vpack.c.b16 %v6637, %v6633
  %v6806 = vpack.c.b16 %v6638, %v6634
  %v6807 = vpack.c.b16 %v6639, %v6635
  %v6808 = vpack.c.b16 %v6640, %v6636
  %v6809 = vpack.c.b16 %v6645, %v6641
  %v6810 = vpack.c.b16 %v6646, %v6642
  %v6811 = vpack.c.b16 %v6647, %v6643
  %v6812 = vpack.c.b16 %v6648, %v6644
  %v6813 = vpack.c.b16 %v6653, %v6649
  %v6814 = vpack.c.b16 %v6654, %v6650
  %v6815 = vpack.c.b16 %v6655, %v6651
  %v6816 = vpack.c.b16 %v6656, %v6652
  %v6817 = vpack.c.b16 %v6661, %v6657
  %v6818 = vpack.c.b16 %v6662, %v6658
  %v6819 = vpack.c.b16 %v6663, %v6659
  %v6820 = vpack.c.b16 %v6664, %v6660
  %v6821 = vpack.c.b16 %v6669, %v6665
  %v6822 = vpack.c.b16 %v6670, %v6666
  %v6823 = vpack.c.b16 %v6671, %v6667
  %v6824 = vpack.c.b16 %v6672, %v6668
  %v6825 = vpack.c.b16 %v6677, %v6673
  %v6826 = vpack.c.b16 %v6678, %v6674
  %v6827 = vpack.c.b16 %v6679, %v6675
  %v6828 = vpack.c.b16 %v6680, %v6676
  %v6829 = vpack.c.b16 %v6685, %v6681
  %v6830 = vpack.c.b16 %v6686, %v6682
  %v6831 = vpack.c.b16 %v6687, %v6683
  %v6832 = vpack.c.b16 %v6688, %v6684
  %v6833 = vpack.c.b16 %v6693, %v6689
  %v6834 = vpack.c.b16 %v6694, %v6690
  %v6835 = vpack.c.b16 %v6695, %v6691
  %v6836 = vpack.c.b16 %v6696, %v6692
  %v6837 = vpack.c.b16 %v6701, %v6697
  %v6838 = vpack.c.b16 %v6702, %v6698
  %v6839 = vpack.c.b16 %v6703, %v6699
  %v6840 = vpack.c.b16 %v6704, %v6700
  %v6841 = vpack.c.b16 %v6709, %v6705
  %v6842 = vpack.c.b16 %v6710, %v6706
  %v6843 = vpack.c.b16 %v6711, %v6707
  %v6844 = vpack.c.b16 %v6712, %v6708
  %v6845 = vpack.c.b16 %v6717, %v6713
  %v6846 = vpack.c.b16 %v6718, %v6714
  %v6847 = vpack.c.b16 %v6719, %v6715
  %v6848 = vpack.c.b16 %v6720, %v6716
  %6977 = vmatprep.subr.bf16.mxu0 %v6722
  %6978 = vmatpush1.bf16.msra.mxu0 %v6721
  %6979 = vmatprep.subr.bf16.mxu0 %v6726
  %6980 = vmatpush1.bf16.msra.mxu0 %v6725
  %6981 = vmatprep.subr.bf16.mxu0 %v6730
  %6982 = vmatpush1.bf16.msra.mxu0 %v6729
  %6983 = vmatprep.subr.bf16.mxu0 %v6734
  %6984 = vmatpush1.bf16.msra.mxu0 %v6733
  %6985 = vmatprep.subr.bf16.mxu0 %v6738
  %6986 = vmatpush1.bf16.msra.mxu0 %v6737
  %6987 = vmatprep.subr.bf16.mxu0 %v6742
  %6988 = vmatpush1.bf16.msra.mxu0 %v6741
  %6989 = vmatprep.subr.bf16.mxu0 %v6746
  %6990 = vmatpush1.bf16.msra.mxu0 %v6745
  %6991 = vmatprep.subr.bf16.mxu0 %v6750
  %6992 = vmatpush1.bf16.msra.mxu0 %v6749
  %6993 = vmatprep.subr.bf16.mxu0 %v6754
  %6994 = vmatpush1.bf16.msra.mxu0 %v6753
  %6995 = vmatprep.subr.bf16.mxu0 %v6758
  %6996 = vmatpush1.bf16.msra.mxu0 %v6757
  %6997 = vmatprep.subr.bf16.mxu0 %v6762
  %6998 = vmatpush1.bf16.msra.mxu0 %v6761
  %6999 = vmatprep.subr.bf16.mxu0 %v6766
  %7000 = vmatpush1.bf16.msra.mxu0 %v6765
  %7001 = vmatprep.subr.bf16.mxu0 %v6770
  %7002 = vmatpush1.bf16.msra.mxu0 %v6769
  %7003 = vmatprep.subr.bf16.mxu0 %v6774
  %7004 = vmatpush1.bf16.msra.mxu0 %v6773
  %7005 = vmatprep.subr.bf16.mxu0 %v6778
  %7006 = vmatpush1.bf16.msra.mxu0 %v6777
  %7007 = vmatprep.subr.bf16.mxu0 %v6782
  %7008 = vmatpush1.bf16.msra.mxu0 %v6781
  %7009 = vmatprep.mubr.bf16.mxu0 %v4240
  %7010 = vmatmul.mubr.bf16.gmra.mrb[0].mxu0 %v4239
  %v7011 = vpop.f32.mrb[0].mxu0
  %v7012 = vadd.f32 0.0, %v7011
  %v7013 = vpop.f32.mrb[0].mxu0
  %v7014 = vadd.f32 0.0, %v7013
  %v7015 = vpop.f32.mrb[0].mxu0
  %v7016 = vadd.f32 0.0, %v7015
  %v7017 = vpop.f32.mrb[0].mxu0
  %v7018 = vadd.f32 0.0, %v7017
  %7019 = vmatprep.mubr.bf16.mxu0 %v4244
  %7020 = vmatmul.mubr.bf16.gmra.mrb[0].mxu0 %v4243
  %v7021 = vpop.f32.mrb[0].mxu0
  %v7022 = vadd.f32 0.0, %v7021
  %v7023 = vpop.f32.mrb[0].mxu0
  %v7024 = vadd.f32 0.0, %v7023
  %v7025 = vpop.f32.mrb[0].mxu0
  %v7026 = vadd.f32 0.0, %v7025
  %v7027 = vpop.f32.mrb[0].mxu0
  %v7028 = vadd.f32 0.0, %v7027
  %7029 = vdwg.mxu0
  %7030 = vmatprep.subr.bf16.mxu0 %v6786
  %7031 = vmatpush1.bf16.msra.mxu0 %v6785
  %7032 = vmatprep.subr.bf16.mxu0 %v6790
  %7033 = vmatpush1.bf16.msra.mxu0 %v6789
  %7034 = vmatprep.subr.bf16.mxu0 %v6794
  %7035 = vmatpush1.bf16.msra.mxu0 %v6793
  %7036 = vmatprep.subr.bf16.mxu0 %v6798
  %7037 = vmatpush1.bf16.msra.mxu0 %v6797
  %7038 = vmatprep.subr.bf16.mxu0 %v6802
  %7039 = vmatpush1.bf16.msra.mxu0 %v6801
  %7040 = vmatprep.subr.bf16.mxu0 %v6806
  %7041 = vmatpush1.bf16.msra.mxu0 %v6805
  %7042 = vmatprep.subr.bf16.mxu0 %v6810
  %7043 = vmatpush1.bf16.msra.mxu0 %v6809
  %7044 = vmatprep.subr.bf16.mxu0 %v6814
  %7045 = vmatpush1.bf16.msra.mxu0 %v6813
  %7046 = vmatprep.subr.bf16.mxu0 %v6818
  %7047 = vmatpush1.bf16.msra.mxu0 %v6817
  %7048 = vmatprep.subr.bf16.mxu0 %v6822
  %7049 = vmatpush1.bf16.msra.mxu0 %v6821
  %7050 = vmatprep.subr.bf16.mxu0 %v6826
  %7051 = vmatpush1.bf16.msra.mxu0 %v6825
  %7052 = vmatprep.subr.bf16.mxu0 %v6830
  %7053 = vmatpush1.bf16.msra.mxu0 %v6829
  %7054 = vmatprep.subr.bf16.mxu0 %v6834
  %7055 = vmatpush1.bf16.msra.mxu0 %v6833
  %7056 = vmatprep.subr.bf16.mxu0 %v6838
  %7057 = vmatpush1.bf16.msra.mxu0 %v6837
  %7058 = vmatprep.subr.bf16.mxu0 %v6842
  %7059 = vmatpush1.bf16.msra.mxu0 %v6841
  %7060 = vmatprep.subr.bf16.mxu0 %v6846
  %7061 = vmatpush1.bf16.msra.mxu0 %v6845
  %7062 = vmatprep.mubr.bf16.mxu0 %v4242
  %7063 = vmatmul.mubr.bf16.gmra.mrb[0].mxu0 %v4241
  %v7064 = vpop.f32.mrb[0].mxu0
  %v7065 = vadd.f32 %v7012, %v7064
  %v7066 = vpop.f32.mrb[0].mxu0
  %v7067 = vadd.f32 %v7014, %v7066
  %v7068 = vpop.f32.mrb[0].mxu0
  %v7069 = vadd.f32 %v7016, %v7068
  %v7070 = vpop.f32.mrb[0].mxu0
  %v7071 = vadd.f32 %v7018, %v7070
  %7072 = vmatprep.mubr.bf16.mxu0 %v4246
  %7073 = vmatmul.mubr.bf16.gmra.mrb[0].mxu0 %v4245
  %v7074 = vpop.f32.mrb[0].mxu0
  %v7075 = vadd.f32 %v7022, %v7074
  %v7076 = vpop.f32.mrb[0].mxu0
  %v7077 = vadd.f32 %v7024, %v7076
  %v7078 = vpop.f32.mrb[0].mxu0
  %v7079 = vadd.f32 %v7026, %v7078
  %v7080 = vpop.f32.mrb[0].mxu0
  %v7081 = vadd.f32 %v7028, %v7080
  %7082 = vdwg.mxu0
  %7083 = vmatprep.subr.bf16.mxu0 %v6724
  %7084 = vmatpush1.bf16.msra.mxu0 %v6723
  %7085 = vmatprep.subr.bf16.mxu0 %v6728
  %7086 = vmatpush1.bf16.msra.mxu0 %v6727
  %7087 = vmatprep.subr.bf16.mxu0 %v6732
  %7088 = vmatpush1.bf16.msra.mxu0 %v6731
  %7089 = vmatprep.subr.bf16.mxu0 %v6736
  %7090 = vmatpush1.bf16.msra.mxu0 %v6735
  %7091 = vmatprep.subr.bf16.mxu0 %v6740
  %7092 = vmatpush1.bf16.msra.mxu0 %v6739
  %7093 = vmatprep.subr.bf16.mxu0 %v6744
  %7094 = vmatpush1.bf16.msra.mxu0 %v6743
  %7095 = vmatprep.subr.bf16.mxu0 %v6748
  %7096 = vmatpush1.bf16.msra.mxu0 %v6747
  %7097 = vmatprep.subr.bf16.mxu0 %v6752
  %7098 = vmatpush1.bf16.msra.mxu0 %v6751
  %7099 = vmatprep.subr.bf16.mxu0 %v6756
  %7100 = vmatpush1.bf16.msra.mxu0 %v6755
  %7101 = vmatprep.subr.bf16.mxu0 %v6760
  %7102 = vmatpush1.bf16.msra.mxu0 %v6759
  %7103 = vmatprep.subr.bf16.mxu0 %v6764
  %7104 = vmatpush1.bf16.msra.mxu0 %v6763
  %7105 = vmatprep.subr.bf16.mxu0 %v6768
  %7106 = vmatpush1.bf16.msra.mxu0 %v6767
  %7107 = vmatprep.subr.bf16.mxu0 %v6772
  %7108 = vmatpush1.bf16.msra.mxu0 %v6771
  %7109 = vmatprep.subr.bf16.mxu0 %v6776
  %7110 = vmatpush1.bf16.msra.mxu0 %v6775
  %7111 = vmatprep.subr.bf16.mxu0 %v6780
  %7112 = vmatpush1.bf16.msra.mxu0 %v6779
  %7113 = vmatprep.subr.bf16.mxu0 %v6784
  %7114 = vmatpush1.bf16.msra.mxu0 %v6783
  %7115 = vmatprep.mubr.bf16.mxu0 %v4240
  %7116 = vmatmul.mubr.bf16.gmra.mrb[0].mxu0 %v4239
  %v7117 = vpop.f32.mrb[0].mxu0
  %v7118 = vadd.f32 0.0, %v7117
  %v7119 = vpop.f32.mrb[0].mxu0
  %v7120 = vadd.f32 0.0, %v7119
  %v7121 = vpop.f32.mrb[0].mxu0
  %v7122 = vadd.f32 0.0, %v7121
  %v7123 = vpop.f32.mrb[0].mxu0
  %v7124 = vadd.f32 0.0, %v7123
  %7125 = vmatprep.mubr.bf16.mxu0 %v4244
  %7126 = vmatmul.mubr.bf16.gmra.mrb[0].mxu0 %v4243
  %v7127 = vpop.f32.mrb[0].mxu0
  %v7128 = vadd.f32 0.0, %v7127
  %v7129 = vpop.f32.mrb[0].mxu0
  %v7130 = vadd.f32 0.0, %v7129
  %v7131 = vpop.f32.mrb[0].mxu0
  %v7132 = vadd.f32 0.0, %v7131
  %v7133 = vpop.f32.mrb[0].mxu0
  %v7134 = vadd.f32 0.0, %v7133
  %7135 = vdwg.mxu0
  %7136 = vmatprep.subr.bf16.mxu0 %v6788
  %7137 = vmatpush1.bf16.msra.mxu0 %v6787
  %7138 = vmatprep.subr.bf16.mxu0 %v6792
  %7139 = vmatpush1.bf16.msra.mxu0 %v6791
  %7140 = vmatprep.subr.bf16.mxu0 %v6796
  %7141 = vmatpush1.bf16.msra.mxu0 %v6795
  %7142 = vmatprep.subr.bf16.mxu0 %v6800
  %7143 = vmatpush1.bf16.msra.mxu0 %v6799
  %7144 = vmatprep.subr.bf16.mxu0 %v6804
  %7145 = vmatpush1.bf16.msra.mxu0 %v6803
  %7146 = vmatprep.subr.bf16.mxu0 %v6808
  %7147 = vmatpush1.bf16.msra.mxu0 %v6807
  %7148 = vmatprep.subr.bf16.mxu0 %v6812
  %7149 = vmatpush1.bf16.msra.mxu0 %v6811
  %7150 = vmatprep.subr.bf16.mxu0 %v6816
  %7151 = vmatpush1.bf16.msra.mxu0 %v6815
  %7152 = vmatprep.subr.bf16.mxu0 %v6820
  %7153 = vmatpush1.bf16.msra.mxu0 %v6819
  %7154 = vmatprep.subr.bf16.mxu0 %v6824
  %7155 = vmatpush1.bf16.msra.mxu0 %v6823
  %7156 = vmatprep.subr.bf16.mxu0 %v6828
  %7157 = vmatpush1.bf16.msra.mxu0 %v6827
  %7158 = vmatprep.subr.bf16.mxu0 %v6832
  %7159 = vmatpush1.bf16.msra.mxu0 %v6831
  %7160 = vmatprep.subr.bf16.mxu0 %v6836
  %7161 = vmatpush1.bf16.msra.mxu0 %v6835
  %7162 = vmatprep.subr.bf16.mxu0 %v6840
  %7163 = vmatpush1.bf16.msra.mxu0 %v6839
  %7164 = vmatprep.subr.bf16.mxu0 %v6844
  %7165 = vmatpush1.bf16.msra.mxu0 %v6843
  %7166 = vmatprep.subr.bf16.mxu0 %v6848
  %7167 = vmatpush1.bf16.msra.mxu0 %v6847
  %7168 = vmatprep.mubr.bf16.mxu0 %v4242
  %7169 = vmatmul.mubr.bf16.gmra.mrb[0].mxu0 %v4241
  %v7170 = vpop.f32.mrb[0].mxu0
  %v7171 = vadd.f32 %v7118, %v7170
  %v7172 = vpop.f32.mrb[0].mxu0
  %v7173 = vadd.f32 %v7120, %v7172
  %v7174 = vpop.f32.mrb[0].mxu0
  %v7175 = vadd.f32 %v7122, %v7174
  %v7176 = vpop.f32.mrb[0].mxu0
  %v7177 = vadd.f32 %v7124, %v7176
  %7178 = vmatprep.mubr.bf16.mxu0 %v4246
  %7179 = vmatmul.mubr.bf16.gmra.mrb[0].mxu0 %v4245
  %v7180 = vpop.f32.mrb[0].mxu0
  %v7181 = vadd.f32 %v7128, %v7180
  %v7182 = vpop.f32.mrb[0].mxu0
  %v7183 = vadd.f32 %v7130, %v7182
  %v7184 = vpop.f32.mrb[0].mxu0
  %v7185 = vadd.f32 %v7132, %v7184
  %v7186 = vpop.f32.mrb[0].mxu0
  %v7187 = vadd.f32 %v7134, %v7186
  %7188 = vdwg.mxu0
  %7189 = vmatprep.subr.mxu0 %v5105
  %7190 = vmatpush1.msra.mxu0 %v5103
  %7191 = vmatprep.subr.mxu0 %v5109
  %7192 = vmatpush1.msra.mxu0 %v5107
  %7193 = vmatprep.subr.mxu0 %v5115
  %7194 = vmatpush1.msra.mxu0 %v5113
  %7195 = vmatprep.subr.mxu0 %v5119
  %7196 = vmatpush1.msra.mxu0 %v5117
  %7197 = vmatprep.subr.mxu0 0.0
  %7198 = vmatpush1.msra.mxu0 0.0
  %7199 = vmatprep.subr.mxu0 0.0
  %7200 = vmatpush1.msra.mxu0 0.0
  %7201 = vmatprep.subr.mxu0 0.0
  %7202 = vmatpush1.msra.mxu0 0.0
  %7203 = vmatprep.subr.mxu0 0.0
  %7204 = vmatpush1.msra.mxu0 0.0
  %7205 = vmatprep.subr.mxu0 0.0
  %7206 = vmatpush1.msra.mxu0 0.0
  %7207 = vmatprep.subr.mxu0 0.0
  %7208 = vmatpush1.msra.mxu0 0.0
  %7209 = vmatprep.subr.mxu0 0.0
  %7210 = vmatpush1.msra.mxu0 0.0
  %7211 = vmatprep.subr.mxu0 0.0
  %7212 = vmatpush1.msra.mxu0 0.0
  %7213 = vmatprep.subr.mxu0 0.0
  %7214 = vmatpush1.msra.mxu0 0.0
  %7215 = vmatprep.subr.mxu0 0.0
  %7216 = vmatpush1.msra.mxu0 0.0
  %7217 = vmatprep.subr.mxu0 0.0
  %7218 = vmatpush1.msra.mxu0 0.0
  %7219 = vmatprep.subr.mxu0 0.0
  %7220 = vmatpush1.msra.mxu0 0.0
  %7221 = vmatprep.subr.mxu0 0.0
  %7222 = vmatpush1.msra.mxu0 0.0
  %7223 = vmatprep.subr.mxu0 0.0
  %7224 = vmatpush1.msra.mxu0 0.0
  %7225 = vmatprep.subr.mxu0 0.0
  %7226 = vmatpush1.msra.mxu0 0.0
  %7227 = vmatprep.subr.mxu0 0.0
  %7228 = vmatpush1.msra.mxu0 0.0
  %7229 = vmatprep.subr.mxu0 0.0
  %7230 = vmatpush1.msra.mxu0 0.0
  %7231 = vmatprep.subr.mxu0 0.0
  %7232 = vmatpush1.msra.mxu0 0.0
  %7233 = vmatprep.subr.mxu0 0.0
  %7234 = vmatpush1.msra.mxu0 0.0
  %7235 = vmatprep.subr.mxu0 0.0
  %7236 = vmatpush1.msra.mxu0 0.0
  %7237 = vmatprep.subr.mxu0 0.0
  %7238 = vmatpush1.msra.mxu0 0.0
  %7239 = vmatprep.subr.mxu0 0.0
  %7240 = vmatpush1.msra.mxu0 0.0
  %7241 = vmatprep.subr.mxu0 0.0
  %7242 = vmatpush1.msra.mxu0 0.0
  %7243 = vmatprep.subr.mxu0 0.0
  %7244 = vmatpush1.msra.mxu0 0.0
  %7245 = vmatprep.subr.mxu0 0.0
  %7246 = vmatpush1.msra.mxu0 0.0
  %7247 = vmatprep.subr.mxu0 0.0
  %7248 = vmatpush1.msra.mxu0 0.0
  %7249 = vmatprep.subr.mxu0 0.0
  %7250 = vmatpush1.msra.mxu0 0.0
  %7251 = vmatprep.subr.mxu0 0.0
  %7252 = vmatpush1.msra.mxu0 0.0
  %7253 = vmatprep.mubr.f32.mxu0 0.0
  %7254 = vmatmul.mubr.f32.gmra.mrb[0].mxu0 %v3094
  %v7255 = vpop.f32.mrb[0].mxu0
  %v7256 = vadd.f32 %v6084, %v7255
  %v7257 = vpop.f32.mrb[0].mxu0
  %v7258 = vadd.f32 %v6086, %v7257
  %7259 = vmatprep.mubr.f32.mxu0 0.0
  %7260 = vmatmul.mubr.f32.gmra.mrb[0].mxu0 %v3097
  %v7261 = vpop.f32.mrb[0].mxu0
  %v7262 = vadd.f32 %v6088, %v7261
  %v7263 = vpop.f32.mrb[0].mxu0
  %v7264 = vadd.f32 %v6090, %v7263
  %7265 = vmatprep.mubr.f32.mxu0 0.0
  %7266 = vmatmul.mubr.f32.gmra.mrb[0].mxu0 %v3100
  %v7267 = vpop.f32.mrb[0].mxu0
  %v7268 = vadd.f32 %v6094, %v7267
  %v7269 = vpop.f32.mrb[0].mxu0
  %v7270 = vadd.f32 %v6096, %v7269
  %7271 = vmatprep.mubr.f32.mxu0 0.0
  %7272 = vmatmul.mubr.f32.gmra.mrb[0].mxu0 %v3103
  %v7273 = vpop.f32.mrb[0].mxu0
  %v7274 = vadd.f32 %v6098, %v7273
  %v7275 = vpop.f32.mrb[0].mxu0
  %v7276 = vadd.f32 %v6100, %v7275
  %7277 = vdwg.mxu0
  %7278 = vmatprep.subr.mxu0 %v5211
  %7279 = vmatpush1.msra.mxu0 %v5209
  %7280 = vmatprep.subr.mxu0 %v5215
  %7281 = vmatpush1.msra.mxu0 %v5213
  %7282 = vmatprep.subr.mxu0 %v5221
  %7283 = vmatpush1.msra.mxu0 %v5219
  %7284 = vmatprep.subr.mxu0 %v5225
  %7285 = vmatpush1.msra.mxu0 %v5223
  %7286 = vmatprep.subr.mxu0 0.0
  %7287 = vmatpush1.msra.mxu0 0.0
  %7288 = vmatprep.subr.mxu0 0.0
  %7289 = vmatpush1.msra.mxu0 0.0
  %7290 = vmatprep.subr.mxu0 0.0
  %7291 = vmatpush1.msra.mxu0 0.0
  %7292 = vmatprep.subr.mxu0 0.0
  %7293 = vmatpush1.msra.mxu0 0.0
  %7294 = vmatprep.subr.mxu0 0.0
  %7295 = vmatpush1.msra.mxu0 0.0
  %7296 = vmatprep.subr.mxu0 0.0
  %7297 = vmatpush1.msra.mxu0 0.0
  %7298 = vmatprep.subr.mxu0 0.0
  %7299 = vmatpush1.msra.mxu0 0.0
  %7300 = vmatprep.subr.mxu0 0.0
  %7301 = vmatpush1.msra.mxu0 0.0
  %7302 = vmatprep.subr.mxu0 0.0
  %7303 = vmatpush1.msra.mxu0 0.0
  %7304 = vmatprep.subr.mxu0 0.0
  %7305 = vmatpush1.msra.mxu0 0.0
  %7306 = vmatprep.subr.mxu0 0.0
  %7307 = vmatpush1.msra.mxu0 0.0
  %7308 = vmatprep.subr.mxu0 0.0
  %7309 = vmatpush1.msra.mxu0 0.0
  %7310 = vmatprep.subr.mxu0 0.0
  %7311 = vmatpush1.msra.mxu0 0.0
  %7312 = vmatprep.subr.mxu0 0.0
  %7313 = vmatpush1.msra.mxu0 0.0
  %7314 = vmatprep.subr.mxu0 0.0
  %7315 = vmatpush1.msra.mxu0 0.0
  %7316 = vmatprep.subr.mxu0 0.0
  %7317 = vmatpush1.msra.mxu0 0.0
  %7318 = vmatprep.subr.mxu0 0.0
  %7319 = vmatpush1.msra.mxu0 0.0
  %7320 = vmatprep.subr.mxu0 0.0
  %7321 = vmatpush1.msra.mxu0 0.0
  %7322 = vmatprep.subr.mxu0 0.0
  %7323 = vmatpush1.msra.mxu0 0.0
  %7324 = vmatprep.subr.mxu0 0.0
  %7325 = vmatpush1.msra.mxu0 0.0
  %7326 = vmatprep.subr.mxu0 0.0
  %7327 = vmatpush1.msra.mxu0 0.0
  %7328 = vmatprep.subr.mxu0 0.0
  %7329 = vmatpush1.msra.mxu0 0.0
  %7330 = vmatprep.subr.mxu0 0.0
  %7331 = vmatpush1.msra.mxu0 0.0
  %7332 = vmatprep.subr.mxu0 0.0
  %7333 = vmatpush1.msra.mxu0 0.0
  %7334 = vmatprep.subr.mxu0 0.0
  %7335 = vmatpush1.msra.mxu0 0.0
  %7336 = vmatprep.subr.mxu0 0.0
  %7337 = vmatpush1.msra.mxu0 0.0
  %7338 = vmatprep.subr.mxu0 0.0
  %7339 = vmatpush1.msra.mxu0 0.0
  %7340 = vmatprep.subr.mxu0 0.0
  %7341 = vmatpush1.msra.mxu0 0.0
  %7342 = vmatprep.mubr.f32.mxu0 0.0
  %7343 = vmatmul.mubr.f32.gmra.mrb[0].mxu0 %v3094
  %v7344 = vpop.f32.mrb[0].mxu0
  %v7345 = vadd.f32 %v6190, %v7344
  %v7346 = vpop.f32.mrb[0].mxu0
  %v7347 = vadd.f32 %v6192, %v7346
  %7348 = vmatprep.mubr.f32.mxu0 0.0
  %7349 = vmatmul.mubr.f32.gmra.mrb[0].mxu0 %v3097
  %v7350 = vpop.f32.mrb[0].mxu0
  %v7351 = vadd.f32 %v6194, %v7350
  %v7352 = vpop.f32.mrb[0].mxu0
  %v7353 = vadd.f32 %v6196, %v7352
  %7354 = vmatprep.mubr.f32.mxu0 0.0
  %7355 = vmatmul.mubr.f32.gmra.mrb[0].mxu0 %v3100
  %v7356 = vpop.f32.mrb[0].mxu0
  %v7357 = vadd.f32 %v6200, %v7356
  %v7358 = vpop.f32.mrb[0].mxu0
  %v7359 = vadd.f32 %v6202, %v7358
  %7360 = vmatprep.mubr.f32.mxu0 0.0
  %7361 = vmatmul.mubr.f32.gmra.mrb[0].mxu0 %v3103
  %v7362 = vpop.f32.mrb[0].mxu0
  %v7363 = vadd.f32 %v6204, %v7362
  %v7364 = vpop.f32.mrb[0].mxu0
  %v7365 = vadd.f32 %v6206, %v7364
  %7366 = vdwg.mxu0
  %7367 = vmatprep.subr.mxu0 %v7067
  %7368 = vmatpush1.msra.mxu0 %v7065
  %7369 = vmatprep.subr.mxu0 %v7071
  %7370 = vmatpush1.msra.mxu0 %v7069
  %7371 = vmatprep.subr.mxu0 %v7077
  %7372 = vmatpush1.msra.mxu0 %v7075
  %7373 = vmatprep.subr.mxu0 %v7081
  %7374 = vmatpush1.msra.mxu0 %v7079
  %7375 = vmatprep.subr.mxu0 0.0
  %7376 = vmatpush1.msra.mxu0 0.0
  %7377 = vmatprep.subr.mxu0 0.0
  %7378 = vmatpush1.msra.mxu0 0.0
  %7379 = vmatprep.subr.mxu0 0.0
  %7380 = vmatpush1.msra.mxu0 0.0
  %7381 = vmatprep.subr.mxu0 0.0
  %7382 = vmatpush1.msra.mxu0 0.0
  %7383 = vmatprep.subr.mxu0 0.0
  %7384 = vmatpush1.msra.mxu0 0.0
  %7385 = vmatprep.subr.mxu0 0.0
  %7386 = vmatpush1.msra.mxu0 0.0
  %7387 = vmatprep.subr.mxu0 0.0
  %7388 = vmatpush1.msra.mxu0 0.0
  %7389 = vmatprep.subr.mxu0 0.0
  %7390 = vmatpush1.msra.mxu0 0.0
  %7391 = vmatprep.subr.mxu0 0.0
  %7392 = vmatpush1.msra.mxu0 0.0
  %7393 = vmatprep.subr.mxu0 0.0
  %7394 = vmatpush1.msra.mxu0 0.0
  %7395 = vmatprep.subr.mxu0 0.0
  %7396 = vmatpush1.msra.mxu0 0.0
  %7397 = vmatprep.subr.mxu0 0.0
  %7398 = vmatpush1.msra.mxu0 0.0
  %7399 = vmatprep.subr.mxu0 0.0
  %7400 = vmatpush1.msra.mxu0 0.0
  %7401 = vmatprep.subr.mxu0 0.0
  %7402 = vmatpush1.msra.mxu0 0.0
  %7403 = vmatprep.subr.mxu0 0.0
  %7404 = vmatpush1.msra.mxu0 0.0
  %7405 = vmatprep.subr.mxu0 0.0
  %7406 = vmatpush1.msra.mxu0 0.0
  %7407 = vmatprep.subr.mxu0 0.0
  %7408 = vmatpush1.msra.mxu0 0.0
  %7409 = vmatprep.subr.mxu0 0.0
  %7410 = vmatpush1.msra.mxu0 0.0
  %7411 = vmatprep.subr.mxu0 0.0
  %7412 = vmatpush1.msra.mxu0 0.0
  %7413 = vmatprep.subr.mxu0 0.0
  %7414 = vmatpush1.msra.mxu0 0.0
  %7415 = vmatprep.subr.mxu0 0.0
  %7416 = vmatpush1.msra.mxu0 0.0
  %7417 = vmatprep.subr.mxu0 0.0
  %7418 = vmatpush1.msra.mxu0 0.0
  %7419 = vmatprep.subr.mxu0 0.0
  %7420 = vmatpush1.msra.mxu0 0.0
  %7421 = vmatprep.subr.mxu0 0.0
  %7422 = vmatpush1.msra.mxu0 0.0
  %7423 = vmatprep.subr.mxu0 0.0
  %7424 = vmatpush1.msra.mxu0 0.0
  %7425 = vmatprep.subr.mxu0 0.0
  %7426 = vmatpush1.msra.mxu0 0.0
  %7427 = vmatprep.subr.mxu0 0.0
  %7428 = vmatpush1.msra.mxu0 0.0
  %7429 = vmatprep.subr.mxu0 0.0
  %7430 = vmatpush1.msra.mxu0 0.0
  %7431 = vmatprep.mubr.f32.mxu0 0.0
  %7432 = vmatmul.mubr.f32.gmra.mrb[0].mxu0 %v3284
  %v7433 = vpop.f32.mrb[0].mxu0
  %v7434 = vadd.f32 0.0, %v7433
  %v7435 = vpop.f32.mrb[0].mxu0
  %v7436 = vadd.f32 0.0, %v7435
  %7437 = vmatprep.mubr.f32.mxu0 0.0
  %7438 = vmatmul.mubr.f32.gmra.mrb[0].mxu0 %v3287
  %v7439 = vpop.f32.mrb[0].mxu0
  %v7440 = vadd.f32 0.0, %v7439
  %v7441 = vpop.f32.mrb[0].mxu0
  %v7442 = vadd.f32 0.0, %v7441
  %7443 = vmatprep.mubr.f32.mxu0 0.0
  %7444 = vmatmul.mubr.f32.gmra.mrb[0].mxu0 %v3290
  %v7445 = vpop.f32.mrb[0].mxu0
  %v7446 = vadd.f32 0.0, %v7445
  %v7447 = vpop.f32.mrb[0].mxu0
  %v7448 = vadd.f32 0.0, %v7447
  %7449 = vmatprep.mubr.f32.mxu0 0.0
  %7450 = vmatmul.mubr.f32.gmra.mrb[0].mxu0 %v3293
  %v7451 = vpop.f32.mrb[0].mxu0
  %v7452 = vadd.f32 0.0, %v7451
  %v7453 = vpop.f32.mrb[0].mxu0
  %v7454 = vadd.f32 0.0, %v7453
  %7455 = vdwg.mxu0
  %7456 = vmatprep.subr.mxu0 %v7173
  %7457 = vmatpush1.msra.mxu0 %v7171
  %7458 = vmatprep.subr.mxu0 %v7177
  %7459 = vmatpush1.msra.mxu0 %v7175
  %7460 = vmatprep.subr.mxu0 %v7183
  %7461 = vmatpush1.msra.mxu0 %v7181
  %7462 = vmatprep.subr.mxu0 %v7187
  %7463 = vmatpush1.msra.mxu0 %v7185
  %7464 = vmatprep.subr.mxu0 0.0
  %7465 = vmatpush1.msra.mxu0 0.0
  %7466 = vmatprep.subr.mxu0 0.0
  %7467 = vmatpush1.msra.mxu0 0.0
  %7468 = vmatprep.subr.mxu0 0.0
  %7469 = vmatpush1.msra.mxu0 0.0
  %7470 = vmatprep.subr.mxu0 0.0
  %7471 = vmatpush1.msra.mxu0 0.0
  %7472 = vmatprep.subr.mxu0 0.0
  %7473 = vmatpush1.msra.mxu0 0.0
  %7474 = vmatprep.subr.mxu0 0.0
  %7475 = vmatpush1.msra.mxu0 0.0
  %7476 = vmatprep.subr.mxu0 0.0
  %7477 = vmatpush1.msra.mxu0 0.0
  %7478 = vmatprep.subr.mxu0 0.0
  %7479 = vmatpush1.msra.mxu0 0.0
  %7480 = vmatprep.subr.mxu0 0.0
  %7481 = vmatpush1.msra.mxu0 0.0
  %7482 = vmatprep.subr.mxu0 0.0
  %7483 = vmatpush1.msra.mxu0 0.0
  %7484 = vmatprep.subr.mxu0 0.0
  %7485 = vmatpush1.msra.mxu0 0.0
  %7486 = vmatprep.subr.mxu0 0.0
  %7487 = vmatpush1.msra.mxu0 0.0
  %7488 = vmatprep.subr.mxu0 0.0
  %7489 = vmatpush1.msra.mxu0 0.0
  %7490 = vmatprep.subr.mxu0 0.0
  %7491 = vmatpush1.msra.mxu0 0.0
  %7492 = vmatprep.subr.mxu0 0.0
  %7493 = vmatpush1.msra.mxu0 0.0
  %7494 = vmatprep.subr.mxu0 0.0
  %7495 = vmatpush1.msra.mxu0 0.0
  %7496 = vmatprep.subr.mxu0 0.0
  %7497 = vmatpush1.msra.mxu0 0.0
  %7498 = vmatprep.subr.mxu0 0.0
  %7499 = vmatpush1.msra.mxu0 0.0
  %7500 = vmatprep.subr.mxu0 0.0
  %7501 = vmatpush1.msra.mxu0 0.0
  %7502 = vmatprep.subr.mxu0 0.0
  %7503 = vmatpush1.msra.mxu0 0.0
  %7504 = vmatprep.subr.mxu0 0.0
  %7505 = vmatpush1.msra.mxu0 0.0
  %7506 = vmatprep.subr.mxu0 0.0
  %7507 = vmatpush1.msra.mxu0 0.0
  %7508 = vmatprep.subr.mxu0 0.0
  %7509 = vmatpush1.msra.mxu0 0.0
  %7510 = vmatprep.subr.mxu0 0.0
  %7511 = vmatpush1.msra.mxu0 0.0
  %7512 = vmatprep.subr.mxu0 0.0
  %7513 = vmatpush1.msra.mxu0 0.0
  %7514 = vmatprep.subr.mxu0 0.0
  %7515 = vmatpush1.msra.mxu0 0.0
  %7516 = vmatprep.subr.mxu0 0.0
  %7517 = vmatpush1.msra.mxu0 0.0
  %7518 = vmatprep.subr.mxu0 0.0
  %7519 = vmatpush1.msra.mxu0 0.0
  %7520 = vmatprep.mubr.f32.mxu0 0.0
  %7521 = vmatmul.mubr.f32.gmra.mrb[0].mxu0 %v3284
  %v7522 = vpop.f32.mrb[0].mxu0
  %v7523 = vadd.f32 0.0, %v7522
  %v7524 = vpop.f32.mrb[0].mxu0
  %v7525 = vadd.f32 0.0, %v7524
  %7526 = vmatprep.mubr.f32.mxu0 0.0
  %7527 = vmatmul.mubr.f32.gmra.mrb[0].mxu0 %v3287
  %v7528 = vpop.f32.mrb[0].mxu0
  %v7529 = vadd.f32 0.0, %v7528
  %v7530 = vpop.f32.mrb[0].mxu0
  %v7531 = vadd.f32 0.0, %v7530
  %7532 = vmatprep.mubr.f32.mxu0 0.0
  %7533 = vmatmul.mubr.f32.gmra.mrb[0].mxu0 %v3290
  %v7534 = vpop.f32.mrb[0].mxu0
  %v7535 = vadd.f32 0.0, %v7534
  %v7536 = vpop.f32.mrb[0].mxu0
  %v7537 = vadd.f32 0.0, %v7536
  %7538 = vmatprep.mubr.f32.mxu0 0.0
  %7539 = vmatmul.mubr.f32.gmra.mrb[0].mxu0 %v3293
  %v7540 = vpop.f32.mrb[0].mxu0
  %v7541 = vadd.f32 0.0, %v7540
  %v7542 = vpop.f32.mrb[0].mxu0
  %v7543 = vadd.f32 0.0, %v7542
  %7544 = vdwg.mxu0
  %v7545 = vadd.f32 %v7256, %v7434
  %v7546 = vadd.f32 %v7258, %v7436
  %v7547 = vadd.f32 %v7345, %v7523
  %v7548 = vadd.f32 %v7347, %v7525
  %v7549 = vadd.f32 %v7262, %v7440
  %v7550 = vadd.f32 %v7264, %v7442
  %v7551 = vadd.f32 %v7351, %v7529
  %v7552 = vadd.f32 %v7353, %v7531
  %v7553 = vadd.f32 %v7268, %v7446
  %v7554 = vadd.f32 %v7270, %v7448
  %v7555 = vadd.f32 %v7357, %v7535
  %v7556 = vadd.f32 %v7359, %v7537
  %v7557 = vadd.f32 %v7274, %v7452
  %v7558 = vadd.f32 %v7276, %v7454
  %v7559 = vadd.f32 %v7363, %v7541
  %v7560 = vadd.f32 %v7365, %v7543
  %v7561 = vadd.f32 %v7545, %v7549
  %v7562 = vadd.f32 %v7561, %v7553
  %v7563 = vadd.f32 %v7562, %v7557
  %v7564 = vrot.slane %v7563, 4
  %v7565 = vadd.f32 %v7563, %v7564
  %v7566 = vrot.slane %v7565, 2
  %v7567 = vadd.f32 %v7565, %v7566
  %v7568 = vrot.slane %v7567, 1
  %v7569 = vadd.f32 %v7567, %v7568
  %v7570 = vadd.f32 %v7546, %v7550
  %v7571 = vadd.f32 %v7570, %v7554
  %v7572 = vadd.f32 %v7571, %v7558
  %v7573 = vrot.slane %v7572, 4
  %v7574 = vadd.f32 %v7572, %v7573
  %v7575 = vrot.slane %v7574, 2
  %v7576 = vadd.f32 %v7574, %v7575
  %v7577 = vrot.slane %v7576, 1
  %v7578 = vadd.f32 %v7576, %v7577
  %v7579 = vadd.f32 %v7547, %v7551
  %v7580 = vadd.f32 %v7579, %v7555
  %v7581 = vadd.f32 %v7580, %v7559
  %v7582 = vrot.slane %v7581, 4
  %v7583 = vadd.f32 %v7581, %v7582
  %v7584 = vrot.slane %v7583, 2
  %v7585 = vadd.f32 %v7583, %v7584
  %v7586 = vrot.slane %v7585, 1
  %v7587 = vadd.f32 %v7585, %v7586
  %v7588 = vadd.f32 %v7548, %v7552
  %v7589 = vadd.f32 %v7588, %v7556
  %v7590 = vadd.f32 %v7589, %v7560
  %v7591 = vrot.slane %v7590, 4
  %v7592 = vadd.f32 %v7590, %v7591
  %v7593 = vrot.slane %v7592, 2
  %v7594 = vadd.f32 %v7592, %v7593
  %v7595 = vrot.slane %v7594, 1
  %v7596 = vadd.f32 %v7594, %v7595
  %v7597 = vmul.f32 %v7545, %v7545
  %v7598 = vmul.f32 %v7546, %v7546
  %v7599 = vmul.f32 %v7547, %v7547
  %v7600 = vmul.f32 %v7548, %v7548
  %v7601 = vmul.f32 %v7549, %v7549
  %v7602 = vmul.f32 %v7550, %v7550
  %v7603 = vmul.f32 %v7551, %v7551
  %v7604 = vmul.f32 %v7552, %v7552
  %v7605 = vmul.f32 %v7553, %v7553
  %v7606 = vmul.f32 %v7554, %v7554
  %v7607 = vmul.f32 %v7555, %v7555
  %v7608 = vmul.f32 %v7556, %v7556
  %v7609 = vmul.f32 %v7557, %v7557
  %v7610 = vmul.f32 %v7558, %v7558
  %v7611 = vmul.f32 %v7559, %v7559
  %v7612 = vmul.f32 %v7560, %v7560
  %v7613 = vadd.f32 %v7597, %v7601
  %v7614 = vadd.f32 %v7613, %v7605
  %v7615 = vadd.f32 %v7614, %v7609
  %v7616 = vrot.slane %v7615, 4
  %v7617 = vadd.f32 %v7615, %v7616
  %v7618 = vrot.slane %v7617, 2
  %v7619 = vadd.f32 %v7617, %v7618
  %v7620 = vrot.slane %v7619, 1
  %v7621 = vadd.f32 %v7619, %v7620
  %v7622 = vadd.f32 %v7598, %v7602
  %v7623 = vadd.f32 %v7622, %v7606
  %v7624 = vadd.f32 %v7623, %v7610
  %v7625 = vrot.slane %v7624, 4
  %v7626 = vadd.f32 %v7624, %v7625
  %v7627 = vrot.slane %v7626, 2
  %v7628 = vadd.f32 %v7626, %v7627
  %v7629 = vrot.slane %v7628, 1
  %v7630 = vadd.f32 %v7628, %v7629
  %v7631 = vadd.f32 %v7599, %v7603
  %v7632 = vadd.f32 %v7631, %v7607
  %v7633 = vadd.f32 %v7632, %v7611
  %v7634 = vrot.slane %v7633, 4
  %v7635 = vadd.f32 %v7633, %v7634
  %v7636 = vrot.slane %v7635, 2
  %v7637 = vadd.f32 %v7635, %v7636
  %v7638 = vrot.slane %v7637, 1
  %v7639 = vadd.f32 %v7637, %v7638
  %v7640 = vadd.f32 %v7600, %v7604
  %v7641 = vadd.f32 %v7640, %v7608
  %v7642 = vadd.f32 %v7641, %v7612
  %v7643 = vrot.slane %v7642, 4
  %v7644 = vadd.f32 %v7642, %v7643
  %v7645 = vrot.slane %v7644, 2
  %v7646 = vadd.f32 %v7644, %v7645
  %v7647 = vrot.slane %v7646, 1
  %v7648 = vadd.f32 %v7646, %v7647
  %7649 = vmatprep.subr.mxu0 0.0
  %7650 = vmatpush1.msra.mxu0 %v62
  %7651 = vmatprep.subr.mxu0 0.0
  %7652 = vmatpush1.msra.mxu0 %v63
  %7653 = vmatprep.subr.mxu0 0.0
  %7654 = vmatpush1.msra.mxu0 %v64
  %7655 = vmatprep.subr.mxu0 0.0
  %7656 = vmatpush1.msra.mxu0 %v65
  %7657 = vmatprep.subr.mxu0 0.0
  %7658 = vmatpush1.msra.mxu0 %v66
  %7659 = vmatprep.subr.mxu0 0.0
  %7660 = vmatpush1.msra.mxu0 %v67
  %7661 = vmatprep.subr.mxu0 0.0
  %7662 = vmatpush1.msra.mxu0 %v68
  %7663 = vmatprep.subr.mxu0 0.0
  %7664 = vmatpush1.msra.mxu0 %v69
  %7665 = vmatprep.subr.mxu0 0.0
  %7666 = vmatpush1.msra.mxu0 %v70
  %7667 = vmatprep.subr.mxu0 0.0
  %7668 = vmatpush1.msra.mxu0 %v71
  %7669 = vmatprep.subr.mxu0 0.0
  %7670 = vmatpush1.msra.mxu0 %v72
  %7671 = vmatprep.subr.mxu0 0.0
  %7672 = vmatpush1.msra.mxu0 %v73
  %7673 = vmatprep.subr.mxu0 0.0
  %7674 = vmatpush1.msra.mxu0 %v74
  %7675 = vmatprep.subr.mxu0 0.0
  %7676 = vmatpush1.msra.mxu0 %v75
  %7677 = vmatprep.subr.mxu0 0.0
  %7678 = vmatpush1.msra.mxu0 %v76
  %7679 = vmatprep.subr.mxu0 0.0
  %7680 = vmatpush1.msra.mxu0 %v77
  %7681 = vmatprep.subr.mxu0 0.0
  %7682 = vmatpush1.msra.mxu0 %v78
  %7683 = vmatprep.subr.mxu0 0.0
  %7684 = vmatpush1.msra.mxu0 %v79
  %7685 = vmatprep.subr.mxu0 0.0
  %7686 = vmatpush1.msra.mxu0 %v80
  %7687 = vmatprep.subr.mxu0 0.0
  %7688 = vmatpush1.msra.mxu0 %v81
  %7689 = vmatprep.subr.mxu0 0.0
  %7690 = vmatpush1.msra.mxu0 %v82
  %7691 = vmatprep.subr.mxu0 0.0
  %7692 = vmatpush1.msra.mxu0 %v83
  %7693 = vmatprep.subr.mxu0 0.0
  %7694 = vmatpush1.msra.mxu0 %v84
  %7695 = vmatprep.subr.mxu0 0.0
  %7696 = vmatpush1.msra.mxu0 %v85
  %7697 = vmatprep.subr.mxu0 0.0
  %7698 = vmatpush1.msra.mxu0 %v86
  %7699 = vmatprep.subr.mxu0 0.0
  %7700 = vmatpush1.msra.mxu0 %v87
  %7701 = vmatprep.subr.mxu0 0.0
  %7702 = vmatpush1.msra.mxu0 %v88
  %7703 = vmatprep.subr.mxu0 0.0
  %7704 = vmatpush1.msra.mxu0 %v89
  %7705 = vmatprep.subr.mxu0 0.0
  %7706 = vmatpush1.msra.mxu0 %v90
  %7707 = vmatprep.subr.mxu0 0.0
  %7708 = vmatpush1.msra.mxu0 %v91
  %7709 = vmatprep.subr.mxu0 0.0
  %7710 = vmatpush1.msra.mxu0 %v92
  %7711 = vmatprep.subr.mxu0 0.0
  %7712 = vmatpush1.msra.mxu0 %v93
  %7713 = vmatprep.mubr.f32.mxu0 %v7578
  %7714 = vmatmul.mubr.f32.gmra.mrb[0].mxu0 %v7569
  %v7715 = vpop.f32.mrb[0].mxu0
  %v7716 = vadd.f32 0.0, %v7715
  %v7717 = vpop.f32.mrb[0].mxu0
  %7718 = vdwg.mxu0
  %7719 = vmatprep.subr.mxu0 0.0
  %7720 = vmatpush1.msra.mxu0 %v94
  %7721 = vmatprep.subr.mxu0 0.0
  %7722 = vmatpush1.msra.mxu0 %v95
  %7723 = vmatprep.subr.mxu0 0.0
  %7724 = vmatpush1.msra.mxu0 %v96
  %7725 = vmatprep.subr.mxu0 0.0
  %7726 = vmatpush1.msra.mxu0 %v97
  %7727 = vmatprep.subr.mxu0 0.0
  %7728 = vmatpush1.msra.mxu0 %v98
  %7729 = vmatprep.subr.mxu0 0.0
  %7730 = vmatpush1.msra.mxu0 %v99
  %7731 = vmatprep.subr.mxu0 0.0
  %7732 = vmatpush1.msra.mxu0 %v100
  %7733 = vmatprep.subr.mxu0 0.0
  %7734 = vmatpush1.msra.mxu0 %v101
  %7735 = vmatprep.subr.mxu0 0.0
  %7736 = vmatpush1.msra.mxu0 %v102
  %7737 = vmatprep.subr.mxu0 0.0
  %7738 = vmatpush1.msra.mxu0 %v103
  %7739 = vmatprep.subr.mxu0 0.0
  %7740 = vmatpush1.msra.mxu0 %v104
  %7741 = vmatprep.subr.mxu0 0.0
  %7742 = vmatpush1.msra.mxu0 %v105
  %7743 = vmatprep.subr.mxu0 0.0
  %7744 = vmatpush1.msra.mxu0 %v106
  %7745 = vmatprep.subr.mxu0 0.0
  %7746 = vmatpush1.msra.mxu0 %v107
  %7747 = vmatprep.subr.mxu0 0.0
  %7748 = vmatpush1.msra.mxu0 %v108
  %7749 = vmatprep.subr.mxu0 0.0
  %7750 = vmatpush1.msra.mxu0 %v109
  %7751 = vmatprep.subr.mxu0 0.0
  %7752 = vmatpush1.msra.mxu0 %v110
  %7753 = vmatprep.subr.mxu0 0.0
  %7754 = vmatpush1.msra.mxu0 %v111
  %7755 = vmatprep.subr.mxu0 0.0
  %7756 = vmatpush1.msra.mxu0 %v112
  %7757 = vmatprep.subr.mxu0 0.0
  %7758 = vmatpush1.msra.mxu0 %v113
  %7759 = vmatprep.subr.mxu0 0.0
  %7760 = vmatpush1.msra.mxu0 %v114
  %7761 = vmatprep.subr.mxu0 0.0
  %7762 = vmatpush1.msra.mxu0 %v115
  %7763 = vmatprep.subr.mxu0 0.0
  %7764 = vmatpush1.msra.mxu0 %v116
  %7765 = vmatprep.subr.mxu0 0.0
  %7766 = vmatpush1.msra.mxu0 %v117
  %7767 = vmatprep.subr.mxu0 0.0
  %7768 = vmatpush1.msra.mxu0 %v118
  %7769 = vmatprep.subr.mxu0 0.0
  %7770 = vmatpush1.msra.mxu0 %v119
  %7771 = vmatprep.subr.mxu0 0.0
  %7772 = vmatpush1.msra.mxu0 %v120
  %7773 = vmatprep.subr.mxu0 0.0
  %7774 = vmatpush1.msra.mxu0 %v121
  %7775 = vmatprep.subr.mxu0 0.0
  %7776 = vmatpush1.msra.mxu0 %v122
  %7777 = vmatprep.subr.mxu0 0.0
  %7778 = vmatpush1.msra.mxu0 %v123
  %7779 = vmatprep.subr.mxu0 0.0
  %7780 = vmatpush1.msra.mxu0 %v124
  %7781 = vmatprep.subr.mxu0 0.0
  %7782 = vmatpush1.msra.mxu0 %v125
  %7783 = vmatprep.mubr.f32.mxu0 %v7596
  %7784 = vmatmul.mubr.f32.gmra.mrb[0].mxu0 %v7587
  %v7785 = vpop.f32.mrb[0].mxu0
  %v7786 = vadd.f32 %v7716, %v7785
  %v7787 = vpop.f32.mrb[0].mxu0
  %7788 = vdwg.mxu0
  %7789 = vmatprep.subr.mxu0 0.0
  %7790 = vmatpush1.msra.mxu0 %v62
  %7791 = vmatprep.subr.mxu0 0.0
  %7792 = vmatpush1.msra.mxu0 %v63
  %7793 = vmatprep.subr.mxu0 0.0
  %7794 = vmatpush1.msra.mxu0 %v64
  %7795 = vmatprep.subr.mxu0 0.0
  %7796 = vmatpush1.msra.mxu0 %v65
  %7797 = vmatprep.subr.mxu0 0.0
  %7798 = vmatpush1.msra.mxu0 %v66
  %7799 = vmatprep.subr.mxu0 0.0
  %7800 = vmatpush1.msra.mxu0 %v67
  %7801 = vmatprep.subr.mxu0 0.0
  %7802 = vmatpush1.msra.mxu0 %v68
  %7803 = vmatprep.subr.mxu0 0.0
  %7804 = vmatpush1.msra.mxu0 %v69
  %7805 = vmatprep.subr.mxu0 0.0
  %7806 = vmatpush1.msra.mxu0 %v70
  %7807 = vmatprep.subr.mxu0 0.0
  %7808 = vmatpush1.msra.mxu0 %v71
  %7809 = vmatprep.subr.mxu0 0.0
  %7810 = vmatpush1.msra.mxu0 %v72
  %7811 = vmatprep.subr.mxu0 0.0
  %7812 = vmatpush1.msra.mxu0 %v73
  %7813 = vmatprep.subr.mxu0 0.0
  %7814 = vmatpush1.msra.mxu0 %v74
  %7815 = vmatprep.subr.mxu0 0.0
  %7816 = vmatpush1.msra.mxu0 %v75
  %7817 = vmatprep.subr.mxu0 0.0
  %7818 = vmatpush1.msra.mxu0 %v76
  %7819 = vmatprep.subr.mxu0 0.0
  %7820 = vmatpush1.msra.mxu0 %v77
  %7821 = vmatprep.subr.mxu0 0.0
  %7822 = vmatpush1.msra.mxu0 %v78
  %7823 = vmatprep.subr.mxu0 0.0
  %7824 = vmatpush1.msra.mxu0 %v79
  %7825 = vmatprep.subr.mxu0 0.0
  %7826 = vmatpush1.msra.mxu0 %v80
  %7827 = vmatprep.subr.mxu0 0.0
  %7828 = vmatpush1.msra.mxu0 %v81
  %7829 = vmatprep.subr.mxu0 0.0
  %7830 = vmatpush1.msra.mxu0 %v82
  %7831 = vmatprep.subr.mxu0 0.0
  %7832 = vmatpush1.msra.mxu0 %v83
  %7833 = vmatprep.subr.mxu0 0.0
  %7834 = vmatpush1.msra.mxu0 %v84
  %7835 = vmatprep.subr.mxu0 0.0
  %7836 = vmatpush1.msra.mxu0 %v85
  %7837 = vmatprep.subr.mxu0 0.0
  %7838 = vmatpush1.msra.mxu0 %v86
  %7839 = vmatprep.subr.mxu0 0.0
  %7840 = vmatpush1.msra.mxu0 %v87
  %7841 = vmatprep.subr.mxu0 0.0
  %7842 = vmatpush1.msra.mxu0 %v88
  %7843 = vmatprep.subr.mxu0 0.0
  %7844 = vmatpush1.msra.mxu0 %v89
  %7845 = vmatprep.subr.mxu0 0.0
  %7846 = vmatpush1.msra.mxu0 %v90
  %7847 = vmatprep.subr.mxu0 0.0
  %7848 = vmatpush1.msra.mxu0 %v91
  %7849 = vmatprep.subr.mxu0 0.0
  %7850 = vmatpush1.msra.mxu0 %v92
  %7851 = vmatprep.subr.mxu0 0.0
  %7852 = vmatpush1.msra.mxu0 %v93
  %7853 = vmatprep.mubr.f32.mxu0 %v7630
  %7854 = vmatmul.mubr.f32.gmra.mrb[0].mxu0 %v7621
  %v7855 = vpop.f32.mrb[0].mxu0
  %v7856 = vadd.f32 0.0, %v7855
  %v7857 = vpop.f32.mrb[0].mxu0
  %7858 = vdwg.mxu0
  %7859 = vmatprep.subr.mxu0 0.0
  %7860 = vmatpush1.msra.mxu0 %v94
  %7861 = vmatprep.subr.mxu0 0.0
  %7862 = vmatpush1.msra.mxu0 %v95
  %7863 = vmatprep.subr.mxu0 0.0
  %7864 = vmatpush1.msra.mxu0 %v96
  %7865 = vmatprep.subr.mxu0 0.0
  %7866 = vmatpush1.msra.mxu0 %v97
  %7867 = vmatprep.subr.mxu0 0.0
  %7868 = vmatpush1.msra.mxu0 %v98
  %7869 = vmatprep.subr.mxu0 0.0
  %7870 = vmatpush1.msra.mxu0 %v99
  %7871 = vmatprep.subr.mxu0 0.0
  %7872 = vmatpush1.msra.mxu0 %v100
  %7873 = vmatprep.subr.mxu0 0.0
  %7874 = vmatpush1.msra.mxu0 %v101
  %7875 = vmatprep.subr.mxu0 0.0
  %7876 = vmatpush1.msra.mxu0 %v102
  %7877 = vmatprep.subr.mxu0 0.0
  %7878 = vmatpush1.msra.mxu0 %v103
  %7879 = vmatprep.subr.mxu0 0.0
  %7880 = vmatpush1.msra.mxu0 %v104
  %7881 = vmatprep.subr.mxu0 0.0
  %7882 = vmatpush1.msra.mxu0 %v105
  %7883 = vmatprep.subr.mxu0 0.0
  %7884 = vmatpush1.msra.mxu0 %v106
  %7885 = vmatprep.subr.mxu0 0.0
  %7886 = vmatpush1.msra.mxu0 %v107
  %7887 = vmatprep.subr.mxu0 0.0
  %7888 = vmatpush1.msra.mxu0 %v108
  %7889 = vmatprep.subr.mxu0 0.0
  %7890 = vmatpush1.msra.mxu0 %v109
  %7891 = vmatprep.subr.mxu0 0.0
  %7892 = vmatpush1.msra.mxu0 %v110
  %7893 = vmatprep.subr.mxu0 0.0
  %7894 = vmatpush1.msra.mxu0 %v111
  %7895 = vmatprep.subr.mxu0 0.0
  %7896 = vmatpush1.msra.mxu0 %v112
  %7897 = vmatprep.subr.mxu0 0.0
  %7898 = vmatpush1.msra.mxu0 %v113
  %7899 = vmatprep.subr.mxu0 0.0
  %7900 = vmatpush1.msra.mxu0 %v114
  %7901 = vmatprep.subr.mxu0 0.0
  %7902 = vmatpush1.msra.mxu0 %v115
  %7903 = vmatprep.subr.mxu0 0.0
  %7904 = vmatpush1.msra.mxu0 %v116
  %7905 = vmatprep.subr.mxu0 0.0
  %7906 = vmatpush1.msra.mxu0 %v117
  %7907 = vmatprep.subr.mxu0 0.0
  %7908 = vmatpush1.msra.mxu0 %v118
  %7909 = vmatprep.subr.mxu0 0.0
  %7910 = vmatpush1.msra.mxu0 %v119
  %7911 = vmatprep.subr.mxu0 0.0
  %7912 = vmatpush1.msra.mxu0 %v120
  %7913 = vmatprep.subr.mxu0 0.0
  %7914 = vmatpush1.msra.mxu0 %v121
  %7915 = vmatprep.subr.mxu0 0.0
  %7916 = vmatpush1.msra.mxu0 %v122
  %7917 = vmatprep.subr.mxu0 0.0
  %7918 = vmatpush1.msra.mxu0 %v123
  %7919 = vmatprep.subr.mxu0 0.0
  %7920 = vmatpush1.msra.mxu0 %v124
  %7921 = vmatprep.subr.mxu0 0.0
  %7922 = vmatpush1.msra.mxu0 %v125
  %7923 = vmatprep.mubr.f32.mxu0 %v7648
  %7924 = vmatmul.mubr.f32.gmra.mrb[0].mxu0 %v7639
  %v7925 = vpop.f32.mrb[0].mxu0
  %v7926 = vadd.f32 %v7856, %v7925
  %v7927 = vpop.f32.mrb[0].mxu0
  %7928 = vdwg.mxu0
  %v7929 = vmul.f32 %v7786, 0.001953125
  %v7930 = vmul.f32 %v7926, 0.001953125
  %v7931 = vmul.f32 %v7929, %v7929
  %v7932 = vsub.f32 %v7930, %v7931
  %v7933 = vmax.f32 %v7932, 0.0
  %v7934 = vld [vmem:[%s9] sm:$0x1]
  %v7935 = vadd.f32 %v7933, 1e-05
  %v7936 = vrsqrt.pop %v7935
  %v7937 = vmul.f32 %v7934, %v7936
  %v7938 = vld [vmem:[%s10] sm:$0x1]
  %v7939 = vmul.f32 %v7929, %v7937
  %v7940 = vsub.f32 %v7938, %v7939
  %v7942 = vsel %vm3092, %v7937, 0
  %7944 = vmatprep.subr.mxu0 %v127
  %7945 = vmatpush1.msra.mxu0 %v126
  %7946 = vmatprep.subr.mxu0 %v131
  %7947 = vmatpush1.msra.mxu0 %v130
  %7948 = vmatprep.subr.mxu0 %v135
  %7949 = vmatpush1.msra.mxu0 %v134
  %7950 = vmatprep.subr.mxu0 %v139
  %7951 = vmatpush1.msra.mxu0 %v138
  %7952 = vmatprep.subr.mxu0 0.0
  %7953 = vmatpush1.msra.mxu0 0.0
  %7954 = vmatprep.subr.mxu0 0.0
  %7955 = vmatpush1.msra.mxu0 0.0
  %7956 = vmatprep.subr.mxu0 0.0
  %7957 = vmatpush1.msra.mxu0 0.0
  %7958 = vmatprep.subr.mxu0 0.0
  %7959 = vmatpush1.msra.mxu0 0.0
  %7960 = vmatprep.subr.mxu0 0.0
  %7961 = vmatpush1.msra.mxu0 0.0
  %7962 = vmatprep.subr.mxu0 0.0
  %7963 = vmatpush1.msra.mxu0 0.0
  %7964 = vmatprep.subr.mxu0 0.0
  %7965 = vmatpush1.msra.mxu0 0.0
  %7966 = vmatprep.subr.mxu0 0.0
  %7967 = vmatpush1.msra.mxu0 0.0
  %7968 = vmatprep.subr.mxu0 0.0
  %7969 = vmatpush1.msra.mxu0 0.0
  %7970 = vmatprep.subr.mxu0 0.0
  %7971 = vmatpush1.msra.mxu0 0.0
  %7972 = vmatprep.subr.mxu0 0.0
  %7973 = vmatpush1.msra.mxu0 0.0
  %7974 = vmatprep.subr.mxu0 0.0
  %7975 = vmatpush1.msra.mxu0 0.0
  %7976 = vmatprep.subr.mxu0 0.0
  %7977 = vmatpush1.msra.mxu0 0.0
  %7978 = vmatprep.subr.mxu0 0.0
  %7979 = vmatpush1.msra.mxu0 0.0
  %7980 = vmatprep.subr.mxu0 0.0
  %7981 = vmatpush1.msra.mxu0 0.0
  %7982 = vmatprep.subr.mxu0 0.0
  %7983 = vmatpush1.msra.mxu0 0.0
  %7984 = vmatprep.subr.mxu0 0.0
  %7985 = vmatpush1.msra.mxu0 0.0
  %7986 = vmatprep.subr.mxu0 0.0
  %7987 = vmatpush1.msra.mxu0 0.0
  %7988 = vmatprep.subr.mxu0 0.0
  %7989 = vmatpush1.msra.mxu0 0.0
  %7990 = vmatprep.subr.mxu0 0.0
  %7991 = vmatpush1.msra.mxu0 0.0
  %7992 = vmatprep.subr.mxu0 0.0
  %7993 = vmatpush1.msra.mxu0 0.0
  %7994 = vmatprep.subr.mxu0 0.0
  %7995 = vmatpush1.msra.mxu0 0.0
  %7996 = vmatprep.subr.mxu0 0.0
  %7997 = vmatpush1.msra.mxu0 0.0
  %7998 = vmatprep.subr.mxu0 0.0
  %7999 = vmatpush1.msra.mxu0 0.0
  %8000 = vmatprep.subr.mxu0 0.0
  %8001 = vmatpush1.msra.mxu0 0.0
  %8002 = vmatprep.subr.mxu0 0.0
  %8003 = vmatpush1.msra.mxu0 0.0
  %8004 = vmatprep.subr.mxu0 0.0
  %8005 = vmatpush1.msra.mxu0 0.0
  %8006 = vmatprep.subr.mxu0 0.0
  %8007 = vmatpush1.msra.mxu0 0.0
  %8008 = vmatprep.mubr.f32.mxu0 0.0
  %8009 = vmatmul.mubr.f32.gmra.mrb[0].mxu0 %v7942
  %v8010 = vpop.f32.mrb[0].mxu0
  %v8011 = vadd.f32 0.0, %v8010
  %v8012 = vpop.f32.mrb[0].mxu0
  %v8013 = vadd.f32 0.0, %v8012
  %8014 = vdwg.mxu0
  %8015 = vmatprep.subr.mxu0 %v129
  %8016 = vmatpush1.msra.mxu0 %v128
  %8017 = vmatprep.subr.mxu0 %v133
  %8018 = vmatpush1.msra.mxu0 %v132
  %8019 = vmatprep.subr.mxu0 %v137
  %8020 = vmatpush1.msra.mxu0 %v136
  %8021 = vmatprep.subr.mxu0 %v141
  %8022 = vmatpush1.msra.mxu0 %v140
  %8023 = vmatprep.subr.mxu0 0.0
  %8024 = vmatpush1.msra.mxu0 0.0
  %8025 = vmatprep.subr.mxu0 0.0
  %8026 = vmatpush1.msra.mxu0 0.0
  %8027 = vmatprep.subr.mxu0 0.0
  %8028 = vmatpush1.msra.mxu0 0.0
  %8029 = vmatprep.subr.mxu0 0.0
  %8030 = vmatpush1.msra.mxu0 0.0
  %8031 = vmatprep.subr.mxu0 0.0
  %8032 = vmatpush1.msra.mxu0 0.0
  %8033 = vmatprep.subr.mxu0 0.0
  %8034 = vmatpush1.msra.mxu0 0.0
  %8035 = vmatprep.subr.mxu0 0.0
  %8036 = vmatpush1.msra.mxu0 0.0
  %8037 = vmatprep.subr.mxu0 0.0
  %8038 = vmatpush1.msra.mxu0 0.0
  %8039 = vmatprep.subr.mxu0 0.0
  %8040 = vmatpush1.msra.mxu0 0.0
  %8041 = vmatprep.subr.mxu0 0.0
  %8042 = vmatpush1.msra.mxu0 0.0
  %8043 = vmatprep.subr.mxu0 0.0
  %8044 = vmatpush1.msra.mxu0 0.0
  %8045 = vmatprep.subr.mxu0 0.0
  %8046 = vmatpush1.msra.mxu0 0.0
  %8047 = vmatprep.subr.mxu0 0.0
  %8048 = vmatpush1.msra.mxu0 0.0
  %8049 = vmatprep.subr.mxu0 0.0
  %8050 = vmatpush1.msra.mxu0 0.0
  %8051 = vmatprep.subr.mxu0 0.0
  %8052 = vmatpush1.msra.mxu0 0.0
  %8053 = vmatprep.subr.mxu0 0.0
  %8054 = vmatpush1.msra.mxu0 0.0
  %8055 = vmatprep.subr.mxu0 0.0
  %8056 = vmatpush1.msra.mxu0 0.0
  %8057 = vmatprep.subr.mxu0 0.0
  %8058 = vmatpush1.msra.mxu0 0.0
  %8059 = vmatprep.subr.mxu0 0.0
  %8060 = vmatpush1.msra.mxu0 0.0
  %8061 = vmatprep.subr.mxu0 0.0
  %8062 = vmatpush1.msra.mxu0 0.0
  %8063 = vmatprep.subr.mxu0 0.0
  %8064 = vmatpush1.msra.mxu0 0.0
  %8065 = vmatprep.subr.mxu0 0.0
  %8066 = vmatpush1.msra.mxu0 0.0
  %8067 = vmatprep.subr.mxu0 0.0
  %8068 = vmatpush1.msra.mxu0 0.0
  %8069 = vmatprep.subr.mxu0 0.0
  %8070 = vmatpush1.msra.mxu0 0.0
  %8071 = vmatprep.subr.mxu0 0.0
  %8072 = vmatpush1.msra.mxu0 0.0
  %8073 = vmatprep.subr.mxu0 0.0
  %8074 = vmatpush1.msra.mxu0 0.0
  %8075 = vmatprep.subr.mxu0 0.0
  %8076 = vmatpush1.msra.mxu0 0.0
  %8077 = vmatprep.subr.mxu0 0.0
  %8078 = vmatpush1.msra.mxu0 0.0
  %8079 = vmatprep.mubr.f32.mxu0 0.0
  %8080 = vmatmul.mubr.f32.gmra.mrb[0].mxu0 %v7942
  %v8081 = vpop.f32.mrb[0].mxu0
  %v8082 = vadd.f32 0.0, %v8081
  %v8083 = vpop.f32.mrb[0].mxu0
  %v8084 = vadd.f32 0.0, %v8083
  %8085 = vdwg.mxu0
  %v8087 = vsel %vm3092, %v7940, 0
  %8089 = vmatprep.subr.mxu0 %v127
  %8090 = vmatpush1.msra.mxu0 %v126
  %8091 = vmatprep.subr.mxu0 %v131
  %8092 = vmatpush1.msra.mxu0 %v130
  %8093 = vmatprep.subr.mxu0 %v135
  %8094 = vmatpush1.msra.mxu0 %v134
  %8095 = vmatprep.subr.mxu0 %v139
  %8096 = vmatpush1.msra.mxu0 %v138
  %8097 = vmatprep.subr.mxu0 0.0
  %8098 = vmatpush1.msra.mxu0 0.0
  %8099 = vmatprep.subr.mxu0 0.0
  %8100 = vmatpush1.msra.mxu0 0.0
  %8101 = vmatprep.subr.mxu0 0.0
  %8102 = vmatpush1.msra.mxu0 0.0
  %8103 = vmatprep.subr.mxu0 0.0
  %8104 = vmatpush1.msra.mxu0 0.0
  %8105 = vmatprep.subr.mxu0 0.0
  %8106 = vmatpush1.msra.mxu0 0.0
  %8107 = vmatprep.subr.mxu0 0.0
  %8108 = vmatpush1.msra.mxu0 0.0
  %8109 = vmatprep.subr.mxu0 0.0
  %8110 = vmatpush1.msra.mxu0 0.0
  %8111 = vmatprep.subr.mxu0 0.0
  %8112 = vmatpush1.msra.mxu0 0.0
  %8113 = vmatprep.subr.mxu0 0.0
  %8114 = vmatpush1.msra.mxu0 0.0
  %8115 = vmatprep.subr.mxu0 0.0
  %8116 = vmatpush1.msra.mxu0 0.0
  %8117 = vmatprep.subr.mxu0 0.0
  %8118 = vmatpush1.msra.mxu0 0.0
  %8119 = vmatprep.subr.mxu0 0.0
  %8120 = vmatpush1.msra.mxu0 0.0
  %8121 = vmatprep.subr.mxu0 0.0
  %8122 = vmatpush1.msra.mxu0 0.0
  %8123 = vmatprep.subr.mxu0 0.0
  %8124 = vmatpush1.msra.mxu0 0.0
  %8125 = vmatprep.subr.mxu0 0.0
  %8126 = vmatpush1.msra.mxu0 0.0
  %8127 = vmatprep.subr.mxu0 0.0
  %8128 = vmatpush1.msra.mxu0 0.0
  %8129 = vmatprep.subr.mxu0 0.0
  %8130 = vmatpush1.msra.mxu0 0.0
  %8131 = vmatprep.subr.mxu0 0.0
  %8132 = vmatpush1.msra.mxu0 0.0
  %8133 = vmatprep.subr.mxu0 0.0
  %8134 = vmatpush1.msra.mxu0 0.0
  %8135 = vmatprep.subr.mxu0 0.0
  %8136 = vmatpush1.msra.mxu0 0.0
  %8137 = vmatprep.subr.mxu0 0.0
  %8138 = vmatpush1.msra.mxu0 0.0
  %8139 = vmatprep.subr.mxu0 0.0
  %8140 = vmatpush1.msra.mxu0 0.0
  %8141 = vmatprep.subr.mxu0 0.0
  %8142 = vmatpush1.msra.mxu0 0.0
  %8143 = vmatprep.subr.mxu0 0.0
  %8144 = vmatpush1.msra.mxu0 0.0
  %8145 = vmatprep.subr.mxu0 0.0
  %8146 = vmatpush1.msra.mxu0 0.0
  %8147 = vmatprep.subr.mxu0 0.0
  %8148 = vmatpush1.msra.mxu0 0.0
  %8149 = vmatprep.subr.mxu0 0.0
  %8150 = vmatpush1.msra.mxu0 0.0
  %8151 = vmatprep.subr.mxu0 0.0
  %8152 = vmatpush1.msra.mxu0 0.0
  %8153 = vmatprep.mubr.f32.mxu0 0.0
  %8154 = vmatmul.mubr.f32.gmra.mrb[0].mxu0 %v8087
  %v8155 = vpop.f32.mrb[0].mxu0
  %v8156 = vadd.f32 0.0, %v8155
  %v8157 = vpop.f32.mrb[0].mxu0
  %v8158 = vadd.f32 0.0, %v8157
  %8159 = vdwg.mxu0
  %8160 = vmatprep.subr.mxu0 %v129
  %8161 = vmatpush1.msra.mxu0 %v128
  %8162 = vmatprep.subr.mxu0 %v133
  %8163 = vmatpush1.msra.mxu0 %v132
  %8164 = vmatprep.subr.mxu0 %v137
  %8165 = vmatpush1.msra.mxu0 %v136
  %8166 = vmatprep.subr.mxu0 %v141
  %8167 = vmatpush1.msra.mxu0 %v140
  %8168 = vmatprep.subr.mxu0 0.0
  %8169 = vmatpush1.msra.mxu0 0.0
  %8170 = vmatprep.subr.mxu0 0.0
  %8171 = vmatpush1.msra.mxu0 0.0
  %8172 = vmatprep.subr.mxu0 0.0
  %8173 = vmatpush1.msra.mxu0 0.0
  %8174 = vmatprep.subr.mxu0 0.0
  %8175 = vmatpush1.msra.mxu0 0.0
  %8176 = vmatprep.subr.mxu0 0.0
  %8177 = vmatpush1.msra.mxu0 0.0
  %8178 = vmatprep.subr.mxu0 0.0
  %8179 = vmatpush1.msra.mxu0 0.0
  %8180 = vmatprep.subr.mxu0 0.0
  %8181 = vmatpush1.msra.mxu0 0.0
  %8182 = vmatprep.subr.mxu0 0.0
  %8183 = vmatpush1.msra.mxu0 0.0
  %8184 = vmatprep.subr.mxu0 0.0
  %8185 = vmatpush1.msra.mxu0 0.0
  %8186 = vmatprep.subr.mxu0 0.0
  %8187 = vmatpush1.msra.mxu0 0.0
  %8188 = vmatprep.subr.mxu0 0.0
  %8189 = vmatpush1.msra.mxu0 0.0
  %8190 = vmatprep.subr.mxu0 0.0
  %8191 = vmatpush1.msra.mxu0 0.0
  %8192 = vmatprep.subr.mxu0 0.0
  %8193 = vmatpush1.msra.mxu0 0.0
  %8194 = vmatprep.subr.mxu0 0.0
  %8195 = vmatpush1.msra.mxu0 0.0
  %8196 = vmatprep.subr.mxu0 0.0
  %8197 = vmatpush1.msra.mxu0 0.0
  %8198 = vmatprep.subr.mxu0 0.0
  %8199 = vmatpush1.msra.mxu0 0.0
  %8200 = vmatprep.subr.mxu0 0.0
  %8201 = vmatpush1.msra.mxu0 0.0
  %8202 = vmatprep.subr.mxu0 0.0
  %8203 = vmatpush1.msra.mxu0 0.0
  %8204 = vmatprep.subr.mxu0 0.0
  %8205 = vmatpush1.msra.mxu0 0.0
  %8206 = vmatprep.subr.mxu0 0.0
  %8207 = vmatpush1.msra.mxu0 0.0
  %8208 = vmatprep.subr.mxu0 0.0
  %8209 = vmatpush1.msra.mxu0 0.0
  %8210 = vmatprep.subr.mxu0 0.0
  %8211 = vmatpush1.msra.mxu0 0.0
  %8212 = vmatprep.subr.mxu0 0.0
  %8213 = vmatpush1.msra.mxu0 0.0
  %8214 = vmatprep.subr.mxu0 0.0
  %8215 = vmatpush1.msra.mxu0 0.0
  %8216 = vmatprep.subr.mxu0 0.0
  %8217 = vmatpush1.msra.mxu0 0.0
  %8218 = vmatprep.subr.mxu0 0.0
  %8219 = vmatpush1.msra.mxu0 0.0
  %8220 = vmatprep.subr.mxu0 0.0
  %8221 = vmatpush1.msra.mxu0 0.0
  %8222 = vmatprep.subr.mxu0 0.0
  %8223 = vmatpush1.msra.mxu0 0.0
  %8224 = vmatprep.mubr.f32.mxu0 0.0
  %8225 = vmatmul.mubr.f32.gmra.mrb[0].mxu0 %v8087
  %v8226 = vpop.f32.mrb[0].mxu0
  %v8227 = vadd.f32 0.0, %v8226
  %v8228 = vpop.f32.mrb[0].mxu0
  %v8229 = vadd.f32 0.0, %v8228
  %8230 = vdwg.mxu0
  %v8231 = vlaneseq
  %v8232 = vshrl.u32 %v8231, 7
  %v8233 = vsub.s32 0, %v8232
  %v8234 = vrot.slane %v8011, %v8233
  %v8235 = vlaneseq
  %v8236 = vshrl.u32 %v8235, 7
  %v8237 = vsub.s32 0, %v8236
  %v8238 = vrot.slane %v8013, %v8237
  %v8239 = vlaneseq
  %v8240 = vshrl.u32 %v8239, 7
  %v8241 = vsub.s32 0, %v8240
  %v8242 = vrot.slane %v8082, %v8241
  %v8243 = vlaneseq
  %v8244 = vshrl.u32 %v8243, 7
  %v8245 = vsub.s32 0, %v8244
  %v8246 = vrot.slane %v8084, %v8245
  %v8247 = vmul.f32 %v7545, %v8234
  %v8248 = vmul.f32 %v7546, %v8238
  %v8249 = vmul.f32 %v7547, %v8242
  %v8250 = vmul.f32 %v7548, %v8246
  %v8251 = vmul.f32 %v7549, %v8234
  %v8252 = vmul.f32 %v7550, %v8238
  %v8253 = vmul.f32 %v7551, %v8242
  %v8254 = vmul.f32 %v7552, %v8246
  %v8255 = vmul.f32 %v7553, %v8234
  %v8256 = vmul.f32 %v7554, %v8238
  %v8257 = vmul.f32 %v7555, %v8242
  %v8258 = vmul.f32 %v7556, %v8246
  %v8259 = vmul.f32 %v7557, %v8234
  %v8260 = vmul.f32 %v7558, %v8238
  %v8261 = vmul.f32 %v7559, %v8242
  %v8262 = vmul.f32 %v7560, %v8246
  %v8263 = vlaneseq
  %v8264 = vshrl.u32 %v8263, 7
  %v8265 = vsub.s32 0, %v8264
  %v8266 = vrot.slane %v8156, %v8265
  %v8267 = vlaneseq
  %v8268 = vshrl.u32 %v8267, 7
  %v8269 = vsub.s32 0, %v8268
  %v8270 = vrot.slane %v8158, %v8269
  %v8271 = vlaneseq
  %v8272 = vshrl.u32 %v8271, 7
  %v8273 = vsub.s32 0, %v8272
  %v8274 = vrot.slane %v8227, %v8273
  %v8275 = vlaneseq
  %v8276 = vshrl.u32 %v8275, 7
  %v8277 = vsub.s32 0, %v8276
  %v8278 = vrot.slane %v8229, %v8277
  %v8279 = vadd.f32 %v8247, %v8266
  %v8280 = vadd.f32 %v8248, %v8270
  %v8281 = vadd.f32 %v8249, %v8274
  %v8282 = vadd.f32 %v8250, %v8278
  %v8283 = vadd.f32 %v8251, %v8266
  %v8284 = vadd.f32 %v8252, %v8270
  %v8285 = vadd.f32 %v8253, %v8274
  %v8286 = vadd.f32 %v8254, %v8278
  %v8287 = vadd.f32 %v8255, %v8266
  %v8288 = vadd.f32 %v8256, %v8270
  %v8289 = vadd.f32 %v8257, %v8274
  %v8290 = vadd.f32 %v8258, %v8278
  %v8291 = vadd.f32 %v8259, %v8266
  %v8292 = vadd.f32 %v8260, %v8270
  %v8293 = vadd.f32 %v8261, %v8274
  %v8294 = vadd.f32 %v8262, %v8278
  %v8295 = vadd.f32 %v8279, %v38
  %v8296 = vadd.f32 %v8280, %v39
  %v8297 = vadd.f32 %v8281, %v40
  %v8298 = vadd.f32 %v8282, %v41
  %v8299 = vadd.f32 %v8283, %v42
  %v8300 = vadd.f32 %v8284, %v43
  %v8301 = vadd.f32 %v8285, %v44
  %v8302 = vadd.f32 %v8286, %v45
  %v8303 = vadd.f32 %v8287, %v46
  %v8304 = vadd.f32 %v8288, %v47
  %v8305 = vadd.f32 %v8289, %v48
  %v8306 = vadd.f32 %v8290, %v49
  %v8307 = vadd.f32 %v8291, %v50
  %v8308 = vadd.f32 %v8292, %v51
  %v8309 = vadd.f32 %v8293, %v52
  %v8310 = vadd.f32 %v8294, %v53
  %v8311 = vmax.f32 %v8295, 0.0
  %v8312 = vmax.f32 %v8296, 0.0
  %v8313 = vmax.f32 %v8297, 0.0
  %v8314 = vmax.f32 %v8298, 0.0
  %v8315 = vmax.f32 %v8299, 0.0
  %v8316 = vmax.f32 %v8300, 0.0
  %v8317 = vmax.f32 %v8301, 0.0
  %v8318 = vmax.f32 %v8302, 0.0
  %v8319 = vmax.f32 %v8303, 0.0
  %v8320 = vmax.f32 %v8304, 0.0
  %v8321 = vmax.f32 %v8305, 0.0
  %v8322 = vmax.f32 %v8306, 0.0
  %v8323 = vmax.f32 %v8307, 0.0
  %v8324 = vmax.f32 %v8308, 0.0
  %v8325 = vmax.f32 %v8309, 0.0
  %v8326 = vmax.f32 %v8310, 0.0
  %8327 = vst [vmem:[%s11] sm:$0xff] %v8311
  %8328 = vst [vmem:[%s11 + $0x8] sm:$0xff] %v8312
  %8329 = vst [vmem:[%s11 + $0x10] sm:$0xff] %v8313
  %8330 = vst [vmem:[%s11 + $0x18] sm:$0xff] %v8314
  %8331 = vst [vmem:[%s11 + $0x20] sm:$0xff] %v8315
  %8332 = vst [vmem:[%s11 + $0x28] sm:$0xff] %v8316
  %8333 = vst [vmem:[%s11 + $0x30] sm:$0xff] %v8317
  %8334 = vst [vmem:[%s11 + $0x38] sm:$0xff] %v8318
  %8335 = vst [vmem:[%s11 + $0x40] sm:$0xff] %v8319
  %8336 = vst [vmem:[%s11 + $0x48] sm:$0xff] %v8320
  %8337 = vst [vmem:[%s11 + $0x50] sm:$0xff] %v8321
  %8338 = vst [vmem:[%s11 + $0x58] sm:$0xff] %v8322
  %8339 = vst [vmem:[%s11 + $0x60] sm:$0xff] %v8323
  %8340 = vst [vmem:[%s11 + $0x68] sm:$0xff] %v8324
  %8341 = vst [vmem:[%s11 + $0x70] sm:$0xff] %v8325
  %8342 = vst [vmem:[%s11 + $0x78] sm:$0xff] %v8326
  // Predicated region
  $region46: #{basic_block0.1} parent=0 // pred_check
    _
  $region47: #{basic_block0.1} parent=0 // pred_check_branch
    %8344 = sbr.rel (0) target = $region49
  $region48: #{basic_block0.1} parent=0 // pred_region
    _
  $region49: #{basic_block0.1} parent=0 // pred_fallthru
    _
  // Predicated region
  $region50: #{basic_block0.1} parent=0 // pred_check
    _
  $region51: #{basic_block0.1} parent=0 // pred_check_branch
    %8346 = sbr.rel (0) target = $region53
  $region52: #{basic_block0.1} parent=0 // pred_region
    _
  $region53: #{basic_block0.1} parent=0 // pred_fallthru
    _

</llo_original>
